<compile_context>
chip_gen: v7x
topology: tpu7x:2x2x1
jax: 0.10.0
libtpu: 0.0.40
codegen_flags: <defaults>
</compile_context>

<pallas_src>
import numpy as np
import jax
import jax.numpy as jnp
from jax import lax
from jax.experimental import pallas as pl
from jax.experimental.pallas import tpu as pltpu

# Small, self-consistent hyperparameters for the synthetic module.
NZ = 32      # nz  (latent dim)
NGF = 8      # ngf
NC = 3       # nc  (output channels)
BATCH = 2
K = 4        # kernel size of every ConvTranspose2d
EPS = 1e-5   # BatchNorm eps

# (C_in, C_out, stride, pad, H_in, H_out) -- all spatial dims are square.
LAYERS = (
    (NZ,      NGF * 8, 1, 0,  1,  4),
    (NGF * 8, NGF * 4, 2, 1,  4,  8),
    (NGF * 4, NGF * 2, 2, 1,  8, 16),
    (NGF * 2, NGF,     2, 1, 16, 32),
    (NGF,     NC,      2, 1, 32, 64),
)
N_LAYERS = len(LAYERS)
N_BN = N_LAYERS - 1        # BN+ReLU after layers 1..4, tanh after layer 5
H_OUT = LAYERS[-1][5]      # 64


# ------------------------------ Pallas kernel ------------------------------

def dcgan_fused_kernel(*refs):
    """Entire generator forward; every ref lives in VMEM.

    Input ref order: x2d,
      M[0..4]   bf16 (K, Win*Cin, Wout*Cout)   block-Toeplitz (W direction),
      S[0..4]   bf16 (K, N*Hout, N*Hin)        0/1 row placement (H direction),
      gamma[0..3], beta[0..3]        f32 (1, C),
      ones_map[0..3]  f32 (Wout*C, C)   per-channel reduce over x,
      ones_map_T[0..3] f32 (C, Wout*C)  per-channel broadcast over x.
    Output: (N*64, 64*NC) f32, rows=(n, oy), cols=(ox, co).
    """
    idx = 1
    x_ref = refs[0]
    m_refs = refs[idx:idx + N_LAYERS]; idx += N_LAYERS
    s_refs = refs[idx:idx + N_LAYERS]; idx += N_LAYERS
    g_refs = refs[idx:idx + N_BN]; idx += N_BN
    b_refs = refs[idx:idx + N_BN]; idx += N_BN
    om_refs = refs[idx:idx + N_BN]; idx += N_BN
    omt_refs = refs[idx:idx + N_BN]; idx += N_BN
    o_ref = refs[idx]

    h = x_ref[...]                                  # f32, (N*H_in, W_in*C_in)
    for l in range(N_LAYERS):                       # static unroll (5 layers)
        m = m_refs[l]
        s = s_refs[l]
        hb = h.astype(jnp.bfloat16)                 # bf16 operands for the MXU
        acc = None
        for ky in range(K):                         # static unroll (4 terms)
            # Both matmul stages use pure-bf16 operands with f32 accumulation:
            # avoids f32 multi-pass MXU matmuls; T's bf16 rounding is tiny vs
            # the bf16 weights already used on the dominant first stage.
            t = jnp.dot(hb, m[ky], preferred_element_type=jnp.float32)
            c = jnp.dot(s[ky], t.astype(jnp.bfloat16),
                        preferred_element_type=jnp.float32)
            acc = c if acc is None else acc + c
        # acc: (N*Hout, Wout*Cout); rows=(n,y), cols=(x,c) -> channels-last.
        if l < N_BN:
            gamma = g_refs[l][...]                  # (1, C)
            beta = b_refs[l][...]                   # (1, C)
            om = om_refs[l][...]                    # (Wout*C, C)
            omt = omt_refs[l][...]                  # (C, Wout*C)
            c_out = gamma.shape[1]
            count = acc.shape[0] * (acc.shape[1] // c_out)     # N*Hout*Wout
            inv_count = 1.0 / float(count)
            # One-pass batch stats: per-channel sum and sum-of-squares.
            # Kept in f32 (tiny 1-row matmuls; protects var = E[x^2]-mean^2).
            rs1 = jnp.sum(acc, axis=0, keepdims=True)          # (1, Wout*C)
            rs2 = jnp.sum(acc * acc, axis=0, keepdims=True)
            s1 = jnp.dot(rs1, om, preferred_element_type=jnp.float32)  # (1, C)
            s2 = jnp.dot(rs2, om, preferred_element_type=jnp.float32)
            mean = s1 * inv_count
            var = s2 * inv_count - mean * mean
            scale_c = gamma * lax.rsqrt(var + EPS)             # (1, C)
            shift_c = beta - mean * scale_c
            scale_w = jnp.dot(scale_c, omt, preferred_element_type=jnp.float32)
            shift_w = jnp.dot(shift_c, omt, preferred_element_type=jnp.float32)
            h = jnp.maximum(acc * scale_w + shift_w, 0.0)      # BN + ReLU
        else:
            o_ref[...] = jnp.tanh(acc)                         # final tanh


# -------------------- host-side operand prep (done once) --------------------

def build_operands(params, batch):
    """Precompute the per-layer Toeplitz / selection / BN-helper matrices.

    ConvTranspose2d:
        out[n,co,oy,ox] = sum_{ci,iy,ix} in[n,ci,iy,ix]
                          * w[ci, co, oy - s*iy + p, ox - s*ix + p]
    With activations as 2-D (N*H, W*C) matrices this is exactly
        Y = sum_ky  S_ky @ (X @ M_ky).
    """
    m_list, s_list, g_list, b_list, om_list, omt_list = [], [], [], [], [], []
    for li, (cin, cout, stride, pad, hin, hout) in enumerate(LAYERS, start=1):
        win, wout = hin, hout
        w = np.asarray(params[f'w{li}'], dtype=np.float32)     # (cin, cout, K, K)

        m_stack = np.zeros((K, win * cin, wout * cout), np.float32)
        for ky in range(K):
            for ix in range(win):
                for ox in range(wout):
                    kx = ox - stride * ix + pad
                    if 0 <= kx < K:
                        m_stack[ky, ix * cin:(ix + 1) * cin,
                                ox * cout:(ox + 1) * cout] = w[:, :, ky, kx]

        s_stack = np.zeros((K, batch * hout, batch * hin), np.float32)
        for ky in range(K):
            for n in range(batch):
                for oy in range(hout):
                    t = oy + pad - ky
                    if t % stride == 0:
                        iy = t // stride
                        if 0 <= iy < hin:
                            s_stack[ky, n * hout + oy, n * hin + iy] = 1.0

        m_list.append(jnp.asarray(m_stack, dtype=jnp.bfloat16))   # bf16 weights
        s_list.append(jnp.asarray(s_stack, dtype=jnp.bfloat16))   # 0/1 exact in bf16

        if li <= N_BN:
            g_list.append(jnp.asarray(params[f'g{li}'],
                                      dtype=jnp.float32).reshape(1, cout))
            b_list.append(jnp.asarray(params[f'b{li}'],
                                      dtype=jnp.float32).reshape(1, cout))
            om = np.tile(np.eye(cout, dtype=np.float32), (wout, 1))  # (wout*cout, cout)
            om_list.append(jnp.asarray(om))
            omt_list.append(jnp.asarray(np.ascontiguousarray(om.T)))
    return dict(m=m_list, s=s_list, g=g_list, b=b_list, om=om_list, omt=omt_list)


def _cost_estimate(batch):
    """Advisory scheduling hint for XLA (flops / transcendentals / bytes)."""
    flops = 0
    bytes_accessed = batch * NZ * 4                               # latent input
    for (cin, cout, stride, pad, hin, hout) in LAYERS:
        win, wout = hin, hout
        rows_in, rows_out = batch * hin, batch * hout
        flops += K * 2 * rows_in * (win * cin) * (wout * cout)    # X @ M_ky
        flops += K * 2 * rows_out * rows_in * (wout * cout)       # S_ky @ T
        bytes_accessed += K * (win * cin) * (wout * cout) * 2     # M (bf16)
        bytes_accessed += K * rows_out * rows_in * 2              # S (bf16)
        if cout != NC:
            bytes_accessed += 2 * cout * 4 + 2 * wout * cout * cout * 4
    bytes_accessed += batch * H_OUT * H_OUT * NC * 4              # output
    transcendentals = batch * H_OUT * H_OUT * NC + sum(l[1] for l in LAYERS[:N_BN])
    return pl.CostEstimate(flops=int(flops), transcendentals=int(transcendentals),
                           bytes_accessed=int(bytes_accessed))


# ------------------------------- Generator ---------------------------------

@jax.jit
def generator_forward(x, ops):
    """x: (N, nz, 1, 1) -> (N, nc, 64, 64), matching the PyTorch Sequential."""
    n = x.shape[0]
    x2d = x.reshape(n, NZ)          # rows = n (H_in=W_in=1), cols = ci
    flat = (tuple(ops['m']) + tuple(ops['s']) + tuple(ops['g'])
            + tuple(ops['b']) + tuple(ops['om']) + tuple(ops['omt']))
    out2d = pl.pallas_call(
        dcgan_fused_kernel,
        out_shape=jax.ShapeDtypeStruct((n * H_OUT, H_OUT * NC), jnp.float32),
        in_specs=[pl.BlockSpec(memory_space=pltpu.MemorySpace.VMEM)] * (1 + len(flat)),
        out_specs=pl.BlockSpec(memory_space=pltpu.MemorySpace.VMEM),
        compiler_params=pltpu.CompilerParams(vmem_limit_bytes=32 * 1024 * 1024),
        cost_estimate=_cost_estimate(n),
    )(x2d, *flat)
    # (N*64, 64*3) rows=(n,oy), cols=(ox,co) -> NHWC -> NCHW once, at the end.
    return out2d.reshape(n, H_OUT, H_OUT, NC).transpose(0, 3, 1, 2)


def init_params(key):
    """Deterministic DCGAN-style init: conv ~ N(0, .02), BN gamma ~ N(1, .02)."""
    ks = jax.random.split(key, 9)

    def conv_w(k, cin, cout):
        return 0.02 * jax.random.normal(k, (cin, cout, K, K), jnp.float32)

    def bn_g(k, c):
        return 1.0 + 0.02 * jax.random.normal(k, (c,), jnp.float32)

    return dict(
        w1=conv_w(ks[0], NZ, NGF * 8), g1=bn_g(ks[1], NGF * 8),
        b1=jnp.zeros((NGF * 8,), jnp.float32),
        w2=conv_w(ks[2], NGF * 8, NGF * 4), g2=bn_g(ks[3], NGF * 4),
        b2=jnp.zeros((NGF * 4,), jnp.float32),
        w3=conv_w(ks[4], NGF * 4, NGF * 2), g3=bn_g(ks[5], NGF * 2),
        b3=jnp.zeros((NGF * 2,), jnp.float32),
        w4=conv_w(ks[6], NGF * 2, NGF), g4=bn_g(ks[7], NGF),
        b4=jnp.zeros((NGF,), jnp.float32),
        w5=conv_w(ks[8], NGF, NC),
    )


# ----------------------- pure-JAX reference (check) ------------------------

def _ref_conv_transpose(x, w, stride, pad):
    wf = w[:, :, ::-1, ::-1].transpose(1, 0, 2, 3)   # (C_out, C_in, K, K)
    return lax.conv_general_dilated(
        x, wf, window_strides=(1, 1),
        padding=[(K - 1 - pad, K - 1 - pad)] * 2,
        lhs_dilation=(stride, stride),
        dimension_numbers=('NCHW', 'OIHW', 'NCHW'),
        precision=lax.Precision.HIGHEST)


def _ref_bn_relu(x, gamma, beta):
    mean = x.mean(axis=(0, 2, 3), keepdims=True)
    var = ((x - mean) ** 2).mean(axis=(0, 2, 3), keepdims=True)
    y = (x - mean) * lax.rsqrt(var + EPS)
    y = y * gamma.reshape(1, -1, 1, 1) + beta.reshape(1, -1, 1, 1)
    return jnp.maximum(y, 0.0)


def reference_forward(x, p):
    h = _ref_bn_relu(_ref_conv_transpose(x, p['w1'], 1, 0), p['g1'], p['b1'])
    h = _ref_bn_relu(_ref_conv_transpose(h, p['w2'], 2, 1), p['g2'], p['b2'])
    h = _ref_bn_relu(_ref_conv_transpose(h, p['w3'], 2, 1), p['g3'], p['b3'])
    h = _ref_bn_relu(_ref_conv_transpose(h, p['w4'], 2, 1), p['g4'], p['b4'])
    return jnp.tanh(_ref_conv_transpose(h, p['w5'], 2, 1))


if __name__ == "__main__":
    key = jax.random.PRNGKey(0)
    pkey, xkey = jax.random.split(key)
    params = init_params(pkey)
    ops = build_operands(params, BATCH)     # hoisted: built once, not per forward
    x = jax.random.normal(xkey, (BATCH, NZ, 1, 1), jnp.float32)

    out = jax.block_until_ready(generator_forward(x, ops))

    assert out.shape == (BATCH, NC, 64, 64), out.shape
    assert bool(jnp.all(jnp.isfinite(out)))
    ref = reference_forward(x, params)
    # bf16 matmul operands (f32 accumulation) -> 5e-2 tolerance is genuinely needed.
    assert bool(jnp.allclose(out, ref, atol=5e-2, rtol=5e-2)), (
        "max abs err", float(jnp.max(jnp.abs(out - ref))))
    print("KERNEL_OK")
</pallas_src>

<mosaic_0001>
module attributes {stable_mosaic.version = 11 : i64} {
  func.func @dcgan_fused_kernel(%arg0: memref<2x32xf32, #tpu.memory_space<vmem>>, %arg1: memref<4x32x256xbf16, #tpu.memory_space<vmem>>, %arg2: memref<4x256x256xbf16, #tpu.memory_space<vmem>>, %arg3: memref<4x256x256xbf16, #tpu.memory_space<vmem>>, %arg4: memref<4x256x256xbf16, #tpu.memory_space<vmem>>, %arg5: memref<4x256x192xbf16, #tpu.memory_space<vmem>>, %arg6: memref<4x8x2xbf16, #tpu.memory_space<vmem>>, %arg7: memref<4x16x8xbf16, #tpu.memory_space<vmem>>, %arg8: memref<4x32x16xbf16, #tpu.memory_space<vmem>>, %arg9: memref<4x64x32xbf16, #tpu.memory_space<vmem>>, %arg10: memref<4x128x64xbf16, #tpu.memory_space<vmem>>, %arg11: memref<1x64xf32, #tpu.memory_space<vmem>>, %arg12: memref<1x32xf32, #tpu.memory_space<vmem>>, %arg13: memref<1x16xf32, #tpu.memory_space<vmem>>, %arg14: memref<1x8xf32, #tpu.memory_space<vmem>>, %arg15: memref<1x64xf32, #tpu.memory_space<vmem>>, %arg16: memref<1x32xf32, #tpu.memory_space<vmem>>, %arg17: memref<1x16xf32, #tpu.memory_space<vmem>>, %arg18: memref<1x8xf32, #tpu.memory_space<vmem>>, %arg19: memref<256x64xf32, #tpu.memory_space<vmem>>, %arg20: memref<256x32xf32, #tpu.memory_space<vmem>>, %arg21: memref<256x16xf32, #tpu.memory_space<vmem>>, %arg22: memref<256x8xf32, #tpu.memory_space<vmem>>, %arg23: memref<64x256xf32, #tpu.memory_space<vmem>>, %arg24: memref<32x256xf32, #tpu.memory_space<vmem>>, %arg25: memref<16x256xf32, #tpu.memory_space<vmem>>, %arg26: memref<8x256xf32, #tpu.memory_space<vmem>>, %arg27: memref<128x192xf32, #tpu.memory_space<vmem>>) attributes {dimension_semantics = [], scalar_prefetch = 0 : i64, scratch_operands = 0 : i64, tpu.core_type = #tpu.core_type<tc>} {
    %c0 = arith.constant 0 : index
    %c0_0 = arith.constant 0 : index
    %0 = vector.load %arg0[%c0, %c0_0] : memref<2x32xf32, #tpu.memory_space<vmem>>, vector<2x32xf32>
    %1 = arith.truncf %0 : vector<2x32xf32> to vector<2x32xbf16>
    %c0_1 = arith.constant 0 : index
    %c0_2 = arith.constant 0 : index
    %c0_3 = arith.constant 0 : index
    %2 = vector.load %arg1[%c0_1, %c0_2, %c0_3] : memref<4x32x256xbf16, #tpu.memory_space<vmem>>, vector<1x32x256xbf16>
    %3 = vector.shape_cast %2 : vector<1x32x256xbf16> to vector<32x256xbf16>
    %cst = arith.constant dense<0.000000e+00> : vector<2x256xf32>
    %4 = tpu.matmul %1, %3, %cst {dimension_numbers = #tpu.dot_dimension_numbers<[1], [0], [0], [1], [0, 0, 1, 1], [], []>} : vector<2x32xbf16>, vector<32x256xbf16>, vector<2x256xf32> -> vector<2x256xf32>
    %c0_4 = arith.constant 0 : index
    %c0_5 = arith.constant 0 : index
    %c0_6 = arith.constant 0 : index
    %5 = vector.load %arg6[%c0_4, %c0_5, %c0_6] : memref<4x8x2xbf16, #tpu.memory_space<vmem>>, vector<1x8x2xbf16>
    %6 = vector.shape_cast %5 : vector<1x8x2xbf16> to vector<8x2xbf16>
    %7 = arith.truncf %4 : vector<2x256xf32> to vector<2x256xbf16>
    %cst_7 = arith.constant dense<0.000000e+00> : vector<8x256xf32>
    %8 = tpu.matmul %6, %7, %cst_7 {dimension_numbers = #tpu.dot_dimension_numbers<[1], [0], [0], [1], [0, 0, 1, 1], [], []>} : vector<8x2xbf16>, vector<2x256xbf16>, vector<8x256xf32> -> vector<8x256xf32>
    %c1 = arith.constant 1 : index
    %c0_8 = arith.constant 0 : index
    %c0_9 = arith.constant 0 : index
    %9 = vector.load %arg1[%c1, %c0_8, %c0_9] : memref<4x32x256xbf16, #tpu.memory_space<vmem>>, vector<1x32x256xbf16>
    %10 = vector.shape_cast %9 : vector<1x32x256xbf16> to vector<32x256xbf16>
    %cst_10 = arith.constant dense<0.000000e+00> : vector<2x256xf32>
    %11 = tpu.matmul %1, %10, %cst_10 {dimension_numbers = #tpu.dot_dimension_numbers<[1], [0], [0], [1], [0, 0, 1, 1], [], []>} : vector<2x32xbf16>, vector<32x256xbf16>, vector<2x256xf32> -> vector<2x256xf32>
    %c1_11 = arith.constant 1 : index
    %c0_12 = arith.constant 0 : index
    %c0_13 = arith.constant 0 : index
    %12 = vector.load %arg6[%c1_11, %c0_12, %c0_13] : memref<4x8x2xbf16, #tpu.memory_space<vmem>>, vector<1x8x2xbf16>
    %13 = vector.shape_cast %12 : vector<1x8x2xbf16> to vector<8x2xbf16>
    %14 = arith.truncf %11 : vector<2x256xf32> to vector<2x256xbf16>
    %cst_14 = arith.constant dense<0.000000e+00> : vector<8x256xf32>
    %15 = tpu.matmul %13, %14, %cst_14 {dimension_numbers = #tpu.dot_dimension_numbers<[1], [0], [0], [1], [0, 0, 1, 1], [], []>} : vector<8x2xbf16>, vector<2x256xbf16>, vector<8x256xf32> -> vector<8x256xf32>
    %16 = arith.addf %8, %15 : vector<8x256xf32>
    %c2 = arith.constant 2 : index
    %c0_15 = arith.constant 0 : index
    %c0_16 = arith.constant 0 : index
    %17 = vector.load %arg1[%c2, %c0_15, %c0_16] : memref<4x32x256xbf16, #tpu.memory_space<vmem>>, vector<1x32x256xbf16>
    %18 = vector.shape_cast %17 : vector<1x32x256xbf16> to vector<32x256xbf16>
    %cst_17 = arith.constant dense<0.000000e+00> : vector<2x256xf32>
    %19 = tpu.matmul %1, %18, %cst_17 {dimension_numbers = #tpu.dot_dimension_numbers<[1], [0], [0], [1], [0, 0, 1, 1], [], []>} : vector<2x32xbf16>, vector<32x256xbf16>, vector<2x256xf32> -> vector<2x256xf32>
    %c2_18 = arith.constant 2 : index
    %c0_19 = arith.constant 0 : index
    %c0_20 = arith.constant 0 : index
    %20 = vector.load %arg6[%c2_18, %c0_19, %c0_20] : memref<4x8x2xbf16, #tpu.memory_space<vmem>>, vector<1x8x2xbf16>
    %21 = vector.shape_cast %20 : vector<1x8x2xbf16> to vector<8x2xbf16>
    %22 = arith.truncf %19 : vector<2x256xf32> to vector<2x256xbf16>
    %cst_21 = arith.constant dense<0.000000e+00> : vector<8x256xf32>
    %23 = tpu.matmul %21, %22, %cst_21 {dimension_numbers = #tpu.dot_dimension_numbers<[1], [0], [0], [1], [0, 0, 1, 1], [], []>} : vector<8x2xbf16>, vector<2x256xbf16>, vector<8x256xf32> -> vector<8x256xf32>
    %24 = arith.addf %16, %23 : vector<8x256xf32>
    %c3 = arith.constant 3 : index
    %c0_22 = arith.constant 0 : index
    %c0_23 = arith.constant 0 : index
    %25 = vector.load %arg1[%c3, %c0_22, %c0_23] : memref<4x32x256xbf16, #tpu.memory_space<vmem>>, vector<1x32x256xbf16>
    %26 = vector.shape_cast %25 : vector<1x32x256xbf16> to vector<32x256xbf16>
    %cst_24 = arith.constant dense<0.000000e+00> : vector<2x256xf32>
    %27 = tpu.matmul %1, %26, %cst_24 {dimension_numbers = #tpu.dot_dimension_numbers<[1], [0], [0], [1], [0, 0, 1, 1], [], []>} : vector<2x32xbf16>, vector<32x256xbf16>, vector<2x256xf32> -> vector<2x256xf32>
    %c3_25 = arith.constant 3 : index
    %c0_26 = arith.constant 0 : index
    %c0_27 = arith.constant 0 : index
    %28 = vector.load %arg6[%c3_25, %c0_26, %c0_27] : memref<4x8x2xbf16, #tpu.memory_space<vmem>>, vector<1x8x2xbf16>
    %29 = vector.shape_cast %28 : vector<1x8x2xbf16> to vector<8x2xbf16>
    %30 = arith.truncf %27 : vector<2x256xf32> to vector<2x256xbf16>
    %cst_28 = arith.constant dense<0.000000e+00> : vector<8x256xf32>
    %31 = tpu.matmul %29, %30, %cst_28 {dimension_numbers = #tpu.dot_dimension_numbers<[1], [0], [0], [1], [0, 0, 1, 1], [], []>} : vector<8x2xbf16>, vector<2x256xbf16>, vector<8x256xf32> -> vector<8x256xf32>
    %32 = arith.addf %24, %31 : vector<8x256xf32>
    %c0_29 = arith.constant 0 : index
    %c0_30 = arith.constant 0 : index
    %33 = vector.load %arg11[%c0_29, %c0_30] : memref<1x64xf32, #tpu.memory_space<vmem>>, vector<1x64xf32>
    %c0_31 = arith.constant 0 : index
    %c0_32 = arith.constant 0 : index
    %34 = vector.load %arg15[%c0_31, %c0_32] : memref<1x64xf32, #tpu.memory_space<vmem>>, vector<1x64xf32>
    %c0_33 = arith.constant 0 : index
    %c0_34 = arith.constant 0 : index
    %35 = vector.load %arg19[%c0_33, %c0_34] : memref<256x64xf32, #tpu.memory_space<vmem>>, vector<256x64xf32>
    %c0_35 = arith.constant 0 : index
    %c0_36 = arith.constant 0 : index
    %36 = vector.load %arg23[%c0_35, %c0_36] : memref<64x256xf32, #tpu.memory_space<vmem>>, vector<64x256xf32>
    %cst_37 = arith.constant dense<0.000000e+00> : vector<256xf32>
    %37 = vector.multi_reduction <add>, %32, %cst_37 [0] : vector<8x256xf32> to vector<256xf32>
    %38 = vector.shape_cast %37 : vector<256xf32> to vector<1x256xf32>
    %39 = arith.mulf %32, %32 : vector<8x256xf32>
    %cst_38 = arith.constant dense<0.000000e+00> : vector<256xf32>
    %40 = vector.multi_reduction <add>, %39, %cst_38 [0] : vector<8x256xf32> to vector<256xf32>
    %41 = vector.shape_cast %40 : vector<256xf32> to vector<1x256xf32>
    %cst_39 = arith.constant dense<0.000000e+00> : vector<1x64xf32>
    %42 = tpu.matmul %38, %35, %cst_39 {dimension_numbers = #tpu.dot_dimension_numbers<[1], [0], [0], [1], [0, 0, 1, 1], [], []>} : vector<1x256xf32>, vector<256x64xf32>, vector<1x64xf32> -> vector<1x64xf32>
    %cst_40 = arith.constant dense<0.000000e+00> : vector<1x64xf32>
    %43 = tpu.matmul %41, %35, %cst_40 {dimension_numbers = #tpu.dot_dimension_numbers<[1], [0], [0], [1], [0, 0, 1, 1], [], []>} : vector<1x256xf32>, vector<256x64xf32>, vector<1x64xf32> -> vector<1x64xf32>
    %cst_41 = arith.constant 3.125000e-02 : f32
    %44 = vector.broadcast %cst_41 : f32 to vector<1x64xf32>
    %45 = arith.mulf %42, %44 : vector<1x64xf32>
    %cst_42 = arith.constant 3.125000e-02 : f32
    %46 = vector.broadcast %cst_42 : f32 to vector<1x64xf32>
    %47 = arith.mulf %43, %46 : vector<1x64xf32>
    %48 = arith.mulf %45, %45 : vector<1x64xf32>
    %49 = arith.subf %47, %48 : vector<1x64xf32>
    %cst_43 = arith.constant 9.99999974E-6 : f32
    %50 = vector.broadcast %cst_43 : f32 to vector<1x64xf32>
    %51 = arith.addf %49, %50 : vector<1x64xf32>
    %52 = math.rsqrt %51 : vector<1x64xf32>
    %53 = arith.mulf %33, %52 : vector<1x64xf32>
    %54 = arith.mulf %45, %53 : vector<1x64xf32>
    %55 = arith.subf %34, %54 : vector<1x64xf32>
    %cst_44 = arith.constant dense<0.000000e+00> : vector<1x256xf32>
    %56 = tpu.matmul %53, %36, %cst_44 {dimension_numbers = #tpu.dot_dimension_numbers<[1], [0], [0], [1], [0, 0, 1, 1], [], []>} : vector<1x64xf32>, vector<64x256xf32>, vector<1x256xf32> -> vector<1x256xf32>
    %cst_45 = arith.constant dense<0.000000e+00> : vector<1x256xf32>
    %57 = tpu.matmul %55, %36, %cst_45 {dimension_numbers = #tpu.dot_dimension_numbers<[1], [0], [0], [1], [0, 0, 1, 1], [], []>} : vector<1x64xf32>, vector<64x256xf32>, vector<1x256xf32> -> vector<1x256xf32>
    %58 = vector.broadcast %56 : vector<1x256xf32> to vector<8x256xf32>
    %59 = arith.mulf %32, %58 : vector<8x256xf32>
    %60 = vector.broadcast %57 : vector<1x256xf32> to vector<8x256xf32>
    %61 = arith.addf %59, %60 : vector<8x256xf32>
    %cst_46 = arith.constant 0.000000e+00 : f32
    %62 = vector.broadcast %cst_46 : f32 to vector<8x256xf32>
    %63 = arith.maximumf %61, %62 : vector<8x256xf32>
    %64 = arith.truncf %63 : vector<8x256xf32> to vector<8x256xbf16>
    %c0_47 = arith.constant 0 : index
    %c0_48 = arith.constant 0 : index
    %c0_49 = arith.constant 0 : index
    %65 = vector.load %arg2[%c0_47, %c0_48, %c0_49] : memref<4x256x256xbf16, #tpu.memory_space<vmem>>, vector<1x256x256xbf16>
    %66 = vector.shape_cast %65 : vector<1x256x256xbf16> to vector<256x256xbf16>
    %cst_50 = arith.constant dense<0.000000e+00> : vector<8x256xf32>
    %67 = tpu.matmul %64, %66, %cst_50 {dimension_numbers = #tpu.dot_dimension_numbers<[1], [0], [0], [1], [0, 0, 1, 1], [], []>} : vector<8x256xbf16>, vector<256x256xbf16>, vector<8x256xf32> -> vector<8x256xf32>
    %c0_51 = arith.constant 0 : index
    %c0_52 = arith.constant 0 : index
    %c0_53 = arith.constant 0 : index
    %68 = vector.load %arg7[%c0_51, %c0_52, %c0_53] : memref<4x16x8xbf16, #tpu.memory_space<vmem>>, vector<1x16x8xbf16>
    %69 = vector.shape_cast %68 : vector<1x16x8xbf16> to vector<16x8xbf16>
    %70 = arith.truncf %67 : vector<8x256xf32> to vector<8x256xbf16>
    %cst_54 = arith.constant dense<0.000000e+00> : vector<16x256xf32>
    %71 = tpu.matmul %69, %70, %cst_54 {dimension_numbers = #tpu.dot_dimension_numbers<[1], [0], [0], [1], [0, 0, 1, 1], [], []>} : vector<16x8xbf16>, vector<8x256xbf16>, vector<16x256xf32> -> vector<16x256xf32>
    %c1_55 = arith.constant 1 : index
    %c0_56 = arith.constant 0 : index
    %c0_57 = arith.constant 0 : index
    %72 = vector.load %arg2[%c1_55, %c0_56, %c0_57] : memref<4x256x256xbf16, #tpu.memory_space<vmem>>, vector<1x256x256xbf16>
    %73 = vector.shape_cast %72 : vector<1x256x256xbf16> to vector<256x256xbf16>
    %cst_58 = arith.constant dense<0.000000e+00> : vector<8x256xf32>
    %74 = tpu.matmul %64, %73, %cst_58 {dimension_numbers = #tpu.dot_dimension_numbers<[1], [0], [0], [1], [0, 0, 1, 1], [], []>} : vector<8x256xbf16>, vector<256x256xbf16>, vector<8x256xf32> -> vector<8x256xf32>
    %c1_59 = arith.constant 1 : index
    %c0_60 = arith.constant 0 : index
    %c0_61 = arith.constant 0 : index
    %75 = vector.load %arg7[%c1_59, %c0_60, %c0_61] : memref<4x16x8xbf16, #tpu.memory_space<vmem>>, vector<1x16x8xbf16>
    %76 = vector.shape_cast %75 : vector<1x16x8xbf16> to vector<16x8xbf16>
    %77 = arith.truncf %74 : vector<8x256xf32> to vector<8x256xbf16>
    %cst_62 = arith.constant dense<0.000000e+00> : vector<16x256xf32>
    %78 = tpu.matmul %76, %77, %cst_62 {dimension_numbers = #tpu.dot_dimension_numbers<[1], [0], [0], [1], [0, 0, 1, 1], [], []>} : vector<16x8xbf16>, vector<8x256xbf16>, vector<16x256xf32> -> vector<16x256xf32>
    %79 = arith.addf %71, %78 : vector<16x256xf32>
    %c2_63 = arith.constant 2 : index
    %c0_64 = arith.constant 0 : index
    %c0_65 = arith.constant 0 : index
    %80 = vector.load %arg2[%c2_63, %c0_64, %c0_65] : memref<4x256x256xbf16, #tpu.memory_space<vmem>>, vector<1x256x256xbf16>
    %81 = vector.shape_cast %80 : vector<1x256x256xbf16> to vector<256x256xbf16>
    %cst_66 = arith.constant dense<0.000000e+00> : vector<8x256xf32>
    %82 = tpu.matmul %64, %81, %cst_66 {dimension_numbers = #tpu.dot_dimension_numbers<[1], [0], [0], [1], [0, 0, 1, 1], [], []>} : vector<8x256xbf16>, vector<256x256xbf16>, vector<8x256xf32> -> vector<8x256xf32>
    %c2_67 = arith.constant 2 : index
    %c0_68 = arith.constant 0 : index
    %c0_69 = arith.constant 0 : index
    %83 = vector.load %arg7[%c2_67, %c0_68, %c0_69] : memref<4x16x8xbf16, #tpu.memory_space<vmem>>, vector<1x16x8xbf16>
    %84 = vector.shape_cast %83 : vector<1x16x8xbf16> to vector<16x8xbf16>
    %85 = arith.truncf %82 : vector<8x256xf32> to vector<8x256xbf16>
    %cst_70 = arith.constant dense<0.000000e+00> : vector<16x256xf32>
    %86 = tpu.matmul %84, %85, %cst_70 {dimension_numbers = #tpu.dot_dimension_numbers<[1], [0], [0], [1], [0, 0, 1, 1], [], []>} : vector<16x8xbf16>, vector<8x256xbf16>, vector<16x256xf32> -> vector<16x256xf32>
    %87 = arith.addf %79, %86 : vector<16x256xf32>
    %c3_71 = arith.constant 3 : index
    %c0_72 = arith.constant 0 : index
    %c0_73 = arith.constant 0 : index
    %88 = vector.load %arg2[%c3_71, %c0_72, %c0_73] : memref<4x256x256xbf16, #tpu.memory_space<vmem>>, vector<1x256x256xbf16>
    %89 = vector.shape_cast %88 : vector<1x256x256xbf16> to vector<256x256xbf16>
    %cst_74 = arith.constant dense<0.000000e+00> : vector<8x256xf32>
    %90 = tpu.matmul %64, %89, %cst_74 {dimension_numbers = #tpu.dot_dimension_numbers<[1], [0], [0], [1], [0, 0, 1, 1], [], []>} : vector<8x256xbf16>, vector<256x256xbf16>, vector<8x256xf32> -> vector<8x256xf32>
    %c3_75 = arith.constant 3 : index
    %c0_76 = arith.constant 0 : index
    %c0_77 = arith.constant 0 : index
    %91 = vector.load %arg7[%c3_75, %c0_76, %c0_77] : memref<4x16x8xbf16, #tpu.memory_space<vmem>>, vector<1x16x8xbf16>
    %92 = vector.shape_cast %91 : vector<1x16x8xbf16> to vector<16x8xbf16>
    %93 = arith.truncf %90 : vector<8x256xf32> to vector<8x256xbf16>
    %cst_78 = arith.constant dense<0.000000e+00> : vector<16x256xf32>
    %94 = tpu.matmul %92, %93, %cst_78 {dimension_numbers = #tpu.dot_dimension_numbers<[1], [0], [0], [1], [0, 0, 1, 1], [], []>} : vector<16x8xbf16>, vector<8x256xbf16>, vector<16x256xf32> -> vector<16x256xf32>
    %95 = arith.addf %87, %94 : vector<16x256xf32>
    %c0_79 = arith.constant 0 : index
    %c0_80 = arith.constant 0 : index
    %96 = vector.load %arg12[%c0_79, %c0_80] : memref<1x32xf32, #tpu.memory_space<vmem>>, vector<1x32xf32>
    %c0_81 = arith.constant 0 : index
    %c0_82 = arith.constant 0 : index
    %97 = vector.load %arg16[%c0_81, %c0_82] : memref<1x32xf32, #tpu.memory_space<vmem>>, vector<1x32xf32>
    %c0_83 = arith.constant 0 : index
    %c0_84 = arith.constant 0 : index
    %98 = vector.load %arg20[%c0_83, %c0_84] : memref<256x32xf32, #tpu.memory_space<vmem>>, vector<256x32xf32>
    %c0_85 = arith.constant 0 : index
    %c0_86 = arith.constant 0 : index
    %99 = vector.load %arg24[%c0_85, %c0_86] : memref<32x256xf32, #tpu.memory_space<vmem>>, vector<32x256xf32>
    %cst_87 = arith.constant dense<0.000000e+00> : vector<256xf32>
    %100 = vector.multi_reduction <add>, %95, %cst_87 [0] : vector<16x256xf32> to vector<256xf32>
    %101 = vector.shape_cast %100 : vector<256xf32> to vector<1x256xf32>
    %102 = arith.mulf %95, %95 : vector<16x256xf32>
    %cst_88 = arith.constant dense<0.000000e+00> : vector<256xf32>
    %103 = vector.multi_reduction <add>, %102, %cst_88 [0] : vector<16x256xf32> to vector<256xf32>
    %104 = vector.shape_cast %103 : vector<256xf32> to vector<1x256xf32>
    %cst_89 = arith.constant dense<0.000000e+00> : vector<1x32xf32>
    %105 = tpu.matmul %101, %98, %cst_89 {dimension_numbers = #tpu.dot_dimension_numbers<[1], [0], [0], [1], [0, 0, 1, 1], [], []>} : vector<1x256xf32>, vector<256x32xf32>, vector<1x32xf32> -> vector<1x32xf32>
    %cst_90 = arith.constant dense<0.000000e+00> : vector<1x32xf32>
    %106 = tpu.matmul %104, %98, %cst_90 {dimension_numbers = #tpu.dot_dimension_numbers<[1], [0], [0], [1], [0, 0, 1, 1], [], []>} : vector<1x256xf32>, vector<256x32xf32>, vector<1x32xf32> -> vector<1x32xf32>
    %cst_91 = arith.constant 7.812500e-03 : f32
    %107 = vector.broadcast %cst_91 : f32 to vector<1x32xf32>
    %108 = arith.mulf %105, %107 : vector<1x32xf32>
    %cst_92 = arith.constant 7.812500e-03 : f32
    %109 = vector.broadcast %cst_92 : f32 to vector<1x32xf32>
    %110 = arith.mulf %106, %109 : vector<1x32xf32>
    %111 = arith.mulf %108, %108 : vector<1x32xf32>
    %112 = arith.subf %110, %111 : vector<1x32xf32>
    %cst_93 = arith.constant 9.99999974E-6 : f32
    %113 = vector.broadcast %cst_93 : f32 to vector<1x32xf32>
    %114 = arith.addf %112, %113 : vector<1x32xf32>
    %115 = math.rsqrt %114 : vector<1x32xf32>
    %116 = arith.mulf %96, %115 : vector<1x32xf32>
    %117 = arith.mulf %108, %116 : vector<1x32xf32>
    %118 = arith.subf %97, %117 : vector<1x32xf32>
    %cst_94 = arith.constant dense<0.000000e+00> : vector<1x256xf32>
    %119 = tpu.matmul %116, %99, %cst_94 {dimension_numbers = #tpu.dot_dimension_numbers<[1], [0], [0], [1], [0, 0, 1, 1], [], []>} : vector<1x32xf32>, vector<32x256xf32>, vector<1x256xf32> -> vector<1x256xf32>
    %cst_95 = arith.constant dense<0.000000e+00> : vector<1x256xf32>
    %120 = tpu.matmul %118, %99, %cst_95 {dimension_numbers = #tpu.dot_dimension_numbers<[1], [0], [0], [1], [0, 0, 1, 1], [], []>} : vector<1x32xf32>, vector<32x256xf32>, vector<1x256xf32> -> vector<1x256xf32>
    %121 = vector.broadcast %119 : vector<1x256xf32> to vector<16x256xf32>
    %122 = arith.mulf %95, %121 : vector<16x256xf32>
    %123 = vector.broadcast %120 : vector<1x256xf32> to vector<16x256xf32>
    %124 = arith.addf %122, %123 : vector<16x256xf32>
    %cst_96 = arith.constant 0.000000e+00 : f32
    %125 = vector.broadcast %cst_96 : f32 to vector<16x256xf32>
    %126 = arith.maximumf %124, %125 : vector<16x256xf32>
    %127 = arith.truncf %126 : vector<16x256xf32> to vector<16x256xbf16>
    %c0_97 = arith.constant 0 : index
    %c0_98 = arith.constant 0 : index
    %c0_99 = arith.constant 0 : index
    %128 = vector.load %arg3[%c0_97, %c0_98, %c0_99] : memref<4x256x256xbf16, #tpu.memory_space<vmem>>, vector<1x256x256xbf16>
    %129 = vector.shape_cast %128 : vector<1x256x256xbf16> to vector<256x256xbf16>
    %cst_100 = arith.constant dense<0.000000e+00> : vector<16x256xf32>
    %130 = tpu.matmul %127, %129, %cst_100 {dimension_numbers = #tpu.dot_dimension_numbers<[1], [0], [0], [1], [0, 0, 1, 1], [], []>} : vector<16x256xbf16>, vector<256x256xbf16>, vector<16x256xf32> -> vector<16x256xf32>
    %c0_101 = arith.constant 0 : index
    %c0_102 = arith.constant 0 : index
    %c0_103 = arith.constant 0 : index
    %131 = vector.load %arg8[%c0_101, %c0_102, %c0_103] : memref<4x32x16xbf16, #tpu.memory_space<vmem>>, vector<1x32x16xbf16>
    %132 = vector.shape_cast %131 : vector<1x32x16xbf16> to vector<32x16xbf16>
    %133 = arith.truncf %130 : vector<16x256xf32> to vector<16x256xbf16>
    %cst_104 = arith.constant dense<0.000000e+00> : vector<32x256xf32>
    %134 = tpu.matmul %132, %133, %cst_104 {dimension_numbers = #tpu.dot_dimension_numbers<[1], [0], [0], [1], [0, 0, 1, 1], [], []>} : vector<32x16xbf16>, vector<16x256xbf16>, vector<32x256xf32> -> vector<32x256xf32>
    %c1_105 = arith.constant 1 : index
    %c0_106 = arith.constant 0 : index
    %c0_107 = arith.constant 0 : index
    %135 = vector.load %arg3[%c1_105, %c0_106, %c0_107] : memref<4x256x256xbf16, #tpu.memory_space<vmem>>, vector<1x256x256xbf16>
    %136 = vector.shape_cast %135 : vector<1x256x256xbf16> to vector<256x256xbf16>
    %cst_108 = arith.constant dense<0.000000e+00> : vector<16x256xf32>
    %137 = tpu.matmul %127, %136, %cst_108 {dimension_numbers = #tpu.dot_dimension_numbers<[1], [0], [0], [1], [0, 0, 1, 1], [], []>} : vector<16x256xbf16>, vector<256x256xbf16>, vector<16x256xf32> -> vector<16x256xf32>
    %c1_109 = arith.constant 1 : index
    %c0_110 = arith.constant 0 : index
    %c0_111 = arith.constant 0 : index
    %138 = vector.load %arg8[%c1_109, %c0_110, %c0_111] : memref<4x32x16xbf16, #tpu.memory_space<vmem>>, vector<1x32x16xbf16>
    %139 = vector.shape_cast %138 : vector<1x32x16xbf16> to vector<32x16xbf16>
    %140 = arith.truncf %137 : vector<16x256xf32> to vector<16x256xbf16>
    %cst_112 = arith.constant dense<0.000000e+00> : vector<32x256xf32>
    %141 = tpu.matmul %139, %140, %cst_112 {dimension_numbers = #tpu.dot_dimension_numbers<[1], [0], [0], [1], [0, 0, 1, 1], [], []>} : vector<32x16xbf16>, vector<16x256xbf16>, vector<32x256xf32> -> vector<32x256xf32>
    %142 = arith.addf %134, %141 : vector<32x256xf32>
    %c2_113 = arith.constant 2 : index
    %c0_114 = arith.constant 0 : index
    %c0_115 = arith.constant 0 : index
    %143 = vector.load %arg3[%c2_113, %c0_114, %c0_115] : memref<4x256x256xbf16, #tpu.memory_space<vmem>>, vector<1x256x256xbf16>
    %144 = vector.shape_cast %143 : vector<1x256x256xbf16> to vector<256x256xbf16>
    %cst_116 = arith.constant dense<0.000000e+00> : vector<16x256xf32>
    %145 = tpu.matmul %127, %144, %cst_116 {dimension_numbers = #tpu.dot_dimension_numbers<[1], [0], [0], [1], [0, 0, 1, 1], [], []>} : vector<16x256xbf16>, vector<256x256xbf16>, vector<16x256xf32> -> vector<16x256xf32>
    %c2_117 = arith.constant 2 : index
    %c0_118 = arith.constant 0 : index
    %c0_119 = arith.constant 0 : index
    %146 = vector.load %arg8[%c2_117, %c0_118, %c0_119] : memref<4x32x16xbf16, #tpu.memory_space<vmem>>, vector<1x32x16xbf16>
    %147 = vector.shape_cast %146 : vector<1x32x16xbf16> to vector<32x16xbf16>
    %148 = arith.truncf %145 : vector<16x256xf32> to vector<16x256xbf16>
    %cst_120 = arith.constant dense<0.000000e+00> : vector<32x256xf32>
    %149 = tpu.matmul %147, %148, %cst_120 {dimension_numbers = #tpu.dot_dimension_numbers<[1], [0], [0], [1], [0, 0, 1, 1], [], []>} : vector<32x16xbf16>, vector<16x256xbf16>, vector<32x256xf32> -> vector<32x256xf32>
    %150 = arith.addf %142, %149 : vector<32x256xf32>
    %c3_121 = arith.constant 3 : index
    %c0_122 = arith.constant 0 : index
    %c0_123 = arith.constant 0 : index
    %151 = vector.load %arg3[%c3_121, %c0_122, %c0_123] : memref<4x256x256xbf16, #tpu.memory_space<vmem>>, vector<1x256x256xbf16>
    %152 = vector.shape_cast %151 : vector<1x256x256xbf16> to vector<256x256xbf16>
    %cst_124 = arith.constant dense<0.000000e+00> : vector<16x256xf32>
    %153 = tpu.matmul %127, %152, %cst_124 {dimension_numbers = #tpu.dot_dimension_numbers<[1], [0], [0], [1], [0, 0, 1, 1], [], []>} : vector<16x256xbf16>, vector<256x256xbf16>, vector<16x256xf32> -> vector<16x256xf32>
    %c3_125 = arith.constant 3 : index
    %c0_126 = arith.constant 0 : index
    %c0_127 = arith.constant 0 : index
    %154 = vector.load %arg8[%c3_125, %c0_126, %c0_127] : memref<4x32x16xbf16, #tpu.memory_space<vmem>>, vector<1x32x16xbf16>
    %155 = vector.shape_cast %154 : vector<1x32x16xbf16> to vector<32x16xbf16>
    %156 = arith.truncf %153 : vector<16x256xf32> to vector<16x256xbf16>
    %cst_128 = arith.constant dense<0.000000e+00> : vector<32x256xf32>
    %157 = tpu.matmul %155, %156, %cst_128 {dimension_numbers = #tpu.dot_dimension_numbers<[1], [0], [0], [1], [0, 0, 1, 1], [], []>} : vector<32x16xbf16>, vector<16x256xbf16>, vector<32x256xf32> -> vector<32x256xf32>
    %158 = arith.addf %150, %157 : vector<32x256xf32>
    %c0_129 = arith.constant 0 : index
    %c0_130 = arith.constant 0 : index
    %159 = vector.load %arg13[%c0_129, %c0_130] : memref<1x16xf32, #tpu.memory_space<vmem>>, vector<1x16xf32>
    %c0_131 = arith.constant 0 : index
    %c0_132 = arith.constant 0 : index
    %160 = vector.load %arg17[%c0_131, %c0_132] : memref<1x16xf32, #tpu.memory_space<vmem>>, vector<1x16xf32>
    %c0_133 = arith.constant 0 : index
    %c0_134 = arith.constant 0 : index
    %161 = vector.load %arg21[%c0_133, %c0_134] : memref<256x16xf32, #tpu.memory_space<vmem>>, vector<256x16xf32>
    %c0_135 = arith.constant 0 : index
    %c0_136 = arith.constant 0 : index
    %162 = vector.load %arg25[%c0_135, %c0_136] : memref<16x256xf32, #tpu.memory_space<vmem>>, vector<16x256xf32>
    %cst_137 = arith.constant dense<0.000000e+00> : vector<256xf32>
    %163 = vector.multi_reduction <add>, %158, %cst_137 [0] : vector<32x256xf32> to vector<256xf32>
    %164 = vector.shape_cast %163 : vector<256xf32> to vector<1x256xf32>
    %165 = arith.mulf %158, %158 : vector<32x256xf32>
    %cst_138 = arith.constant dense<0.000000e+00> : vector<256xf32>
    %166 = vector.multi_reduction <add>, %165, %cst_138 [0] : vector<32x256xf32> to vector<256xf32>
    %167 = vector.shape_cast %166 : vector<256xf32> to vector<1x256xf32>
    %cst_139 = arith.constant dense<0.000000e+00> : vector<1x16xf32>
    %168 = tpu.matmul %164, %161, %cst_139 {dimension_numbers = #tpu.dot_dimension_numbers<[1], [0], [0], [1], [0, 0, 1, 1], [], []>} : vector<1x256xf32>, vector<256x16xf32>, vector<1x16xf32> -> vector<1x16xf32>
    %cst_140 = arith.constant dense<0.000000e+00> : vector<1x16xf32>
    %169 = tpu.matmul %167, %161, %cst_140 {dimension_numbers = #tpu.dot_dimension_numbers<[1], [0], [0], [1], [0, 0, 1, 1], [], []>} : vector<1x256xf32>, vector<256x16xf32>, vector<1x16xf32> -> vector<1x16xf32>
    %cst_141 = arith.constant 0.001953125 : f32
    %170 = vector.broadcast %cst_141 : f32 to vector<1x16xf32>
    %171 = arith.mulf %168, %170 : vector<1x16xf32>
    %cst_142 = arith.constant 0.001953125 : f32
    %172 = vector.broadcast %cst_142 : f32 to vector<1x16xf32>
    %173 = arith.mulf %169, %172 : vector<1x16xf32>
    %174 = arith.mulf %171, %171 : vector<1x16xf32>
    %175 = arith.subf %173, %174 : vector<1x16xf32>
    %cst_143 = arith.constant 9.99999974E-6 : f32
    %176 = vector.broadcast %cst_143 : f32 to vector<1x16xf32>
    %177 = arith.addf %175, %176 : vector<1x16xf32>
    %178 = math.rsqrt %177 : vector<1x16xf32>
    %179 = arith.mulf %159, %178 : vector<1x16xf32>
    %180 = arith.mulf %171, %179 : vector<1x16xf32>
    %181 = arith.subf %160, %180 : vector<1x16xf32>
    %cst_144 = arith.constant dense<0.000000e+00> : vector<1x256xf32>
    %182 = tpu.matmul %179, %162, %cst_144 {dimension_numbers = #tpu.dot_dimension_numbers<[1], [0], [0], [1], [0, 0, 1, 1], [], []>} : vector<1x16xf32>, vector<16x256xf32>, vector<1x256xf32> -> vector<1x256xf32>
    %cst_145 = arith.constant dense<0.000000e+00> : vector<1x256xf32>
    %183 = tpu.matmul %181, %162, %cst_145 {dimension_numbers = #tpu.dot_dimension_numbers<[1], [0], [0], [1], [0, 0, 1, 1], [], []>} : vector<1x16xf32>, vector<16x256xf32>, vector<1x256xf32> -> vector<1x256xf32>
    %184 = vector.broadcast %182 : vector<1x256xf32> to vector<32x256xf32>
    %185 = arith.mulf %158, %184 : vector<32x256xf32>
    %186 = vector.broadcast %183 : vector<1x256xf32> to vector<32x256xf32>
    %187 = arith.addf %185, %186 : vector<32x256xf32>
    %cst_146 = arith.constant 0.000000e+00 : f32
    %188 = vector.broadcast %cst_146 : f32 to vector<32x256xf32>
    %189 = arith.maximumf %187, %188 : vector<32x256xf32>
    %190 = arith.truncf %189 : vector<32x256xf32> to vector<32x256xbf16>
    %c0_147 = arith.constant 0 : index
    %c0_148 = arith.constant 0 : index
    %c0_149 = arith.constant 0 : index
    %191 = vector.load %arg4[%c0_147, %c0_148, %c0_149] : memref<4x256x256xbf16, #tpu.memory_space<vmem>>, vector<1x256x256xbf16>
    %192 = vector.shape_cast %191 : vector<1x256x256xbf16> to vector<256x256xbf16>
    %cst_150 = arith.constant dense<0.000000e+00> : vector<32x256xf32>
    %193 = tpu.matmul %190, %192, %cst_150 {dimension_numbers = #tpu.dot_dimension_numbers<[1], [0], [0], [1], [0, 0, 1, 1], [], []>} : vector<32x256xbf16>, vector<256x256xbf16>, vector<32x256xf32> -> vector<32x256xf32>
    %c0_151 = arith.constant 0 : index
    %c0_152 = arith.constant 0 : index
    %c0_153 = arith.constant 0 : index
    %194 = vector.load %arg9[%c0_151, %c0_152, %c0_153] : memref<4x64x32xbf16, #tpu.memory_space<vmem>>, vector<1x64x32xbf16>
    %195 = vector.shape_cast %194 : vector<1x64x32xbf16> to vector<64x32xbf16>
    %196 = arith.truncf %193 : vector<32x256xf32> to vector<32x256xbf16>
    %cst_154 = arith.constant dense<0.000000e+00> : vector<64x256xf32>
    %197 = tpu.matmul %195, %196, %cst_154 {dimension_numbers = #tpu.dot_dimension_numbers<[1], [0], [0], [1], [0, 0, 1, 1], [], []>} : vector<64x32xbf16>, vector<32x256xbf16>, vector<64x256xf32> -> vector<64x256xf32>
    %c1_155 = arith.constant 1 : index
    %c0_156 = arith.constant 0 : index
    %c0_157 = arith.constant 0 : index
    %198 = vector.load %arg4[%c1_155, %c0_156, %c0_157] : memref<4x256x256xbf16, #tpu.memory_space<vmem>>, vector<1x256x256xbf16>
    %199 = vector.shape_cast %198 : vector<1x256x256xbf16> to vector<256x256xbf16>
    %cst_158 = arith.constant dense<0.000000e+00> : vector<32x256xf32>
    %200 = tpu.matmul %190, %199, %cst_158 {dimension_numbers = #tpu.dot_dimension_numbers<[1], [0], [0], [1], [0, 0, 1, 1], [], []>} : vector<32x256xbf16>, vector<256x256xbf16>, vector<32x256xf32> -> vector<32x256xf32>
    %c1_159 = arith.constant 1 : index
    %c0_160 = arith.constant 0 : index
    %c0_161 = arith.constant 0 : index
    %201 = vector.load %arg9[%c1_159, %c0_160, %c0_161] : memref<4x64x32xbf16, #tpu.memory_space<vmem>>, vector<1x64x32xbf16>
    %202 = vector.shape_cast %201 : vector<1x64x32xbf16> to vector<64x32xbf16>
    %203 = arith.truncf %200 : vector<32x256xf32> to vector<32x256xbf16>
    %cst_162 = arith.constant dense<0.000000e+00> : vector<64x256xf32>
    %204 = tpu.matmul %202, %203, %cst_162 {dimension_numbers = #tpu.dot_dimension_numbers<[1], [0], [0], [1], [0, 0, 1, 1], [], []>} : vector<64x32xbf16>, vector<32x256xbf16>, vector<64x256xf32> -> vector<64x256xf32>
    %205 = arith.addf %197, %204 : vector<64x256xf32>
    %c2_163 = arith.constant 2 : index
    %c0_164 = arith.constant 0 : index
    %c0_165 = arith.constant 0 : index
    %206 = vector.load %arg4[%c2_163, %c0_164, %c0_165] : memref<4x256x256xbf16, #tpu.memory_space<vmem>>, vector<1x256x256xbf16>
    %207 = vector.shape_cast %206 : vector<1x256x256xbf16> to vector<256x256xbf16>
    %cst_166 = arith.constant dense<0.000000e+00> : vector<32x256xf32>
    %208 = tpu.matmul %190, %207, %cst_166 {dimension_numbers = #tpu.dot_dimension_numbers<[1], [0], [0], [1], [0, 0, 1, 1], [], []>} : vector<32x256xbf16>, vector<256x256xbf16>, vector<32x256xf32> -> vector<32x256xf32>
    %c2_167 = arith.constant 2 : index
    %c0_168 = arith.constant 0 : index
    %c0_169 = arith.constant 0 : index
    %209 = vector.load %arg9[%c2_167, %c0_168, %c0_169] : memref<4x64x32xbf16, #tpu.memory_space<vmem>>, vector<1x64x32xbf16>
    %210 = vector.shape_cast %209 : vector<1x64x32xbf16> to vector<64x32xbf16>
    %211 = arith.truncf %208 : vector<32x256xf32> to vector<32x256xbf16>
    %cst_170 = arith.constant dense<0.000000e+00> : vector<64x256xf32>
    %212 = tpu.matmul %210, %211, %cst_170 {dimension_numbers = #tpu.dot_dimension_numbers<[1], [0], [0], [1], [0, 0, 1, 1], [], []>} : vector<64x32xbf16>, vector<32x256xbf16>, vector<64x256xf32> -> vector<64x256xf32>
    %213 = arith.addf %205, %212 : vector<64x256xf32>
    %c3_171 = arith.constant 3 : index
    %c0_172 = arith.constant 0 : index
    %c0_173 = arith.constant 0 : index
    %214 = vector.load %arg4[%c3_171, %c0_172, %c0_173] : memref<4x256x256xbf16, #tpu.memory_space<vmem>>, vector<1x256x256xbf16>
    %215 = vector.shape_cast %214 : vector<1x256x256xbf16> to vector<256x256xbf16>
    %cst_174 = arith.constant dense<0.000000e+00> : vector<32x256xf32>
    %216 = tpu.matmul %190, %215, %cst_174 {dimension_numbers = #tpu.dot_dimension_numbers<[1], [0], [0], [1], [0, 0, 1, 1], [], []>} : vector<32x256xbf16>, vector<256x256xbf16>, vector<32x256xf32> -> vector<32x256xf32>
    %c3_175 = arith.constant 3 : index
    %c0_176 = arith.constant 0 : index
    %c0_177 = arith.constant 0 : index
    %217 = vector.load %arg9[%c3_175, %c0_176, %c0_177] : memref<4x64x32xbf16, #tpu.memory_space<vmem>>, vector<1x64x32xbf16>
    %218 = vector.shape_cast %217 : vector<1x64x32xbf16> to vector<64x32xbf16>
    %219 = arith.truncf %216 : vector<32x256xf32> to vector<32x256xbf16>
    %cst_178 = arith.constant dense<0.000000e+00> : vector<64x256xf32>
    %220 = tpu.matmul %218, %219, %cst_178 {dimension_numbers = #tpu.dot_dimension_numbers<[1], [0], [0], [1], [0, 0, 1, 1], [], []>} : vector<64x32xbf16>, vector<32x256xbf16>, vector<64x256xf32> -> vector<64x256xf32>
    %221 = arith.addf %213, %220 : vector<64x256xf32>
    %c0_179 = arith.constant 0 : index
    %c0_180 = arith.constant 0 : index
    %222 = vector.load %arg14[%c0_179, %c0_180] : memref<1x8xf32, #tpu.memory_space<vmem>>, vector<1x8xf32>
    %c0_181 = arith.constant 0 : index
    %c0_182 = arith.constant 0 : index
    %223 = vector.load %arg18[%c0_181, %c0_182] : memref<1x8xf32, #tpu.memory_space<vmem>>, vector<1x8xf32>
    %c0_183 = arith.constant 0 : index
    %c0_184 = arith.constant 0 : index
    %224 = vector.load %arg22[%c0_183, %c0_184] : memref<256x8xf32, #tpu.memory_space<vmem>>, vector<256x8xf32>
    %c0_185 = arith.constant 0 : index
    %c0_186 = arith.constant 0 : index
    %225 = vector.load %arg26[%c0_185, %c0_186] : memref<8x256xf32, #tpu.memory_space<vmem>>, vector<8x256xf32>
    %cst_187 = arith.constant dense<0.000000e+00> : vector<256xf32>
    %226 = vector.multi_reduction <add>, %221, %cst_187 [0] : vector<64x256xf32> to vector<256xf32>
    %227 = vector.shape_cast %226 : vector<256xf32> to vector<1x256xf32>
    %228 = arith.mulf %221, %221 : vector<64x256xf32>
    %cst_188 = arith.constant dense<0.000000e+00> : vector<256xf32>
    %229 = vector.multi_reduction <add>, %228, %cst_188 [0] : vector<64x256xf32> to vector<256xf32>
    %230 = vector.shape_cast %229 : vector<256xf32> to vector<1x256xf32>
    %cst_189 = arith.constant dense<0.000000e+00> : vector<1x8xf32>
    %231 = tpu.matmul %227, %224, %cst_189 {dimension_numbers = #tpu.dot_dimension_numbers<[1], [0], [0], [1], [0, 0, 1, 1], [], []>} : vector<1x256xf32>, vector<256x8xf32>, vector<1x8xf32> -> vector<1x8xf32>
    %cst_190 = arith.constant dense<0.000000e+00> : vector<1x8xf32>
    %232 = tpu.matmul %230, %224, %cst_190 {dimension_numbers = #tpu.dot_dimension_numbers<[1], [0], [0], [1], [0, 0, 1, 1], [], []>} : vector<1x256xf32>, vector<256x8xf32>, vector<1x8xf32> -> vector<1x8xf32>
    %cst_191 = arith.constant 4.8828125E-4 : f32
    %233 = vector.broadcast %cst_191 : f32 to vector<1x8xf32>
    %234 = arith.mulf %231, %233 : vector<1x8xf32>
    %cst_192 = arith.constant 4.8828125E-4 : f32
    %235 = vector.broadcast %cst_192 : f32 to vector<1x8xf32>
    %236 = arith.mulf %232, %235 : vector<1x8xf32>
    %237 = arith.mulf %234, %234 : vector<1x8xf32>
    %238 = arith.subf %236, %237 : vector<1x8xf32>
    %cst_193 = arith.constant 9.99999974E-6 : f32
    %239 = vector.broadcast %cst_193 : f32 to vector<1x8xf32>
    %240 = arith.addf %238, %239 : vector<1x8xf32>
    %241 = math.rsqrt %240 : vector<1x8xf32>
    %242 = arith.mulf %222, %241 : vector<1x8xf32>
    %243 = arith.mulf %234, %242 : vector<1x8xf32>
    %244 = arith.subf %223, %243 : vector<1x8xf32>
    %cst_194 = arith.constant dense<0.000000e+00> : vector<1x256xf32>
    %245 = tpu.matmul %242, %225, %cst_194 {dimension_numbers = #tpu.dot_dimension_numbers<[1], [0], [0], [1], [0, 0, 1, 1], [], []>} : vector<1x8xf32>, vector<8x256xf32>, vector<1x256xf32> -> vector<1x256xf32>
    %cst_195 = arith.constant dense<0.000000e+00> : vector<1x256xf32>
    %246 = tpu.matmul %244, %225, %cst_195 {dimension_numbers = #tpu.dot_dimension_numbers<[1], [0], [0], [1], [0, 0, 1, 1], [], []>} : vector<1x8xf32>, vector<8x256xf32>, vector<1x256xf32> -> vector<1x256xf32>
    %247 = vector.broadcast %245 : vector<1x256xf32> to vector<64x256xf32>
    %248 = arith.mulf %221, %247 : vector<64x256xf32>
    %249 = vector.broadcast %246 : vector<1x256xf32> to vector<64x256xf32>
    %250 = arith.addf %248, %249 : vector<64x256xf32>
    %cst_196 = arith.constant 0.000000e+00 : f32
    %251 = vector.broadcast %cst_196 : f32 to vector<64x256xf32>
    %252 = arith.maximumf %250, %251 : vector<64x256xf32>
    %253 = arith.truncf %252 : vector<64x256xf32> to vector<64x256xbf16>
    %c0_197 = arith.constant 0 : index
    %c0_198 = arith.constant 0 : index
    %c0_199 = arith.constant 0 : index
    %254 = vector.load %arg5[%c0_197, %c0_198, %c0_199] : memref<4x256x192xbf16, #tpu.memory_space<vmem>>, vector<1x256x192xbf16>
    %255 = vector.shape_cast %254 : vector<1x256x192xbf16> to vector<256x192xbf16>
    %cst_200 = arith.constant dense<0.000000e+00> : vector<64x192xf32>
    %256 = tpu.matmul %253, %255, %cst_200 {dimension_numbers = #tpu.dot_dimension_numbers<[1], [0], [0], [1], [0, 0, 1, 1], [], []>} : vector<64x256xbf16>, vector<256x192xbf16>, vector<64x192xf32> -> vector<64x192xf32>
    %c0_201 = arith.constant 0 : index
    %c0_202 = arith.constant 0 : index
    %c0_203 = arith.constant 0 : index
    %257 = vector.load %arg10[%c0_201, %c0_202, %c0_203] : memref<4x128x64xbf16, #tpu.memory_space<vmem>>, vector<1x128x64xbf16>
    %258 = vector.shape_cast %257 : vector<1x128x64xbf16> to vector<128x64xbf16>
    %259 = arith.truncf %256 : vector<64x192xf32> to vector<64x192xbf16>
    %cst_204 = arith.constant dense<0.000000e+00> : vector<128x192xf32>
    %260 = tpu.matmul %258, %259, %cst_204 {dimension_numbers = #tpu.dot_dimension_numbers<[1], [0], [0], [1], [0, 0, 1, 1], [], []>} : vector<128x64xbf16>, vector<64x192xbf16>, vector<128x192xf32> -> vector<128x192xf32>
    %c1_205 = arith.constant 1 : index
    %c0_206 = arith.constant 0 : index
    %c0_207 = arith.constant 0 : index
    %261 = vector.load %arg5[%c1_205, %c0_206, %c0_207] : memref<4x256x192xbf16, #tpu.memory_space<vmem>>, vector<1x256x192xbf16>
    %262 = vector.shape_cast %261 : vector<1x256x192xbf16> to vector<256x192xbf16>
    %cst_208 = arith.constant dense<0.000000e+00> : vector<64x192xf32>
    %263 = tpu.matmul %253, %262, %cst_208 {dimension_numbers = #tpu.dot_dimension_numbers<[1], [0], [0], [1], [0, 0, 1, 1], [], []>} : vector<64x256xbf16>, vector<256x192xbf16>, vector<64x192xf32> -> vector<64x192xf32>
    %c1_209 = arith.constant 1 : index
    %c0_210 = arith.constant 0 : index
    %c0_211 = arith.constant 0 : index
    %264 = vector.load %arg10[%c1_209, %c0_210, %c0_211] : memref<4x128x64xbf16, #tpu.memory_space<vmem>>, vector<1x128x64xbf16>
    %265 = vector.shape_cast %264 : vector<1x128x64xbf16> to vector<128x64xbf16>
    %266 = arith.truncf %263 : vector<64x192xf32> to vector<64x192xbf16>
    %cst_212 = arith.constant dense<0.000000e+00> : vector<128x192xf32>
    %267 = tpu.matmul %265, %266, %cst_212 {dimension_numbers = #tpu.dot_dimension_numbers<[1], [0], [0], [1], [0, 0, 1, 1], [], []>} : vector<128x64xbf16>, vector<64x192xbf16>, vector<128x192xf32> -> vector<128x192xf32>
    %268 = arith.addf %260, %267 : vector<128x192xf32>
    %c2_213 = arith.constant 2 : index
    %c0_214 = arith.constant 0 : index
    %c0_215 = arith.constant 0 : index
    %269 = vector.load %arg5[%c2_213, %c0_214, %c0_215] : memref<4x256x192xbf16, #tpu.memory_space<vmem>>, vector<1x256x192xbf16>
    %270 = vector.shape_cast %269 : vector<1x256x192xbf16> to vector<256x192xbf16>
    %cst_216 = arith.constant dense<0.000000e+00> : vector<64x192xf32>
    %271 = tpu.matmul %253, %270, %cst_216 {dimension_numbers = #tpu.dot_dimension_numbers<[1], [0], [0], [1], [0, 0, 1, 1], [], []>} : vector<64x256xbf16>, vector<256x192xbf16>, vector<64x192xf32> -> vector<64x192xf32>
    %c2_217 = arith.constant 2 : index
    %c0_218 = arith.constant 0 : index
    %c0_219 = arith.constant 0 : index
    %272 = vector.load %arg10[%c2_217, %c0_218, %c0_219] : memref<4x128x64xbf16, #tpu.memory_space<vmem>>, vector<1x128x64xbf16>
    %273 = vector.shape_cast %272 : vector<1x128x64xbf16> to vector<128x64xbf16>
    %274 = arith.truncf %271 : vector<64x192xf32> to vector<64x192xbf16>
    %cst_220 = arith.constant dense<0.000000e+00> : vector<128x192xf32>
    %275 = tpu.matmul %273, %274, %cst_220 {dimension_numbers = #tpu.dot_dimension_numbers<[1], [0], [0], [1], [0, 0, 1, 1], [], []>} : vector<128x64xbf16>, vector<64x192xbf16>, vector<128x192xf32> -> vector<128x192xf32>
    %276 = arith.addf %268, %275 : vector<128x192xf32>
    %c3_221 = arith.constant 3 : index
    %c0_222 = arith.constant 0 : index
    %c0_223 = arith.constant 0 : index
    %277 = vector.load %arg5[%c3_221, %c0_222, %c0_223] : memref<4x256x192xbf16, #tpu.memory_space<vmem>>, vector<1x256x192xbf16>
    %278 = vector.shape_cast %277 : vector<1x256x192xbf16> to vector<256x192xbf16>
    %cst_224 = arith.constant dense<0.000000e+00> : vector<64x192xf32>
    %279 = tpu.matmul %253, %278, %cst_224 {dimension_numbers = #tpu.dot_dimension_numbers<[1], [0], [0], [1], [0, 0, 1, 1], [], []>} : vector<64x256xbf16>, vector<256x192xbf16>, vector<64x192xf32> -> vector<64x192xf32>
    %c3_225 = arith.constant 3 : index
    %c0_226 = arith.constant 0 : index
    %c0_227 = arith.constant 0 : index
    %280 = vector.load %arg10[%c3_225, %c0_226, %c0_227] : memref<4x128x64xbf16, #tpu.memory_space<vmem>>, vector<1x128x64xbf16>
    %281 = vector.shape_cast %280 : vector<1x128x64xbf16> to vector<128x64xbf16>
    %282 = arith.truncf %279 : vector<64x192xf32> to vector<64x192xbf16>
    %cst_228 = arith.constant dense<0.000000e+00> : vector<128x192xf32>
    %283 = tpu.matmul %281, %282, %cst_228 {dimension_numbers = #tpu.dot_dimension_numbers<[1], [0], [0], [1], [0, 0, 1, 1], [], []>} : vector<128x64xbf16>, vector<64x192xbf16>, vector<128x192xf32> -> vector<128x192xf32>
    %284 = arith.addf %276, %283 : vector<128x192xf32>
    %285 = math.tanh %284 : vector<128x192xf32>
    %c0_229 = arith.constant 0 : index
    %c0_230 = arith.constant 0 : index
    %286 = vector.load %arg27[%c0_229, %c0_230] : memref<128x192xf32, #tpu.memory_space<vmem>>, vector<128x192xf32>
    tpu.vector_store %arg27[%c0_229, %c0_230], %285 {strides = array<i32>} : memref<128x192xf32, #tpu.memory_space<vmem>>, vector<128x192xf32>,
    return
  }
}

</mosaic_0001>

<llo_original>
// kernel: generator_forward.1
$region0: #{generator_forward.1}
  #allocation0 [shape = 'u32[]', space=smem, size = 0x4, offset = 0x4, fixed_abs, tag = 'smem constant byte address 0x4 - core index']
  #allocation1 [shape = 'u32[144,128]{1,0:T(1,128)}', space=vmem, size = 0x12000, scoped, tag = 'internal scratch']
  %s0 = inlined_call_operand.hbm [shape: f32[2,32], index: 0, kind: input, shape index: {}]
  %s1 = inlined_call_operand.hbm [shape: bf16[4,32,256], index: 1, kind: input, shape index: {}]
  %s2 = inlined_call_operand.vmem [shape: bf16[4,256,256], index: 2, kind: input, shape index: {}]
  %s3 = inlined_call_operand.vmem [shape: bf16[4,256,256], index: 3, kind: input, shape index: {}]
  %s4 = inlined_call_operand.vmem [shape: bf16[4,256,256], index: 4, kind: input, shape index: {}]
  %s5 = inlined_call_operand.vmem [shape: bf16[4,256,192], index: 5, kind: input, shape index: {}]
  %s6 = inlined_call_operand.vmem [shape: bf16[4,8,2], index: 6, kind: input, shape index: {}]
  %s7 = inlined_call_operand.vmem [shape: bf16[4,16,8], index: 7, kind: input, shape index: {}]
  %s8 = inlined_call_operand.vmem [shape: bf16[4,32,16], index: 8, kind: input, shape index: {}]
  %s9 = inlined_call_operand.vmem [shape: bf16[4,64,32], index: 9, kind: input, shape index: {}]
  %s10 = inlined_call_operand.vmem [shape: bf16[4,128,64], index: 10, kind: input, shape index: {}]
  %s11 = inlined_call_operand.vmem [shape: f32[1,64], index: 11, kind: input, shape index: {}]
  %s12 = inlined_call_operand.hbm [shape: f32[1,32], index: 12, kind: input, shape index: {}]
  %s13 = inlined_call_operand.hbm [shape: f32[1,16], index: 13, kind: input, shape index: {}]
  %s14 = inlined_call_operand.hbm [shape: f32[1,8], index: 14, kind: input, shape index: {}]
  %s15 = inlined_call_operand.hbm [shape: f32[1,64], index: 15, kind: input, shape index: {}]
  %s16 = inlined_call_operand.hbm [shape: f32[1,32], index: 16, kind: input, shape index: {}]
  %s17 = inlined_call_operand.hbm [shape: f32[1,16], index: 17, kind: input, shape index: {}]
  %s18 = inlined_call_operand.hbm [shape: f32[1,8], index: 18, kind: input, shape index: {}]
  %s19 = inlined_call_operand.vmem [shape: f32[256,64], index: 19, kind: input, shape index: {}]
  %s20 = inlined_call_operand.vmem [shape: f32[256,32], index: 20, kind: input, shape index: {}]
  %s21 = inlined_call_operand.vmem [shape: f32[256,16], index: 21, kind: input, shape index: {}]
  %s22 = inlined_call_operand.vmem [shape: f32[256,8], index: 22, kind: input, shape index: {}]
  %s23 = inlined_call_operand.hbm [shape: f32[64,256], index: 23, kind: input, shape index: {}]
  %s24 = inlined_call_operand.hbm [shape: f32[32,256], index: 24, kind: input, shape index: {}]
  %s25 = inlined_call_operand.hbm [shape: f32[16,256], index: 25, kind: input, shape index: {}]
  %s26 = inlined_call_operand.hbm [shape: f32[8,256], index: 26, kind: input, shape index: {}]
  %s27 = inlined_call_operand.vmem [shape: f32[128,192], index: 27, kind: output, shape index: {}]
  %s28 = sld [smem:[#allocation0]]
  $region170: #{generator_forward.1} parent=0
    _
  %s30 = ssub.s32 1, %s28
  %s31 = scalar_select 0, %s30, %s28
  $region1: #{generator_forward.1} parent=0
    #allocation2 [shape = 'u8[1024]{0}', space=vmem, size = 0x400, scoped, tag = 'input window, operand 0, single buffered']
    #allocation3 [shape = 's32[1]{0}', space=sflag, size = 0x4, scoped, tag = 'scoped memory for generator_forward.1']
    #allocation4 [shape = 'u8[65536]{0}', space=vmem, size = 0x10000, scoped, tag = 'input window, operand 1, single buffered']
    #allocation5 [shape = 's32[1]{0}', space=sflag, size = 0x4, scoped, tag = 'scoped memory for generator_forward.1']
    #allocation6 [shape = 'u8[512]{0}', space=vmem, size = 0x400, scoped, tag = 'input window, operand 12, single buffered']
    #allocation7 [shape = 'u8[512]{0}', space=vmem, size = 0x400, scoped, tag = 'input window, operand 13, single buffered']
    #allocation8 [shape = 's32[1]{0}', space=sflag, size = 0x4, scoped, tag = 'scoped memory for generator_forward.1']
    #allocation9 [shape = 'u8[512]{0}', space=vmem, size = 0x400, scoped, tag = 'input window, operand 14, single buffered']
    #allocation10 [shape = 'u8[512]{0}', space=vmem, size = 0x400, scoped, tag = 'input window, operand 15, single buffered']
    #allocation11 [shape = 's32[1]{0}', space=sflag, size = 0x4, scoped, tag = 'scoped memory for generator_forward.1']
    #allocation12 [shape = 'u8[512]{0}', space=vmem, size = 0x400, scoped, tag = 'input window, operand 16, single buffered']
    #allocation13 [shape = 'u8[512]{0}', space=vmem, size = 0x400, scoped, tag = 'input window, operand 17, single buffered']
    #allocation14 [shape = 's32[1]{0}', space=sflag, size = 0x4, scoped, tag = 'scoped memory for generator_forward.1']
    #allocation15 [shape = 'u8[512]{0}', space=vmem, size = 0x400, scoped, tag = 'input window, operand 18, single buffered']
    #allocation16 [shape = 'u8[65536]{0}', space=vmem, size = 0x10000, scoped, tag = 'input window, operand 23, single buffered']
    #allocation17 [shape = 's32[1]{0}', space=sflag, size = 0x4, scoped, tag = 'scoped memory for generator_forward.1']
    #allocation18 [shape = 'u8[32768]{0}', space=vmem, size = 0x8000, scoped, tag = 'input window, operand 24, single buffered']
    #allocation19 [shape = 'u8[16384]{0}', space=vmem, size = 0x4000, scoped, tag = 'input window, operand 25, single buffered']
    #allocation20 [shape = 's32[1]{0}', space=sflag, size = 0x4, scoped, tag = 'scoped memory for generator_forward.1']
    #allocation21 [shape = 'u8[8192]{0}', space=vmem, size = 0x2000, scoped, tag = 'input window, operand 26, single buffered']
    %32 = vsyncpa [#allocation3], 0
    %33 = vsyncpa [#allocation5], 0
    %34 = vsyncpa [#allocation8], 0
    %35 = vsyncpa [#allocation11], 0
    %36 = vsyncpa [#allocation14], 0
    %37 = vsyncpa [#allocation17], 0
    %38 = vsyncpa [#allocation20], 0
    // Predicated region
    $region2: #{generator_forward.1} parent=1 // pred_check
      _
    $region3: #{generator_forward.1} parent=1 // pred_check_branch
      %40 = sbr.rel (0) target = $region5
    $region4: #{generator_forward.1} parent=1 // pred_region
      %s42 = ssub.s32 32, 32
      %43 = vsyncadd [#allocation3], %s42
      %s45 = sshll.u32 [#allocation2], 4
      %s46 = int_to_ptr.vmem [resolvable:$true] %s45
      %48 = dma.hbm_to_vmem [thread:$0]  %s0, 32, %s46, [#allocation3]
    $region5: #{generator_forward.1} parent=1 // pred_fallthru
      _
    // Predicated region
    $region6: #{generator_forward.1} parent=1 // pred_check
      _
    $region7: #{generator_forward.1} parent=1 // pred_check_branch
      %50 = sbr.rel (0) target = $region9
    $region8: #{generator_forward.1} parent=1 // pred_region
      %s52 = ssub.s32 2048, 2048
      %53 = vsyncadd [#allocation5], %s52
      %s54 = sshll.u32 [#allocation4], 4
      %s55 = int_to_ptr.vmem [resolvable:$true] %s54
      %60 = dma.hbm_to_vmem [thread:$0]  %s1, 2048, %s55, [#allocation5], 128, 128, 8
    $region9: #{generator_forward.1} parent=1 // pred_fallthru
      _
    // Predicated region
    $region10: #{generator_forward.1} parent=1 // pred_check
      _
    $region11: #{generator_forward.1} parent=1 // pred_check_branch
      %62 = sbr.rel (0) target = $region13
    $region12: #{generator_forward.1} parent=1 // pred_region
      _
    $region13: #{generator_forward.1} parent=1 // pred_fallthru
      _
    // Predicated region
    $region14: #{generator_forward.1} parent=1 // pred_check
      _
    $region15: #{generator_forward.1} parent=1 // pred_check_branch
      %64 = sbr.rel (0) target = $region17
    $region16: #{generator_forward.1} parent=1 // pred_region
      _
    $region17: #{generator_forward.1} parent=1 // pred_fallthru
      _
    // Predicated region
    $region18: #{generator_forward.1} parent=1 // pred_check
      _
    $region19: #{generator_forward.1} parent=1 // pred_check_branch
      %66 = sbr.rel (0) target = $region21
    $region20: #{generator_forward.1} parent=1 // pred_region
      _
    $region21: #{generator_forward.1} parent=1 // pred_fallthru
      _
    // Predicated region
    $region22: #{generator_forward.1} parent=1 // pred_check
      _
    $region23: #{generator_forward.1} parent=1 // pred_check_branch
      %68 = sbr.rel (0) target = $region25
    $region24: #{generator_forward.1} parent=1 // pred_region
      _
    $region25: #{generator_forward.1} parent=1 // pred_fallthru
      _
    // Predicated region
    $region26: #{generator_forward.1} parent=1 // pred_check
      _
    $region27: #{generator_forward.1} parent=1 // pred_check_branch
      %70 = sbr.rel (0) target = $region29
    $region28: #{generator_forward.1} parent=1 // pred_region
      _
    $region29: #{generator_forward.1} parent=1 // pred_fallthru
      _
    // Predicated region
    $region30: #{generator_forward.1} parent=1 // pred_check
      _
    $region31: #{generator_forward.1} parent=1 // pred_check_branch
      %72 = sbr.rel (0) target = $region33
    $region32: #{generator_forward.1} parent=1 // pred_region
      _
    $region33: #{generator_forward.1} parent=1 // pred_fallthru
      _
    // Predicated region
    $region34: #{generator_forward.1} parent=1 // pred_check
      _
    $region35: #{generator_forward.1} parent=1 // pred_check_branch
      %74 = sbr.rel (0) target = $region37
    $region36: #{generator_forward.1} parent=1 // pred_region
      _
    $region37: #{generator_forward.1} parent=1 // pred_fallthru
      _
    // Predicated region
    $region38: #{generator_forward.1} parent=1 // pred_check
      _
    $region39: #{generator_forward.1} parent=1 // pred_check_branch
      %76 = sbr.rel (0) target = $region41
    $region40: #{generator_forward.1} parent=1 // pred_region
      _
    $region41: #{generator_forward.1} parent=1 // pred_fallthru
      _
    // Predicated region
    $region42: #{generator_forward.1} parent=1 // pred_check
      _
    $region43: #{generator_forward.1} parent=1 // pred_check_branch
      %78 = sbr.rel (0) target = $region45
    $region44: #{generator_forward.1} parent=1 // pred_region
      _
    $region45: #{generator_forward.1} parent=1 // pred_fallthru
      _
    // Predicated region
    $region46: #{generator_forward.1} parent=1 // pred_check
      _
    $region47: #{generator_forward.1} parent=1 // pred_check_branch
      %80 = sbr.rel (0) target = $region49
    $region48: #{generator_forward.1} parent=1 // pred_region
      _
    $region49: #{generator_forward.1} parent=1 // pred_fallthru
      _
    // Predicated region
    $region50: #{generator_forward.1} parent=1 // pred_check
      _
    $region51: #{generator_forward.1} parent=1 // pred_check_branch
      %82 = sbr.rel (0) target = $region53
    $region52: #{generator_forward.1} parent=1 // pred_region
      %s84 = ssub.s32 16, 16
      %85 = vsyncadd [#allocation5], %s84
      %s87 = sshll.u32 [#allocation6], 4
      %s88 = int_to_ptr.vmem [resolvable:$true] %s87
      %90 = dma.hbm_to_vmem [thread:$0]  %s12, 16, %s88, [#allocation5]
    $region53: #{generator_forward.1} parent=1 // pred_fallthru
      _
    // Predicated region
    $region54: #{generator_forward.1} parent=1 // pred_check
      _
    $region55: #{generator_forward.1} parent=1 // pred_check_branch
      %92 = sbr.rel (0) target = $region57
    $region56: #{generator_forward.1} parent=1 // pred_region
      %s94 = ssub.s32 16, 16
      %95 = vsyncadd [#allocation8], %s94
      %s97 = sshll.u32 [#allocation7], 4
      %s98 = int_to_ptr.vmem [resolvable:$true] %s97
      %100 = dma.hbm_to_vmem [thread:$0]  %s13, 16, %s98, [#allocation8]
    $region57: #{generator_forward.1} parent=1 // pred_fallthru
      _
    // Predicated region
    $region58: #{generator_forward.1} parent=1 // pred_check
      _
    $region59: #{generator_forward.1} parent=1 // pred_check_branch
      %102 = sbr.rel (0) target = $region61
    $region60: #{generator_forward.1} parent=1 // pred_region
      %s104 = ssub.s32 16, 16
      %105 = vsyncadd [#allocation8], %s104
      %s107 = sshll.u32 [#allocation9], 4
      %s108 = int_to_ptr.vmem [resolvable:$true] %s107
      %110 = dma.hbm_to_vmem [thread:$0]  %s14, 16, %s108, [#allocation8]
    $region61: #{generator_forward.1} parent=1 // pred_fallthru
      _
    // Predicated region
    $region62: #{generator_forward.1} parent=1 // pred_check
      _
    $region63: #{generator_forward.1} parent=1 // pred_check_branch
      %112 = sbr.rel (0) target = $region65
    $region64: #{generator_forward.1} parent=1 // pred_region
      %s114 = ssub.s32 16, 16
      %115 = vsyncadd [#allocation11], %s114
      %s117 = sshll.u32 [#allocation10], 4
      %s118 = int_to_ptr.vmem [resolvable:$true] %s117
      %120 = dma.hbm_to_vmem [thread:$0]  %s15, 16, %s118, [#allocation11]
    $region65: #{generator_forward.1} parent=1 // pred_fallthru
      _
    // Predicated region
    $region66: #{generator_forward.1} parent=1 // pred_check
      _
    $region67: #{generator_forward.1} parent=1 // pred_check_branch
      %122 = sbr.rel (0) target = $region69
    $region68: #{generator_forward.1} parent=1 // pred_region
      %s124 = ssub.s32 16, 16
      %125 = vsyncadd [#allocation11], %s124
      %s127 = sshll.u32 [#allocation12], 4
      %s128 = int_to_ptr.vmem [resolvable:$true] %s127
      %130 = dma.hbm_to_vmem [thread:$0]  %s16, 16, %s128, [#allocation11]
    $region69: #{generator_forward.1} parent=1 // pred_fallthru
      _
    // Predicated region
    $region70: #{generator_forward.1} parent=1 // pred_check
      _
    $region71: #{generator_forward.1} parent=1 // pred_check_branch
      %132 = sbr.rel (0) target = $region73
    $region72: #{generator_forward.1} parent=1 // pred_region
      %s134 = ssub.s32 16, 16
      %135 = vsyncadd [#allocation14], %s134
      %s137 = sshll.u32 [#allocation13], 4
      %s138 = int_to_ptr.vmem [resolvable:$true] %s137
      %140 = dma.hbm_to_vmem [thread:$0]  %s17, 16, %s138, [#allocation14]
    $region73: #{generator_forward.1} parent=1 // pred_fallthru
      _
    // Predicated region
    $region74: #{generator_forward.1} parent=1 // pred_check
      _
    $region75: #{generator_forward.1} parent=1 // pred_check_branch
      %142 = sbr.rel (0) target = $region77
    $region76: #{generator_forward.1} parent=1 // pred_region
      %s144 = ssub.s32 16, 16
      %145 = vsyncadd [#allocation14], %s144
      %s147 = sshll.u32 [#allocation15], 4
      %s148 = int_to_ptr.vmem [resolvable:$true] %s147
      %150 = dma.hbm_to_vmem [thread:$0]  %s18, 16, %s148, [#allocation14]
    $region77: #{generator_forward.1} parent=1 // pred_fallthru
      _
    // Predicated region
    $region78: #{generator_forward.1} parent=1 // pred_check
      _
    $region79: #{generator_forward.1} parent=1 // pred_check_branch
      %152 = sbr.rel (0) target = $region81
    $region80: #{generator_forward.1} parent=1 // pred_region
      _
    $region81: #{generator_forward.1} parent=1 // pred_fallthru
      _
    // Predicated region
    $region82: #{generator_forward.1} parent=1 // pred_check
      _
    $region83: #{generator_forward.1} parent=1 // pred_check_branch
      %154 = sbr.rel (0) target = $region85
    $region84: #{generator_forward.1} parent=1 // pred_region
      _
    $region85: #{generator_forward.1} parent=1 // pred_fallthru
      _
    // Predicated region
    $region86: #{generator_forward.1} parent=1 // pred_check
      _
    $region87: #{generator_forward.1} parent=1 // pred_check_branch
      %156 = sbr.rel (0) target = $region89
    $region88: #{generator_forward.1} parent=1 // pred_region
      _
    $region89: #{generator_forward.1} parent=1 // pred_fallthru
      _
    // Predicated region
    $region90: #{generator_forward.1} parent=1 // pred_check
      _
    $region91: #{generator_forward.1} parent=1 // pred_check_branch
      %158 = sbr.rel (0) target = $region93
    $region92: #{generator_forward.1} parent=1 // pred_region
      _
    $region93: #{generator_forward.1} parent=1 // pred_fallthru
      _
    // Predicated region
    $region94: #{generator_forward.1} parent=1 // pred_check
      _
    $region95: #{generator_forward.1} parent=1 // pred_check_branch
      %160 = sbr.rel (0) target = $region97
    $region96: #{generator_forward.1} parent=1 // pred_region
      %s162 = ssub.s32 2048, 2048
      %163 = vsyncadd [#allocation17], %s162
      %s164 = sshll.u32 [#allocation16], 4
      %s165 = int_to_ptr.vmem [resolvable:$true] %s164
      %170 = dma.hbm_to_vmem [thread:$0]  %s23, 2048, %s165, [#allocation17], 256, 256, 16
    $region97: #{generator_forward.1} parent=1 // pred_fallthru
      _
    // Predicated region
    $region98: #{generator_forward.1} parent=1 // pred_check
      _
    $region99: #{generator_forward.1} parent=1 // pred_check_branch
      %172 = sbr.rel (0) target = $region101
    $region100: #{generator_forward.1} parent=1 // pred_region
      %s174 = ssub.s32 1024, 1024
      %175 = vsyncadd [#allocation17], %s174
      %s176 = sshll.u32 [#allocation18], 4
      %s177 = int_to_ptr.vmem [resolvable:$true] %s176
      %182 = dma.hbm_to_vmem [thread:$0]  %s24, 1024, %s177, [#allocation17], 256, 256, 16
    $region101: #{generator_forward.1} parent=1 // pred_fallthru
      _
    // Predicated region
    $region102: #{generator_forward.1} parent=1 // pred_check
      _
    $region103: #{generator_forward.1} parent=1 // pred_check_branch
      %184 = sbr.rel (0) target = $region105
    $region104: #{generator_forward.1} parent=1 // pred_region
      %s186 = ssub.s32 512, 512
      %187 = vsyncadd [#allocation20], %s186
      %s188 = sshll.u32 [#allocation19], 4
      %s189 = int_to_ptr.vmem [resolvable:$true] %s188
      %194 = dma.hbm_to_vmem [thread:$0]  %s25, 512, %s189, [#allocation20], 256, 256, 16
    $region105: #{generator_forward.1} parent=1 // pred_fallthru
      _
    // Predicated region
    $region106: #{generator_forward.1} parent=1 // pred_check
      _
    $region107: #{generator_forward.1} parent=1 // pred_check_branch
      %196 = sbr.rel (0) target = $region109
    $region108: #{generator_forward.1} parent=1 // pred_region
      %s198 = ssub.s32 256, 256
      %199 = vsyncadd [#allocation20], %s198
      %s201 = sshll.u32 [#allocation21], 4
      %s202 = int_to_ptr.vmem [resolvable:$true] %s201
      %204 = dma.hbm_to_vmem [thread:$0]  %s26, 256, %s202, [#allocation20]
    $region109: #{generator_forward.1} parent=1 // pred_fallthru
      _
    // Predicated region
    $region110: #{generator_forward.1} parent=1 // pred_check
      _
    $region111: #{generator_forward.1} parent=1 // pred_check_branch
      %206 = sbr.rel (0) target = $region113
    $region112: #{generator_forward.1} parent=1 // pred_region
      %207 = dma.done [#allocation3], 32
    $region113: #{generator_forward.1} parent=1 // pred_fallthru
      _
    // Predicated region
    $region114: #{generator_forward.1} parent=1 // pred_check
      _
    $region115: #{generator_forward.1} parent=1 // pred_check_branch
      %209 = sbr.rel (0) target = $region117
    $region116: #{generator_forward.1} parent=1 // pred_region
      %210 = dma.done [#allocation5], 2048
    $region117: #{generator_forward.1} parent=1 // pred_fallthru
      _
    // Predicated region
    $region118: #{generator_forward.1} parent=1 // pred_check
      _
    $region119: #{generator_forward.1} parent=1 // pred_check_branch
      %212 = sbr.rel (0) target = $region121
    $region120: #{generator_forward.1} parent=1 // pred_region
      %213 = dma.done [#allocation5], 16
    $region121: #{generator_forward.1} parent=1 // pred_fallthru
      _
    // Predicated region
    $region122: #{generator_forward.1} parent=1 // pred_check
      _
    $region123: #{generator_forward.1} parent=1 // pred_check_branch
      %215 = sbr.rel (0) target = $region125
    $region124: #{generator_forward.1} parent=1 // pred_region
      %216 = dma.done [#allocation8], 16
    $region125: #{generator_forward.1} parent=1 // pred_fallthru
      _
    // Predicated region
    $region126: #{generator_forward.1} parent=1 // pred_check
      _
    $region127: #{generator_forward.1} parent=1 // pred_check_branch
      %218 = sbr.rel (0) target = $region129
    $region128: #{generator_forward.1} parent=1 // pred_region
      %219 = dma.done [#allocation8], 16
    $region129: #{generator_forward.1} parent=1 // pred_fallthru
      _
    // Predicated region
    $region130: #{generator_forward.1} parent=1 // pred_check
      _
    $region131: #{generator_forward.1} parent=1 // pred_check_branch
      %221 = sbr.rel (0) target = $region133
    $region132: #{generator_forward.1} parent=1 // pred_region
      %222 = dma.done [#allocation11], 16
    $region133: #{generator_forward.1} parent=1 // pred_fallthru
      _
    // Predicated region
    $region134: #{generator_forward.1} parent=1 // pred_check
      _
    $region135: #{generator_forward.1} parent=1 // pred_check_branch
      %224 = sbr.rel (0) target = $region137
    $region136: #{generator_forward.1} parent=1 // pred_region
      %225 = dma.done [#allocation11], 16
    $region137: #{generator_forward.1} parent=1 // pred_fallthru
      _
    // Predicated region
    $region138: #{generator_forward.1} parent=1 // pred_check
      _
    $region139: #{generator_forward.1} parent=1 // pred_check_branch
      %227 = sbr.rel (0) target = $region141
    $region140: #{generator_forward.1} parent=1 // pred_region
      %228 = dma.done [#allocation14], 16
    $region141: #{generator_forward.1} parent=1 // pred_fallthru
      _
    // Predicated region
    $region142: #{generator_forward.1} parent=1 // pred_check
      _
    $region143: #{generator_forward.1} parent=1 // pred_check_branch
      %230 = sbr.rel (0) target = $region145
    $region144: #{generator_forward.1} parent=1 // pred_region
      %231 = dma.done [#allocation14], 16
    $region145: #{generator_forward.1} parent=1 // pred_fallthru
      _
    // Predicated region
    $region146: #{generator_forward.1} parent=1 // pred_check
      _
    $region147: #{generator_forward.1} parent=1 // pred_check_branch
      %233 = sbr.rel (0) target = $region149
    $region148: #{generator_forward.1} parent=1 // pred_region
      %234 = dma.done [#allocation17], 2048
    $region149: #{generator_forward.1} parent=1 // pred_fallthru
      _
    // Predicated region
    $region150: #{generator_forward.1} parent=1 // pred_check
      _
    $region151: #{generator_forward.1} parent=1 // pred_check_branch
      %236 = sbr.rel (0) target = $region153
    $region152: #{generator_forward.1} parent=1 // pred_region
      %237 = dma.done [#allocation17], 1024
    $region153: #{generator_forward.1} parent=1 // pred_fallthru
      _
    // Predicated region
    $region154: #{generator_forward.1} parent=1 // pred_check
      _
    $region155: #{generator_forward.1} parent=1 // pred_check_branch
      %239 = sbr.rel (0) target = $region157
    $region156: #{generator_forward.1} parent=1 // pred_region
      %240 = dma.done [#allocation20], 512
    $region157: #{generator_forward.1} parent=1 // pred_fallthru
      _
    // Predicated region
    $region158: #{generator_forward.1} parent=1 // pred_check
      _
    $region159: #{generator_forward.1} parent=1 // pred_check_branch
      %242 = sbr.rel (0) target = $region161
    $region160: #{generator_forward.1} parent=1 // pred_region
      %243 = dma.done [#allocation20], 256
    $region161: #{generator_forward.1} parent=1 // pred_fallthru
      _
    %v245 = vld [vmem:[#allocation2] sm:$0x3]
    %v246 = vpack.c.bf16 %v245, %v245
    %v247 = vld [vmem:[#allocation4] sm:$0xff]
    %v248 = vld [vmem:[#allocation4 + $0x8] sm:$0xff]
    %v249 = vld [vmem:[#allocation4 + $0x10] sm:$0xff]
    %v250 = vld [vmem:[#allocation4 + $0x18] sm:$0xff]
    %v255 = vunpack.c.l.b16 %v247
    %v256 = vunpack.c.h.b16 %v247
    %v257 = vunpack.c.l.b16 %v248
    %v258 = vunpack.c.h.b16 %v248
    %v259 = vunpack.c.l.b16 %v249
    %v260 = vunpack.c.h.b16 %v249
    %v261 = vunpack.c.l.b16 %v250
    %v262 = vunpack.c.h.b16 %v250
    %v263 = vpack.c.b16 %v257, %v255
    %v264 = vpack.c.b16 %v258, %v256
    %v265 = vpack.c.b16 %v261, %v259
    %v266 = vpack.c.b16 %v262, %v260
    %vm271 = vcmask 261120
    %v273 = vsel %vm271, %v246, 0
    %275 = vmatprep.subr.bf16.mxu0 %v264
    %276 = vmatpush1.bf16.msra.mxu0 %v263
    %277 = vmatprep.subr.bf16.mxu0 %v266
    %278 = vmatpush1.bf16.msra.mxu0 %v265
    %279 = vmatprep.subr.bf16.mxu0 0
    %280 = vmatpush1.bf16.msra.mxu0 0
    %281 = vmatprep.subr.bf16.mxu0 0
    %282 = vmatpush1.bf16.msra.mxu0 0
    %283 = vmatprep.subr.bf16.mxu0 0
    %284 = vmatpush1.bf16.msra.mxu0 0
    %285 = vmatprep.subr.bf16.mxu0 0
    %286 = vmatpush1.bf16.msra.mxu0 0
    %287 = vmatprep.subr.bf16.mxu0 0
    %288 = vmatpush1.bf16.msra.mxu0 0
    %289 = vmatprep.subr.bf16.mxu0 0
    %290 = vmatpush1.bf16.msra.mxu0 0
    %291 = vmatprep.subr.bf16.mxu0 0
    %292 = vmatpush1.bf16.msra.mxu0 0
    %293 = vmatprep.subr.bf16.mxu0 0
    %294 = vmatpush1.bf16.msra.mxu0 0
    %295 = vmatprep.subr.bf16.mxu0 0
    %296 = vmatpush1.bf16.msra.mxu0 0
    %297 = vmatprep.subr.bf16.mxu0 0
    %298 = vmatpush1.bf16.msra.mxu0 0
    %299 = vmatprep.subr.bf16.mxu0 0
    %300 = vmatpush1.bf16.msra.mxu0 0
    %301 = vmatprep.subr.bf16.mxu0 0
    %302 = vmatpush1.bf16.msra.mxu0 0
    %303 = vmatprep.subr.bf16.mxu0 0
    %304 = vmatpush1.bf16.msra.mxu0 0
    %305 = vmatprep.subr.bf16.mxu0 0
    %306 = vmatpush1.bf16.msra.mxu0 0
    %307 = vmatprep.mubr.bf16.mxu0 0
    %308 = vmatmul.mubr.bf16.gmra.mrb[0].mxu0 %v273
    %v309 = vpop.f32.mrb[0].mxu0
    %v310 = vadd.f32 0.0, %v309
    %v311 = vpop.f32.mrb[0].mxu0
    %v312 = vadd.f32 0.0, %v311
    %v313 = vpop.f32.mrb[0].mxu0
    %v314 = vpop.f32.mrb[0].mxu0
    %315 = vdwg.mxu0
    %v316 = vld [vmem:[%s6] sm:$0xf]
    %v317 = vpack.c.bf16 %v310, %v310
    %v318 = vpack.c.bf16 %v312, %v312
    %s319 = scalar_lea.vmem [#allocation4], 32
    %v320 = vld [vmem:[%s319] sm:$0xff]
    %v321 = vld [vmem:[%s319 + $0x8] sm:$0xff]
    %v322 = vld [vmem:[%s319 + $0x10] sm:$0xff]
    %v323 = vld [vmem:[%s319 + $0x18] sm:$0xff]
    %v328 = vunpack.c.l.b16 %v320
    %v329 = vunpack.c.h.b16 %v320
    %v330 = vunpack.c.l.b16 %v321
    %v331 = vunpack.c.h.b16 %v321
    %v332 = vunpack.c.l.b16 %v322
    %v333 = vunpack.c.h.b16 %v322
    %v334 = vunpack.c.l.b16 %v323
    %v335 = vunpack.c.h.b16 %v323
    %v336 = vpack.c.b16 %v330, %v328
    %v337 = vpack.c.b16 %v331, %v329
    %v338 = vpack.c.b16 %v334, %v332
    %v339 = vpack.c.b16 %v335, %v333
    %344 = vmatprep.subr.bf16.mxu0 %v337
    %345 = vmatpush1.bf16.msra.mxu0 %v336
    %346 = vmatprep.subr.bf16.mxu0 %v339
    %347 = vmatpush1.bf16.msra.mxu0 %v338
    %348 = vmatprep.subr.bf16.mxu0 0
    %349 = vmatpush1.bf16.msra.mxu0 0
    %350 = vmatprep.subr.bf16.mxu0 0
    %351 = vmatpush1.bf16.msra.mxu0 0
    %352 = vmatprep.subr.bf16.mxu0 0
    %353 = vmatpush1.bf16.msra.mxu0 0
    %354 = vmatprep.subr.bf16.mxu0 0
    %355 = vmatpush1.bf16.msra.mxu0 0
    %356 = vmatprep.subr.bf16.mxu0 0
    %357 = vmatpush1.bf16.msra.mxu0 0
    %358 = vmatprep.subr.bf16.mxu0 0
    %359 = vmatpush1.bf16.msra.mxu0 0
    %360 = vmatprep.subr.bf16.mxu0 0
    %361 = vmatpush1.bf16.msra.mxu0 0
    %362 = vmatprep.subr.bf16.mxu0 0
    %363 = vmatpush1.bf16.msra.mxu0 0
    %364 = vmatprep.subr.bf16.mxu0 0
    %365 = vmatpush1.bf16.msra.mxu0 0
    %366 = vmatprep.subr.bf16.mxu0 0
    %367 = vmatpush1.bf16.msra.mxu0 0
    %368 = vmatprep.subr.bf16.mxu0 0
    %369 = vmatpush1.bf16.msra.mxu0 0
    %370 = vmatprep.subr.bf16.mxu0 0
    %371 = vmatpush1.bf16.msra.mxu0 0
    %372 = vmatprep.subr.bf16.mxu0 0
    %373 = vmatpush1.bf16.msra.mxu0 0
    %374 = vmatprep.subr.bf16.mxu0 0
    %375 = vmatpush1.bf16.msra.mxu0 0
    %376 = vmatprep.mubr.bf16.mxu0 0
    %377 = vmatmul.mubr.bf16.gmra.mrb[0].mxu0 %v273
    %v378 = vpop.f32.mrb[0].mxu0
    %v379 = vadd.f32 0.0, %v378
    %v380 = vpop.f32.mrb[0].mxu0
    %v381 = vadd.f32 0.0, %v380
    %v382 = vpop.f32.mrb[0].mxu0
    %v383 = vpop.f32.mrb[0].mxu0
    %384 = vdwg.mxu0
    %s385 = scalar_lea.vmem %s6, 4
    %v386 = vld [vmem:[%s385] sm:$0xf]
    %v387 = vpack.c.bf16 %v379, %v379
    %v388 = vpack.c.bf16 %v381, %v381
    %vm389 = vcmask 15360
    %v391 = vsel %vm389, %v386, 0
    %vm393 = vcmask 1040384
    %v395 = vsel %vm393, %v387, 0
    %v398 = vsel %vm393, %v388, 0
    %400 = vmatprep.subr.bf16.mxu0 %v398
    %401 = vmatpush1.bf16.msra.mxu0 %v395
    %402 = vmatprep.subr.bf16.mxu0 0
    %403 = vmatpush1.bf16.msra.mxu0 0
    %404 = vmatprep.subr.bf16.mxu0 0
    %405 = vmatpush1.bf16.msra.mxu0 0
    %406 = vmatprep.subr.bf16.mxu0 0
    %407 = vmatpush1.bf16.msra.mxu0 0
    %408 = vmatprep.subr.bf16.mxu0 0
    %409 = vmatpush1.bf16.msra.mxu0 0
    %410 = vmatprep.subr.bf16.mxu0 0
    %411 = vmatpush1.bf16.msra.mxu0 0
    %412 = vmatprep.subr.bf16.mxu0 0
    %413 = vmatpush1.bf16.msra.mxu0 0
    %414 = vmatprep.subr.bf16.mxu0 0
    %415 = vmatpush1.bf16.msra.mxu0 0
    %416 = vmatprep.subr.bf16.mxu0 0
    %417 = vmatpush1.bf16.msra.mxu0 0
    %418 = vmatprep.subr.bf16.mxu0 0
    %419 = vmatpush1.bf16.msra.mxu0 0
    %420 = vmatprep.subr.bf16.mxu0 0
    %421 = vmatpush1.bf16.msra.mxu0 0
    %422 = vmatprep.subr.bf16.mxu0 0
    %423 = vmatpush1.bf16.msra.mxu0 0
    %424 = vmatprep.subr.bf16.mxu0 0
    %425 = vmatpush1.bf16.msra.mxu0 0
    %426 = vmatprep.subr.bf16.mxu0 0
    %427 = vmatpush1.bf16.msra.mxu0 0
    %428 = vmatprep.subr.bf16.mxu0 0
    %429 = vmatpush1.bf16.msra.mxu0 0
    %430 = vmatprep.subr.bf16.mxu0 0
    %431 = vmatpush1.bf16.msra.mxu0 0
    %432 = vmatprep.mubr.bf16.mxu0 0
    %433 = vmatmul.mubr.bf16.gmra.mrb[0].mxu0 %v391
    %v434 = vpop.f32.mrb[0].mxu0
    %v435 = vadd.f32 0.0, %v434
    %v436 = vpop.f32.mrb[0].mxu0
    %v437 = vadd.f32 0.0, %v436
    %v438 = vpop.f32.mrb[0].mxu0
    %v439 = vpop.f32.mrb[0].mxu0
    %440 = vdwg.mxu0
    %v442 = vsel %vm389, %v316, 0
    %v445 = vsel %vm393, %v317, 0
    %v448 = vsel %vm393, %v318, 0
    %450 = vmatprep.subr.bf16.mxu0 %v448
    %451 = vmatpush1.bf16.msra.mxu0 %v445
    %452 = vmatprep.subr.bf16.mxu0 0
    %453 = vmatpush1.bf16.msra.mxu0 0
    %454 = vmatprep.subr.bf16.mxu0 0
    %455 = vmatpush1.bf16.msra.mxu0 0
    %456 = vmatprep.subr.bf16.mxu0 0
    %457 = vmatpush1.bf16.msra.mxu0 0
    %458 = vmatprep.subr.bf16.mxu0 0
    %459 = vmatpush1.bf16.msra.mxu0 0
    %460 = vmatprep.subr.bf16.mxu0 0
    %461 = vmatpush1.bf16.msra.mxu0 0
    %462 = vmatprep.subr.bf16.mxu0 0
    %463 = vmatpush1.bf16.msra.mxu0 0
    %464 = vmatprep.subr.bf16.mxu0 0
    %465 = vmatpush1.bf16.msra.mxu0 0
    %466 = vmatprep.subr.bf16.mxu0 0
    %467 = vmatpush1.bf16.msra.mxu0 0
    %468 = vmatprep.subr.bf16.mxu0 0
    %469 = vmatpush1.bf16.msra.mxu0 0
    %470 = vmatprep.subr.bf16.mxu0 0
    %471 = vmatpush1.bf16.msra.mxu0 0
    %472 = vmatprep.subr.bf16.mxu0 0
    %473 = vmatpush1.bf16.msra.mxu0 0
    %474 = vmatprep.subr.bf16.mxu0 0
    %475 = vmatpush1.bf16.msra.mxu0 0
    %476 = vmatprep.subr.bf16.mxu0 0
    %477 = vmatpush1.bf16.msra.mxu0 0
    %478 = vmatprep.subr.bf16.mxu0 0
    %479 = vmatpush1.bf16.msra.mxu0 0
    %480 = vmatprep.subr.bf16.mxu0 0
    %481 = vmatpush1.bf16.msra.mxu0 0
    %482 = vmatprep.mubr.bf16.mxu0 0
    %483 = vmatmul.mubr.bf16.gmra.mrb[0].mxu0 %v442
    %v484 = vpop.f32.mrb[0].mxu0
    %v485 = vadd.f32 %v435, %v484
    %v486 = vpop.f32.mrb[0].mxu0
    %v487 = vadd.f32 %v437, %v486
    %v488 = vpop.f32.mrb[0].mxu0
    %v489 = vpop.f32.mrb[0].mxu0
    %490 = vdwg.mxu0
    %s491 = scalar_lea.vmem [#allocation4], 64
    %v492 = vld [vmem:[%s491] sm:$0xff]
    %v493 = vld [vmem:[%s491 + $0x8] sm:$0xff]
    %v494 = vld [vmem:[%s491 + $0x10] sm:$0xff]
    %v495 = vld [vmem:[%s491 + $0x18] sm:$0xff]
    %v500 = vunpack.c.l.b16 %v492
    %v501 = vunpack.c.h.b16 %v492
    %v502 = vunpack.c.l.b16 %v493
    %v503 = vunpack.c.h.b16 %v493
    %v504 = vunpack.c.l.b16 %v494
    %v505 = vunpack.c.h.b16 %v494
    %v506 = vunpack.c.l.b16 %v495
    %v507 = vunpack.c.h.b16 %v495
    %v508 = vpack.c.b16 %v502, %v500
    %v509 = vpack.c.b16 %v503, %v501
    %v510 = vpack.c.b16 %v506, %v504
    %v511 = vpack.c.b16 %v507, %v505
    %516 = vmatprep.subr.bf16.mxu0 %v509
    %517 = vmatpush1.bf16.msra.mxu0 %v508
    %518 = vmatprep.subr.bf16.mxu0 %v511
    %519 = vmatpush1.bf16.msra.mxu0 %v510
    %520 = vmatprep.subr.bf16.mxu0 0
    %521 = vmatpush1.bf16.msra.mxu0 0
    %522 = vmatprep.subr.bf16.mxu0 0
    %523 = vmatpush1.bf16.msra.mxu0 0
    %524 = vmatprep.subr.bf16.mxu0 0
    %525 = vmatpush1.bf16.msra.mxu0 0
    %526 = vmatprep.subr.bf16.mxu0 0
    %527 = vmatpush1.bf16.msra.mxu0 0
    %528 = vmatprep.subr.bf16.mxu0 0
    %529 = vmatpush1.bf16.msra.mxu0 0
    %530 = vmatprep.subr.bf16.mxu0 0
    %531 = vmatpush1.bf16.msra.mxu0 0
    %532 = vmatprep.subr.bf16.mxu0 0
    %533 = vmatpush1.bf16.msra.mxu0 0
    %534 = vmatprep.subr.bf16.mxu0 0
    %535 = vmatpush1.bf16.msra.mxu0 0
    %536 = vmatprep.subr.bf16.mxu0 0
    %537 = vmatpush1.bf16.msra.mxu0 0
    %538 = vmatprep.subr.bf16.mxu0 0
    %539 = vmatpush1.bf16.msra.mxu0 0
    %540 = vmatprep.subr.bf16.mxu0 0
    %541 = vmatpush1.bf16.msra.mxu0 0
    %542 = vmatprep.subr.bf16.mxu0 0
    %543 = vmatpush1.bf16.msra.mxu0 0
    %544 = vmatprep.subr.bf16.mxu0 0
    %545 = vmatpush1.bf16.msra.mxu0 0
    %546 = vmatprep.subr.bf16.mxu0 0
    %547 = vmatpush1.bf16.msra.mxu0 0
    %548 = vmatprep.mubr.bf16.mxu0 0
    %549 = vmatmul.mubr.bf16.gmra.mrb[0].mxu0 %v273
    %v550 = vpop.f32.mrb[0].mxu0
    %v551 = vadd.f32 0.0, %v550
    %v552 = vpop.f32.mrb[0].mxu0
    %v553 = vadd.f32 0.0, %v552
    %v554 = vpop.f32.mrb[0].mxu0
    %v555 = vpop.f32.mrb[0].mxu0
    %556 = vdwg.mxu0
    %s557 = scalar_lea.vmem %s6, 8
    %v558 = vld [vmem:[%s557] sm:$0xf]
    %v559 = vpack.c.bf16 %v551, %v551
    %v560 = vpack.c.bf16 %v553, %v553
    %v562 = vsel %vm389, %v558, 0
    %v565 = vsel %vm393, %v559, 0
    %v568 = vsel %vm393, %v560, 0
    %570 = vmatprep.subr.bf16.mxu0 %v568
    %571 = vmatpush1.bf16.msra.mxu0 %v565
    %572 = vmatprep.subr.bf16.mxu0 0
    %573 = vmatpush1.bf16.msra.mxu0 0
    %574 = vmatprep.subr.bf16.mxu0 0
    %575 = vmatpush1.bf16.msra.mxu0 0
    %576 = vmatprep.subr.bf16.mxu0 0
    %577 = vmatpush1.bf16.msra.mxu0 0
    %578 = vmatprep.subr.bf16.mxu0 0
    %579 = vmatpush1.bf16.msra.mxu0 0
    %580 = vmatprep.subr.bf16.mxu0 0
    %581 = vmatpush1.bf16.msra.mxu0 0
    %582 = vmatprep.subr.bf16.mxu0 0
    %583 = vmatpush1.bf16.msra.mxu0 0
    %584 = vmatprep.subr.bf16.mxu0 0
    %585 = vmatpush1.bf16.msra.mxu0 0
    %586 = vmatprep.subr.bf16.mxu0 0
    %587 = vmatpush1.bf16.msra.mxu0 0
    %588 = vmatprep.subr.bf16.mxu0 0
    %589 = vmatpush1.bf16.msra.mxu0 0
    %590 = vmatprep.subr.bf16.mxu0 0
    %591 = vmatpush1.bf16.msra.mxu0 0
    %592 = vmatprep.subr.bf16.mxu0 0
    %593 = vmatpush1.bf16.msra.mxu0 0
    %594 = vmatprep.subr.bf16.mxu0 0
    %595 = vmatpush1.bf16.msra.mxu0 0
    %596 = vmatprep.subr.bf16.mxu0 0
    %597 = vmatpush1.bf16.msra.mxu0 0
    %598 = vmatprep.subr.bf16.mxu0 0
    %599 = vmatpush1.bf16.msra.mxu0 0
    %600 = vmatprep.subr.bf16.mxu0 0
    %601 = vmatpush1.bf16.msra.mxu0 0
    %602 = vmatprep.mubr.bf16.mxu0 0
    %603 = vmatmul.mubr.bf16.gmra.mrb[0].mxu0 %v562
    %v604 = vpop.f32.mrb[0].mxu0
    %v605 = vadd.f32 0.0, %v604
    %v606 = vpop.f32.mrb[0].mxu0
    %v607 = vadd.f32 0.0, %v606
    %v608 = vpop.f32.mrb[0].mxu0
    %v609 = vpop.f32.mrb[0].mxu0
    %610 = vdwg.mxu0
    %v611 = vadd.f32 %v485, %v605
    %v612 = vadd.f32 %v487, %v607
    %s613 = scalar_lea.vmem [#allocation4], 96
    %v614 = vld [vmem:[%s613] sm:$0xff]
    %v615 = vld [vmem:[%s613 + $0x8] sm:$0xff]
    %v616 = vld [vmem:[%s613 + $0x10] sm:$0xff]
    %v617 = vld [vmem:[%s613 + $0x18] sm:$0xff]
    %v622 = vunpack.c.l.b16 %v614
    %v623 = vunpack.c.h.b16 %v614
    %v624 = vunpack.c.l.b16 %v615
    %v625 = vunpack.c.h.b16 %v615
    %v626 = vunpack.c.l.b16 %v616
    %v627 = vunpack.c.h.b16 %v616
    %v628 = vunpack.c.l.b16 %v617
    %v629 = vunpack.c.h.b16 %v617
    %v630 = vpack.c.b16 %v624, %v622
    %v631 = vpack.c.b16 %v625, %v623
    %v632 = vpack.c.b16 %v628, %v626
    %v633 = vpack.c.b16 %v629, %v627
    %638 = vmatprep.subr.bf16.mxu0 %v631
    %639 = vmatpush1.bf16.msra.mxu0 %v630
    %640 = vmatprep.subr.bf16.mxu0 %v633
    %641 = vmatpush1.bf16.msra.mxu0 %v632
    %642 = vmatprep.subr.bf16.mxu0 0
    %643 = vmatpush1.bf16.msra.mxu0 0
    %644 = vmatprep.subr.bf16.mxu0 0
    %645 = vmatpush1.bf16.msra.mxu0 0
    %646 = vmatprep.subr.bf16.mxu0 0
    %647 = vmatpush1.bf16.msra.mxu0 0
    %648 = vmatprep.subr.bf16.mxu0 0
    %649 = vmatpush1.bf16.msra.mxu0 0
    %650 = vmatprep.subr.bf16.mxu0 0
    %651 = vmatpush1.bf16.msra.mxu0 0
    %652 = vmatprep.subr.bf16.mxu0 0
    %653 = vmatpush1.bf16.msra.mxu0 0
    %654 = vmatprep.subr.bf16.mxu0 0
    %655 = vmatpush1.bf16.msra.mxu0 0
    %656 = vmatprep.subr.bf16.mxu0 0
    %657 = vmatpush1.bf16.msra.mxu0 0
    %658 = vmatprep.subr.bf16.mxu0 0
    %659 = vmatpush1.bf16.msra.mxu0 0
    %660 = vmatprep.subr.bf16.mxu0 0
    %661 = vmatpush1.bf16.msra.mxu0 0
    %662 = vmatprep.subr.bf16.mxu0 0
    %663 = vmatpush1.bf16.msra.mxu0 0
    %664 = vmatprep.subr.bf16.mxu0 0
    %665 = vmatpush1.bf16.msra.mxu0 0
    %666 = vmatprep.subr.bf16.mxu0 0
    %667 = vmatpush1.bf16.msra.mxu0 0
    %668 = vmatprep.subr.bf16.mxu0 0
    %669 = vmatpush1.bf16.msra.mxu0 0
    %670 = vmatprep.mubr.bf16.mxu0 0
    %671 = vmatmul.mubr.bf16.gmra.mrb[0].mxu0 %v273
    %v672 = vpop.f32.mrb[0].mxu0
    %v673 = vadd.f32 0.0, %v672
    %v674 = vpop.f32.mrb[0].mxu0
    %v675 = vadd.f32 0.0, %v674
    %v676 = vpop.f32.mrb[0].mxu0
    %v677 = vpop.f32.mrb[0].mxu0
    %678 = vdwg.mxu0
    %s679 = scalar_lea.vmem %s6, 12
    %v680 = vld [vmem:[%s679] sm:$0xf]
    %v681 = vpack.c.bf16 %v673, %v673
    %v682 = vpack.c.bf16 %v675, %v675
    %v684 = vsel %vm389, %v680, 0
    %v687 = vsel %vm393, %v681, 0
    %v690 = vsel %vm393, %v682, 0
    %692 = vmatprep.subr.bf16.mxu0 %v690
    %693 = vmatpush1.bf16.msra.mxu0 %v687
    %694 = vmatprep.subr.bf16.mxu0 0
    %695 = vmatpush1.bf16.msra.mxu0 0
    %696 = vmatprep.subr.bf16.mxu0 0
    %697 = vmatpush1.bf16.msra.mxu0 0
    %698 = vmatprep.subr.bf16.mxu0 0
    %699 = vmatpush1.bf16.msra.mxu0 0
    %700 = vmatprep.subr.bf16.mxu0 0
    %701 = vmatpush1.bf16.msra.mxu0 0
    %702 = vmatprep.subr.bf16.mxu0 0
    %703 = vmatpush1.bf16.msra.mxu0 0
    %704 = vmatprep.subr.bf16.mxu0 0
    %705 = vmatpush1.bf16.msra.mxu0 0
    %706 = vmatprep.subr.bf16.mxu0 0
    %707 = vmatpush1.bf16.msra.mxu0 0
    %708 = vmatprep.subr.bf16.mxu0 0
    %709 = vmatpush1.bf16.msra.mxu0 0
    %710 = vmatprep.subr.bf16.mxu0 0
    %711 = vmatpush1.bf16.msra.mxu0 0
    %712 = vmatprep.subr.bf16.mxu0 0
    %713 = vmatpush1.bf16.msra.mxu0 0
    %714 = vmatprep.subr.bf16.mxu0 0
    %715 = vmatpush1.bf16.msra.mxu0 0
    %716 = vmatprep.subr.bf16.mxu0 0
    %717 = vmatpush1.bf16.msra.mxu0 0
    %718 = vmatprep.subr.bf16.mxu0 0
    %719 = vmatpush1.bf16.msra.mxu0 0
    %720 = vmatprep.subr.bf16.mxu0 0
    %721 = vmatpush1.bf16.msra.mxu0 0
    %722 = vmatprep.subr.bf16.mxu0 0
    %723 = vmatpush1.bf16.msra.mxu0 0
    %724 = vmatprep.mubr.bf16.mxu0 0
    %725 = vmatmul.mubr.bf16.gmra.mrb[0].mxu0 %v684
    %v726 = vpop.f32.mrb[0].mxu0
    %v727 = vadd.f32 0.0, %v726
    %v728 = vpop.f32.mrb[0].mxu0
    %v729 = vadd.f32 0.0, %v728
    %v730 = vpop.f32.mrb[0].mxu0
    %v731 = vpop.f32.mrb[0].mxu0
    %732 = vdwg.mxu0
    %v733 = vadd.f32 %v611, %v727
    %v734 = vadd.f32 %v612, %v729
    %v735 = vld [vmem:[%s11] sm:$0x1]
    %v736 = vld [vmem:[#allocation10] sm:$0x1]
    %v737 = vld [vmem:[%s19] sm:$0xff]
    %v738 = vld [vmem:[%s19 + $0x8] sm:$0xff]
    %v739 = vld [vmem:[%s19 + $0x10] sm:$0xff]
    %v740 = vld [vmem:[%s19 + $0x18] sm:$0xff]
    %v741 = vld [vmem:[%s19 + $0x20] sm:$0xff]
    %v742 = vld [vmem:[%s19 + $0x28] sm:$0xff]
    %v743 = vld [vmem:[%s19 + $0x30] sm:$0xff]
    %v744 = vld [vmem:[%s19 + $0x38] sm:$0xff]
    %v745 = vld [vmem:[%s19 + $0x40] sm:$0xff]
    %v746 = vld [vmem:[%s19 + $0x48] sm:$0xff]
    %v747 = vld [vmem:[%s19 + $0x50] sm:$0xff]
    %v748 = vld [vmem:[%s19 + $0x58] sm:$0xff]
    %v749 = vld [vmem:[%s19 + $0x60] sm:$0xff]
    %v750 = vld [vmem:[%s19 + $0x68] sm:$0xff]
    %v751 = vld [vmem:[%s19 + $0x70] sm:$0xff]
    %v752 = vld [vmem:[%s19 + $0x78] sm:$0xff]
    %v753 = vld [vmem:[%s19 + $0x80] sm:$0xff]
    %v754 = vld [vmem:[%s19 + $0x88] sm:$0xff]
    %v755 = vld [vmem:[%s19 + $0x90] sm:$0xff]
    %v756 = vld [vmem:[%s19 + $0x98] sm:$0xff]
    %v757 = vld [vmem:[%s19 + $0xa0] sm:$0xff]
    %v758 = vld [vmem:[%s19 + $0xa8] sm:$0xff]
    %v759 = vld [vmem:[%s19 + $0xb0] sm:$0xff]
    %v760 = vld [vmem:[%s19 + $0xb8] sm:$0xff]
    %v761 = vld [vmem:[%s19 + $0xc0] sm:$0xff]
    %v762 = vld [vmem:[%s19 + $0xc8] sm:$0xff]
    %v763 = vld [vmem:[%s19 + $0xd0] sm:$0xff]
    %v764 = vld [vmem:[%s19 + $0xd8] sm:$0xff]
    %v765 = vld [vmem:[%s19 + $0xe0] sm:$0xff]
    %v766 = vld [vmem:[%s19 + $0xe8] sm:$0xff]
    %v767 = vld [vmem:[%s19 + $0xf0] sm:$0xff]
    %v768 = vld [vmem:[%s19 + $0xf8] sm:$0xff]
    %v769 = vld [vmem:[#allocation16] sm:$0xff]
    %v770 = vld [vmem:[#allocation16 + $0x8] sm:$0xff]
    %v771 = vld [vmem:[#allocation16 + $0x10] sm:$0xff]
    %v772 = vld [vmem:[#allocation16 + $0x18] sm:$0xff]
    %v773 = vld [vmem:[#allocation16 + $0x20] sm:$0xff]
    %v774 = vld [vmem:[#allocation16 + $0x28] sm:$0xff]
    %v775 = vld [vmem:[#allocation16 + $0x30] sm:$0xff]
    %v776 = vld [vmem:[#allocation16 + $0x38] sm:$0xff]
    %v777 = vld [vmem:[#allocation16 + $0x40] sm:$0xff]
    %v778 = vld [vmem:[#allocation16 + $0x48] sm:$0xff]
    %v779 = vld [vmem:[#allocation16 + $0x50] sm:$0xff]
    %v780 = vld [vmem:[#allocation16 + $0x58] sm:$0xff]
    %v781 = vld [vmem:[#allocation16 + $0x60] sm:$0xff]
    %v782 = vld [vmem:[#allocation16 + $0x68] sm:$0xff]
    %v783 = vld [vmem:[#allocation16 + $0x70] sm:$0xff]
    %v784 = vld [vmem:[#allocation16 + $0x78] sm:$0xff]
    %v785 = vrot.slane %v733, 4
    %v786 = vadd.f32 %v733, %v785
    %v787 = vrot.slane %v786, 2
    %v788 = vadd.f32 %v786, %v787
    %v789 = vrot.slane %v788, 1
    %v790 = vadd.f32 %v788, %v789
    %v791 = vrot.slane %v734, 4
    %v792 = vadd.f32 %v734, %v791
    %v793 = vrot.slane %v792, 2
    %v794 = vadd.f32 %v792, %v793
    %v795 = vrot.slane %v794, 1
    %v796 = vadd.f32 %v794, %v795
    %v797 = vmul.f32 %v733, %v733
    %v798 = vmul.f32 %v734, %v734
    %v799 = vrot.slane %v797, 4
    %v800 = vadd.f32 %v797, %v799
    %v801 = vrot.slane %v800, 2
    %v802 = vadd.f32 %v800, %v801
    %v803 = vrot.slane %v802, 1
    %v804 = vadd.f32 %v802, %v803
    %v805 = vrot.slane %v798, 4
    %v806 = vadd.f32 %v798, %v805
    %v807 = vrot.slane %v806, 2
    %v808 = vadd.f32 %v806, %v807
    %v809 = vrot.slane %v808, 1
    %v810 = vadd.f32 %v808, %v809
    %811 = vmatprep.subr.mxu0 0.0
    %812 = vmatpush1.msra.mxu0 %v737
    %813 = vmatprep.subr.mxu0 0.0
    %814 = vmatpush1.msra.mxu0 %v738
    %815 = vmatprep.subr.mxu0 0.0
    %816 = vmatpush1.msra.mxu0 %v739
    %817 = vmatprep.subr.mxu0 0.0
    %818 = vmatpush1.msra.mxu0 %v740
    %819 = vmatprep.subr.mxu0 0.0
    %820 = vmatpush1.msra.mxu0 %v741
    %821 = vmatprep.subr.mxu0 0.0
    %822 = vmatpush1.msra.mxu0 %v742
    %823 = vmatprep.subr.mxu0 0.0
    %824 = vmatpush1.msra.mxu0 %v743
    %825 = vmatprep.subr.mxu0 0.0
    %826 = vmatpush1.msra.mxu0 %v744
    %827 = vmatprep.subr.mxu0 0.0
    %828 = vmatpush1.msra.mxu0 %v745
    %829 = vmatprep.subr.mxu0 0.0
    %830 = vmatpush1.msra.mxu0 %v746
    %831 = vmatprep.subr.mxu0 0.0
    %832 = vmatpush1.msra.mxu0 %v747
    %833 = vmatprep.subr.mxu0 0.0
    %834 = vmatpush1.msra.mxu0 %v748
    %835 = vmatprep.subr.mxu0 0.0
    %836 = vmatpush1.msra.mxu0 %v749
    %837 = vmatprep.subr.mxu0 0.0
    %838 = vmatpush1.msra.mxu0 %v750
    %839 = vmatprep.subr.mxu0 0.0
    %840 = vmatpush1.msra.mxu0 %v751
    %841 = vmatprep.subr.mxu0 0.0
    %842 = vmatpush1.msra.mxu0 %v752
    %843 = vmatprep.subr.mxu0 0.0
    %844 = vmatpush1.msra.mxu0 %v753
    %845 = vmatprep.subr.mxu0 0.0
    %846 = vmatpush1.msra.mxu0 %v754
    %847 = vmatprep.subr.mxu0 0.0
    %848 = vmatpush1.msra.mxu0 %v755
    %849 = vmatprep.subr.mxu0 0.0
    %850 = vmatpush1.msra.mxu0 %v756
    %851 = vmatprep.subr.mxu0 0.0
    %852 = vmatpush1.msra.mxu0 %v757
    %853 = vmatprep.subr.mxu0 0.0
    %854 = vmatpush1.msra.mxu0 %v758
    %855 = vmatprep.subr.mxu0 0.0
    %856 = vmatpush1.msra.mxu0 %v759
    %857 = vmatprep.subr.mxu0 0.0
    %858 = vmatpush1.msra.mxu0 %v760
    %859 = vmatprep.subr.mxu0 0.0
    %860 = vmatpush1.msra.mxu0 %v761
    %861 = vmatprep.subr.mxu0 0.0
    %862 = vmatpush1.msra.mxu0 %v762
    %863 = vmatprep.subr.mxu0 0.0
    %864 = vmatpush1.msra.mxu0 %v763
    %865 = vmatprep.subr.mxu0 0.0
    %866 = vmatpush1.msra.mxu0 %v764
    %867 = vmatprep.subr.mxu0 0.0
    %868 = vmatpush1.msra.mxu0 %v765
    %869 = vmatprep.subr.mxu0 0.0
    %870 = vmatpush1.msra.mxu0 %v766
    %871 = vmatprep.subr.mxu0 0.0
    %872 = vmatpush1.msra.mxu0 %v767
    %873 = vmatprep.subr.mxu0 0.0
    %874 = vmatpush1.msra.mxu0 %v768
    %875 = vmatprep.mubr.f32.mxu0 %v796
    %876 = vmatmul.mubr.f32.gmra.mrb[0].mxu0 %v790
    %v877 = vpop.f32.mrb[0].mxu0
    %v878 = vadd.f32 0.0, %v877
    %v879 = vpop.f32.mrb[0].mxu0
    %880 = vdwg.mxu0
    %881 = vmatprep.subr.mxu0 0.0
    %882 = vmatpush1.msra.mxu0 %v737
    %883 = vmatprep.subr.mxu0 0.0
    %884 = vmatpush1.msra.mxu0 %v738
    %885 = vmatprep.subr.mxu0 0.0
    %886 = vmatpush1.msra.mxu0 %v739
    %887 = vmatprep.subr.mxu0 0.0
    %888 = vmatpush1.msra.mxu0 %v740
    %889 = vmatprep.subr.mxu0 0.0
    %890 = vmatpush1.msra.mxu0 %v741
    %891 = vmatprep.subr.mxu0 0.0
    %892 = vmatpush1.msra.mxu0 %v742
    %893 = vmatprep.subr.mxu0 0.0
    %894 = vmatpush1.msra.mxu0 %v743
    %895 = vmatprep.subr.mxu0 0.0
    %896 = vmatpush1.msra.mxu0 %v744
    %897 = vmatprep.subr.mxu0 0.0
    %898 = vmatpush1.msra.mxu0 %v745
    %899 = vmatprep.subr.mxu0 0.0
    %900 = vmatpush1.msra.mxu0 %v746
    %901 = vmatprep.subr.mxu0 0.0
    %902 = vmatpush1.msra.mxu0 %v747
    %903 = vmatprep.subr.mxu0 0.0
    %904 = vmatpush1.msra.mxu0 %v748
    %905 = vmatprep.subr.mxu0 0.0
    %906 = vmatpush1.msra.mxu0 %v749
    %907 = vmatprep.subr.mxu0 0.0
    %908 = vmatpush1.msra.mxu0 %v750
    %909 = vmatprep.subr.mxu0 0.0
    %910 = vmatpush1.msra.mxu0 %v751
    %911 = vmatprep.subr.mxu0 0.0
    %912 = vmatpush1.msra.mxu0 %v752
    %913 = vmatprep.subr.mxu0 0.0
    %914 = vmatpush1.msra.mxu0 %v753
    %915 = vmatprep.subr.mxu0 0.0
    %916 = vmatpush1.msra.mxu0 %v754
    %917 = vmatprep.subr.mxu0 0.0
    %918 = vmatpush1.msra.mxu0 %v755
    %919 = vmatprep.subr.mxu0 0.0
    %920 = vmatpush1.msra.mxu0 %v756
    %921 = vmatprep.subr.mxu0 0.0
    %922 = vmatpush1.msra.mxu0 %v757
    %923 = vmatprep.subr.mxu0 0.0
    %924 = vmatpush1.msra.mxu0 %v758
    %925 = vmatprep.subr.mxu0 0.0
    %926 = vmatpush1.msra.mxu0 %v759
    %927 = vmatprep.subr.mxu0 0.0
    %928 = vmatpush1.msra.mxu0 %v760
    %929 = vmatprep.subr.mxu0 0.0
    %930 = vmatpush1.msra.mxu0 %v761
    %931 = vmatprep.subr.mxu0 0.0
    %932 = vmatpush1.msra.mxu0 %v762
    %933 = vmatprep.subr.mxu0 0.0
    %934 = vmatpush1.msra.mxu0 %v763
    %935 = vmatprep.subr.mxu0 0.0
    %936 = vmatpush1.msra.mxu0 %v764
    %937 = vmatprep.subr.mxu0 0.0
    %938 = vmatpush1.msra.mxu0 %v765
    %939 = vmatprep.subr.mxu0 0.0
    %940 = vmatpush1.msra.mxu0 %v766
    %941 = vmatprep.subr.mxu0 0.0
    %942 = vmatpush1.msra.mxu0 %v767
    %943 = vmatprep.subr.mxu0 0.0
    %944 = vmatpush1.msra.mxu0 %v768
    %945 = vmatprep.mubr.f32.mxu0 %v810
    %946 = vmatmul.mubr.f32.gmra.mrb[0].mxu0 %v804
    %v947 = vpop.f32.mrb[0].mxu0
    %v948 = vadd.f32 0.0, %v947
    %v949 = vpop.f32.mrb[0].mxu0
    %950 = vdwg.mxu0
    %v951 = vmul.f32 %v878, 0.03125
    %v952 = vmul.f32 %v948, 0.03125
    %v953 = vmul.f32 %v951, %v951
    %v954 = vsub.f32 %v952, %v953
    %v955 = vadd.f32 %v954, 1e-05
    %v956 = vrsqrt.pop %v955
    %v957 = vmul.f32 %v735, %v956
    %v958 = vmul.f32 %v951, %v957
    %v959 = vsub.f32 %v736, %v958
    %vm960 = vcmask 523264
    %v962 = vsel %vm960, %v957, 0
    %964 = vmatprep.subr.mxu0 %v770
    %965 = vmatpush1.msra.mxu0 %v769
    %966 = vmatprep.subr.mxu0 %v772
    %967 = vmatpush1.msra.mxu0 %v771
    %968 = vmatprep.subr.mxu0 %v774
    %969 = vmatpush1.msra.mxu0 %v773
    %970 = vmatprep.subr.mxu0 %v776
    %971 = vmatpush1.msra.mxu0 %v775
    %972 = vmatprep.subr.mxu0 %v778
    %973 = vmatpush1.msra.mxu0 %v777
    %974 = vmatprep.subr.mxu0 %v780
    %975 = vmatpush1.msra.mxu0 %v779
    %976 = vmatprep.subr.mxu0 %v782
    %977 = vmatpush1.msra.mxu0 %v781
    %978 = vmatprep.subr.mxu0 %v784
    %979 = vmatpush1.msra.mxu0 %v783
    %980 = vmatprep.subr.mxu0 0.0
    %981 = vmatpush1.msra.mxu0 0.0
    %982 = vmatprep.subr.mxu0 0.0
    %983 = vmatpush1.msra.mxu0 0.0
    %984 = vmatprep.subr.mxu0 0.0
    %985 = vmatpush1.msra.mxu0 0.0
    %986 = vmatprep.subr.mxu0 0.0
    %987 = vmatpush1.msra.mxu0 0.0
    %988 = vmatprep.subr.mxu0 0.0
    %989 = vmatpush1.msra.mxu0 0.0
    %990 = vmatprep.subr.mxu0 0.0
    %991 = vmatpush1.msra.mxu0 0.0
    %992 = vmatprep.subr.mxu0 0.0
    %993 = vmatpush1.msra.mxu0 0.0
    %994 = vmatprep.subr.mxu0 0.0
    %995 = vmatpush1.msra.mxu0 0.0
    %996 = vmatprep.subr.mxu0 0.0
    %997 = vmatpush1.msra.mxu0 0.0
    %998 = vmatprep.subr.mxu0 0.0
    %999 = vmatpush1.msra.mxu0 0.0
    %1000 = vmatprep.subr.mxu0 0.0
    %1001 = vmatpush1.msra.mxu0 0.0
    %1002 = vmatprep.subr.mxu0 0.0
    %1003 = vmatpush1.msra.mxu0 0.0
    %1004 = vmatprep.subr.mxu0 0.0
    %1005 = vmatpush1.msra.mxu0 0.0
    %1006 = vmatprep.subr.mxu0 0.0
    %1007 = vmatpush1.msra.mxu0 0.0
    %1008 = vmatprep.subr.mxu0 0.0
    %1009 = vmatpush1.msra.mxu0 0.0
    %1010 = vmatprep.subr.mxu0 0.0
    %1011 = vmatpush1.msra.mxu0 0.0
    %1012 = vmatprep.subr.mxu0 0.0
    %1013 = vmatpush1.msra.mxu0 0.0
    %1014 = vmatprep.subr.mxu0 0.0
    %1015 = vmatpush1.msra.mxu0 0.0
    %1016 = vmatprep.subr.mxu0 0.0
    %1017 = vmatpush1.msra.mxu0 0.0
    %1018 = vmatprep.subr.mxu0 0.0
    %1019 = vmatpush1.msra.mxu0 0.0
    %1020 = vmatprep.subr.mxu0 0.0
    %1021 = vmatpush1.msra.mxu0 0.0
    %1022 = vmatprep.subr.mxu0 0.0
    %1023 = vmatpush1.msra.mxu0 0.0
    %1024 = vmatprep.subr.mxu0 0.0
    %1025 = vmatpush1.msra.mxu0 0.0
    %1026 = vmatprep.subr.mxu0 0.0
    %1027 = vmatpush1.msra.mxu0 0.0
    %1028 = vmatprep.mubr.f32.mxu0 0.0
    %1029 = vmatmul.mubr.f32.gmra.mrb[0].mxu0 %v962
    %v1030 = vpop.f32.mrb[0].mxu0
    %v1031 = vadd.f32 0.0, %v1030
    %v1032 = vpop.f32.mrb[0].mxu0
    %v1033 = vadd.f32 0.0, %v1032
    %1034 = vdwg.mxu0
    %v1036 = vsel %vm960, %v959, 0
    %1038 = vmatprep.subr.mxu0 %v770
    %1039 = vmatpush1.msra.mxu0 %v769
    %1040 = vmatprep.subr.mxu0 %v772
    %1041 = vmatpush1.msra.mxu0 %v771
    %1042 = vmatprep.subr.mxu0 %v774
    %1043 = vmatpush1.msra.mxu0 %v773
    %1044 = vmatprep.subr.mxu0 %v776
    %1045 = vmatpush1.msra.mxu0 %v775
    %1046 = vmatprep.subr.mxu0 %v778
    %1047 = vmatpush1.msra.mxu0 %v777
    %1048 = vmatprep.subr.mxu0 %v780
    %1049 = vmatpush1.msra.mxu0 %v779
    %1050 = vmatprep.subr.mxu0 %v782
    %1051 = vmatpush1.msra.mxu0 %v781
    %1052 = vmatprep.subr.mxu0 %v784
    %1053 = vmatpush1.msra.mxu0 %v783
    %1054 = vmatprep.subr.mxu0 0.0
    %1055 = vmatpush1.msra.mxu0 0.0
    %1056 = vmatprep.subr.mxu0 0.0
    %1057 = vmatpush1.msra.mxu0 0.0
    %1058 = vmatprep.subr.mxu0 0.0
    %1059 = vmatpush1.msra.mxu0 0.0
    %1060 = vmatprep.subr.mxu0 0.0
    %1061 = vmatpush1.msra.mxu0 0.0
    %1062 = vmatprep.subr.mxu0 0.0
    %1063 = vmatpush1.msra.mxu0 0.0
    %1064 = vmatprep.subr.mxu0 0.0
    %1065 = vmatpush1.msra.mxu0 0.0
    %1066 = vmatprep.subr.mxu0 0.0
    %1067 = vmatpush1.msra.mxu0 0.0
    %1068 = vmatprep.subr.mxu0 0.0
    %1069 = vmatpush1.msra.mxu0 0.0
    %1070 = vmatprep.subr.mxu0 0.0
    %1071 = vmatpush1.msra.mxu0 0.0
    %1072 = vmatprep.subr.mxu0 0.0
    %1073 = vmatpush1.msra.mxu0 0.0
    %1074 = vmatprep.subr.mxu0 0.0
    %1075 = vmatpush1.msra.mxu0 0.0
    %1076 = vmatprep.subr.mxu0 0.0
    %1077 = vmatpush1.msra.mxu0 0.0
    %1078 = vmatprep.subr.mxu0 0.0
    %1079 = vmatpush1.msra.mxu0 0.0
    %1080 = vmatprep.subr.mxu0 0.0
    %1081 = vmatpush1.msra.mxu0 0.0
    %1082 = vmatprep.subr.mxu0 0.0
    %1083 = vmatpush1.msra.mxu0 0.0
    %1084 = vmatprep.subr.mxu0 0.0
    %1085 = vmatpush1.msra.mxu0 0.0
    %1086 = vmatprep.subr.mxu0 0.0
    %1087 = vmatpush1.msra.mxu0 0.0
    %1088 = vmatprep.subr.mxu0 0.0
    %1089 = vmatpush1.msra.mxu0 0.0
    %1090 = vmatprep.subr.mxu0 0.0
    %1091 = vmatpush1.msra.mxu0 0.0
    %1092 = vmatprep.subr.mxu0 0.0
    %1093 = vmatpush1.msra.mxu0 0.0
    %1094 = vmatprep.subr.mxu0 0.0
    %1095 = vmatpush1.msra.mxu0 0.0
    %1096 = vmatprep.subr.mxu0 0.0
    %1097 = vmatpush1.msra.mxu0 0.0
    %1098 = vmatprep.subr.mxu0 0.0
    %1099 = vmatpush1.msra.mxu0 0.0
    %1100 = vmatprep.subr.mxu0 0.0
    %1101 = vmatpush1.msra.mxu0 0.0
    %1102 = vmatprep.mubr.f32.mxu0 0.0
    %1103 = vmatmul.mubr.f32.gmra.mrb[0].mxu0 %v1036
    %v1104 = vpop.f32.mrb[0].mxu0
    %v1105 = vadd.f32 0.0, %v1104
    %v1106 = vpop.f32.mrb[0].mxu0
    %v1107 = vadd.f32 0.0, %v1106
    %1108 = vdwg.mxu0
    %v1109 = vlaneseq
    %v1110 = vshrl.u32 %v1109, 7
    %v1111 = vsub.s32 0, %v1110
    %v1112 = vrot.slane %v1031, %v1111
    %v1113 = vlaneseq
    %v1114 = vshrl.u32 %v1113, 7
    %v1115 = vsub.s32 0, %v1114
    %v1116 = vrot.slane %v1033, %v1115
    %v1117 = vmul.f32 %v733, %v1112
    %v1118 = vmul.f32 %v734, %v1116
    %v1119 = vlaneseq
    %v1120 = vshrl.u32 %v1119, 7
    %v1121 = vsub.s32 0, %v1120
    %v1122 = vrot.slane %v1105, %v1121
    %v1123 = vlaneseq
    %v1124 = vshrl.u32 %v1123, 7
    %v1125 = vsub.s32 0, %v1124
    %v1126 = vrot.slane %v1107, %v1125
    %v1127 = vadd.f32 %v1117, %v1122
    %v1128 = vadd.f32 %v1118, %v1126
    %v1129 = vmax.f32 %v1127, 0.0
    %v1130 = vmax.f32 %v1128, 0.0
    %v1131 = vpack.c.bf16 %v1129, %v1129
    %v1132 = vpack.c.bf16 %v1130, %v1130
    %v1133 = vld [vmem:[%s2] sm:$0xff]
    %v1134 = vld [vmem:[%s2 + $0x8] sm:$0xff]
    %v1135 = vld [vmem:[%s2 + $0x10] sm:$0xff]
    %v1136 = vld [vmem:[%s2 + $0x18] sm:$0xff]
    %v1137 = vld [vmem:[%s2 + $0x20] sm:$0xff]
    %v1138 = vld [vmem:[%s2 + $0x28] sm:$0xff]
    %v1139 = vld [vmem:[%s2 + $0x30] sm:$0xff]
    %v1140 = vld [vmem:[%s2 + $0x38] sm:$0xff]
    %v1141 = vld [vmem:[%s2 + $0x40] sm:$0xff]
    %v1142 = vld [vmem:[%s2 + $0x48] sm:$0xff]
    %v1143 = vld [vmem:[%s2 + $0x50] sm:$0xff]
    %v1144 = vld [vmem:[%s2 + $0x58] sm:$0xff]
    %v1145 = vld [vmem:[%s2 + $0x60] sm:$0xff]
    %v1146 = vld [vmem:[%s2 + $0x68] sm:$0xff]
    %v1147 = vld [vmem:[%s2 + $0x70] sm:$0xff]
    %v1148 = vld [vmem:[%s2 + $0x78] sm:$0xff]
    %v1149 = vld [vmem:[%s2 + $0x80] sm:$0xff]
    %v1150 = vld [vmem:[%s2 + $0x88] sm:$0xff]
    %v1151 = vld [vmem:[%s2 + $0x90] sm:$0xff]
    %v1152 = vld [vmem:[%s2 + $0x98] sm:$0xff]
    %v1153 = vld [vmem:[%s2 + $0xa0] sm:$0xff]
    %v1154 = vld [vmem:[%s2 + $0xa8] sm:$0xff]
    %v1155 = vld [vmem:[%s2 + $0xb0] sm:$0xff]
    %v1156 = vld [vmem:[%s2 + $0xb8] sm:$0xff]
    %v1157 = vld [vmem:[%s2 + $0xc0] sm:$0xff]
    %v1158 = vld [vmem:[%s2 + $0xc8] sm:$0xff]
    %v1159 = vld [vmem:[%s2 + $0xd0] sm:$0xff]
    %v1160 = vld [vmem:[%s2 + $0xd8] sm:$0xff]
    %v1161 = vld [vmem:[%s2 + $0xe0] sm:$0xff]
    %v1162 = vld [vmem:[%s2 + $0xe8] sm:$0xff]
    %v1163 = vld [vmem:[%s2 + $0xf0] sm:$0xff]
    %v1164 = vld [vmem:[%s2 + $0xf8] sm:$0xff]
    %v1197 = vunpack.c.l.b16 %v1133
    %v1198 = vunpack.c.h.b16 %v1133
    %v1199 = vunpack.c.l.b16 %v1134
    %v1200 = vunpack.c.h.b16 %v1134
    %v1201 = vunpack.c.l.b16 %v1135
    %v1202 = vunpack.c.h.b16 %v1135
    %v1203 = vunpack.c.l.b16 %v1136
    %v1204 = vunpack.c.h.b16 %v1136
    %v1205 = vunpack.c.l.b16 %v1137
    %v1206 = vunpack.c.h.b16 %v1137
    %v1207 = vunpack.c.l.b16 %v1138
    %v1208 = vunpack.c.h.b16 %v1138
    %v1209 = vunpack.c.l.b16 %v1139
    %v1210 = vunpack.c.h.b16 %v1139
    %v1211 = vunpack.c.l.b16 %v1140
    %v1212 = vunpack.c.h.b16 %v1140
    %v1213 = vunpack.c.l.b16 %v1141
    %v1214 = vunpack.c.h.b16 %v1141
    %v1215 = vunpack.c.l.b16 %v1142
    %v1216 = vunpack.c.h.b16 %v1142
    %v1217 = vunpack.c.l.b16 %v1143
    %v1218 = vunpack.c.h.b16 %v1143
    %v1219 = vunpack.c.l.b16 %v1144
    %v1220 = vunpack.c.h.b16 %v1144
    %v1221 = vunpack.c.l.b16 %v1145
    %v1222 = vunpack.c.h.b16 %v1145
    %v1223 = vunpack.c.l.b16 %v1146
    %v1224 = vunpack.c.h.b16 %v1146
    %v1225 = vunpack.c.l.b16 %v1147
    %v1226 = vunpack.c.h.b16 %v1147
    %v1227 = vunpack.c.l.b16 %v1148
    %v1228 = vunpack.c.h.b16 %v1148
    %v1229 = vunpack.c.l.b16 %v1149
    %v1230 = vunpack.c.h.b16 %v1149
    %v1231 = vunpack.c.l.b16 %v1150
    %v1232 = vunpack.c.h.b16 %v1150
    %v1233 = vunpack.c.l.b16 %v1151
    %v1234 = vunpack.c.h.b16 %v1151
    %v1235 = vunpack.c.l.b16 %v1152
    %v1236 = vunpack.c.h.b16 %v1152
    %v1237 = vunpack.c.l.b16 %v1153
    %v1238 = vunpack.c.h.b16 %v1153
    %v1239 = vunpack.c.l.b16 %v1154
    %v1240 = vunpack.c.h.b16 %v1154
    %v1241 = vunpack.c.l.b16 %v1155
    %v1242 = vunpack.c.h.b16 %v1155
    %v1243 = vunpack.c.l.b16 %v1156
    %v1244 = vunpack.c.h.b16 %v1156
    %v1245 = vunpack.c.l.b16 %v1157
    %v1246 = vunpack.c.h.b16 %v1157
    %v1247 = vunpack.c.l.b16 %v1158
    %v1248 = vunpack.c.h.b16 %v1158
    %v1249 = vunpack.c.l.b16 %v1159
    %v1250 = vunpack.c.h.b16 %v1159
    %v1251 = vunpack.c.l.b16 %v1160
    %v1252 = vunpack.c.h.b16 %v1160
    %v1253 = vunpack.c.l.b16 %v1161
    %v1254 = vunpack.c.h.b16 %v1161
    %v1255 = vunpack.c.l.b16 %v1162
    %v1256 = vunpack.c.h.b16 %v1162
    %v1257 = vunpack.c.l.b16 %v1163
    %v1258 = vunpack.c.h.b16 %v1163
    %v1259 = vunpack.c.l.b16 %v1164
    %v1260 = vunpack.c.h.b16 %v1164
    %v1261 = vpack.c.b16 %v1199, %v1197
    %v1262 = vpack.c.b16 %v1200, %v1198
    %v1263 = vpack.c.b16 %v1203, %v1201
    %v1264 = vpack.c.b16 %v1204, %v1202
    %v1265 = vpack.c.b16 %v1207, %v1205
    %v1266 = vpack.c.b16 %v1208, %v1206
    %v1267 = vpack.c.b16 %v1211, %v1209
    %v1268 = vpack.c.b16 %v1212, %v1210
    %v1269 = vpack.c.b16 %v1215, %v1213
    %v1270 = vpack.c.b16 %v1216, %v1214
    %v1271 = vpack.c.b16 %v1219, %v1217
    %v1272 = vpack.c.b16 %v1220, %v1218
    %v1273 = vpack.c.b16 %v1223, %v1221
    %v1274 = vpack.c.b16 %v1224, %v1222
    %v1275 = vpack.c.b16 %v1227, %v1225
    %v1276 = vpack.c.b16 %v1228, %v1226
    %v1277 = vpack.c.b16 %v1231, %v1229
    %v1278 = vpack.c.b16 %v1232, %v1230
    %v1279 = vpack.c.b16 %v1235, %v1233
    %v1280 = vpack.c.b16 %v1236, %v1234
    %v1281 = vpack.c.b16 %v1239, %v1237
    %v1282 = vpack.c.b16 %v1240, %v1238
    %v1283 = vpack.c.b16 %v1243, %v1241
    %v1284 = vpack.c.b16 %v1244, %v1242
    %v1285 = vpack.c.b16 %v1247, %v1245
    %v1286 = vpack.c.b16 %v1248, %v1246
    %v1287 = vpack.c.b16 %v1251, %v1249
    %v1288 = vpack.c.b16 %v1252, %v1250
    %v1289 = vpack.c.b16 %v1255, %v1253
    %v1290 = vpack.c.b16 %v1256, %v1254
    %v1291 = vpack.c.b16 %v1259, %v1257
    %v1292 = vpack.c.b16 %v1260, %v1258
    %1325 = vmatprep.subr.bf16.mxu0 %v1262
    %1326 = vmatpush1.bf16.msra.mxu0 %v1261
    %1327 = vmatprep.subr.bf16.mxu0 %v1264
    %1328 = vmatpush1.bf16.msra.mxu0 %v1263
    %1329 = vmatprep.subr.bf16.mxu0 %v1266
    %1330 = vmatpush1.bf16.msra.mxu0 %v1265
    %1331 = vmatprep.subr.bf16.mxu0 %v1268
    %1332 = vmatpush1.bf16.msra.mxu0 %v1267
    %1333 = vmatprep.subr.bf16.mxu0 %v1270
    %1334 = vmatpush1.bf16.msra.mxu0 %v1269
    %1335 = vmatprep.subr.bf16.mxu0 %v1272
    %1336 = vmatpush1.bf16.msra.mxu0 %v1271
    %1337 = vmatprep.subr.bf16.mxu0 %v1274
    %1338 = vmatpush1.bf16.msra.mxu0 %v1273
    %1339 = vmatprep.subr.bf16.mxu0 %v1276
    %1340 = vmatpush1.bf16.msra.mxu0 %v1275
    %1341 = vmatprep.subr.bf16.mxu0 %v1278
    %1342 = vmatpush1.bf16.msra.mxu0 %v1277
    %1343 = vmatprep.subr.bf16.mxu0 %v1280
    %1344 = vmatpush1.bf16.msra.mxu0 %v1279
    %1345 = vmatprep.subr.bf16.mxu0 %v1282
    %1346 = vmatpush1.bf16.msra.mxu0 %v1281
    %1347 = vmatprep.subr.bf16.mxu0 %v1284
    %1348 = vmatpush1.bf16.msra.mxu0 %v1283
    %1349 = vmatprep.subr.bf16.mxu0 %v1286
    %1350 = vmatpush1.bf16.msra.mxu0 %v1285
    %1351 = vmatprep.subr.bf16.mxu0 %v1288
    %1352 = vmatpush1.bf16.msra.mxu0 %v1287
    %1353 = vmatprep.subr.bf16.mxu0 %v1290
    %1354 = vmatpush1.bf16.msra.mxu0 %v1289
    %1355 = vmatprep.subr.bf16.mxu0 %v1292
    %1356 = vmatpush1.bf16.msra.mxu0 %v1291
    %1357 = vmatprep.mubr.bf16.mxu0 %v1132
    %1358 = vmatmul.mubr.bf16.gmra.mrb[0].mxu0 %v1131
    %v1359 = vpop.f32.mrb[0].mxu0
    %v1360 = vadd.f32 0.0, %v1359
    %v1361 = vpop.f32.mrb[0].mxu0
    %v1362 = vadd.f32 0.0, %v1361
    %v1363 = vpop.f32.mrb[0].mxu0
    %v1364 = vpop.f32.mrb[0].mxu0
    %1365 = vdwg.mxu0
    %v1366 = vld [vmem:[%s7] sm:$0xf]
    %v1367 = vld [vmem:[%s7 + $0x4] sm:$0xf]
    %v1368 = vpack.c.bf16 %v1360, %v1360
    %v1369 = vpack.c.bf16 %v1362, %v1362
    %s1370 = scalar_lea.vmem %s2, 256
    %v1371 = vld [vmem:[%s1370] sm:$0xff]
    %v1372 = vld [vmem:[%s1370 + $0x8] sm:$0xff]
    %v1373 = vld [vmem:[%s1370 + $0x10] sm:$0xff]
    %v1374 = vld [vmem:[%s1370 + $0x18] sm:$0xff]
    %v1375 = vld [vmem:[%s1370 + $0x20] sm:$0xff]
    %v1376 = vld [vmem:[%s1370 + $0x28] sm:$0xff]
    %v1377 = vld [vmem:[%s1370 + $0x30] sm:$0xff]
    %v1378 = vld [vmem:[%s1370 + $0x38] sm:$0xff]
    %v1379 = vld [vmem:[%s1370 + $0x40] sm:$0xff]
    %v1380 = vld [vmem:[%s1370 + $0x48] sm:$0xff]
    %v1381 = vld [vmem:[%s1370 + $0x50] sm:$0xff]
    %v1382 = vld [vmem:[%s1370 + $0x58] sm:$0xff]
    %v1383 = vld [vmem:[%s1370 + $0x60] sm:$0xff]
    %v1384 = vld [vmem:[%s1370 + $0x68] sm:$0xff]
    %v1385 = vld [vmem:[%s1370 + $0x70] sm:$0xff]
    %v1386 = vld [vmem:[%s1370 + $0x78] sm:$0xff]
    %v1387 = vld [vmem:[%s1370 + $0x80] sm:$0xff]
    %v1388 = vld [vmem:[%s1370 + $0x88] sm:$0xff]
    %v1389 = vld [vmem:[%s1370 + $0x90] sm:$0xff]
    %v1390 = vld [vmem:[%s1370 + $0x98] sm:$0xff]
    %v1391 = vld [vmem:[%s1370 + $0xa0] sm:$0xff]
    %v1392 = vld [vmem:[%s1370 + $0xa8] sm:$0xff]
    %v1393 = vld [vmem:[%s1370 + $0xb0] sm:$0xff]
    %v1394 = vld [vmem:[%s1370 + $0xb8] sm:$0xff]
    %v1395 = vld [vmem:[%s1370 + $0xc0] sm:$0xff]
    %v1396 = vld [vmem:[%s1370 + $0xc8] sm:$0xff]
    %v1397 = vld [vmem:[%s1370 + $0xd0] sm:$0xff]
    %v1398 = vld [vmem:[%s1370 + $0xd8] sm:$0xff]
    %v1399 = vld [vmem:[%s1370 + $0xe0] sm:$0xff]
    %v1400 = vld [vmem:[%s1370 + $0xe8] sm:$0xff]
    %v1401 = vld [vmem:[%s1370 + $0xf0] sm:$0xff]
    %v1402 = vld [vmem:[%s1370 + $0xf8] sm:$0xff]
    %v1435 = vunpack.c.l.b16 %v1371
    %v1436 = vunpack.c.h.b16 %v1371
    %v1437 = vunpack.c.l.b16 %v1372
    %v1438 = vunpack.c.h.b16 %v1372
    %v1439 = vunpack.c.l.b16 %v1373
    %v1440 = vunpack.c.h.b16 %v1373
    %v1441 = vunpack.c.l.b16 %v1374
    %v1442 = vunpack.c.h.b16 %v1374
    %v1443 = vunpack.c.l.b16 %v1375
    %v1444 = vunpack.c.h.b16 %v1375
    %v1445 = vunpack.c.l.b16 %v1376
    %v1446 = vunpack.c.h.b16 %v1376
    %v1447 = vunpack.c.l.b16 %v1377
    %v1448 = vunpack.c.h.b16 %v1377
    %v1449 = vunpack.c.l.b16 %v1378
    %v1450 = vunpack.c.h.b16 %v1378
    %v1451 = vunpack.c.l.b16 %v1379
    %v1452 = vunpack.c.h.b16 %v1379
    %v1453 = vunpack.c.l.b16 %v1380
    %v1454 = vunpack.c.h.b16 %v1380
    %v1455 = vunpack.c.l.b16 %v1381
    %v1456 = vunpack.c.h.b16 %v1381
    %v1457 = vunpack.c.l.b16 %v1382
    %v1458 = vunpack.c.h.b16 %v1382
    %v1459 = vunpack.c.l.b16 %v1383
    %v1460 = vunpack.c.h.b16 %v1383
    %v1461 = vunpack.c.l.b16 %v1384
    %v1462 = vunpack.c.h.b16 %v1384
    %v1463 = vunpack.c.l.b16 %v1385
    %v1464 = vunpack.c.h.b16 %v1385
    %v1465 = vunpack.c.l.b16 %v1386
    %v1466 = vunpack.c.h.b16 %v1386
    %v1467 = vunpack.c.l.b16 %v1387
    %v1468 = vunpack.c.h.b16 %v1387
    %v1469 = vunpack.c.l.b16 %v1388
    %v1470 = vunpack.c.h.b16 %v1388
    %v1471 = vunpack.c.l.b16 %v1389
    %v1472 = vunpack.c.h.b16 %v1389
    %v1473 = vunpack.c.l.b16 %v1390
    %v1474 = vunpack.c.h.b16 %v1390
    %v1475 = vunpack.c.l.b16 %v1391
    %v1476 = vunpack.c.h.b16 %v1391
    %v1477 = vunpack.c.l.b16 %v1392
    %v1478 = vunpack.c.h.b16 %v1392
    %v1479 = vunpack.c.l.b16 %v1393
    %v1480 = vunpack.c.h.b16 %v1393
    %v1481 = vunpack.c.l.b16 %v1394
    %v1482 = vunpack.c.h.b16 %v1394
    %v1483 = vunpack.c.l.b16 %v1395
    %v1484 = vunpack.c.h.b16 %v1395
    %v1485 = vunpack.c.l.b16 %v1396
    %v1486 = vunpack.c.h.b16 %v1396
    %v1487 = vunpack.c.l.b16 %v1397
    %v1488 = vunpack.c.h.b16 %v1397
    %v1489 = vunpack.c.l.b16 %v1398
    %v1490 = vunpack.c.h.b16 %v1398
    %v1491 = vunpack.c.l.b16 %v1399
    %v1492 = vunpack.c.h.b16 %v1399
    %v1493 = vunpack.c.l.b16 %v1400
    %v1494 = vunpack.c.h.b16 %v1400
    %v1495 = vunpack.c.l.b16 %v1401
    %v1496 = vunpack.c.h.b16 %v1401
    %v1497 = vunpack.c.l.b16 %v1402
    %v1498 = vunpack.c.h.b16 %v1402
    %v1499 = vpack.c.b16 %v1437, %v1435
    %v1500 = vpack.c.b16 %v1438, %v1436
    %v1501 = vpack.c.b16 %v1441, %v1439
    %v1502 = vpack.c.b16 %v1442, %v1440
    %v1503 = vpack.c.b16 %v1445, %v1443
    %v1504 = vpack.c.b16 %v1446, %v1444
    %v1505 = vpack.c.b16 %v1449, %v1447
    %v1506 = vpack.c.b16 %v1450, %v1448
    %v1507 = vpack.c.b16 %v1453, %v1451
    %v1508 = vpack.c.b16 %v1454, %v1452
    %v1509 = vpack.c.b16 %v1457, %v1455
    %v1510 = vpack.c.b16 %v1458, %v1456
    %v1511 = vpack.c.b16 %v1461, %v1459
    %v1512 = vpack.c.b16 %v1462, %v1460
    %v1513 = vpack.c.b16 %v1465, %v1463
    %v1514 = vpack.c.b16 %v1466, %v1464
    %v1515 = vpack.c.b16 %v1469, %v1467
    %v1516 = vpack.c.b16 %v1470, %v1468
    %v1517 = vpack.c.b16 %v1473, %v1471
    %v1518 = vpack.c.b16 %v1474, %v1472
    %v1519 = vpack.c.b16 %v1477, %v1475
    %v1520 = vpack.c.b16 %v1478, %v1476
    %v1521 = vpack.c.b16 %v1481, %v1479
    %v1522 = vpack.c.b16 %v1482, %v1480
    %v1523 = vpack.c.b16 %v1485, %v1483
    %v1524 = vpack.c.b16 %v1486, %v1484
    %v1525 = vpack.c.b16 %v1489, %v1487
    %v1526 = vpack.c.b16 %v1490, %v1488
    %v1527 = vpack.c.b16 %v1493, %v1491
    %v1528 = vpack.c.b16 %v1494, %v1492
    %v1529 = vpack.c.b16 %v1497, %v1495
    %v1530 = vpack.c.b16 %v1498, %v1496
    %1563 = vmatprep.subr.bf16.mxu0 %v1500
    %1564 = vmatpush1.bf16.msra.mxu0 %v1499
    %1565 = vmatprep.subr.bf16.mxu0 %v1502
    %1566 = vmatpush1.bf16.msra.mxu0 %v1501
    %1567 = vmatprep.subr.bf16.mxu0 %v1504
    %1568 = vmatpush1.bf16.msra.mxu0 %v1503
    %1569 = vmatprep.subr.bf16.mxu0 %v1506
    %1570 = vmatpush1.bf16.msra.mxu0 %v1505
    %1571 = vmatprep.subr.bf16.mxu0 %v1508
    %1572 = vmatpush1.bf16.msra.mxu0 %v1507
    %1573 = vmatprep.subr.bf16.mxu0 %v1510
    %1574 = vmatpush1.bf16.msra.mxu0 %v1509
    %1575 = vmatprep.subr.bf16.mxu0 %v1512
    %1576 = vmatpush1.bf16.msra.mxu0 %v1511
    %1577 = vmatprep.subr.bf16.mxu0 %v1514
    %1578 = vmatpush1.bf16.msra.mxu0 %v1513
    %1579 = vmatprep.subr.bf16.mxu0 %v1516
    %1580 = vmatpush1.bf16.msra.mxu0 %v1515
    %1581 = vmatprep.subr.bf16.mxu0 %v1518
    %1582 = vmatpush1.bf16.msra.mxu0 %v1517
    %1583 = vmatprep.subr.bf16.mxu0 %v1520
    %1584 = vmatpush1.bf16.msra.mxu0 %v1519
    %1585 = vmatprep.subr.bf16.mxu0 %v1522
    %1586 = vmatpush1.bf16.msra.mxu0 %v1521
    %1587 = vmatprep.subr.bf16.mxu0 %v1524
    %1588 = vmatpush1.bf16.msra.mxu0 %v1523
    %1589 = vmatprep.subr.bf16.mxu0 %v1526
    %1590 = vmatpush1.bf16.msra.mxu0 %v1525
    %1591 = vmatprep.subr.bf16.mxu0 %v1528
    %1592 = vmatpush1.bf16.msra.mxu0 %v1527
    %1593 = vmatprep.subr.bf16.mxu0 %v1530
    %1594 = vmatpush1.bf16.msra.mxu0 %v1529
    %1595 = vmatprep.mubr.bf16.mxu0 %v1132
    %1596 = vmatmul.mubr.bf16.gmra.mrb[0].mxu0 %v1131
    %v1597 = vpop.f32.mrb[0].mxu0
    %v1598 = vadd.f32 0.0, %v1597
    %v1599 = vpop.f32.mrb[0].mxu0
    %v1600 = vadd.f32 0.0, %v1599
    %v1601 = vpop.f32.mrb[0].mxu0
    %v1602 = vpop.f32.mrb[0].mxu0
    %1603 = vdwg.mxu0
    %s1604 = scalar_lea.vmem %s7, 8
    %v1605 = vld [vmem:[%s1604] sm:$0xf]
    %v1606 = vld [vmem:[%s1604 + $0x4] sm:$0xf]
    %v1607 = vpack.c.bf16 %v1598, %v1598
    %v1608 = vpack.c.bf16 %v1600, %v1600
    %v1611 = vunpack.c.l.b16 %v1605
    %v1612 = vunpack.c.l.b16 %v1606
    %v1613 = vpack.c.b16 %v1612, %v1611
    %vm1614 = vcmask 64512
    %v1616 = vsel %vm1614, %v1613, 0
    %vm1618 = vcmask 1043456
    %v1620 = vsel %vm1618, %v1607, 0
    %v1623 = vsel %vm1618, %v1608, 0
    %1625 = vmatprep.subr.bf16.mxu0 %v1623
    %1626 = vmatpush1.bf16.msra.mxu0 %v1620
    %1627 = vmatprep.subr.bf16.mxu0 0
    %1628 = vmatpush1.bf16.msra.mxu0 0
    %1629 = vmatprep.subr.bf16.mxu0 0
    %1630 = vmatpush1.bf16.msra.mxu0 0
    %1631 = vmatprep.subr.bf16.mxu0 0
    %1632 = vmatpush1.bf16.msra.mxu0 0
    %1633 = vmatprep.subr.bf16.mxu0 0
    %1634 = vmatpush1.bf16.msra.mxu0 0
    %1635 = vmatprep.subr.bf16.mxu0 0
    %1636 = vmatpush1.bf16.msra.mxu0 0
    %1637 = vmatprep.subr.bf16.mxu0 0
    %1638 = vmatpush1.bf16.msra.mxu0 0
    %1639 = vmatprep.subr.bf16.mxu0 0
    %1640 = vmatpush1.bf16.msra.mxu0 0
    %1641 = vmatprep.subr.bf16.mxu0 0
    %1642 = vmatpush1.bf16.msra.mxu0 0
    %1643 = vmatprep.subr.bf16.mxu0 0
    %1644 = vmatpush1.bf16.msra.mxu0 0
    %1645 = vmatprep.subr.bf16.mxu0 0
    %1646 = vmatpush1.bf16.msra.mxu0 0
    %1647 = vmatprep.subr.bf16.mxu0 0
    %1648 = vmatpush1.bf16.msra.mxu0 0
    %1649 = vmatprep.subr.bf16.mxu0 0
    %1650 = vmatpush1.bf16.msra.mxu0 0
    %1651 = vmatprep.subr.bf16.mxu0 0
    %1652 = vmatpush1.bf16.msra.mxu0 0
    %1653 = vmatprep.subr.bf16.mxu0 0
    %1654 = vmatpush1.bf16.msra.mxu0 0
    %1655 = vmatprep.subr.bf16.mxu0 0
    %1656 = vmatpush1.bf16.msra.mxu0 0
    %1657 = vmatprep.mubr.bf16.mxu0 0
    %1658 = vmatmul.mubr.bf16.gmra.mrb[0].mxu0 %v1616
    %v1659 = vpop.f32.mrb[0].mxu0
    %v1660 = vadd.f32 0.0, %v1659
    %v1661 = vpop.f32.mrb[0].mxu0
    %v1662 = vadd.f32 0.0, %v1661
    %v1663 = vpop.f32.mrb[0].mxu0
    %v1664 = vadd.f32 0.0, %v1663
    %v1665 = vpop.f32.mrb[0].mxu0
    %v1666 = vadd.f32 0.0, %v1665
    %1667 = vdwg.mxu0
    %v1670 = vunpack.c.l.b16 %v1366
    %v1671 = vunpack.c.l.b16 %v1367
    %v1672 = vpack.c.b16 %v1671, %v1670
    %v1674 = vsel %vm1614, %v1672, 0
    %v1677 = vsel %vm1618, %v1368, 0
    %v1680 = vsel %vm1618, %v1369, 0
    %1682 = vmatprep.subr.bf16.mxu0 %v1680
    %1683 = vmatpush1.bf16.msra.mxu0 %v1677
    %1684 = vmatprep.subr.bf16.mxu0 0
    %1685 = vmatpush1.bf16.msra.mxu0 0
    %1686 = vmatprep.subr.bf16.mxu0 0
    %1687 = vmatpush1.bf16.msra.mxu0 0
    %1688 = vmatprep.subr.bf16.mxu0 0
    %1689 = vmatpush1.bf16.msra.mxu0 0
    %1690 = vmatprep.subr.bf16.mxu0 0
    %1691 = vmatpush1.bf16.msra.mxu0 0
    %1692 = vmatprep.subr.bf16.mxu0 0
    %1693 = vmatpush1.bf16.msra.mxu0 0
    %1694 = vmatprep.subr.bf16.mxu0 0
    %1695 = vmatpush1.bf16.msra.mxu0 0
    %1696 = vmatprep.subr.bf16.mxu0 0
    %1697 = vmatpush1.bf16.msra.mxu0 0
    %1698 = vmatprep.subr.bf16.mxu0 0
    %1699 = vmatpush1.bf16.msra.mxu0 0
    %1700 = vmatprep.subr.bf16.mxu0 0
    %1701 = vmatpush1.bf16.msra.mxu0 0
    %1702 = vmatprep.subr.bf16.mxu0 0
    %1703 = vmatpush1.bf16.msra.mxu0 0
    %1704 = vmatprep.subr.bf16.mxu0 0
    %1705 = vmatpush1.bf16.msra.mxu0 0
    %1706 = vmatprep.subr.bf16.mxu0 0
    %1707 = vmatpush1.bf16.msra.mxu0 0
    %1708 = vmatprep.subr.bf16.mxu0 0
    %1709 = vmatpush1.bf16.msra.mxu0 0
    %1710 = vmatprep.subr.bf16.mxu0 0
    %1711 = vmatpush1.bf16.msra.mxu0 0
    %1712 = vmatprep.subr.bf16.mxu0 0
    %1713 = vmatpush1.bf16.msra.mxu0 0
    %1714 = vmatprep.mubr.bf16.mxu0 0
    %1715 = vmatmul.mubr.bf16.gmra.mrb[0].mxu0 %v1674
    %v1716 = vpop.f32.mrb[0].mxu0
    %v1717 = vadd.f32 %v1660, %v1716
    %v1718 = vpop.f32.mrb[0].mxu0
    %v1719 = vadd.f32 %v1662, %v1718
    %v1720 = vpop.f32.mrb[0].mxu0
    %v1721 = vadd.f32 %v1664, %v1720
    %v1722 = vpop.f32.mrb[0].mxu0
    %v1723 = vadd.f32 %v1666, %v1722
    %1724 = vdwg.mxu0
    %s1725 = scalar_lea.vmem %s2, 512
    %v1726 = vld [vmem:[%s1725] sm:$0xff]
    %v1727 = vld [vmem:[%s1725 + $0x8] sm:$0xff]
    %v1728 = vld [vmem:[%s1725 + $0x10] sm:$0xff]
    %v1729 = vld [vmem:[%s1725 + $0x18] sm:$0xff]
    %v1730 = vld [vmem:[%s1725 + $0x20] sm:$0xff]
    %v1731 = vld [vmem:[%s1725 + $0x28] sm:$0xff]
    %v1732 = vld [vmem:[%s1725 + $0x30] sm:$0xff]
    %v1733 = vld [vmem:[%s1725 + $0x38] sm:$0xff]
    %v1734 = vld [vmem:[%s1725 + $0x40] sm:$0xff]
    %v1735 = vld [vmem:[%s1725 + $0x48] sm:$0xff]
    %v1736 = vld [vmem:[%s1725 + $0x50] sm:$0xff]
    %v1737 = vld [vmem:[%s1725 + $0x58] sm:$0xff]
    %v1738 = vld [vmem:[%s1725 + $0x60] sm:$0xff]
    %v1739 = vld [vmem:[%s1725 + $0x68] sm:$0xff]
    %v1740 = vld [vmem:[%s1725 + $0x70] sm:$0xff]
    %v1741 = vld [vmem:[%s1725 + $0x78] sm:$0xff]
    %v1742 = vld [vmem:[%s1725 + $0x80] sm:$0xff]
    %v1743 = vld [vmem:[%s1725 + $0x88] sm:$0xff]
    %v1744 = vld [vmem:[%s1725 + $0x90] sm:$0xff]
    %v1745 = vld [vmem:[%s1725 + $0x98] sm:$0xff]
    %v1746 = vld [vmem:[%s1725 + $0xa0] sm:$0xff]
    %v1747 = vld [vmem:[%s1725 + $0xa8] sm:$0xff]
    %v1748 = vld [vmem:[%s1725 + $0xb0] sm:$0xff]
    %v1749 = vld [vmem:[%s1725 + $0xb8] sm:$0xff]
    %v1750 = vld [vmem:[%s1725 + $0xc0] sm:$0xff]
    %v1751 = vld [vmem:[%s1725 + $0xc8] sm:$0xff]
    %v1752 = vld [vmem:[%s1725 + $0xd0] sm:$0xff]
    %v1753 = vld [vmem:[%s1725 + $0xd8] sm:$0xff]
    %v1754 = vld [vmem:[%s1725 + $0xe0] sm:$0xff]
    %v1755 = vld [vmem:[%s1725 + $0xe8] sm:$0xff]
    %v1756 = vld [vmem:[%s1725 + $0xf0] sm:$0xff]
    %v1757 = vld [vmem:[%s1725 + $0xf8] sm:$0xff]
    %v1790 = vunpack.c.l.b16 %v1726
    %v1791 = vunpack.c.h.b16 %v1726
    %v1792 = vunpack.c.l.b16 %v1727
    %v1793 = vunpack.c.h.b16 %v1727
    %v1794 = vunpack.c.l.b16 %v1728
    %v1795 = vunpack.c.h.b16 %v1728
    %v1796 = vunpack.c.l.b16 %v1729
    %v1797 = vunpack.c.h.b16 %v1729
    %v1798 = vunpack.c.l.b16 %v1730
    %v1799 = vunpack.c.h.b16 %v1730
    %v1800 = vunpack.c.l.b16 %v1731
    %v1801 = vunpack.c.h.b16 %v1731
    %v1802 = vunpack.c.l.b16 %v1732
    %v1803 = vunpack.c.h.b16 %v1732
    %v1804 = vunpack.c.l.b16 %v1733
    %v1805 = vunpack.c.h.b16 %v1733
    %v1806 = vunpack.c.l.b16 %v1734
    %v1807 = vunpack.c.h.b16 %v1734
    %v1808 = vunpack.c.l.b16 %v1735
    %v1809 = vunpack.c.h.b16 %v1735
    %v1810 = vunpack.c.l.b16 %v1736
    %v1811 = vunpack.c.h.b16 %v1736
    %v1812 = vunpack.c.l.b16 %v1737
    %v1813 = vunpack.c.h.b16 %v1737
    %v1814 = vunpack.c.l.b16 %v1738
    %v1815 = vunpack.c.h.b16 %v1738
    %v1816 = vunpack.c.l.b16 %v1739
    %v1817 = vunpack.c.h.b16 %v1739
    %v1818 = vunpack.c.l.b16 %v1740
    %v1819 = vunpack.c.h.b16 %v1740
    %v1820 = vunpack.c.l.b16 %v1741
    %v1821 = vunpack.c.h.b16 %v1741
    %v1822 = vunpack.c.l.b16 %v1742
    %v1823 = vunpack.c.h.b16 %v1742
    %v1824 = vunpack.c.l.b16 %v1743
    %v1825 = vunpack.c.h.b16 %v1743
    %v1826 = vunpack.c.l.b16 %v1744
    %v1827 = vunpack.c.h.b16 %v1744
    %v1828 = vunpack.c.l.b16 %v1745
    %v1829 = vunpack.c.h.b16 %v1745
    %v1830 = vunpack.c.l.b16 %v1746
    %v1831 = vunpack.c.h.b16 %v1746
    %v1832 = vunpack.c.l.b16 %v1747
    %v1833 = vunpack.c.h.b16 %v1747
    %v1834 = vunpack.c.l.b16 %v1748
    %v1835 = vunpack.c.h.b16 %v1748
    %v1836 = vunpack.c.l.b16 %v1749
    %v1837 = vunpack.c.h.b16 %v1749
    %v1838 = vunpack.c.l.b16 %v1750
    %v1839 = vunpack.c.h.b16 %v1750
    %v1840 = vunpack.c.l.b16 %v1751
    %v1841 = vunpack.c.h.b16 %v1751
    %v1842 = vunpack.c.l.b16 %v1752
    %v1843 = vunpack.c.h.b16 %v1752
    %v1844 = vunpack.c.l.b16 %v1753
    %v1845 = vunpack.c.h.b16 %v1753
    %v1846 = vunpack.c.l.b16 %v1754
    %v1847 = vunpack.c.h.b16 %v1754
    %v1848 = vunpack.c.l.b16 %v1755
    %v1849 = vunpack.c.h.b16 %v1755
    %v1850 = vunpack.c.l.b16 %v1756
    %v1851 = vunpack.c.h.b16 %v1756
    %v1852 = vunpack.c.l.b16 %v1757
    %v1853 = vunpack.c.h.b16 %v1757
    %v1854 = vpack.c.b16 %v1792, %v1790
    %v1855 = vpack.c.b16 %v1793, %v1791
    %v1856 = vpack.c.b16 %v1796, %v1794
    %v1857 = vpack.c.b16 %v1797, %v1795
    %v1858 = vpack.c.b16 %v1800, %v1798
    %v1859 = vpack.c.b16 %v1801, %v1799
    %v1860 = vpack.c.b16 %v1804, %v1802
    %v1861 = vpack.c.b16 %v1805, %v1803
    %v1862 = vpack.c.b16 %v1808, %v1806
    %v1863 = vpack.c.b16 %v1809, %v1807
    %v1864 = vpack.c.b16 %v1812, %v1810
    %v1865 = vpack.c.b16 %v1813, %v1811
    %v1866 = vpack.c.b16 %v1816, %v1814
    %v1867 = vpack.c.b16 %v1817, %v1815
    %v1868 = vpack.c.b16 %v1820, %v1818
    %v1869 = vpack.c.b16 %v1821, %v1819
    %v1870 = vpack.c.b16 %v1824, %v1822
    %v1871 = vpack.c.b16 %v1825, %v1823
    %v1872 = vpack.c.b16 %v1828, %v1826
    %v1873 = vpack.c.b16 %v1829, %v1827
    %v1874 = vpack.c.b16 %v1832, %v1830
    %v1875 = vpack.c.b16 %v1833, %v1831
    %v1876 = vpack.c.b16 %v1836, %v1834
    %v1877 = vpack.c.b16 %v1837, %v1835
    %v1878 = vpack.c.b16 %v1840, %v1838
    %v1879 = vpack.c.b16 %v1841, %v1839
    %v1880 = vpack.c.b16 %v1844, %v1842
    %v1881 = vpack.c.b16 %v1845, %v1843
    %v1882 = vpack.c.b16 %v1848, %v1846
    %v1883 = vpack.c.b16 %v1849, %v1847
    %v1884 = vpack.c.b16 %v1852, %v1850
    %v1885 = vpack.c.b16 %v1853, %v1851
    %1918 = vmatprep.subr.bf16.mxu0 %v1855
    %1919 = vmatpush1.bf16.msra.mxu0 %v1854
    %1920 = vmatprep.subr.bf16.mxu0 %v1857
    %1921 = vmatpush1.bf16.msra.mxu0 %v1856
    %1922 = vmatprep.subr.bf16.mxu0 %v1859
    %1923 = vmatpush1.bf16.msra.mxu0 %v1858
    %1924 = vmatprep.subr.bf16.mxu0 %v1861
    %1925 = vmatpush1.bf16.msra.mxu0 %v1860
    %1926 = vmatprep.subr.bf16.mxu0 %v1863
    %1927 = vmatpush1.bf16.msra.mxu0 %v1862
    %1928 = vmatprep.subr.bf16.mxu0 %v1865
    %1929 = vmatpush1.bf16.msra.mxu0 %v1864
    %1930 = vmatprep.subr.bf16.mxu0 %v1867
    %1931 = vmatpush1.bf16.msra.mxu0 %v1866
    %1932 = vmatprep.subr.bf16.mxu0 %v1869
    %1933 = vmatpush1.bf16.msra.mxu0 %v1868
    %1934 = vmatprep.subr.bf16.mxu0 %v1871
    %1935 = vmatpush1.bf16.msra.mxu0 %v1870
    %1936 = vmatprep.subr.bf16.mxu0 %v1873
    %1937 = vmatpush1.bf16.msra.mxu0 %v1872
    %1938 = vmatprep.subr.bf16.mxu0 %v1875
    %1939 = vmatpush1.bf16.msra.mxu0 %v1874
    %1940 = vmatprep.subr.bf16.mxu0 %v1877
    %1941 = vmatpush1.bf16.msra.mxu0 %v1876
    %1942 = vmatprep.subr.bf16.mxu0 %v1879
    %1943 = vmatpush1.bf16.msra.mxu0 %v1878
    %1944 = vmatprep.subr.bf16.mxu0 %v1881
    %1945 = vmatpush1.bf16.msra.mxu0 %v1880
    %1946 = vmatprep.subr.bf16.mxu0 %v1883
    %1947 = vmatpush1.bf16.msra.mxu0 %v1882
    %1948 = vmatprep.subr.bf16.mxu0 %v1885
    %1949 = vmatpush1.bf16.msra.mxu0 %v1884
    %1950 = vmatprep.mubr.bf16.mxu0 %v1132
    %1951 = vmatmul.mubr.bf16.gmra.mrb[0].mxu0 %v1131
    %v1952 = vpop.f32.mrb[0].mxu0
    %v1953 = vadd.f32 0.0, %v1952
    %v1954 = vpop.f32.mrb[0].mxu0
    %v1955 = vadd.f32 0.0, %v1954
    %v1956 = vpop.f32.mrb[0].mxu0
    %v1957 = vpop.f32.mrb[0].mxu0
    %1958 = vdwg.mxu0
    %s1959 = scalar_lea.vmem %s7, 16
    %v1960 = vld [vmem:[%s1959] sm:$0xf]
    %v1961 = vld [vmem:[%s1959 + $0x4] sm:$0xf]
    %v1962 = vpack.c.bf16 %v1953, %v1953
    %v1963 = vpack.c.bf16 %v1955, %v1955
    %v1966 = vunpack.c.l.b16 %v1960
    %v1967 = vunpack.c.l.b16 %v1961
    %v1968 = vpack.c.b16 %v1967, %v1966
    %v1970 = vsel %vm1614, %v1968, 0
    %v1973 = vsel %vm1618, %v1962, 0
    %v1976 = vsel %vm1618, %v1963, 0
    %1978 = vmatprep.subr.bf16.mxu0 %v1976
    %1979 = vmatpush1.bf16.msra.mxu0 %v1973
    %1980 = vmatprep.subr.bf16.mxu0 0
    %1981 = vmatpush1.bf16.msra.mxu0 0
    %1982 = vmatprep.subr.bf16.mxu0 0
    %1983 = vmatpush1.bf16.msra.mxu0 0
    %1984 = vmatprep.subr.bf16.mxu0 0
    %1985 = vmatpush1.bf16.msra.mxu0 0
    %1986 = vmatprep.subr.bf16.mxu0 0
    %1987 = vmatpush1.bf16.msra.mxu0 0
    %1988 = vmatprep.subr.bf16.mxu0 0
    %1989 = vmatpush1.bf16.msra.mxu0 0
    %1990 = vmatprep.subr.bf16.mxu0 0
    %1991 = vmatpush1.bf16.msra.mxu0 0
    %1992 = vmatprep.subr.bf16.mxu0 0
    %1993 = vmatpush1.bf16.msra.mxu0 0
    %1994 = vmatprep.subr.bf16.mxu0 0
    %1995 = vmatpush1.bf16.msra.mxu0 0
    %1996 = vmatprep.subr.bf16.mxu0 0
    %1997 = vmatpush1.bf16.msra.mxu0 0
    %1998 = vmatprep.subr.bf16.mxu0 0
    %1999 = vmatpush1.bf16.msra.mxu0 0
    %2000 = vmatprep.subr.bf16.mxu0 0
    %2001 = vmatpush1.bf16.msra.mxu0 0
    %2002 = vmatprep.subr.bf16.mxu0 0
    %2003 = vmatpush1.bf16.msra.mxu0 0
    %2004 = vmatprep.subr.bf16.mxu0 0
    %2005 = vmatpush1.bf16.msra.mxu0 0
    %2006 = vmatprep.subr.bf16.mxu0 0
    %2007 = vmatpush1.bf16.msra.mxu0 0
    %2008 = vmatprep.subr.bf16.mxu0 0
    %2009 = vmatpush1.bf16.msra.mxu0 0
    %2010 = vmatprep.mubr.bf16.mxu0 0
    %2011 = vmatmul.mubr.bf16.gmra.mrb[0].mxu0 %v1970
    %v2012 = vpop.f32.mrb[0].mxu0
    %v2013 = vadd.f32 0.0, %v2012
    %v2014 = vpop.f32.mrb[0].mxu0
    %v2015 = vadd.f32 0.0, %v2014
    %v2016 = vpop.f32.mrb[0].mxu0
    %v2017 = vadd.f32 0.0, %v2016
    %v2018 = vpop.f32.mrb[0].mxu0
    %v2019 = vadd.f32 0.0, %v2018
    %2020 = vdwg.mxu0
    %v2021 = vadd.f32 %v1717, %v2013
    %v2022 = vadd.f32 %v1719, %v2015
    %v2023 = vadd.f32 %v1721, %v2017
    %v2024 = vadd.f32 %v1723, %v2019
    %s2025 = scalar_lea.vmem %s2, 768
    %v2026 = vld [vmem:[%s2025] sm:$0xff]
    %v2027 = vld [vmem:[%s2025 + $0x8] sm:$0xff]
    %v2028 = vld [vmem:[%s2025 + $0x10] sm:$0xff]
    %v2029 = vld [vmem:[%s2025 + $0x18] sm:$0xff]
    %v2030 = vld [vmem:[%s2025 + $0x20] sm:$0xff]
    %v2031 = vld [vmem:[%s2025 + $0x28] sm:$0xff]
    %v2032 = vld [vmem:[%s2025 + $0x30] sm:$0xff]
    %v2033 = vld [vmem:[%s2025 + $0x38] sm:$0xff]
    %v2034 = vld [vmem:[%s2025 + $0x40] sm:$0xff]
    %v2035 = vld [vmem:[%s2025 + $0x48] sm:$0xff]
    %v2036 = vld [vmem:[%s2025 + $0x50] sm:$0xff]
    %v2037 = vld [vmem:[%s2025 + $0x58] sm:$0xff]
    %v2038 = vld [vmem:[%s2025 + $0x60] sm:$0xff]
    %v2039 = vld [vmem:[%s2025 + $0x68] sm:$0xff]
    %v2040 = vld [vmem:[%s2025 + $0x70] sm:$0xff]
    %v2041 = vld [vmem:[%s2025 + $0x78] sm:$0xff]
    %v2042 = vld [vmem:[%s2025 + $0x80] sm:$0xff]
    %v2043 = vld [vmem:[%s2025 + $0x88] sm:$0xff]
    %v2044 = vld [vmem:[%s2025 + $0x90] sm:$0xff]
    %v2045 = vld [vmem:[%s2025 + $0x98] sm:$0xff]
    %v2046 = vld [vmem:[%s2025 + $0xa0] sm:$0xff]
    %v2047 = vld [vmem:[%s2025 + $0xa8] sm:$0xff]
    %v2048 = vld [vmem:[%s2025 + $0xb0] sm:$0xff]
    %v2049 = vld [vmem:[%s2025 + $0xb8] sm:$0xff]
    %v2050 = vld [vmem:[%s2025 + $0xc0] sm:$0xff]
    %v2051 = vld [vmem:[%s2025 + $0xc8] sm:$0xff]
    %v2052 = vld [vmem:[%s2025 + $0xd0] sm:$0xff]
    %v2053 = vld [vmem:[%s2025 + $0xd8] sm:$0xff]
    %v2054 = vld [vmem:[%s2025 + $0xe0] sm:$0xff]
    %v2055 = vld [vmem:[%s2025 + $0xe8] sm:$0xff]
    %v2056 = vld [vmem:[%s2025 + $0xf0] sm:$0xff]
    %v2057 = vld [vmem:[%s2025 + $0xf8] sm:$0xff]
    %v2090 = vunpack.c.l.b16 %v2026
    %v2091 = vunpack.c.h.b16 %v2026
    %v2092 = vunpack.c.l.b16 %v2027
    %v2093 = vunpack.c.h.b16 %v2027
    %v2094 = vunpack.c.l.b16 %v2028
    %v2095 = vunpack.c.h.b16 %v2028
    %v2096 = vunpack.c.l.b16 %v2029
    %v2097 = vunpack.c.h.b16 %v2029
    %v2098 = vunpack.c.l.b16 %v2030
    %v2099 = vunpack.c.h.b16 %v2030
    %v2100 = vunpack.c.l.b16 %v2031
    %v2101 = vunpack.c.h.b16 %v2031
    %v2102 = vunpack.c.l.b16 %v2032
    %v2103 = vunpack.c.h.b16 %v2032
    %v2104 = vunpack.c.l.b16 %v2033
    %v2105 = vunpack.c.h.b16 %v2033
    %v2106 = vunpack.c.l.b16 %v2034
    %v2107 = vunpack.c.h.b16 %v2034
    %v2108 = vunpack.c.l.b16 %v2035
    %v2109 = vunpack.c.h.b16 %v2035
    %v2110 = vunpack.c.l.b16 %v2036
    %v2111 = vunpack.c.h.b16 %v2036
    %v2112 = vunpack.c.l.b16 %v2037
    %v2113 = vunpack.c.h.b16 %v2037
    %v2114 = vunpack.c.l.b16 %v2038
    %v2115 = vunpack.c.h.b16 %v2038
    %v2116 = vunpack.c.l.b16 %v2039
    %v2117 = vunpack.c.h.b16 %v2039
    %v2118 = vunpack.c.l.b16 %v2040
    %v2119 = vunpack.c.h.b16 %v2040
    %v2120 = vunpack.c.l.b16 %v2041
    %v2121 = vunpack.c.h.b16 %v2041
    %v2122 = vunpack.c.l.b16 %v2042
    %v2123 = vunpack.c.h.b16 %v2042
    %v2124 = vunpack.c.l.b16 %v2043
    %v2125 = vunpack.c.h.b16 %v2043
    %v2126 = vunpack.c.l.b16 %v2044
    %v2127 = vunpack.c.h.b16 %v2044
    %v2128 = vunpack.c.l.b16 %v2045
    %v2129 = vunpack.c.h.b16 %v2045
    %v2130 = vunpack.c.l.b16 %v2046
    %v2131 = vunpack.c.h.b16 %v2046
    %v2132 = vunpack.c.l.b16 %v2047
    %v2133 = vunpack.c.h.b16 %v2047
    %v2134 = vunpack.c.l.b16 %v2048
    %v2135 = vunpack.c.h.b16 %v2048
    %v2136 = vunpack.c.l.b16 %v2049
    %v2137 = vunpack.c.h.b16 %v2049
    %v2138 = vunpack.c.l.b16 %v2050
    %v2139 = vunpack.c.h.b16 %v2050
    %v2140 = vunpack.c.l.b16 %v2051
    %v2141 = vunpack.c.h.b16 %v2051
    %v2142 = vunpack.c.l.b16 %v2052
    %v2143 = vunpack.c.h.b16 %v2052
    %v2144 = vunpack.c.l.b16 %v2053
    %v2145 = vunpack.c.h.b16 %v2053
    %v2146 = vunpack.c.l.b16 %v2054
    %v2147 = vunpack.c.h.b16 %v2054
    %v2148 = vunpack.c.l.b16 %v2055
    %v2149 = vunpack.c.h.b16 %v2055
    %v2150 = vunpack.c.l.b16 %v2056
    %v2151 = vunpack.c.h.b16 %v2056
    %v2152 = vunpack.c.l.b16 %v2057
    %v2153 = vunpack.c.h.b16 %v2057
    %v2154 = vpack.c.b16 %v2092, %v2090
    %v2155 = vpack.c.b16 %v2093, %v2091
    %v2156 = vpack.c.b16 %v2096, %v2094
    %v2157 = vpack.c.b16 %v2097, %v2095
    %v2158 = vpack.c.b16 %v2100, %v2098
    %v2159 = vpack.c.b16 %v2101, %v2099
    %v2160 = vpack.c.b16 %v2104, %v2102
    %v2161 = vpack.c.b16 %v2105, %v2103
    %v2162 = vpack.c.b16 %v2108, %v2106
    %v2163 = vpack.c.b16 %v2109, %v2107
    %v2164 = vpack.c.b16 %v2112, %v2110
    %v2165 = vpack.c.b16 %v2113, %v2111
    %v2166 = vpack.c.b16 %v2116, %v2114
    %v2167 = vpack.c.b16 %v2117, %v2115
    %v2168 = vpack.c.b16 %v2120, %v2118
    %v2169 = vpack.c.b16 %v2121, %v2119
    %v2170 = vpack.c.b16 %v2124, %v2122
    %v2171 = vpack.c.b16 %v2125, %v2123
    %v2172 = vpack.c.b16 %v2128, %v2126
    %v2173 = vpack.c.b16 %v2129, %v2127
    %v2174 = vpack.c.b16 %v2132, %v2130
    %v2175 = vpack.c.b16 %v2133, %v2131
    %v2176 = vpack.c.b16 %v2136, %v2134
    %v2177 = vpack.c.b16 %v2137, %v2135
    %v2178 = vpack.c.b16 %v2140, %v2138
    %v2179 = vpack.c.b16 %v2141, %v2139
    %v2180 = vpack.c.b16 %v2144, %v2142
    %v2181 = vpack.c.b16 %v2145, %v2143
    %v2182 = vpack.c.b16 %v2148, %v2146
    %v2183 = vpack.c.b16 %v2149, %v2147
    %v2184 = vpack.c.b16 %v2152, %v2150
    %v2185 = vpack.c.b16 %v2153, %v2151
    %2218 = vmatprep.subr.bf16.mxu0 %v2155
    %2219 = vmatpush1.bf16.msra.mxu0 %v2154
    %2220 = vmatprep.subr.bf16.mxu0 %v2157
    %2221 = vmatpush1.bf16.msra.mxu0 %v2156
    %2222 = vmatprep.subr.bf16.mxu0 %v2159
    %2223 = vmatpush1.bf16.msra.mxu0 %v2158
    %2224 = vmatprep.subr.bf16.mxu0 %v2161
    %2225 = vmatpush1.bf16.msra.mxu0 %v2160
    %2226 = vmatprep.subr.bf16.mxu0 %v2163
    %2227 = vmatpush1.bf16.msra.mxu0 %v2162
    %2228 = vmatprep.subr.bf16.mxu0 %v2165
    %2229 = vmatpush1.bf16.msra.mxu0 %v2164
    %2230 = vmatprep.subr.bf16.mxu0 %v2167
    %2231 = vmatpush1.bf16.msra.mxu0 %v2166
    %2232 = vmatprep.subr.bf16.mxu0 %v2169
    %2233 = vmatpush1.bf16.msra.mxu0 %v2168
    %2234 = vmatprep.subr.bf16.mxu0 %v2171
    %2235 = vmatpush1.bf16.msra.mxu0 %v2170
    %2236 = vmatprep.subr.bf16.mxu0 %v2173
    %2237 = vmatpush1.bf16.msra.mxu0 %v2172
    %2238 = vmatprep.subr.bf16.mxu0 %v2175
    %2239 = vmatpush1.bf16.msra.mxu0 %v2174
    %2240 = vmatprep.subr.bf16.mxu0 %v2177
    %2241 = vmatpush1.bf16.msra.mxu0 %v2176
    %2242 = vmatprep.subr.bf16.mxu0 %v2179
    %2243 = vmatpush1.bf16.msra.mxu0 %v2178
    %2244 = vmatprep.subr.bf16.mxu0 %v2181
    %2245 = vmatpush1.bf16.msra.mxu0 %v2180
    %2246 = vmatprep.subr.bf16.mxu0 %v2183
    %2247 = vmatpush1.bf16.msra.mxu0 %v2182
    %2248 = vmatprep.subr.bf16.mxu0 %v2185
    %2249 = vmatpush1.bf16.msra.mxu0 %v2184
    %2250 = vmatprep.mubr.bf16.mxu0 %v1132
    %2251 = vmatmul.mubr.bf16.gmra.mrb[0].mxu0 %v1131
    %v2252 = vpop.f32.mrb[0].mxu0
    %v2253 = vadd.f32 0.0, %v2252
    %v2254 = vpop.f32.mrb[0].mxu0
    %v2255 = vadd.f32 0.0, %v2254
    %v2256 = vpop.f32.mrb[0].mxu0
    %v2257 = vpop.f32.mrb[0].mxu0
    %2258 = vdwg.mxu0
    %s2259 = scalar_lea.vmem %s7, 24
    %v2260 = vld [vmem:[%s2259] sm:$0xf]
    %v2261 = vld [vmem:[%s2259 + $0x4] sm:$0xf]
    %v2262 = vpack.c.bf16 %v2253, %v2253
    %v2263 = vpack.c.bf16 %v2255, %v2255
    %v2266 = vunpack.c.l.b16 %v2260
    %v2267 = vunpack.c.l.b16 %v2261
    %v2268 = vpack.c.b16 %v2267, %v2266
    %v2270 = vsel %vm1614, %v2268, 0
    %v2273 = vsel %vm1618, %v2262, 0
    %v2276 = vsel %vm1618, %v2263, 0
    %2278 = vmatprep.subr.bf16.mxu0 %v2276
    %2279 = vmatpush1.bf16.msra.mxu0 %v2273
    %2280 = vmatprep.subr.bf16.mxu0 0
    %2281 = vmatpush1.bf16.msra.mxu0 0
    %2282 = vmatprep.subr.bf16.mxu0 0
    %2283 = vmatpush1.bf16.msra.mxu0 0
    %2284 = vmatprep.subr.bf16.mxu0 0
    %2285 = vmatpush1.bf16.msra.mxu0 0
    %2286 = vmatprep.subr.bf16.mxu0 0
    %2287 = vmatpush1.bf16.msra.mxu0 0
    %2288 = vmatprep.subr.bf16.mxu0 0
    %2289 = vmatpush1.bf16.msra.mxu0 0
    %2290 = vmatprep.subr.bf16.mxu0 0
    %2291 = vmatpush1.bf16.msra.mxu0 0
    %2292 = vmatprep.subr.bf16.mxu0 0
    %2293 = vmatpush1.bf16.msra.mxu0 0
    %2294 = vmatprep.subr.bf16.mxu0 0
    %2295 = vmatpush1.bf16.msra.mxu0 0
    %2296 = vmatprep.subr.bf16.mxu0 0
    %2297 = vmatpush1.bf16.msra.mxu0 0
    %2298 = vmatprep.subr.bf16.mxu0 0
    %2299 = vmatpush1.bf16.msra.mxu0 0
    %2300 = vmatprep.subr.bf16.mxu0 0
    %2301 = vmatpush1.bf16.msra.mxu0 0
    %2302 = vmatprep.subr.bf16.mxu0 0
    %2303 = vmatpush1.bf16.msra.mxu0 0
    %2304 = vmatprep.subr.bf16.mxu0 0
    %2305 = vmatpush1.bf16.msra.mxu0 0
    %2306 = vmatprep.subr.bf16.mxu0 0
    %2307 = vmatpush1.bf16.msra.mxu0 0
    %2308 = vmatprep.subr.bf16.mxu0 0
    %2309 = vmatpush1.bf16.msra.mxu0 0
    %2310 = vmatprep.mubr.bf16.mxu0 0
    %2311 = vmatmul.mubr.bf16.gmra.mrb[0].mxu0 %v2270
    %v2312 = vpop.f32.mrb[0].mxu0
    %v2313 = vadd.f32 0.0, %v2312
    %v2314 = vpop.f32.mrb[0].mxu0
    %v2315 = vadd.f32 0.0, %v2314
    %v2316 = vpop.f32.mrb[0].mxu0
    %v2317 = vadd.f32 0.0, %v2316
    %v2318 = vpop.f32.mrb[0].mxu0
    %v2319 = vadd.f32 0.0, %v2318
    %2320 = vdwg.mxu0
    %v2321 = vadd.f32 %v2021, %v2313
    %v2322 = vadd.f32 %v2022, %v2315
    %v2323 = vadd.f32 %v2023, %v2317
    %v2324 = vadd.f32 %v2024, %v2319
    %v2325 = vld [vmem:[#allocation6] sm:$0x1]
    %v2326 = vld [vmem:[#allocation12] sm:$0x1]
    %v2327 = vld [vmem:[%s20] sm:$0xff]
    %v2328 = vld [vmem:[%s20 + $0x8] sm:$0xff]
    %v2329 = vld [vmem:[%s20 + $0x10] sm:$0xff]
    %v2330 = vld [vmem:[%s20 + $0x18] sm:$0xff]
    %v2331 = vld [vmem:[%s20 + $0x20] sm:$0xff]
    %v2332 = vld [vmem:[%s20 + $0x28] sm:$0xff]
    %v2333 = vld [vmem:[%s20 + $0x30] sm:$0xff]
    %v2334 = vld [vmem:[%s20 + $0x38] sm:$0xff]
    %v2335 = vld [vmem:[%s20 + $0x40] sm:$0xff]
    %v2336 = vld [vmem:[%s20 + $0x48] sm:$0xff]
    %v2337 = vld [vmem:[%s20 + $0x50] sm:$0xff]
    %v2338 = vld [vmem:[%s20 + $0x58] sm:$0xff]
    %v2339 = vld [vmem:[%s20 + $0x60] sm:$0xff]
    %v2340 = vld [vmem:[%s20 + $0x68] sm:$0xff]
    %v2341 = vld [vmem:[%s20 + $0x70] sm:$0xff]
    %v2342 = vld [vmem:[%s20 + $0x78] sm:$0xff]
    %v2343 = vld [vmem:[%s20 + $0x80] sm:$0xff]
    %v2344 = vld [vmem:[%s20 + $0x88] sm:$0xff]
    %v2345 = vld [vmem:[%s20 + $0x90] sm:$0xff]
    %v2346 = vld [vmem:[%s20 + $0x98] sm:$0xff]
    %v2347 = vld [vmem:[%s20 + $0xa0] sm:$0xff]
    %v2348 = vld [vmem:[%s20 + $0xa8] sm:$0xff]
    %v2349 = vld [vmem:[%s20 + $0xb0] sm:$0xff]
    %v2350 = vld [vmem:[%s20 + $0xb8] sm:$0xff]
    %v2351 = vld [vmem:[%s20 + $0xc0] sm:$0xff]
    %v2352 = vld [vmem:[%s20 + $0xc8] sm:$0xff]
    %v2353 = vld [vmem:[%s20 + $0xd0] sm:$0xff]
    %v2354 = vld [vmem:[%s20 + $0xd8] sm:$0xff]
    %v2355 = vld [vmem:[%s20 + $0xe0] sm:$0xff]
    %v2356 = vld [vmem:[%s20 + $0xe8] sm:$0xff]
    %v2357 = vld [vmem:[%s20 + $0xf0] sm:$0xff]
    %v2358 = vld [vmem:[%s20 + $0xf8] sm:$0xff]
    %v2359 = vld [vmem:[#allocation18] sm:$0xff]
    %v2360 = vld [vmem:[#allocation18 + $0x8] sm:$0xff]
    %v2361 = vld [vmem:[#allocation18 + $0x10] sm:$0xff]
    %v2362 = vld [vmem:[#allocation18 + $0x18] sm:$0xff]
    %v2363 = vld [vmem:[#allocation18 + $0x20] sm:$0xff]
    %v2364 = vld [vmem:[#allocation18 + $0x28] sm:$0xff]
    %v2365 = vld [vmem:[#allocation18 + $0x30] sm:$0xff]
    %v2366 = vld [vmem:[#allocation18 + $0x38] sm:$0xff]
    %v2367 = vadd.f32 %v2321, %v2323
    %v2368 = vrot.slane %v2367, 4
    %v2369 = vadd.f32 %v2367, %v2368
    %v2370 = vrot.slane %v2369, 2
    %v2371 = vadd.f32 %v2369, %v2370
    %v2372 = vrot.slane %v2371, 1
    %v2373 = vadd.f32 %v2371, %v2372
    %v2374 = vadd.f32 %v2322, %v2324
    %v2375 = vrot.slane %v2374, 4
    %v2376 = vadd.f32 %v2374, %v2375
    %v2377 = vrot.slane %v2376, 2
    %v2378 = vadd.f32 %v2376, %v2377
    %v2379 = vrot.slane %v2378, 1
    %v2380 = vadd.f32 %v2378, %v2379
    %v2381 = vmul.f32 %v2321, %v2321
    %v2382 = vmul.f32 %v2322, %v2322
    %v2383 = vmul.f32 %v2323, %v2323
    %v2384 = vmul.f32 %v2324, %v2324
    %v2385 = vadd.f32 %v2381, %v2383
    %v2386 = vrot.slane %v2385, 4
    %v2387 = vadd.f32 %v2385, %v2386
    %v2388 = vrot.slane %v2387, 2
    %v2389 = vadd.f32 %v2387, %v2388
    %v2390 = vrot.slane %v2389, 1
    %v2391 = vadd.f32 %v2389, %v2390
    %v2392 = vadd.f32 %v2382, %v2384
    %v2393 = vrot.slane %v2392, 4
    %v2394 = vadd.f32 %v2392, %v2393
    %v2395 = vrot.slane %v2394, 2
    %v2396 = vadd.f32 %v2394, %v2395
    %v2397 = vrot.slane %v2396, 1
    %v2398 = vadd.f32 %v2396, %v2397
    %2399 = vmatprep.subr.mxu0 0.0
    %2400 = vmatpush1.msra.mxu0 %v2327
    %2401 = vmatprep.subr.mxu0 0.0
    %2402 = vmatpush1.msra.mxu0 %v2328
    %2403 = vmatprep.subr.mxu0 0.0
    %2404 = vmatpush1.msra.mxu0 %v2329
    %2405 = vmatprep.subr.mxu0 0.0
    %2406 = vmatpush1.msra.mxu0 %v2330
    %2407 = vmatprep.subr.mxu0 0.0
    %2408 = vmatpush1.msra.mxu0 %v2331
    %2409 = vmatprep.subr.mxu0 0.0
    %2410 = vmatpush1.msra.mxu0 %v2332
    %2411 = vmatprep.subr.mxu0 0.0
    %2412 = vmatpush1.msra.mxu0 %v2333
    %2413 = vmatprep.subr.mxu0 0.0
    %2414 = vmatpush1.msra.mxu0 %v2334
    %2415 = vmatprep.subr.mxu0 0.0
    %2416 = vmatpush1.msra.mxu0 %v2335
    %2417 = vmatprep.subr.mxu0 0.0
    %2418 = vmatpush1.msra.mxu0 %v2336
    %2419 = vmatprep.subr.mxu0 0.0
    %2420 = vmatpush1.msra.mxu0 %v2337
    %2421 = vmatprep.subr.mxu0 0.0
    %2422 = vmatpush1.msra.mxu0 %v2338
    %2423 = vmatprep.subr.mxu0 0.0
    %2424 = vmatpush1.msra.mxu0 %v2339
    %2425 = vmatprep.subr.mxu0 0.0
    %2426 = vmatpush1.msra.mxu0 %v2340
    %2427 = vmatprep.subr.mxu0 0.0
    %2428 = vmatpush1.msra.mxu0 %v2341
    %2429 = vmatprep.subr.mxu0 0.0
    %2430 = vmatpush1.msra.mxu0 %v2342
    %2431 = vmatprep.subr.mxu0 0.0
    %2432 = vmatpush1.msra.mxu0 %v2343
    %2433 = vmatprep.subr.mxu0 0.0
    %2434 = vmatpush1.msra.mxu0 %v2344
    %2435 = vmatprep.subr.mxu0 0.0
    %2436 = vmatpush1.msra.mxu0 %v2345
    %2437 = vmatprep.subr.mxu0 0.0
    %2438 = vmatpush1.msra.mxu0 %v2346
    %2439 = vmatprep.subr.mxu0 0.0
    %2440 = vmatpush1.msra.mxu0 %v2347
    %2441 = vmatprep.subr.mxu0 0.0
    %2442 = vmatpush1.msra.mxu0 %v2348
    %2443 = vmatprep.subr.mxu0 0.0
    %2444 = vmatpush1.msra.mxu0 %v2349
    %2445 = vmatprep.subr.mxu0 0.0
    %2446 = vmatpush1.msra.mxu0 %v2350
    %2447 = vmatprep.subr.mxu0 0.0
    %2448 = vmatpush1.msra.mxu0 %v2351
    %2449 = vmatprep.subr.mxu0 0.0
    %2450 = vmatpush1.msra.mxu0 %v2352
    %2451 = vmatprep.subr.mxu0 0.0
    %2452 = vmatpush1.msra.mxu0 %v2353
    %2453 = vmatprep.subr.mxu0 0.0
    %2454 = vmatpush1.msra.mxu0 %v2354
    %2455 = vmatprep.subr.mxu0 0.0
    %2456 = vmatpush1.msra.mxu0 %v2355
    %2457 = vmatprep.subr.mxu0 0.0
    %2458 = vmatpush1.msra.mxu0 %v2356
    %2459 = vmatprep.subr.mxu0 0.0
    %2460 = vmatpush1.msra.mxu0 %v2357
    %2461 = vmatprep.subr.mxu0 0.0
    %2462 = vmatpush1.msra.mxu0 %v2358
    %2463 = vmatprep.mubr.f32.mxu0 %v2380
    %2464 = vmatmul.mubr.f32.gmra.mrb[0].mxu0 %v2373
    %v2465 = vpop.f32.mrb[0].mxu0
    %v2466 = vadd.f32 0.0, %v2465
    %v2467 = vpop.f32.mrb[0].mxu0
    %2468 = vdwg.mxu0
    %2469 = vmatprep.subr.mxu0 0.0
    %2470 = vmatpush1.msra.mxu0 %v2327
    %2471 = vmatprep.subr.mxu0 0.0
    %2472 = vmatpush1.msra.mxu0 %v2328
    %2473 = vmatprep.subr.mxu0 0.0
    %2474 = vmatpush1.msra.mxu0 %v2329
    %2475 = vmatprep.subr.mxu0 0.0
    %2476 = vmatpush1.msra.mxu0 %v2330
    %2477 = vmatprep.subr.mxu0 0.0
    %2478 = vmatpush1.msra.mxu0 %v2331
    %2479 = vmatprep.subr.mxu0 0.0
    %2480 = vmatpush1.msra.mxu0 %v2332
    %2481 = vmatprep.subr.mxu0 0.0
    %2482 = vmatpush1.msra.mxu0 %v2333
    %2483 = vmatprep.subr.mxu0 0.0
    %2484 = vmatpush1.msra.mxu0 %v2334
    %2485 = vmatprep.subr.mxu0 0.0
    %2486 = vmatpush1.msra.mxu0 %v2335
    %2487 = vmatprep.subr.mxu0 0.0
    %2488 = vmatpush1.msra.mxu0 %v2336
    %2489 = vmatprep.subr.mxu0 0.0
    %2490 = vmatpush1.msra.mxu0 %v2337
    %2491 = vmatprep.subr.mxu0 0.0
    %2492 = vmatpush1.msra.mxu0 %v2338
    %2493 = vmatprep.subr.mxu0 0.0
    %2494 = vmatpush1.msra.mxu0 %v2339
    %2495 = vmatprep.subr.mxu0 0.0
    %2496 = vmatpush1.msra.mxu0 %v2340
    %2497 = vmatprep.subr.mxu0 0.0
    %2498 = vmatpush1.msra.mxu0 %v2341
    %2499 = vmatprep.subr.mxu0 0.0
    %2500 = vmatpush1.msra.mxu0 %v2342
    %2501 = vmatprep.subr.mxu0 0.0
    %2502 = vmatpush1.msra.mxu0 %v2343
    %2503 = vmatprep.subr.mxu0 0.0
    %2504 = vmatpush1.msra.mxu0 %v2344
    %2505 = vmatprep.subr.mxu0 0.0
    %2506 = vmatpush1.msra.mxu0 %v2345
    %2507 = vmatprep.subr.mxu0 0.0
    %2508 = vmatpush1.msra.mxu0 %v2346
    %2509 = vmatprep.subr.mxu0 0.0
    %2510 = vmatpush1.msra.mxu0 %v2347
    %2511 = vmatprep.subr.mxu0 0.0
    %2512 = vmatpush1.msra.mxu0 %v2348
    %2513 = vmatprep.subr.mxu0 0.0
    %2514 = vmatpush1.msra.mxu0 %v2349
    %2515 = vmatprep.subr.mxu0 0.0
    %2516 = vmatpush1.msra.mxu0 %v2350
    %2517 = vmatprep.subr.mxu0 0.0
    %2518 = vmatpush1.msra.mxu0 %v2351
    %2519 = vmatprep.subr.mxu0 0.0
    %2520 = vmatpush1.msra.mxu0 %v2352
    %2521 = vmatprep.subr.mxu0 0.0
    %2522 = vmatpush1.msra.mxu0 %v2353
    %2523 = vmatprep.subr.mxu0 0.0
    %2524 = vmatpush1.msra.mxu0 %v2354
    %2525 = vmatprep.subr.mxu0 0.0
    %2526 = vmatpush1.msra.mxu0 %v2355
    %2527 = vmatprep.subr.mxu0 0.0
    %2528 = vmatpush1.msra.mxu0 %v2356
    %2529 = vmatprep.subr.mxu0 0.0
    %2530 = vmatpush1.msra.mxu0 %v2357
    %2531 = vmatprep.subr.mxu0 0.0
    %2532 = vmatpush1.msra.mxu0 %v2358
    %2533 = vmatprep.mubr.f32.mxu0 %v2398
    %2534 = vmatmul.mubr.f32.gmra.mrb[0].mxu0 %v2391
    %v2535 = vpop.f32.mrb[0].mxu0
    %v2536 = vadd.f32 0.0, %v2535
    %v2537 = vpop.f32.mrb[0].mxu0
    %2538 = vdwg.mxu0
    %v2539 = vmul.f32 %v2466, 0.0078125
    %v2540 = vmul.f32 %v2536, 0.0078125
    %v2541 = vmul.f32 %v2539, %v2539
    %v2542 = vsub.f32 %v2540, %v2541
    %v2543 = vadd.f32 %v2542, 1e-05
    %v2544 = vrsqrt.pop %v2543
    %v2545 = vmul.f32 %v2325, %v2544
    %v2546 = vmul.f32 %v2539, %v2545
    %v2547 = vsub.f32 %v2326, %v2546
    %v2549 = vsel %vm271, %v2545, 0
    %2551 = vmatprep.subr.mxu0 %v2360
    %2552 = vmatpush1.msra.mxu0 %v2359
    %2553 = vmatprep.subr.mxu0 %v2362
    %2554 = vmatpush1.msra.mxu0 %v2361
    %2555 = vmatprep.subr.mxu0 %v2364
    %2556 = vmatpush1.msra.mxu0 %v2363
    %2557 = vmatprep.subr.mxu0 %v2366
    %2558 = vmatpush1.msra.mxu0 %v2365
    %2559 = vmatprep.subr.mxu0 0.0
    %2560 = vmatpush1.msra.mxu0 0.0
    %2561 = vmatprep.subr.mxu0 0.0
    %2562 = vmatpush1.msra.mxu0 0.0
    %2563 = vmatprep.subr.mxu0 0.0
    %2564 = vmatpush1.msra.mxu0 0.0
    %2565 = vmatprep.subr.mxu0 0.0
    %2566 = vmatpush1.msra.mxu0 0.0
    %2567 = vmatprep.subr.mxu0 0.0
    %2568 = vmatpush1.msra.mxu0 0.0
    %2569 = vmatprep.subr.mxu0 0.0
    %2570 = vmatpush1.msra.mxu0 0.0
    %2571 = vmatprep.subr.mxu0 0.0
    %2572 = vmatpush1.msra.mxu0 0.0
    %2573 = vmatprep.subr.mxu0 0.0
    %2574 = vmatpush1.msra.mxu0 0.0
    %2575 = vmatprep.subr.mxu0 0.0
    %2576 = vmatpush1.msra.mxu0 0.0
    %2577 = vmatprep.subr.mxu0 0.0
    %2578 = vmatpush1.msra.mxu0 0.0
    %2579 = vmatprep.subr.mxu0 0.0
    %2580 = vmatpush1.msra.mxu0 0.0
    %2581 = vmatprep.subr.mxu0 0.0
    %2582 = vmatpush1.msra.mxu0 0.0
    %2583 = vmatprep.subr.mxu0 0.0
    %2584 = vmatpush1.msra.mxu0 0.0
    %2585 = vmatprep.subr.mxu0 0.0
    %2586 = vmatpush1.msra.mxu0 0.0
    %2587 = vmatprep.subr.mxu0 0.0
    %2588 = vmatpush1.msra.mxu0 0.0
    %2589 = vmatprep.subr.mxu0 0.0
    %2590 = vmatpush1.msra.mxu0 0.0
    %2591 = vmatprep.subr.mxu0 0.0
    %2592 = vmatpush1.msra.mxu0 0.0
    %2593 = vmatprep.subr.mxu0 0.0
    %2594 = vmatpush1.msra.mxu0 0.0
    %2595 = vmatprep.subr.mxu0 0.0
    %2596 = vmatpush1.msra.mxu0 0.0
    %2597 = vmatprep.subr.mxu0 0.0
    %2598 = vmatpush1.msra.mxu0 0.0
    %2599 = vmatprep.subr.mxu0 0.0
    %2600 = vmatpush1.msra.mxu0 0.0
    %2601 = vmatprep.subr.mxu0 0.0
    %2602 = vmatpush1.msra.mxu0 0.0
    %2603 = vmatprep.subr.mxu0 0.0
    %2604 = vmatpush1.msra.mxu0 0.0
    %2605 = vmatprep.subr.mxu0 0.0
    %2606 = vmatpush1.msra.mxu0 0.0
    %2607 = vmatprep.subr.mxu0 0.0
    %2608 = vmatpush1.msra.mxu0 0.0
    %2609 = vmatprep.subr.mxu0 0.0
    %2610 = vmatpush1.msra.mxu0 0.0
    %2611 = vmatprep.subr.mxu0 0.0
    %2612 = vmatpush1.msra.mxu0 0.0
    %2613 = vmatprep.subr.mxu0 0.0
    %2614 = vmatpush1.msra.mxu0 0.0
    %2615 = vmatprep.mubr.f32.mxu0 0.0
    %2616 = vmatmul.mubr.f32.gmra.mrb[0].mxu0 %v2549
    %v2617 = vpop.f32.mrb[0].mxu0
    %v2618 = vadd.f32 0.0, %v2617
    %v2619 = vpop.f32.mrb[0].mxu0
    %v2620 = vadd.f32 0.0, %v2619
    %2621 = vdwg.mxu0
    %v2623 = vsel %vm271, %v2547, 0
    %2625 = vmatprep.subr.mxu0 %v2360
    %2626 = vmatpush1.msra.mxu0 %v2359
    %2627 = vmatprep.subr.mxu0 %v2362
    %2628 = vmatpush1.msra.mxu0 %v2361
    %2629 = vmatprep.subr.mxu0 %v2364
    %2630 = vmatpush1.msra.mxu0 %v2363
    %2631 = vmatprep.subr.mxu0 %v2366
    %2632 = vmatpush1.msra.mxu0 %v2365
    %2633 = vmatprep.subr.mxu0 0.0
    %2634 = vmatpush1.msra.mxu0 0.0
    %2635 = vmatprep.subr.mxu0 0.0
    %2636 = vmatpush1.msra.mxu0 0.0
    %2637 = vmatprep.subr.mxu0 0.0
    %2638 = vmatpush1.msra.mxu0 0.0
    %2639 = vmatprep.subr.mxu0 0.0
    %2640 = vmatpush1.msra.mxu0 0.0
    %2641 = vmatprep.subr.mxu0 0.0
    %2642 = vmatpush1.msra.mxu0 0.0
    %2643 = vmatprep.subr.mxu0 0.0
    %2644 = vmatpush1.msra.mxu0 0.0
    %2645 = vmatprep.subr.mxu0 0.0
    %2646 = vmatpush1.msra.mxu0 0.0
    %2647 = vmatprep.subr.mxu0 0.0
    %2648 = vmatpush1.msra.mxu0 0.0
    %2649 = vmatprep.subr.mxu0 0.0
    %2650 = vmatpush1.msra.mxu0 0.0
    %2651 = vmatprep.subr.mxu0 0.0
    %2652 = vmatpush1.msra.mxu0 0.0
    %2653 = vmatprep.subr.mxu0 0.0
    %2654 = vmatpush1.msra.mxu0 0.0
    %2655 = vmatprep.subr.mxu0 0.0
    %2656 = vmatpush1.msra.mxu0 0.0
    %2657 = vmatprep.subr.mxu0 0.0
    %2658 = vmatpush1.msra.mxu0 0.0
    %2659 = vmatprep.subr.mxu0 0.0
    %2660 = vmatpush1.msra.mxu0 0.0
    %2661 = vmatprep.subr.mxu0 0.0
    %2662 = vmatpush1.msra.mxu0 0.0
    %2663 = vmatprep.subr.mxu0 0.0
    %2664 = vmatpush1.msra.mxu0 0.0
    %2665 = vmatprep.subr.mxu0 0.0
    %2666 = vmatpush1.msra.mxu0 0.0
    %2667 = vmatprep.subr.mxu0 0.0
    %2668 = vmatpush1.msra.mxu0 0.0
    %2669 = vmatprep.subr.mxu0 0.0
    %2670 = vmatpush1.msra.mxu0 0.0
    %2671 = vmatprep.subr.mxu0 0.0
    %2672 = vmatpush1.msra.mxu0 0.0
    %2673 = vmatprep.subr.mxu0 0.0
    %2674 = vmatpush1.msra.mxu0 0.0
    %2675 = vmatprep.subr.mxu0 0.0
    %2676 = vmatpush1.msra.mxu0 0.0
    %2677 = vmatprep.subr.mxu0 0.0
    %2678 = vmatpush1.msra.mxu0 0.0
    %2679 = vmatprep.subr.mxu0 0.0
    %2680 = vmatpush1.msra.mxu0 0.0
    %2681 = vmatprep.subr.mxu0 0.0
    %2682 = vmatpush1.msra.mxu0 0.0
    %2683 = vmatprep.subr.mxu0 0.0
    %2684 = vmatpush1.msra.mxu0 0.0
    %2685 = vmatprep.subr.mxu0 0.0
    %2686 = vmatpush1.msra.mxu0 0.0
    %2687 = vmatprep.subr.mxu0 0.0
    %2688 = vmatpush1.msra.mxu0 0.0
    %2689 = vmatprep.mubr.f32.mxu0 0.0
    %2690 = vmatmul.mubr.f32.gmra.mrb[0].mxu0 %v2623
    %v2691 = vpop.f32.mrb[0].mxu0
    %v2692 = vadd.f32 0.0, %v2691
    %v2693 = vpop.f32.mrb[0].mxu0
    %v2694 = vadd.f32 0.0, %v2693
    %2695 = vdwg.mxu0
    %v2696 = vlaneseq
    %v2697 = vshrl.u32 %v2696, 7
    %v2698 = vsub.s32 0, %v2697
    %v2699 = vrot.slane %v2618, %v2698
    %v2700 = vlaneseq
    %v2701 = vshrl.u32 %v2700, 7
    %v2702 = vsub.s32 0, %v2701
    %v2703 = vrot.slane %v2620, %v2702
    %v2704 = vmul.f32 %v2321, %v2699
    %v2705 = vmul.f32 %v2322, %v2703
    %v2706 = vmul.f32 %v2323, %v2699
    %v2707 = vmul.f32 %v2324, %v2703
    %v2708 = vlaneseq
    %v2709 = vshrl.u32 %v2708, 7
    %v2710 = vsub.s32 0, %v2709
    %v2711 = vrot.slane %v2692, %v2710
    %v2712 = vlaneseq
    %v2713 = vshrl.u32 %v2712, 7
    %v2714 = vsub.s32 0, %v2713
    %v2715 = vrot.slane %v2694, %v2714
    %v2716 = vadd.f32 %v2704, %v2711
    %v2717 = vadd.f32 %v2705, %v2715
    %v2718 = vadd.f32 %v2706, %v2711
    %v2719 = vadd.f32 %v2707, %v2715
    %v2720 = vmax.f32 %v2716, 0.0
    %v2721 = vmax.f32 %v2717, 0.0
    %v2722 = vmax.f32 %v2718, 0.0
    %v2723 = vmax.f32 %v2719, 0.0
    %v2724 = vpack.c.bf16 %v2722, %v2720
    %v2725 = vpack.c.bf16 %v2723, %v2721
    %v2726 = vld [vmem:[%s3] sm:$0xff]
    %v2727 = vld [vmem:[%s3 + $0x8] sm:$0xff]
    %v2728 = vld [vmem:[%s3 + $0x10] sm:$0xff]
    %v2729 = vld [vmem:[%s3 + $0x18] sm:$0xff]
    %v2730 = vld [vmem:[%s3 + $0x20] sm:$0xff]
    %v2731 = vld [vmem:[%s3 + $0x28] sm:$0xff]
    %v2732 = vld [vmem:[%s3 + $0x30] sm:$0xff]
    %v2733 = vld [vmem:[%s3 + $0x38] sm:$0xff]
    %v2734 = vld [vmem:[%s3 + $0x40] sm:$0xff]
    %v2735 = vld [vmem:[%s3 + $0x48] sm:$0xff]
    %v2736 = vld [vmem:[%s3 + $0x50] sm:$0xff]
    %v2737 = vld [vmem:[%s3 + $0x58] sm:$0xff]
    %v2738 = vld [vmem:[%s3 + $0x60] sm:$0xff]
    %v2739 = vld [vmem:[%s3 + $0x68] sm:$0xff]
    %v2740 = vld [vmem:[%s3 + $0x70] sm:$0xff]
    %v2741 = vld [vmem:[%s3 + $0x78] sm:$0xff]
    %v2742 = vld [vmem:[%s3 + $0x80] sm:$0xff]
    %v2743 = vld [vmem:[%s3 + $0x88] sm:$0xff]
    %v2744 = vld [vmem:[%s3 + $0x90] sm:$0xff]
    %v2745 = vld [vmem:[%s3 + $0x98] sm:$0xff]
    %v2746 = vld [vmem:[%s3 + $0xa0] sm:$0xff]
    %v2747 = vld [vmem:[%s3 + $0xa8] sm:$0xff]
    %v2748 = vld [vmem:[%s3 + $0xb0] sm:$0xff]
    %v2749 = vld [vmem:[%s3 + $0xb8] sm:$0xff]
    %v2750 = vld [vmem:[%s3 + $0xc0] sm:$0xff]
    %v2751 = vld [vmem:[%s3 + $0xc8] sm:$0xff]
    %v2752 = vld [vmem:[%s3 + $0xd0] sm:$0xff]
    %v2753 = vld [vmem:[%s3 + $0xd8] sm:$0xff]
    %v2754 = vld [vmem:[%s3 + $0xe0] sm:$0xff]
    %v2755 = vld [vmem:[%s3 + $0xe8] sm:$0xff]
    %v2756 = vld [vmem:[%s3 + $0xf0] sm:$0xff]
    %v2757 = vld [vmem:[%s3 + $0xf8] sm:$0xff]
    %v2790 = vunpack.c.l.b16 %v2726
    %v2791 = vunpack.c.h.b16 %v2726
    %v2792 = vunpack.c.l.b16 %v2727
    %v2793 = vunpack.c.h.b16 %v2727
    %v2794 = vunpack.c.l.b16 %v2728
    %v2795 = vunpack.c.h.b16 %v2728
    %v2796 = vunpack.c.l.b16 %v2729
    %v2797 = vunpack.c.h.b16 %v2729
    %v2798 = vunpack.c.l.b16 %v2730
    %v2799 = vunpack.c.h.b16 %v2730
    %v2800 = vunpack.c.l.b16 %v2731
    %v2801 = vunpack.c.h.b16 %v2731
    %v2802 = vunpack.c.l.b16 %v2732
    %v2803 = vunpack.c.h.b16 %v2732
    %v2804 = vunpack.c.l.b16 %v2733
    %v2805 = vunpack.c.h.b16 %v2733
    %v2806 = vunpack.c.l.b16 %v2734
    %v2807 = vunpack.c.h.b16 %v2734
    %v2808 = vunpack.c.l.b16 %v2735
    %v2809 = vunpack.c.h.b16 %v2735
    %v2810 = vunpack.c.l.b16 %v2736
    %v2811 = vunpack.c.h.b16 %v2736
    %v2812 = vunpack.c.l.b16 %v2737
    %v2813 = vunpack.c.h.b16 %v2737
    %v2814 = vunpack.c.l.b16 %v2738
    %v2815 = vunpack.c.h.b16 %v2738
    %v2816 = vunpack.c.l.b16 %v2739
    %v2817 = vunpack.c.h.b16 %v2739
    %v2818 = vunpack.c.l.b16 %v2740
    %v2819 = vunpack.c.h.b16 %v2740
    %v2820 = vunpack.c.l.b16 %v2741
    %v2821 = vunpack.c.h.b16 %v2741
    %v2822 = vunpack.c.l.b16 %v2742
    %v2823 = vunpack.c.h.b16 %v2742
    %v2824 = vunpack.c.l.b16 %v2743
    %v2825 = vunpack.c.h.b16 %v2743
    %v2826 = vunpack.c.l.b16 %v2744
    %v2827 = vunpack.c.h.b16 %v2744
    %v2828 = vunpack.c.l.b16 %v2745
    %v2829 = vunpack.c.h.b16 %v2745
    %v2830 = vunpack.c.l.b16 %v2746
    %v2831 = vunpack.c.h.b16 %v2746
    %v2832 = vunpack.c.l.b16 %v2747
    %v2833 = vunpack.c.h.b16 %v2747
    %v2834 = vunpack.c.l.b16 %v2748
    %v2835 = vunpack.c.h.b16 %v2748
    %v2836 = vunpack.c.l.b16 %v2749
    %v2837 = vunpack.c.h.b16 %v2749
    %v2838 = vunpack.c.l.b16 %v2750
    %v2839 = vunpack.c.h.b16 %v2750
    %v2840 = vunpack.c.l.b16 %v2751
    %v2841 = vunpack.c.h.b16 %v2751
    %v2842 = vunpack.c.l.b16 %v2752
    %v2843 = vunpack.c.h.b16 %v2752
    %v2844 = vunpack.c.l.b16 %v2753
    %v2845 = vunpack.c.h.b16 %v2753
    %v2846 = vunpack.c.l.b16 %v2754
    %v2847 = vunpack.c.h.b16 %v2754
    %v2848 = vunpack.c.l.b16 %v2755
    %v2849 = vunpack.c.h.b16 %v2755
    %v2850 = vunpack.c.l.b16 %v2756
    %v2851 = vunpack.c.h.b16 %v2756
    %v2852 = vunpack.c.l.b16 %v2757
    %v2853 = vunpack.c.h.b16 %v2757
    %v2854 = vpack.c.b16 %v2792, %v2790
    %v2855 = vpack.c.b16 %v2793, %v2791
    %v2856 = vpack.c.b16 %v2796, %v2794
    %v2857 = vpack.c.b16 %v2797, %v2795
    %v2858 = vpack.c.b16 %v2800, %v2798
    %v2859 = vpack.c.b16 %v2801, %v2799
    %v2860 = vpack.c.b16 %v2804, %v2802
    %v2861 = vpack.c.b16 %v2805, %v2803
    %v2862 = vpack.c.b16 %v2808, %v2806
    %v2863 = vpack.c.b16 %v2809, %v2807
    %v2864 = vpack.c.b16 %v2812, %v2810
    %v2865 = vpack.c.b16 %v2813, %v2811
    %v2866 = vpack.c.b16 %v2816, %v2814
    %v2867 = vpack.c.b16 %v2817, %v2815
    %v2868 = vpack.c.b16 %v2820, %v2818
    %v2869 = vpack.c.b16 %v2821, %v2819
    %v2870 = vpack.c.b16 %v2824, %v2822
    %v2871 = vpack.c.b16 %v2825, %v2823
    %v2872 = vpack.c.b16 %v2828, %v2826
    %v2873 = vpack.c.b16 %v2829, %v2827
    %v2874 = vpack.c.b16 %v2832, %v2830
    %v2875 = vpack.c.b16 %v2833, %v2831
    %v2876 = vpack.c.b16 %v2836, %v2834
    %v2877 = vpack.c.b16 %v2837, %v2835
    %v2878 = vpack.c.b16 %v2840, %v2838
    %v2879 = vpack.c.b16 %v2841, %v2839
    %v2880 = vpack.c.b16 %v2844, %v2842
    %v2881 = vpack.c.b16 %v2845, %v2843
    %v2882 = vpack.c.b16 %v2848, %v2846
    %v2883 = vpack.c.b16 %v2849, %v2847
    %v2884 = vpack.c.b16 %v2852, %v2850
    %v2885 = vpack.c.b16 %v2853, %v2851
    %2918 = vmatprep.subr.bf16.mxu0 %v2855
    %2919 = vmatpush1.bf16.msra.mxu0 %v2854
    %2920 = vmatprep.subr.bf16.mxu0 %v2857
    %2921 = vmatpush1.bf16.msra.mxu0 %v2856
    %2922 = vmatprep.subr.bf16.mxu0 %v2859
    %2923 = vmatpush1.bf16.msra.mxu0 %v2858
    %2924 = vmatprep.subr.bf16.mxu0 %v2861
    %2925 = vmatpush1.bf16.msra.mxu0 %v2860
    %2926 = vmatprep.subr.bf16.mxu0 %v2863
    %2927 = vmatpush1.bf16.msra.mxu0 %v2862
    %2928 = vmatprep.subr.bf16.mxu0 %v2865
    %2929 = vmatpush1.bf16.msra.mxu0 %v2864
    %2930 = vmatprep.subr.bf16.mxu0 %v2867
    %2931 = vmatpush1.bf16.msra.mxu0 %v2866
    %2932 = vmatprep.subr.bf16.mxu0 %v2869
    %2933 = vmatpush1.bf16.msra.mxu0 %v2868
    %2934 = vmatprep.subr.bf16.mxu0 %v2871
    %2935 = vmatpush1.bf16.msra.mxu0 %v2870
    %2936 = vmatprep.subr.bf16.mxu0 %v2873
    %2937 = vmatpush1.bf16.msra.mxu0 %v2872
    %2938 = vmatprep.subr.bf16.mxu0 %v2875
    %2939 = vmatpush1.bf16.msra.mxu0 %v2874
    %2940 = vmatprep.subr.bf16.mxu0 %v2877
    %2941 = vmatpush1.bf16.msra.mxu0 %v2876
    %2942 = vmatprep.subr.bf16.mxu0 %v2879
    %2943 = vmatpush1.bf16.msra.mxu0 %v2878
    %2944 = vmatprep.subr.bf16.mxu0 %v2881
    %2945 = vmatpush1.bf16.msra.mxu0 %v2880
    %2946 = vmatprep.subr.bf16.mxu0 %v2883
    %2947 = vmatpush1.bf16.msra.mxu0 %v2882
    %2948 = vmatprep.subr.bf16.mxu0 %v2885
    %2949 = vmatpush1.bf16.msra.mxu0 %v2884
    %2950 = vmatprep.mubr.bf16.mxu0 %v2725
    %2951 = vmatmul.mubr.bf16.gmra.mrb[0].mxu0 %v2724
    %v2952 = vpop.f32.mrb[0].mxu0
    %v2953 = vadd.f32 0.0, %v2952
    %v2954 = vpop.f32.mrb[0].mxu0
    %v2955 = vadd.f32 0.0, %v2954
    %v2956 = vpop.f32.mrb[0].mxu0
    %v2957 = vadd.f32 0.0, %v2956
    %v2958 = vpop.f32.mrb[0].mxu0
    %v2959 = vadd.f32 0.0, %v2958
    %2960 = vdwg.mxu0
    %v2961 = vld [vmem:[%s8] sm:$0xf]
    %v2962 = vld [vmem:[%s8 + $0x4] sm:$0xf]
    %v2963 = vld [vmem:[%s8 + $0x8] sm:$0xf]
    %v2964 = vld [vmem:[%s8 + $0xc] sm:$0xf]
    %v2965 = vpack.c.bf16 %v2957, %v2953
    %v2966 = vpack.c.bf16 %v2959, %v2955
    %s2967 = scalar_lea.vmem %s3, 256
    %v2968 = vld [vmem:[%s2967] sm:$0xff]
    %v2969 = vld [vmem:[%s2967 + $0x8] sm:$0xff]
    %v2970 = vld [vmem:[%s2967 + $0x10] sm:$0xff]
    %v2971 = vld [vmem:[%s2967 + $0x18] sm:$0xff]
    %v2972 = vld [vmem:[%s2967 + $0x20] sm:$0xff]
    %v2973 = vld [vmem:[%s2967 + $0x28] sm:$0xff]
    %v2974 = vld [vmem:[%s2967 + $0x30] sm:$0xff]
    %v2975 = vld [vmem:[%s2967 + $0x38] sm:$0xff]
    %v2976 = vld [vmem:[%s2967 + $0x40] sm:$0xff]
    %v2977 = vld [vmem:[%s2967 + $0x48] sm:$0xff]
    %v2978 = vld [vmem:[%s2967 + $0x50] sm:$0xff]
    %v2979 = vld [vmem:[%s2967 + $0x58] sm:$0xff]
    %v2980 = vld [vmem:[%s2967 + $0x60] sm:$0xff]
    %v2981 = vld [vmem:[%s2967 + $0x68] sm:$0xff]
    %v2982 = vld [vmem:[%s2967 + $0x70] sm:$0xff]
    %v2983 = vld [vmem:[%s2967 + $0x78] sm:$0xff]
    %v2984 = vld [vmem:[%s2967 + $0x80] sm:$0xff]
    %v2985 = vld [vmem:[%s2967 + $0x88] sm:$0xff]
    %v2986 = vld [vmem:[%s2967 + $0x90] sm:$0xff]
    %v2987 = vld [vmem:[%s2967 + $0x98] sm:$0xff]
    %v2988 = vld [vmem:[%s2967 + $0xa0] sm:$0xff]
    %v2989 = vld [vmem:[%s2967 + $0xa8] sm:$0xff]
    %v2990 = vld [vmem:[%s2967 + $0xb0] sm:$0xff]
    %v2991 = vld [vmem:[%s2967 + $0xb8] sm:$0xff]
    %v2992 = vld [vmem:[%s2967 + $0xc0] sm:$0xff]
    %v2993 = vld [vmem:[%s2967 + $0xc8] sm:$0xff]
    %v2994 = vld [vmem:[%s2967 + $0xd0] sm:$0xff]
    %v2995 = vld [vmem:[%s2967 + $0xd8] sm:$0xff]
    %v2996 = vld [vmem:[%s2967 + $0xe0] sm:$0xff]
    %v2997 = vld [vmem:[%s2967 + $0xe8] sm:$0xff]
    %v2998 = vld [vmem:[%s2967 + $0xf0] sm:$0xff]
    %v2999 = vld [vmem:[%s2967 + $0xf8] sm:$0xff]
    %v3032 = vunpack.c.l.b16 %v2968
    %v3033 = vunpack.c.h.b16 %v2968
    %v3034 = vunpack.c.l.b16 %v2969
    %v3035 = vunpack.c.h.b16 %v2969
    %v3036 = vunpack.c.l.b16 %v2970
    %v3037 = vunpack.c.h.b16 %v2970
    %v3038 = vunpack.c.l.b16 %v2971
    %v3039 = vunpack.c.h.b16 %v2971
    %v3040 = vunpack.c.l.b16 %v2972
    %v3041 = vunpack.c.h.b16 %v2972
    %v3042 = vunpack.c.l.b16 %v2973
    %v3043 = vunpack.c.h.b16 %v2973
    %v3044 = vunpack.c.l.b16 %v2974
    %v3045 = vunpack.c.h.b16 %v2974
    %v3046 = vunpack.c.l.b16 %v2975
    %v3047 = vunpack.c.h.b16 %v2975
    %v3048 = vunpack.c.l.b16 %v2976
    %v3049 = vunpack.c.h.b16 %v2976
    %v3050 = vunpack.c.l.b16 %v2977
    %v3051 = vunpack.c.h.b16 %v2977
    %v3052 = vunpack.c.l.b16 %v2978
    %v3053 = vunpack.c.h.b16 %v2978
    %v3054 = vunpack.c.l.b16 %v2979
    %v3055 = vunpack.c.h.b16 %v2979
    %v3056 = vunpack.c.l.b16 %v2980
    %v3057 = vunpack.c.h.b16 %v2980
    %v3058 = vunpack.c.l.b16 %v2981
    %v3059 = vunpack.c.h.b16 %v2981
    %v3060 = vunpack.c.l.b16 %v2982
    %v3061 = vunpack.c.h.b16 %v2982
    %v3062 = vunpack.c.l.b16 %v2983
    %v3063 = vunpack.c.h.b16 %v2983
    %v3064 = vunpack.c.l.b16 %v2984
    %v3065 = vunpack.c.h.b16 %v2984
    %v3066 = vunpack.c.l.b16 %v2985
    %v3067 = vunpack.c.h.b16 %v2985
    %v3068 = vunpack.c.l.b16 %v2986
    %v3069 = vunpack.c.h.b16 %v2986
    %v3070 = vunpack.c.l.b16 %v2987
    %v3071 = vunpack.c.h.b16 %v2987
    %v3072 = vunpack.c.l.b16 %v2988
    %v3073 = vunpack.c.h.b16 %v2988
    %v3074 = vunpack.c.l.b16 %v2989
    %v3075 = vunpack.c.h.b16 %v2989
    %v3076 = vunpack.c.l.b16 %v2990
    %v3077 = vunpack.c.h.b16 %v2990
    %v3078 = vunpack.c.l.b16 %v2991
    %v3079 = vunpack.c.h.b16 %v2991
    %v3080 = vunpack.c.l.b16 %v2992
    %v3081 = vunpack.c.h.b16 %v2992
    %v3082 = vunpack.c.l.b16 %v2993
    %v3083 = vunpack.c.h.b16 %v2993
    %v3084 = vunpack.c.l.b16 %v2994
    %v3085 = vunpack.c.h.b16 %v2994
    %v3086 = vunpack.c.l.b16 %v2995
    %v3087 = vunpack.c.h.b16 %v2995
    %v3088 = vunpack.c.l.b16 %v2996
    %v3089 = vunpack.c.h.b16 %v2996
    %v3090 = vunpack.c.l.b16 %v2997
    %v3091 = vunpack.c.h.b16 %v2997
    %v3092 = vunpack.c.l.b16 %v2998
    %v3093 = vunpack.c.h.b16 %v2998
    %v3094 = vunpack.c.l.b16 %v2999
    %v3095 = vunpack.c.h.b16 %v2999
    %v3096 = vpack.c.b16 %v3034, %v3032
    %v3097 = vpack.c.b16 %v3035, %v3033
    %v3098 = vpack.c.b16 %v3038, %v3036
    %v3099 = vpack.c.b16 %v3039, %v3037
    %v3100 = vpack.c.b16 %v3042, %v3040
    %v3101 = vpack.c.b16 %v3043, %v3041
    %v3102 = vpack.c.b16 %v3046, %v3044
    %v3103 = vpack.c.b16 %v3047, %v3045
    %v3104 = vpack.c.b16 %v3050, %v3048
    %v3105 = vpack.c.b16 %v3051, %v3049
    %v3106 = vpack.c.b16 %v3054, %v3052
    %v3107 = vpack.c.b16 %v3055, %v3053
    %v3108 = vpack.c.b16 %v3058, %v3056
    %v3109 = vpack.c.b16 %v3059, %v3057
    %v3110 = vpack.c.b16 %v3062, %v3060
    %v3111 = vpack.c.b16 %v3063, %v3061
    %v3112 = vpack.c.b16 %v3066, %v3064
    %v3113 = vpack.c.b16 %v3067, %v3065
    %v3114 = vpack.c.b16 %v3070, %v3068
    %v3115 = vpack.c.b16 %v3071, %v3069
    %v3116 = vpack.c.b16 %v3074, %v3072
    %v3117 = vpack.c.b16 %v3075, %v3073
    %v3118 = vpack.c.b16 %v3078, %v3076
    %v3119 = vpack.c.b16 %v3079, %v3077
    %v3120 = vpack.c.b16 %v3082, %v3080
    %v3121 = vpack.c.b16 %v3083, %v3081
    %v3122 = vpack.c.b16 %v3086, %v3084
    %v3123 = vpack.c.b16 %v3087, %v3085
    %v3124 = vpack.c.b16 %v3090, %v3088
    %v3125 = vpack.c.b16 %v3091, %v3089
    %v3126 = vpack.c.b16 %v3094, %v3092
    %v3127 = vpack.c.b16 %v3095, %v3093
    %3160 = vmatprep.subr.bf16.mxu0 %v3097
    %3161 = vmatpush1.bf16.msra.mxu0 %v3096
    %3162 = vmatprep.subr.bf16.mxu0 %v3099
    %3163 = vmatpush1.bf16.msra.mxu0 %v3098
    %3164 = vmatprep.subr.bf16.mxu0 %v3101
    %3165 = vmatpush1.bf16.msra.mxu0 %v3100
    %3166 = vmatprep.subr.bf16.mxu0 %v3103
    %3167 = vmatpush1.bf16.msra.mxu0 %v3102
    %3168 = vmatprep.subr.bf16.mxu0 %v3105
    %3169 = vmatpush1.bf16.msra.mxu0 %v3104
    %3170 = vmatprep.subr.bf16.mxu0 %v3107
    %3171 = vmatpush1.bf16.msra.mxu0 %v3106
    %3172 = vmatprep.subr.bf16.mxu0 %v3109
    %3173 = vmatpush1.bf16.msra.mxu0 %v3108
    %3174 = vmatprep.subr.bf16.mxu0 %v3111
    %3175 = vmatpush1.bf16.msra.mxu0 %v3110
    %3176 = vmatprep.subr.bf16.mxu0 %v3113
    %3177 = vmatpush1.bf16.msra.mxu0 %v3112
    %3178 = vmatprep.subr.bf16.mxu0 %v3115
    %3179 = vmatpush1.bf16.msra.mxu0 %v3114
    %3180 = vmatprep.subr.bf16.mxu0 %v3117
    %3181 = vmatpush1.bf16.msra.mxu0 %v3116
    %3182 = vmatprep.subr.bf16.mxu0 %v3119
    %3183 = vmatpush1.bf16.msra.mxu0 %v3118
    %3184 = vmatprep.subr.bf16.mxu0 %v3121
    %3185 = vmatpush1.bf16.msra.mxu0 %v3120
    %3186 = vmatprep.subr.bf16.mxu0 %v3123
    %3187 = vmatpush1.bf16.msra.mxu0 %v3122
    %3188 = vmatprep.subr.bf16.mxu0 %v3125
    %3189 = vmatpush1.bf16.msra.mxu0 %v3124
    %3190 = vmatprep.subr.bf16.mxu0 %v3127
    %3191 = vmatpush1.bf16.msra.mxu0 %v3126
    %3192 = vmatprep.mubr.bf16.mxu0 %v2725
    %3193 = vmatmul.mubr.bf16.gmra.mrb[0].mxu0 %v2724
    %v3194 = vpop.f32.mrb[0].mxu0
    %v3195 = vadd.f32 0.0, %v3194
    %v3196 = vpop.f32.mrb[0].mxu0
    %v3197 = vadd.f32 0.0, %v3196
    %v3198 = vpop.f32.mrb[0].mxu0
    %v3199 = vadd.f32 0.0, %v3198
    %v3200 = vpop.f32.mrb[0].mxu0
    %v3201 = vadd.f32 0.0, %v3200
    %3202 = vdwg.mxu0
    %s3203 = scalar_lea.vmem %s8, 16
    %v3204 = vld [vmem:[%s3203] sm:$0xf]
    %v3205 = vld [vmem:[%s3203 + $0x4] sm:$0xf]
    %v3206 = vld [vmem:[%s3203 + $0x8] sm:$0xf]
    %v3207 = vld [vmem:[%s3203 + $0xc] sm:$0xf]
    %v3208 = vpack.c.bf16 %v3199, %v3195
    %v3209 = vpack.c.bf16 %v3201, %v3197
    %v3214 = vunpack.c.l.b16 %v3204
    %v3215 = vunpack.c.l.b16 %v3205
    %v3216 = vunpack.c.l.b16 %v3206
    %v3217 = vunpack.c.l.b16 %v3207
    %v3218 = vpack.c.b16 %v3215, %v3214
    %v3219 = vpack.c.b16 %v3217, %v3216
    %vm3220 = vcmask 130048
    %v3222 = vsel %vm3220, %v3218, 0
    %v3225 = vsel %vm3220, %v3219, 0
    %3227 = vmatprep.subr.bf16.mxu0 %v3209
    %3228 = vmatpush1.bf16.msra.mxu0 %v3208
    %3229 = vmatprep.subr.bf16.mxu0 0
    %3230 = vmatpush1.bf16.msra.mxu0 0
    %3231 = vmatprep.subr.bf16.mxu0 0
    %3232 = vmatpush1.bf16.msra.mxu0 0
    %3233 = vmatprep.subr.bf16.mxu0 0
    %3234 = vmatpush1.bf16.msra.mxu0 0
    %3235 = vmatprep.subr.bf16.mxu0 0
    %3236 = vmatpush1.bf16.msra.mxu0 0
    %3237 = vmatprep.subr.bf16.mxu0 0
    %3238 = vmatpush1.bf16.msra.mxu0 0
    %3239 = vmatprep.subr.bf16.mxu0 0
    %3240 = vmatpush1.bf16.msra.mxu0 0
    %3241 = vmatprep.subr.bf16.mxu0 0
    %3242 = vmatpush1.bf16.msra.mxu0 0
    %3243 = vmatprep.subr.bf16.mxu0 0
    %3244 = vmatpush1.bf16.msra.mxu0 0
    %3245 = vmatprep.subr.bf16.mxu0 0
    %3246 = vmatpush1.bf16.msra.mxu0 0
    %3247 = vmatprep.subr.bf16.mxu0 0
    %3248 = vmatpush1.bf16.msra.mxu0 0
    %3249 = vmatprep.subr.bf16.mxu0 0
    %3250 = vmatpush1.bf16.msra.mxu0 0
    %3251 = vmatprep.subr.bf16.mxu0 0
    %3252 = vmatpush1.bf16.msra.mxu0 0
    %3253 = vmatprep.subr.bf16.mxu0 0
    %3254 = vmatpush1.bf16.msra.mxu0 0
    %3255 = vmatprep.subr.bf16.mxu0 0
    %3256 = vmatpush1.bf16.msra.mxu0 0
    %3257 = vmatprep.subr.bf16.mxu0 0
    %3258 = vmatpush1.bf16.msra.mxu0 0
    %3259 = vmatprep.mubr.bf16.mxu0 0
    %3260 = vmatmul.mubr.bf16.gmra.mrb[0].mxu0 %v3222
    %v3261 = vpop.f32.mrb[0].mxu0
    %v3262 = vadd.f32 0.0, %v3261
    %v3263 = vpop.f32.mrb[0].mxu0
    %v3264 = vadd.f32 0.0, %v3263
    %v3265 = vpop.f32.mrb[0].mxu0
    %v3266 = vadd.f32 0.0, %v3265
    %v3267 = vpop.f32.mrb[0].mxu0
    %v3268 = vadd.f32 0.0, %v3267
    %3269 = vmatprep.mubr.bf16.mxu0 0
    %3270 = vmatmul.mubr.bf16.gmra.mrb[0].mxu0 %v3225
    %v3271 = vpop.f32.mrb[0].mxu0
    %v3272 = vadd.f32 0.0, %v3271
    %v3273 = vpop.f32.mrb[0].mxu0
    %v3274 = vadd.f32 0.0, %v3273
    %v3275 = vpop.f32.mrb[0].mxu0
    %v3276 = vadd.f32 0.0, %v3275
    %v3277 = vpop.f32.mrb[0].mxu0
    %v3278 = vadd.f32 0.0, %v3277
    %3279 = vdwg.mxu0
    %v3284 = vunpack.c.l.b16 %v2961
    %v3285 = vunpack.c.l.b16 %v2962
    %v3286 = vunpack.c.l.b16 %v2963
    %v3287 = vunpack.c.l.b16 %v2964
    %v3288 = vpack.c.b16 %v3285, %v3284
    %v3289 = vpack.c.b16 %v3287, %v3286
    %v3291 = vsel %vm3220, %v3288, 0
    %v3294 = vsel %vm3220, %v3289, 0
    %3296 = vmatprep.subr.bf16.mxu0 %v2966
    %3297 = vmatpush1.bf16.msra.mxu0 %v2965
    %3298 = vmatprep.subr.bf16.mxu0 0
    %3299 = vmatpush1.bf16.msra.mxu0 0
    %3300 = vmatprep.subr.bf16.mxu0 0
    %3301 = vmatpush1.bf16.msra.mxu0 0
    %3302 = vmatprep.subr.bf16.mxu0 0
    %3303 = vmatpush1.bf16.msra.mxu0 0
    %3304 = vmatprep.subr.bf16.mxu0 0
    %3305 = vmatpush1.bf16.msra.mxu0 0
    %3306 = vmatprep.subr.bf16.mxu0 0
    %3307 = vmatpush1.bf16.msra.mxu0 0
    %3308 = vmatprep.subr.bf16.mxu0 0
    %3309 = vmatpush1.bf16.msra.mxu0 0
    %3310 = vmatprep.subr.bf16.mxu0 0
    %3311 = vmatpush1.bf16.msra.mxu0 0
    %3312 = vmatprep.subr.bf16.mxu0 0
    %3313 = vmatpush1.bf16.msra.mxu0 0
    %3314 = vmatprep.subr.bf16.mxu0 0
    %3315 = vmatpush1.bf16.msra.mxu0 0
    %3316 = vmatprep.subr.bf16.mxu0 0
    %3317 = vmatpush1.bf16.msra.mxu0 0
    %3318 = vmatprep.subr.bf16.mxu0 0
    %3319 = vmatpush1.bf16.msra.mxu0 0
    %3320 = vmatprep.subr.bf16.mxu0 0
    %3321 = vmatpush1.bf16.msra.mxu0 0
    %3322 = vmatprep.subr.bf16.mxu0 0
    %3323 = vmatpush1.bf16.msra.mxu0 0
    %3324 = vmatprep.subr.bf16.mxu0 0
    %3325 = vmatpush1.bf16.msra.mxu0 0
    %3326 = vmatprep.subr.bf16.mxu0 0
    %3327 = vmatpush1.bf16.msra.mxu0 0
    %3328 = vmatprep.mubr.bf16.mxu0 0
    %3329 = vmatmul.mubr.bf16.gmra.mrb[0].mxu0 %v3291
    %v3330 = vpop.f32.mrb[0].mxu0
    %v3331 = vadd.f32 %v3262, %v3330
    %v3332 = vpop.f32.mrb[0].mxu0
    %v3333 = vadd.f32 %v3264, %v3332
    %v3334 = vpop.f32.mrb[0].mxu0
    %v3335 = vadd.f32 %v3266, %v3334
    %v3336 = vpop.f32.mrb[0].mxu0
    %v3337 = vadd.f32 %v3268, %v3336
    %3338 = vmatprep.mubr.bf16.mxu0 0
    %3339 = vmatmul.mubr.bf16.gmra.mrb[0].mxu0 %v3294
    %v3340 = vpop.f32.mrb[0].mxu0
    %v3341 = vadd.f32 %v3272, %v3340
    %v3342 = vpop.f32.mrb[0].mxu0
    %v3343 = vadd.f32 %v3274, %v3342
    %v3344 = vpop.f32.mrb[0].mxu0
    %v3345 = vadd.f32 %v3276, %v3344
    %v3346 = vpop.f32.mrb[0].mxu0
    %v3347 = vadd.f32 %v3278, %v3346
    %3348 = vdwg.mxu0
    %s3349 = scalar_lea.vmem %s3, 512
    %v3350 = vld [vmem:[%s3349] sm:$0xff]
    %v3351 = vld [vmem:[%s3349 + $0x8] sm:$0xff]
    %v3352 = vld [vmem:[%s3349 + $0x10] sm:$0xff]
    %v3353 = vld [vmem:[%s3349 + $0x18] sm:$0xff]
    %v3354 = vld [vmem:[%s3349 + $0x20] sm:$0xff]
    %v3355 = vld [vmem:[%s3349 + $0x28] sm:$0xff]
    %v3356 = vld [vmem:[%s3349 + $0x30] sm:$0xff]
    %v3357 = vld [vmem:[%s3349 + $0x38] sm:$0xff]
    %v3358 = vld [vmem:[%s3349 + $0x40] sm:$0xff]
    %v3359 = vld [vmem:[%s3349 + $0x48] sm:$0xff]
    %v3360 = vld [vmem:[%s3349 + $0x50] sm:$0xff]
    %v3361 = vld [vmem:[%s3349 + $0x58] sm:$0xff]
    %v3362 = vld [vmem:[%s3349 + $0x60] sm:$0xff]
    %v3363 = vld [vmem:[%s3349 + $0x68] sm:$0xff]
    %v3364 = vld [vmem:[%s3349 + $0x70] sm:$0xff]
    %v3365 = vld [vmem:[%s3349 + $0x78] sm:$0xff]
    %v3366 = vld [vmem:[%s3349 + $0x80] sm:$0xff]
    %v3367 = vld [vmem:[%s3349 + $0x88] sm:$0xff]
    %v3368 = vld [vmem:[%s3349 + $0x90] sm:$0xff]
    %v3369 = vld [vmem:[%s3349 + $0x98] sm:$0xff]
    %v3370 = vld [vmem:[%s3349 + $0xa0] sm:$0xff]
    %v3371 = vld [vmem:[%s3349 + $0xa8] sm:$0xff]
    %v3372 = vld [vmem:[%s3349 + $0xb0] sm:$0xff]
    %v3373 = vld [vmem:[%s3349 + $0xb8] sm:$0xff]
    %v3374 = vld [vmem:[%s3349 + $0xc0] sm:$0xff]
    %v3375 = vld [vmem:[%s3349 + $0xc8] sm:$0xff]
    %v3376 = vld [vmem:[%s3349 + $0xd0] sm:$0xff]
    %v3377 = vld [vmem:[%s3349 + $0xd8] sm:$0xff]
    %v3378 = vld [vmem:[%s3349 + $0xe0] sm:$0xff]
    %v3379 = vld [vmem:[%s3349 + $0xe8] sm:$0xff]
    %v3380 = vld [vmem:[%s3349 + $0xf0] sm:$0xff]
    %v3381 = vld [vmem:[%s3349 + $0xf8] sm:$0xff]
    %v3414 = vunpack.c.l.b16 %v3350
    %v3415 = vunpack.c.h.b16 %v3350
    %v3416 = vunpack.c.l.b16 %v3351
    %v3417 = vunpack.c.h.b16 %v3351
    %v3418 = vunpack.c.l.b16 %v3352
    %v3419 = vunpack.c.h.b16 %v3352
    %v3420 = vunpack.c.l.b16 %v3353
    %v3421 = vunpack.c.h.b16 %v3353
    %v3422 = vunpack.c.l.b16 %v3354
    %v3423 = vunpack.c.h.b16 %v3354
    %v3424 = vunpack.c.l.b16 %v3355
    %v3425 = vunpack.c.h.b16 %v3355
    %v3426 = vunpack.c.l.b16 %v3356
    %v3427 = vunpack.c.h.b16 %v3356
    %v3428 = vunpack.c.l.b16 %v3357
    %v3429 = vunpack.c.h.b16 %v3357
    %v3430 = vunpack.c.l.b16 %v3358
    %v3431 = vunpack.c.h.b16 %v3358
    %v3432 = vunpack.c.l.b16 %v3359
    %v3433 = vunpack.c.h.b16 %v3359
    %v3434 = vunpack.c.l.b16 %v3360
    %v3435 = vunpack.c.h.b16 %v3360
    %v3436 = vunpack.c.l.b16 %v3361
    %v3437 = vunpack.c.h.b16 %v3361
    %v3438 = vunpack.c.l.b16 %v3362
    %v3439 = vunpack.c.h.b16 %v3362
    %v3440 = vunpack.c.l.b16 %v3363
    %v3441 = vunpack.c.h.b16 %v3363
    %v3442 = vunpack.c.l.b16 %v3364
    %v3443 = vunpack.c.h.b16 %v3364
    %v3444 = vunpack.c.l.b16 %v3365
    %v3445 = vunpack.c.h.b16 %v3365
    %v3446 = vunpack.c.l.b16 %v3366
    %v3447 = vunpack.c.h.b16 %v3366
    %v3448 = vunpack.c.l.b16 %v3367
    %v3449 = vunpack.c.h.b16 %v3367
    %v3450 = vunpack.c.l.b16 %v3368
    %v3451 = vunpack.c.h.b16 %v3368
    %v3452 = vunpack.c.l.b16 %v3369
    %v3453 = vunpack.c.h.b16 %v3369
    %v3454 = vunpack.c.l.b16 %v3370
    %v3455 = vunpack.c.h.b16 %v3370
    %v3456 = vunpack.c.l.b16 %v3371
    %v3457 = vunpack.c.h.b16 %v3371
    %v3458 = vunpack.c.l.b16 %v3372
    %v3459 = vunpack.c.h.b16 %v3372
    %v3460 = vunpack.c.l.b16 %v3373
    %v3461 = vunpack.c.h.b16 %v3373
    %v3462 = vunpack.c.l.b16 %v3374
    %v3463 = vunpack.c.h.b16 %v3374
    %v3464 = vunpack.c.l.b16 %v3375
    %v3465 = vunpack.c.h.b16 %v3375
    %v3466 = vunpack.c.l.b16 %v3376
    %v3467 = vunpack.c.h.b16 %v3376
    %v3468 = vunpack.c.l.b16 %v3377
    %v3469 = vunpack.c.h.b16 %v3377
    %v3470 = vunpack.c.l.b16 %v3378
    %v3471 = vunpack.c.h.b16 %v3378
    %v3472 = vunpack.c.l.b16 %v3379
    %v3473 = vunpack.c.h.b16 %v3379
    %v3474 = vunpack.c.l.b16 %v3380
    %v3475 = vunpack.c.h.b16 %v3380
    %v3476 = vunpack.c.l.b16 %v3381
    %v3477 = vunpack.c.h.b16 %v3381
    %v3478 = vpack.c.b16 %v3416, %v3414
    %v3479 = vpack.c.b16 %v3417, %v3415
    %v3480 = vpack.c.b16 %v3420, %v3418
    %v3481 = vpack.c.b16 %v3421, %v3419
    %v3482 = vpack.c.b16 %v3424, %v3422
    %v3483 = vpack.c.b16 %v3425, %v3423
    %v3484 = vpack.c.b16 %v3428, %v3426
    %v3485 = vpack.c.b16 %v3429, %v3427
    %v3486 = vpack.c.b16 %v3432, %v3430
    %v3487 = vpack.c.b16 %v3433, %v3431
    %v3488 = vpack.c.b16 %v3436, %v3434
    %v3489 = vpack.c.b16 %v3437, %v3435
    %v3490 = vpack.c.b16 %v3440, %v3438
    %v3491 = vpack.c.b16 %v3441, %v3439
    %v3492 = vpack.c.b16 %v3444, %v3442
    %v3493 = vpack.c.b16 %v3445, %v3443
    %v3494 = vpack.c.b16 %v3448, %v3446
    %v3495 = vpack.c.b16 %v3449, %v3447
    %v3496 = vpack.c.b16 %v3452, %v3450
    %v3497 = vpack.c.b16 %v3453, %v3451
    %v3498 = vpack.c.b16 %v3456, %v3454
    %v3499 = vpack.c.b16 %v3457, %v3455
    %v3500 = vpack.c.b16 %v3460, %v3458
    %v3501 = vpack.c.b16 %v3461, %v3459
    %v3502 = vpack.c.b16 %v3464, %v3462
    %v3503 = vpack.c.b16 %v3465, %v3463
    %v3504 = vpack.c.b16 %v3468, %v3466
    %v3505 = vpack.c.b16 %v3469, %v3467
    %v3506 = vpack.c.b16 %v3472, %v3470
    %v3507 = vpack.c.b16 %v3473, %v3471
    %v3508 = vpack.c.b16 %v3476, %v3474
    %v3509 = vpack.c.b16 %v3477, %v3475
    %3542 = vmatprep.subr.bf16.mxu0 %v3479
    %3543 = vmatpush1.bf16.msra.mxu0 %v3478
    %3544 = vmatprep.subr.bf16.mxu0 %v3481
    %3545 = vmatpush1.bf16.msra.mxu0 %v3480
    %3546 = vmatprep.subr.bf16.mxu0 %v3483
    %3547 = vmatpush1.bf16.msra.mxu0 %v3482
    %3548 = vmatprep.subr.bf16.mxu0 %v3485
    %3549 = vmatpush1.bf16.msra.mxu0 %v3484
    %3550 = vmatprep.subr.bf16.mxu0 %v3487
    %3551 = vmatpush1.bf16.msra.mxu0 %v3486
    %3552 = vmatprep.subr.bf16.mxu0 %v3489
    %3553 = vmatpush1.bf16.msra.mxu0 %v3488
    %3554 = vmatprep.subr.bf16.mxu0 %v3491
    %3555 = vmatpush1.bf16.msra.mxu0 %v3490
    %3556 = vmatprep.subr.bf16.mxu0 %v3493
    %3557 = vmatpush1.bf16.msra.mxu0 %v3492
    %3558 = vmatprep.subr.bf16.mxu0 %v3495
    %3559 = vmatpush1.bf16.msra.mxu0 %v3494
    %3560 = vmatprep.subr.bf16.mxu0 %v3497
    %3561 = vmatpush1.bf16.msra.mxu0 %v3496
    %3562 = vmatprep.subr.bf16.mxu0 %v3499
    %3563 = vmatpush1.bf16.msra.mxu0 %v3498
    %3564 = vmatprep.subr.bf16.mxu0 %v3501
    %3565 = vmatpush1.bf16.msra.mxu0 %v3500
    %3566 = vmatprep.subr.bf16.mxu0 %v3503
    %3567 = vmatpush1.bf16.msra.mxu0 %v3502
    %3568 = vmatprep.subr.bf16.mxu0 %v3505
    %3569 = vmatpush1.bf16.msra.mxu0 %v3504
    %3570 = vmatprep.subr.bf16.mxu0 %v3507
    %3571 = vmatpush1.bf16.msra.mxu0 %v3506
    %3572 = vmatprep.subr.bf16.mxu0 %v3509
    %3573 = vmatpush1.bf16.msra.mxu0 %v3508
    %3574 = vmatprep.mubr.bf16.mxu0 %v2725
    %3575 = vmatmul.mubr.bf16.gmra.mrb[0].mxu0 %v2724
    %v3576 = vpop.f32.mrb[0].mxu0
    %v3577 = vadd.f32 0.0, %v3576
    %v3578 = vpop.f32.mrb[0].mxu0
    %v3579 = vadd.f32 0.0, %v3578
    %v3580 = vpop.f32.mrb[0].mxu0
    %v3581 = vadd.f32 0.0, %v3580
    %v3582 = vpop.f32.mrb[0].mxu0
    %v3583 = vadd.f32 0.0, %v3582
    %3584 = vdwg.mxu0
    %s3585 = scalar_lea.vmem %s8, 32
    %v3586 = vld [vmem:[%s3585] sm:$0xf]
    %v3587 = vld [vmem:[%s3585 + $0x4] sm:$0xf]
    %v3588 = vld [vmem:[%s3585 + $0x8] sm:$0xf]
    %v3589 = vld [vmem:[%s3585 + $0xc] sm:$0xf]
    %v3590 = vpack.c.bf16 %v3581, %v3577
    %v3591 = vpack.c.bf16 %v3583, %v3579
    %v3596 = vunpack.c.l.b16 %v3586
    %v3597 = vunpack.c.l.b16 %v3587
    %v3598 = vunpack.c.l.b16 %v3588
    %v3599 = vunpack.c.l.b16 %v3589
    %v3600 = vpack.c.b16 %v3597, %v3596
    %v3601 = vpack.c.b16 %v3599, %v3598
    %v3603 = vsel %vm3220, %v3600, 0
    %v3606 = vsel %vm3220, %v3601, 0
    %3608 = vmatprep.subr.bf16.mxu0 %v3591
    %3609 = vmatpush1.bf16.msra.mxu0 %v3590
    %3610 = vmatprep.subr.bf16.mxu0 0
    %3611 = vmatpush1.bf16.msra.mxu0 0
    %3612 = vmatprep.subr.bf16.mxu0 0
    %3613 = vmatpush1.bf16.msra.mxu0 0
    %3614 = vmatprep.subr.bf16.mxu0 0
    %3615 = vmatpush1.bf16.msra.mxu0 0
    %3616 = vmatprep.subr.bf16.mxu0 0
    %3617 = vmatpush1.bf16.msra.mxu0 0
    %3618 = vmatprep.subr.bf16.mxu0 0
    %3619 = vmatpush1.bf16.msra.mxu0 0
    %3620 = vmatprep.subr.bf16.mxu0 0
    %3621 = vmatpush1.bf16.msra.mxu0 0
    %3622 = vmatprep.subr.bf16.mxu0 0
    %3623 = vmatpush1.bf16.msra.mxu0 0
    %3624 = vmatprep.subr.bf16.mxu0 0
    %3625 = vmatpush1.bf16.msra.mxu0 0
    %3626 = vmatprep.subr.bf16.mxu0 0
    %3627 = vmatpush1.bf16.msra.mxu0 0
    %3628 = vmatprep.subr.bf16.mxu0 0
    %3629 = vmatpush1.bf16.msra.mxu0 0
    %3630 = vmatprep.subr.bf16.mxu0 0
    %3631 = vmatpush1.bf16.msra.mxu0 0
    %3632 = vmatprep.subr.bf16.mxu0 0
    %3633 = vmatpush1.bf16.msra.mxu0 0
    %3634 = vmatprep.subr.bf16.mxu0 0
    %3635 = vmatpush1.bf16.msra.mxu0 0
    %3636 = vmatprep.subr.bf16.mxu0 0
    %3637 = vmatpush1.bf16.msra.mxu0 0
    %3638 = vmatprep.subr.bf16.mxu0 0
    %3639 = vmatpush1.bf16.msra.mxu0 0
    %3640 = vmatprep.mubr.bf16.mxu0 0
    %3641 = vmatmul.mubr.bf16.gmra.mrb[0].mxu0 %v3603
    %v3642 = vpop.f32.mrb[0].mxu0
    %v3643 = vadd.f32 0.0, %v3642
    %v3644 = vpop.f32.mrb[0].mxu0
    %v3645 = vadd.f32 0.0, %v3644
    %v3646 = vpop.f32.mrb[0].mxu0
    %v3647 = vadd.f32 0.0, %v3646
    %v3648 = vpop.f32.mrb[0].mxu0
    %v3649 = vadd.f32 0.0, %v3648
    %3650 = vmatprep.mubr.bf16.mxu0 0
    %3651 = vmatmul.mubr.bf16.gmra.mrb[0].mxu0 %v3606
    %v3652 = vpop.f32.mrb[0].mxu0
    %v3653 = vadd.f32 0.0, %v3652
    %v3654 = vpop.f32.mrb[0].mxu0
    %v3655 = vadd.f32 0.0, %v3654
    %v3656 = vpop.f32.mrb[0].mxu0
    %v3657 = vadd.f32 0.0, %v3656
    %v3658 = vpop.f32.mrb[0].mxu0
    %v3659 = vadd.f32 0.0, %v3658
    %3660 = vdwg.mxu0
    %v3661 = vadd.f32 %v3331, %v3643
    %v3662 = vadd.f32 %v3333, %v3645
    %v3663 = vadd.f32 %v3335, %v3647
    %v3664 = vadd.f32 %v3337, %v3649
    %v3665 = vadd.f32 %v3341, %v3653
    %v3666 = vadd.f32 %v3343, %v3655
    %v3667 = vadd.f32 %v3345, %v3657
    %v3668 = vadd.f32 %v3347, %v3659
    %s3669 = scalar_lea.vmem %s3, 768
    %v3670 = vld [vmem:[%s3669] sm:$0xff]
    %v3671 = vld [vmem:[%s3669 + $0x8] sm:$0xff]
    %v3672 = vld [vmem:[%s3669 + $0x10] sm:$0xff]
    %v3673 = vld [vmem:[%s3669 + $0x18] sm:$0xff]
    %v3674 = vld [vmem:[%s3669 + $0x20] sm:$0xff]
    %v3675 = vld [vmem:[%s3669 + $0x28] sm:$0xff]
    %v3676 = vld [vmem:[%s3669 + $0x30] sm:$0xff]
    %v3677 = vld [vmem:[%s3669 + $0x38] sm:$0xff]
    %v3678 = vld [vmem:[%s3669 + $0x40] sm:$0xff]
    %v3679 = vld [vmem:[%s3669 + $0x48] sm:$0xff]
    %v3680 = vld [vmem:[%s3669 + $0x50] sm:$0xff]
    %v3681 = vld [vmem:[%s3669 + $0x58] sm:$0xff]
    %v3682 = vld [vmem:[%s3669 + $0x60] sm:$0xff]
    %v3683 = vld [vmem:[%s3669 + $0x68] sm:$0xff]
    %v3684 = vld [vmem:[%s3669 + $0x70] sm:$0xff]
    %v3685 = vld [vmem:[%s3669 + $0x78] sm:$0xff]
    %v3686 = vld [vmem:[%s3669 + $0x80] sm:$0xff]
    %v3687 = vld [vmem:[%s3669 + $0x88] sm:$0xff]
    %v3688 = vld [vmem:[%s3669 + $0x90] sm:$0xff]
    %v3689 = vld [vmem:[%s3669 + $0x98] sm:$0xff]
    %v3690 = vld [vmem:[%s3669 + $0xa0] sm:$0xff]
    %v3691 = vld [vmem:[%s3669 + $0xa8] sm:$0xff]
    %v3692 = vld [vmem:[%s3669 + $0xb0] sm:$0xff]
    %v3693 = vld [vmem:[%s3669 + $0xb8] sm:$0xff]
    %v3694 = vld [vmem:[%s3669 + $0xc0] sm:$0xff]
    %v3695 = vld [vmem:[%s3669 + $0xc8] sm:$0xff]
    %v3696 = vld [vmem:[%s3669 + $0xd0] sm:$0xff]
    %v3697 = vld [vmem:[%s3669 + $0xd8] sm:$0xff]
    %v3698 = vld [vmem:[%s3669 + $0xe0] sm:$0xff]
    %v3699 = vld [vmem:[%s3669 + $0xe8] sm:$0xff]
    %v3700 = vld [vmem:[%s3669 + $0xf0] sm:$0xff]
    %v3701 = vld [vmem:[%s3669 + $0xf8] sm:$0xff]
    %v3734 = vunpack.c.l.b16 %v3670
    %v3735 = vunpack.c.h.b16 %v3670
    %v3736 = vunpack.c.l.b16 %v3671
    %v3737 = vunpack.c.h.b16 %v3671
    %v3738 = vunpack.c.l.b16 %v3672
    %v3739 = vunpack.c.h.b16 %v3672
    %v3740 = vunpack.c.l.b16 %v3673
    %v3741 = vunpack.c.h.b16 %v3673
    %v3742 = vunpack.c.l.b16 %v3674
    %v3743 = vunpack.c.h.b16 %v3674
    %v3744 = vunpack.c.l.b16 %v3675
    %v3745 = vunpack.c.h.b16 %v3675
    %v3746 = vunpack.c.l.b16 %v3676
    %v3747 = vunpack.c.h.b16 %v3676
    %v3748 = vunpack.c.l.b16 %v3677
    %v3749 = vunpack.c.h.b16 %v3677
    %v3750 = vunpack.c.l.b16 %v3678
    %v3751 = vunpack.c.h.b16 %v3678
    %v3752 = vunpack.c.l.b16 %v3679
    %v3753 = vunpack.c.h.b16 %v3679
    %v3754 = vunpack.c.l.b16 %v3680
    %v3755 = vunpack.c.h.b16 %v3680
    %v3756 = vunpack.c.l.b16 %v3681
    %v3757 = vunpack.c.h.b16 %v3681
    %v3758 = vunpack.c.l.b16 %v3682
    %v3759 = vunpack.c.h.b16 %v3682
    %v3760 = vunpack.c.l.b16 %v3683
    %v3761 = vunpack.c.h.b16 %v3683
    %v3762 = vunpack.c.l.b16 %v3684
    %v3763 = vunpack.c.h.b16 %v3684
    %v3764 = vunpack.c.l.b16 %v3685
    %v3765 = vunpack.c.h.b16 %v3685
    %v3766 = vunpack.c.l.b16 %v3686
    %v3767 = vunpack.c.h.b16 %v3686
    %v3768 = vunpack.c.l.b16 %v3687
    %v3769 = vunpack.c.h.b16 %v3687
    %v3770 = vunpack.c.l.b16 %v3688
    %v3771 = vunpack.c.h.b16 %v3688
    %v3772 = vunpack.c.l.b16 %v3689
    %v3773 = vunpack.c.h.b16 %v3689
    %v3774 = vunpack.c.l.b16 %v3690
    %v3775 = vunpack.c.h.b16 %v3690
    %v3776 = vunpack.c.l.b16 %v3691
    %v3777 = vunpack.c.h.b16 %v3691
    %v3778 = vunpack.c.l.b16 %v3692
    %v3779 = vunpack.c.h.b16 %v3692
    %v3780 = vunpack.c.l.b16 %v3693
    %v3781 = vunpack.c.h.b16 %v3693
    %v3782 = vunpack.c.l.b16 %v3694
    %v3783 = vunpack.c.h.b16 %v3694
    %v3784 = vunpack.c.l.b16 %v3695
    %v3785 = vunpack.c.h.b16 %v3695
    %v3786 = vunpack.c.l.b16 %v3696
    %v3787 = vunpack.c.h.b16 %v3696
    %v3788 = vunpack.c.l.b16 %v3697
    %v3789 = vunpack.c.h.b16 %v3697
    %v3790 = vunpack.c.l.b16 %v3698
    %v3791 = vunpack.c.h.b16 %v3698
    %v3792 = vunpack.c.l.b16 %v3699
    %v3793 = vunpack.c.h.b16 %v3699
    %v3794 = vunpack.c.l.b16 %v3700
    %v3795 = vunpack.c.h.b16 %v3700
    %v3796 = vunpack.c.l.b16 %v3701
    %v3797 = vunpack.c.h.b16 %v3701
    %v3798 = vpack.c.b16 %v3736, %v3734
    %v3799 = vpack.c.b16 %v3737, %v3735
    %v3800 = vpack.c.b16 %v3740, %v3738
    %v3801 = vpack.c.b16 %v3741, %v3739
    %v3802 = vpack.c.b16 %v3744, %v3742
    %v3803 = vpack.c.b16 %v3745, %v3743
    %v3804 = vpack.c.b16 %v3748, %v3746
    %v3805 = vpack.c.b16 %v3749, %v3747
    %v3806 = vpack.c.b16 %v3752, %v3750
    %v3807 = vpack.c.b16 %v3753, %v3751
    %v3808 = vpack.c.b16 %v3756, %v3754
    %v3809 = vpack.c.b16 %v3757, %v3755
    %v3810 = vpack.c.b16 %v3760, %v3758
    %v3811 = vpack.c.b16 %v3761, %v3759
    %v3812 = vpack.c.b16 %v3764, %v3762
    %v3813 = vpack.c.b16 %v3765, %v3763
    %v3814 = vpack.c.b16 %v3768, %v3766
    %v3815 = vpack.c.b16 %v3769, %v3767
    %v3816 = vpack.c.b16 %v3772, %v3770
    %v3817 = vpack.c.b16 %v3773, %v3771
    %v3818 = vpack.c.b16 %v3776, %v3774
    %v3819 = vpack.c.b16 %v3777, %v3775
    %v3820 = vpack.c.b16 %v3780, %v3778
    %v3821 = vpack.c.b16 %v3781, %v3779
    %v3822 = vpack.c.b16 %v3784, %v3782
    %v3823 = vpack.c.b16 %v3785, %v3783
    %v3824 = vpack.c.b16 %v3788, %v3786
    %v3825 = vpack.c.b16 %v3789, %v3787
    %v3826 = vpack.c.b16 %v3792, %v3790
    %v3827 = vpack.c.b16 %v3793, %v3791
    %v3828 = vpack.c.b16 %v3796, %v3794
    %v3829 = vpack.c.b16 %v3797, %v3795
    %3862 = vmatprep.subr.bf16.mxu0 %v3799
    %3863 = vmatpush1.bf16.msra.mxu0 %v3798
    %3864 = vmatprep.subr.bf16.mxu0 %v3801
    %3865 = vmatpush1.bf16.msra.mxu0 %v3800
    %3866 = vmatprep.subr.bf16.mxu0 %v3803
    %3867 = vmatpush1.bf16.msra.mxu0 %v3802
    %3868 = vmatprep.subr.bf16.mxu0 %v3805
    %3869 = vmatpush1.bf16.msra.mxu0 %v3804
    %3870 = vmatprep.subr.bf16.mxu0 %v3807
    %3871 = vmatpush1.bf16.msra.mxu0 %v3806
    %3872 = vmatprep.subr.bf16.mxu0 %v3809
    %3873 = vmatpush1.bf16.msra.mxu0 %v3808
    %3874 = vmatprep.subr.bf16.mxu0 %v3811
    %3875 = vmatpush1.bf16.msra.mxu0 %v3810
    %3876 = vmatprep.subr.bf16.mxu0 %v3813
    %3877 = vmatpush1.bf16.msra.mxu0 %v3812
    %3878 = vmatprep.subr.bf16.mxu0 %v3815
    %3879 = vmatpush1.bf16.msra.mxu0 %v3814
    %3880 = vmatprep.subr.bf16.mxu0 %v3817
    %3881 = vmatpush1.bf16.msra.mxu0 %v3816
    %3882 = vmatprep.subr.bf16.mxu0 %v3819
    %3883 = vmatpush1.bf16.msra.mxu0 %v3818
    %3884 = vmatprep.subr.bf16.mxu0 %v3821
    %3885 = vmatpush1.bf16.msra.mxu0 %v3820
    %3886 = vmatprep.subr.bf16.mxu0 %v3823
    %3887 = vmatpush1.bf16.msra.mxu0 %v3822
    %3888 = vmatprep.subr.bf16.mxu0 %v3825
    %3889 = vmatpush1.bf16.msra.mxu0 %v3824
    %3890 = vmatprep.subr.bf16.mxu0 %v3827
    %3891 = vmatpush1.bf16.msra.mxu0 %v3826
    %3892 = vmatprep.subr.bf16.mxu0 %v3829
    %3893 = vmatpush1.bf16.msra.mxu0 %v3828
    %3894 = vmatprep.mubr.bf16.mxu0 %v2725
    %3895 = vmatmul.mubr.bf16.gmra.mrb[0].mxu0 %v2724
    %v3896 = vpop.f32.mrb[0].mxu0
    %v3897 = vadd.f32 0.0, %v3896
    %v3898 = vpop.f32.mrb[0].mxu0
    %v3899 = vadd.f32 0.0, %v3898
    %v3900 = vpop.f32.mrb[0].mxu0
    %v3901 = vadd.f32 0.0, %v3900
    %v3902 = vpop.f32.mrb[0].mxu0
    %v3903 = vadd.f32 0.0, %v3902
    %3904 = vdwg.mxu0
    %s3905 = scalar_lea.vmem %s8, 48
    %v3906 = vld [vmem:[%s3905] sm:$0xf]
    %v3907 = vld [vmem:[%s3905 + $0x4] sm:$0xf]
    %v3908 = vld [vmem:[%s3905 + $0x8] sm:$0xf]
    %v3909 = vld [vmem:[%s3905 + $0xc] sm:$0xf]
    %v3910 = vpack.c.bf16 %v3901, %v3897
    %v3911 = vpack.c.bf16 %v3903, %v3899
    %v3916 = vunpack.c.l.b16 %v3906
    %v3917 = vunpack.c.l.b16 %v3907
    %v3918 = vunpack.c.l.b16 %v3908
    %v3919 = vunpack.c.l.b16 %v3909
    %v3920 = vpack.c.b16 %v3917, %v3916
    %v3921 = vpack.c.b16 %v3919, %v3918
    %v3923 = vsel %vm3220, %v3920, 0
    %v3926 = vsel %vm3220, %v3921, 0
    %3928 = vmatprep.subr.bf16.mxu0 %v3911
    %3929 = vmatpush1.bf16.msra.mxu0 %v3910
    %3930 = vmatprep.subr.bf16.mxu0 0
    %3931 = vmatpush1.bf16.msra.mxu0 0
    %3932 = vmatprep.subr.bf16.mxu0 0
    %3933 = vmatpush1.bf16.msra.mxu0 0
    %3934 = vmatprep.subr.bf16.mxu0 0
    %3935 = vmatpush1.bf16.msra.mxu0 0
    %3936 = vmatprep.subr.bf16.mxu0 0
    %3937 = vmatpush1.bf16.msra.mxu0 0
    %3938 = vmatprep.subr.bf16.mxu0 0
    %3939 = vmatpush1.bf16.msra.mxu0 0
    %3940 = vmatprep.subr.bf16.mxu0 0
    %3941 = vmatpush1.bf16.msra.mxu0 0
    %3942 = vmatprep.subr.bf16.mxu0 0
    %3943 = vmatpush1.bf16.msra.mxu0 0
    %3944 = vmatprep.subr.bf16.mxu0 0
    %3945 = vmatpush1.bf16.msra.mxu0 0
    %3946 = vmatprep.subr.bf16.mxu0 0
    %3947 = vmatpush1.bf16.msra.mxu0 0
    %3948 = vmatprep.subr.bf16.mxu0 0
    %3949 = vmatpush1.bf16.msra.mxu0 0
    %3950 = vmatprep.subr.bf16.mxu0 0
    %3951 = vmatpush1.bf16.msra.mxu0 0
    %3952 = vmatprep.subr.bf16.mxu0 0
    %3953 = vmatpush1.bf16.msra.mxu0 0
    %3954 = vmatprep.subr.bf16.mxu0 0
    %3955 = vmatpush1.bf16.msra.mxu0 0
    %3956 = vmatprep.subr.bf16.mxu0 0
    %3957 = vmatpush1.bf16.msra.mxu0 0
    %3958 = vmatprep.subr.bf16.mxu0 0
    %3959 = vmatpush1.bf16.msra.mxu0 0
    %3960 = vmatprep.mubr.bf16.mxu0 0
    %3961 = vmatmul.mubr.bf16.gmra.mrb[0].mxu0 %v3923
    %v3962 = vpop.f32.mrb[0].mxu0
    %v3963 = vadd.f32 0.0, %v3962
    %v3964 = vpop.f32.mrb[0].mxu0
    %v3965 = vadd.f32 0.0, %v3964
    %v3966 = vpop.f32.mrb[0].mxu0
    %v3967 = vadd.f32 0.0, %v3966
    %v3968 = vpop.f32.mrb[0].mxu0
    %v3969 = vadd.f32 0.0, %v3968
    %3970 = vmatprep.mubr.bf16.mxu0 0
    %3971 = vmatmul.mubr.bf16.gmra.mrb[0].mxu0 %v3926
    %v3972 = vpop.f32.mrb[0].mxu0
    %v3973 = vadd.f32 0.0, %v3972
    %v3974 = vpop.f32.mrb[0].mxu0
    %v3975 = vadd.f32 0.0, %v3974
    %v3976 = vpop.f32.mrb[0].mxu0
    %v3977 = vadd.f32 0.0, %v3976
    %v3978 = vpop.f32.mrb[0].mxu0
    %v3979 = vadd.f32 0.0, %v3978
    %3980 = vdwg.mxu0
    %v3981 = vadd.f32 %v3661, %v3963
    %v3982 = vadd.f32 %v3662, %v3965
    %v3983 = vadd.f32 %v3663, %v3967
    %v3984 = vadd.f32 %v3664, %v3969
    %v3985 = vadd.f32 %v3665, %v3973
    %v3986 = vadd.f32 %v3666, %v3975
    %v3987 = vadd.f32 %v3667, %v3977
    %v3988 = vadd.f32 %v3668, %v3979
    %v3989 = vld [vmem:[#allocation7] sm:$0x1]
    %v3990 = vld [vmem:[#allocation13] sm:$0x1]
    %v3991 = vld [vmem:[%s21] sm:$0xff]
    %v3992 = vld [vmem:[%s21 + $0x8] sm:$0xff]
    %v3993 = vld [vmem:[%s21 + $0x10] sm:$0xff]
    %v3994 = vld [vmem:[%s21 + $0x18] sm:$0xff]
    %v3995 = vld [vmem:[%s21 + $0x20] sm:$0xff]
    %v3996 = vld [vmem:[%s21 + $0x28] sm:$0xff]
    %v3997 = vld [vmem:[%s21 + $0x30] sm:$0xff]
    %v3998 = vld [vmem:[%s21 + $0x38] sm:$0xff]
    %v3999 = vld [vmem:[%s21 + $0x40] sm:$0xff]
    %v4000 = vld [vmem:[%s21 + $0x48] sm:$0xff]
    %v4001 = vld [vmem:[%s21 + $0x50] sm:$0xff]
    %v4002 = vld [vmem:[%s21 + $0x58] sm:$0xff]
    %v4003 = vld [vmem:[%s21 + $0x60] sm:$0xff]
    %v4004 = vld [vmem:[%s21 + $0x68] sm:$0xff]
    %v4005 = vld [vmem:[%s21 + $0x70] sm:$0xff]
    %v4006 = vld [vmem:[%s21 + $0x78] sm:$0xff]
    %v4007 = vld [vmem:[%s21 + $0x80] sm:$0xff]
    %v4008 = vld [vmem:[%s21 + $0x88] sm:$0xff]
    %v4009 = vld [vmem:[%s21 + $0x90] sm:$0xff]
    %v4010 = vld [vmem:[%s21 + $0x98] sm:$0xff]
    %v4011 = vld [vmem:[%s21 + $0xa0] sm:$0xff]
    %v4012 = vld [vmem:[%s21 + $0xa8] sm:$0xff]
    %v4013 = vld [vmem:[%s21 + $0xb0] sm:$0xff]
    %v4014 = vld [vmem:[%s21 + $0xb8] sm:$0xff]
    %v4015 = vld [vmem:[%s21 + $0xc0] sm:$0xff]
    %v4016 = vld [vmem:[%s21 + $0xc8] sm:$0xff]
    %v4017 = vld [vmem:[%s21 + $0xd0] sm:$0xff]
    %v4018 = vld [vmem:[%s21 + $0xd8] sm:$0xff]
    %v4019 = vld [vmem:[%s21 + $0xe0] sm:$0xff]
    %v4020 = vld [vmem:[%s21 + $0xe8] sm:$0xff]
    %v4021 = vld [vmem:[%s21 + $0xf0] sm:$0xff]
    %v4022 = vld [vmem:[%s21 + $0xf8] sm:$0xff]
    %v4023 = vld [vmem:[#allocation19] sm:$0xff]
    %v4024 = vld [vmem:[#allocation19 + $0x8] sm:$0xff]
    %v4025 = vld [vmem:[#allocation19 + $0x10] sm:$0xff]
    %v4026 = vld [vmem:[#allocation19 + $0x18] sm:$0xff]
    %v4027 = vadd.f32 %v3981, %v3983
    %v4028 = vadd.f32 %v4027, %v3985
    %v4029 = vadd.f32 %v4028, %v3987
    %v4030 = vrot.slane %v4029, 4
    %v4031 = vadd.f32 %v4029, %v4030
    %v4032 = vrot.slane %v4031, 2
    %v4033 = vadd.f32 %v4031, %v4032
    %v4034 = vrot.slane %v4033, 1
    %v4035 = vadd.f32 %v4033, %v4034
    %v4036 = vadd.f32 %v3982, %v3984
    %v4037 = vadd.f32 %v4036, %v3986
    %v4038 = vadd.f32 %v4037, %v3988
    %v4039 = vrot.slane %v4038, 4
    %v4040 = vadd.f32 %v4038, %v4039
    %v4041 = vrot.slane %v4040, 2
    %v4042 = vadd.f32 %v4040, %v4041
    %v4043 = vrot.slane %v4042, 1
    %v4044 = vadd.f32 %v4042, %v4043
    %v4045 = vmul.f32 %v3981, %v3981
    %v4046 = vmul.f32 %v3982, %v3982
    %v4047 = vmul.f32 %v3983, %v3983
    %v4048 = vmul.f32 %v3984, %v3984
    %v4049 = vmul.f32 %v3985, %v3985
    %v4050 = vmul.f32 %v3986, %v3986
    %v4051 = vmul.f32 %v3987, %v3987
    %v4052 = vmul.f32 %v3988, %v3988
    %v4053 = vadd.f32 %v4045, %v4047
    %v4054 = vadd.f32 %v4053, %v4049
    %v4055 = vadd.f32 %v4054, %v4051
    %v4056 = vrot.slane %v4055, 4
    %v4057 = vadd.f32 %v4055, %v4056
    %v4058 = vrot.slane %v4057, 2
    %v4059 = vadd.f32 %v4057, %v4058
    %v4060 = vrot.slane %v4059, 1
    %v4061 = vadd.f32 %v4059, %v4060
    %v4062 = vadd.f32 %v4046, %v4048
    %v4063 = vadd.f32 %v4062, %v4050
    %v4064 = vadd.f32 %v4063, %v4052
    %v4065 = vrot.slane %v4064, 4
    %v4066 = vadd.f32 %v4064, %v4065
    %v4067 = vrot.slane %v4066, 2
    %v4068 = vadd.f32 %v4066, %v4067
    %v4069 = vrot.slane %v4068, 1
    %v4070 = vadd.f32 %v4068, %v4069
    %4071 = vmatprep.subr.mxu0 0.0
    %4072 = vmatpush1.msra.mxu0 %v3991
    %4073 = vmatprep.subr.mxu0 0.0
    %4074 = vmatpush1.msra.mxu0 %v3992
    %4075 = vmatprep.subr.mxu0 0.0
    %4076 = vmatpush1.msra.mxu0 %v3993
    %4077 = vmatprep.subr.mxu0 0.0
    %4078 = vmatpush1.msra.mxu0 %v3994
    %4079 = vmatprep.subr.mxu0 0.0
    %4080 = vmatpush1.msra.mxu0 %v3995
    %4081 = vmatprep.subr.mxu0 0.0
    %4082 = vmatpush1.msra.mxu0 %v3996
    %4083 = vmatprep.subr.mxu0 0.0
    %4084 = vmatpush1.msra.mxu0 %v3997
    %4085 = vmatprep.subr.mxu0 0.0
    %4086 = vmatpush1.msra.mxu0 %v3998
    %4087 = vmatprep.subr.mxu0 0.0
    %4088 = vmatpush1.msra.mxu0 %v3999
    %4089 = vmatprep.subr.mxu0 0.0
    %4090 = vmatpush1.msra.mxu0 %v4000
    %4091 = vmatprep.subr.mxu0 0.0
    %4092 = vmatpush1.msra.mxu0 %v4001
    %4093 = vmatprep.subr.mxu0 0.0
    %4094 = vmatpush1.msra.mxu0 %v4002
    %4095 = vmatprep.subr.mxu0 0.0
    %4096 = vmatpush1.msra.mxu0 %v4003
    %4097 = vmatprep.subr.mxu0 0.0
    %4098 = vmatpush1.msra.mxu0 %v4004
    %4099 = vmatprep.subr.mxu0 0.0
    %4100 = vmatpush1.msra.mxu0 %v4005
    %4101 = vmatprep.subr.mxu0 0.0
    %4102 = vmatpush1.msra.mxu0 %v4006
    %4103 = vmatprep.subr.mxu0 0.0
    %4104 = vmatpush1.msra.mxu0 %v4007
    %4105 = vmatprep.subr.mxu0 0.0
    %4106 = vmatpush1.msra.mxu0 %v4008
    %4107 = vmatprep.subr.mxu0 0.0
    %4108 = vmatpush1.msra.mxu0 %v4009
    %4109 = vmatprep.subr.mxu0 0.0
    %4110 = vmatpush1.msra.mxu0 %v4010
    %4111 = vmatprep.subr.mxu0 0.0
    %4112 = vmatpush1.msra.mxu0 %v4011
    %4113 = vmatprep.subr.mxu0 0.0
    %4114 = vmatpush1.msra.mxu0 %v4012
    %4115 = vmatprep.subr.mxu0 0.0
    %4116 = vmatpush1.msra.mxu0 %v4013
    %4117 = vmatprep.subr.mxu0 0.0
    %4118 = vmatpush1.msra.mxu0 %v4014
    %4119 = vmatprep.subr.mxu0 0.0
    %4120 = vmatpush1.msra.mxu0 %v4015
    %4121 = vmatprep.subr.mxu0 0.0
    %4122 = vmatpush1.msra.mxu0 %v4016
    %4123 = vmatprep.subr.mxu0 0.0
    %4124 = vmatpush1.msra.mxu0 %v4017
    %4125 = vmatprep.subr.mxu0 0.0
    %4126 = vmatpush1.msra.mxu0 %v4018
    %4127 = vmatprep.subr.mxu0 0.0
    %4128 = vmatpush1.msra.mxu0 %v4019
    %4129 = vmatprep.subr.mxu0 0.0
    %4130 = vmatpush1.msra.mxu0 %v4020
    %4131 = vmatprep.subr.mxu0 0.0
    %4132 = vmatpush1.msra.mxu0 %v4021
    %4133 = vmatprep.subr.mxu0 0.0
    %4134 = vmatpush1.msra.mxu0 %v4022
    %4135 = vmatprep.mubr.f32.mxu0 %v4044
    %4136 = vmatmul.mubr.f32.gmra.mrb[0].mxu0 %v4035
    %v4137 = vpop.f32.mrb[0].mxu0
    %v4138 = vadd.f32 0.0, %v4137
    %v4139 = vpop.f32.mrb[0].mxu0
    %4140 = vdwg.mxu0
    %4141 = vmatprep.subr.mxu0 0.0
    %4142 = vmatpush1.msra.mxu0 %v3991
    %4143 = vmatprep.subr.mxu0 0.0
    %4144 = vmatpush1.msra.mxu0 %v3992
    %4145 = vmatprep.subr.mxu0 0.0
    %4146 = vmatpush1.msra.mxu0 %v3993
    %4147 = vmatprep.subr.mxu0 0.0
    %4148 = vmatpush1.msra.mxu0 %v3994
    %4149 = vmatprep.subr.mxu0 0.0
    %4150 = vmatpush1.msra.mxu0 %v3995
    %4151 = vmatprep.subr.mxu0 0.0
    %4152 = vmatpush1.msra.mxu0 %v3996
    %4153 = vmatprep.subr.mxu0 0.0
    %4154 = vmatpush1.msra.mxu0 %v3997
    %4155 = vmatprep.subr.mxu0 0.0
    %4156 = vmatpush1.msra.mxu0 %v3998
    %4157 = vmatprep.subr.mxu0 0.0
    %4158 = vmatpush1.msra.mxu0 %v3999
    %4159 = vmatprep.subr.mxu0 0.0
    %4160 = vmatpush1.msra.mxu0 %v4000
    %4161 = vmatprep.subr.mxu0 0.0
    %4162 = vmatpush1.msra.mxu0 %v4001
    %4163 = vmatprep.subr.mxu0 0.0
    %4164 = vmatpush1.msra.mxu0 %v4002
    %4165 = vmatprep.subr.mxu0 0.0
    %4166 = vmatpush1.msra.mxu0 %v4003
    %4167 = vmatprep.subr.mxu0 0.0
    %4168 = vmatpush1.msra.mxu0 %v4004
    %4169 = vmatprep.subr.mxu0 0.0
    %4170 = vmatpush1.msra.mxu0 %v4005
    %4171 = vmatprep.subr.mxu0 0.0
    %4172 = vmatpush1.msra.mxu0 %v4006
    %4173 = vmatprep.subr.mxu0 0.0
    %4174 = vmatpush1.msra.mxu0 %v4007
    %4175 = vmatprep.subr.mxu0 0.0
    %4176 = vmatpush1.msra.mxu0 %v4008
    %4177 = vmatprep.subr.mxu0 0.0
    %4178 = vmatpush1.msra.mxu0 %v4009
    %4179 = vmatprep.subr.mxu0 0.0
    %4180 = vmatpush1.msra.mxu0 %v4010
    %4181 = vmatprep.subr.mxu0 0.0
    %4182 = vmatpush1.msra.mxu0 %v4011
    %4183 = vmatprep.subr.mxu0 0.0
    %4184 = vmatpush1.msra.mxu0 %v4012
    %4185 = vmatprep.subr.mxu0 0.0
    %4186 = vmatpush1.msra.mxu0 %v4013
    %4187 = vmatprep.subr.mxu0 0.0
    %4188 = vmatpush1.msra.mxu0 %v4014
    %4189 = vmatprep.subr.mxu0 0.0
    %4190 = vmatpush1.msra.mxu0 %v4015
    %4191 = vmatprep.subr.mxu0 0.0
    %4192 = vmatpush1.msra.mxu0 %v4016
    %4193 = vmatprep.subr.mxu0 0.0
    %4194 = vmatpush1.msra.mxu0 %v4017
    %4195 = vmatprep.subr.mxu0 0.0
    %4196 = vmatpush1.msra.mxu0 %v4018
    %4197 = vmatprep.subr.mxu0 0.0
    %4198 = vmatpush1.msra.mxu0 %v4019
    %4199 = vmatprep.subr.mxu0 0.0
    %4200 = vmatpush1.msra.mxu0 %v4020
    %4201 = vmatprep.subr.mxu0 0.0
    %4202 = vmatpush1.msra.mxu0 %v4021
    %4203 = vmatprep.subr.mxu0 0.0
    %4204 = vmatpush1.msra.mxu0 %v4022
    %4205 = vmatprep.mubr.f32.mxu0 %v4070
    %4206 = vmatmul.mubr.f32.gmra.mrb[0].mxu0 %v4061
    %v4207 = vpop.f32.mrb[0].mxu0
    %v4208 = vadd.f32 0.0, %v4207
    %v4209 = vpop.f32.mrb[0].mxu0
    %4210 = vdwg.mxu0
    %v4211 = vmul.f32 %v4138, 0.001953125
    %v4212 = vmul.f32 %v4208, 0.001953125
    %v4213 = vmul.f32 %v4211, %v4211
    %v4214 = vsub.f32 %v4212, %v4213
    %v4215 = vadd.f32 %v4214, 1e-05
    %v4216 = vrsqrt.pop %v4215
    %v4217 = vmul.f32 %v3989, %v4216
    %v4218 = vmul.f32 %v4211, %v4217
    %v4219 = vsub.f32 %v3990, %v4218
    %v4221 = vsel %vm3220, %v4217, 0
    %4223 = vmatprep.subr.mxu0 %v4024
    %4224 = vmatpush1.msra.mxu0 %v4023
    %4225 = vmatprep.subr.mxu0 %v4026
    %4226 = vmatpush1.msra.mxu0 %v4025
    %4227 = vmatprep.subr.mxu0 0.0
    %4228 = vmatpush1.msra.mxu0 0.0
    %4229 = vmatprep.subr.mxu0 0.0
    %4230 = vmatpush1.msra.mxu0 0.0
    %4231 = vmatprep.subr.mxu0 0.0
    %4232 = vmatpush1.msra.mxu0 0.0
    %4233 = vmatprep.subr.mxu0 0.0
    %4234 = vmatpush1.msra.mxu0 0.0
    %4235 = vmatprep.subr.mxu0 0.0
    %4236 = vmatpush1.msra.mxu0 0.0
    %4237 = vmatprep.subr.mxu0 0.0
    %4238 = vmatpush1.msra.mxu0 0.0
    %4239 = vmatprep.subr.mxu0 0.0
    %4240 = vmatpush1.msra.mxu0 0.0
    %4241 = vmatprep.subr.mxu0 0.0
    %4242 = vmatpush1.msra.mxu0 0.0
    %4243 = vmatprep.subr.mxu0 0.0
    %4244 = vmatpush1.msra.mxu0 0.0
    %4245 = vmatprep.subr.mxu0 0.0
    %4246 = vmatpush1.msra.mxu0 0.0
    %4247 = vmatprep.subr.mxu0 0.0
    %4248 = vmatpush1.msra.mxu0 0.0
    %4249 = vmatprep.subr.mxu0 0.0
    %4250 = vmatpush1.msra.mxu0 0.0
    %4251 = vmatprep.subr.mxu0 0.0
    %4252 = vmatpush1.msra.mxu0 0.0
    %4253 = vmatprep.subr.mxu0 0.0
    %4254 = vmatpush1.msra.mxu0 0.0
    %4255 = vmatprep.subr.mxu0 0.0
    %4256 = vmatpush1.msra.mxu0 0.0
    %4257 = vmatprep.subr.mxu0 0.0
    %4258 = vmatpush1.msra.mxu0 0.0
    %4259 = vmatprep.subr.mxu0 0.0
    %4260 = vmatpush1.msra.mxu0 0.0
    %4261 = vmatprep.subr.mxu0 0.0
    %4262 = vmatpush1.msra.mxu0 0.0
    %4263 = vmatprep.subr.mxu0 0.0
    %4264 = vmatpush1.msra.mxu0 0.0
    %4265 = vmatprep.subr.mxu0 0.0
    %4266 = vmatpush1.msra.mxu0 0.0
    %4267 = vmatprep.subr.mxu0 0.0
    %4268 = vmatpush1.msra.mxu0 0.0
    %4269 = vmatprep.subr.mxu0 0.0
    %4270 = vmatpush1.msra.mxu0 0.0
    %4271 = vmatprep.subr.mxu0 0.0
    %4272 = vmatpush1.msra.mxu0 0.0
    %4273 = vmatprep.subr.mxu0 0.0
    %4274 = vmatpush1.msra.mxu0 0.0
    %4275 = vmatprep.subr.mxu0 0.0
    %4276 = vmatpush1.msra.mxu0 0.0
    %4277 = vmatprep.subr.mxu0 0.0
    %4278 = vmatpush1.msra.mxu0 0.0
    %4279 = vmatprep.subr.mxu0 0.0
    %4280 = vmatpush1.msra.mxu0 0.0
    %4281 = vmatprep.subr.mxu0 0.0
    %4282 = vmatpush1.msra.mxu0 0.0
    %4283 = vmatprep.subr.mxu0 0.0
    %4284 = vmatpush1.msra.mxu0 0.0
    %4285 = vmatprep.subr.mxu0 0.0
    %4286 = vmatpush1.msra.mxu0 0.0
    %4287 = vmatprep.mubr.f32.mxu0 0.0
    %4288 = vmatmul.mubr.f32.gmra.mrb[0].mxu0 %v4221
    %v4289 = vpop.f32.mrb[0].mxu0
    %v4290 = vadd.f32 0.0, %v4289
    %v4291 = vpop.f32.mrb[0].mxu0
    %v4292 = vadd.f32 0.0, %v4291
    %4293 = vdwg.mxu0
    %v4295 = vsel %vm3220, %v4219, 0
    %4297 = vmatprep.subr.mxu0 %v4024
    %4298 = vmatpush1.msra.mxu0 %v4023
    %4299 = vmatprep.subr.mxu0 %v4026
    %4300 = vmatpush1.msra.mxu0 %v4025
    %4301 = vmatprep.subr.mxu0 0.0
    %4302 = vmatpush1.msra.mxu0 0.0
    %4303 = vmatprep.subr.mxu0 0.0
    %4304 = vmatpush1.msra.mxu0 0.0
    %4305 = vmatprep.subr.mxu0 0.0
    %4306 = vmatpush1.msra.mxu0 0.0
    %4307 = vmatprep.subr.mxu0 0.0
    %4308 = vmatpush1.msra.mxu0 0.0
    %4309 = vmatprep.subr.mxu0 0.0
    %4310 = vmatpush1.msra.mxu0 0.0
    %4311 = vmatprep.subr.mxu0 0.0
    %4312 = vmatpush1.msra.mxu0 0.0
    %4313 = vmatprep.subr.mxu0 0.0
    %4314 = vmatpush1.msra.mxu0 0.0
    %4315 = vmatprep.subr.mxu0 0.0
    %4316 = vmatpush1.msra.mxu0 0.0
    %4317 = vmatprep.subr.mxu0 0.0
    %4318 = vmatpush1.msra.mxu0 0.0
    %4319 = vmatprep.subr.mxu0 0.0
    %4320 = vmatpush1.msra.mxu0 0.0
    %4321 = vmatprep.subr.mxu0 0.0
    %4322 = vmatpush1.msra.mxu0 0.0
    %4323 = vmatprep.subr.mxu0 0.0
    %4324 = vmatpush1.msra.mxu0 0.0
    %4325 = vmatprep.subr.mxu0 0.0
    %4326 = vmatpush1.msra.mxu0 0.0
    %4327 = vmatprep.subr.mxu0 0.0
    %4328 = vmatpush1.msra.mxu0 0.0
    %4329 = vmatprep.subr.mxu0 0.0
    %4330 = vmatpush1.msra.mxu0 0.0
    %4331 = vmatprep.subr.mxu0 0.0
    %4332 = vmatpush1.msra.mxu0 0.0
    %4333 = vmatprep.subr.mxu0 0.0
    %4334 = vmatpush1.msra.mxu0 0.0
    %4335 = vmatprep.subr.mxu0 0.0
    %4336 = vmatpush1.msra.mxu0 0.0
    %4337 = vmatprep.subr.mxu0 0.0
    %4338 = vmatpush1.msra.mxu0 0.0
    %4339 = vmatprep.subr.mxu0 0.0
    %4340 = vmatpush1.msra.mxu0 0.0
    %4341 = vmatprep.subr.mxu0 0.0
    %4342 = vmatpush1.msra.mxu0 0.0
    %4343 = vmatprep.subr.mxu0 0.0
    %4344 = vmatpush1.msra.mxu0 0.0
    %4345 = vmatprep.subr.mxu0 0.0
    %4346 = vmatpush1.msra.mxu0 0.0
    %4347 = vmatprep.subr.mxu0 0.0
    %4348 = vmatpush1.msra.mxu0 0.0
    %4349 = vmatprep.subr.mxu0 0.0
    %4350 = vmatpush1.msra.mxu0 0.0
    %4351 = vmatprep.subr.mxu0 0.0
    %4352 = vmatpush1.msra.mxu0 0.0
    %4353 = vmatprep.subr.mxu0 0.0
    %4354 = vmatpush1.msra.mxu0 0.0
    %4355 = vmatprep.subr.mxu0 0.0
    %4356 = vmatpush1.msra.mxu0 0.0
    %4357 = vmatprep.subr.mxu0 0.0
    %4358 = vmatpush1.msra.mxu0 0.0
    %4359 = vmatprep.subr.mxu0 0.0
    %4360 = vmatpush1.msra.mxu0 0.0
    %4361 = vmatprep.mubr.f32.mxu0 0.0
    %4362 = vmatmul.mubr.f32.gmra.mrb[0].mxu0 %v4295
    %v4363 = vpop.f32.mrb[0].mxu0
    %v4364 = vadd.f32 0.0, %v4363
    %v4365 = vpop.f32.mrb[0].mxu0
    %v4366 = vadd.f32 0.0, %v4365
    %4367 = vdwg.mxu0
    %v4368 = vlaneseq
    %v4369 = vshrl.u32 %v4368, 7
    %v4370 = vsub.s32 0, %v4369
    %v4371 = vrot.slane %v4290, %v4370
    %v4372 = vlaneseq
    %v4373 = vshrl.u32 %v4372, 7
    %v4374 = vsub.s32 0, %v4373
    %v4375 = vrot.slane %v4292, %v4374
    %v4376 = vmul.f32 %v3981, %v4371
    %v4377 = vmul.f32 %v3982, %v4375
    %v4378 = vmul.f32 %v3983, %v4371
    %v4379 = vmul.f32 %v3984, %v4375
    %v4380 = vmul.f32 %v3985, %v4371
    %v4381 = vmul.f32 %v3986, %v4375
    %v4382 = vmul.f32 %v3987, %v4371
    %v4383 = vmul.f32 %v3988, %v4375
    %v4384 = vlaneseq
    %v4385 = vshrl.u32 %v4384, 7
    %v4386 = vsub.s32 0, %v4385
    %v4387 = vrot.slane %v4364, %v4386
    %v4388 = vlaneseq
    %v4389 = vshrl.u32 %v4388, 7
    %v4390 = vsub.s32 0, %v4389
    %v4391 = vrot.slane %v4366, %v4390
    %v4392 = vadd.f32 %v4376, %v4387
    %v4393 = vadd.f32 %v4377, %v4391
    %v4394 = vadd.f32 %v4378, %v4387
    %v4395 = vadd.f32 %v4379, %v4391
    %v4396 = vadd.f32 %v4380, %v4387
    %v4397 = vadd.f32 %v4381, %v4391
    %v4398 = vadd.f32 %v4382, %v4387
    %v4399 = vadd.f32 %v4383, %v4391
    %v4400 = vmax.f32 %v4392, 0.0
    %v4401 = vmax.f32 %v4393, 0.0
    %v4402 = vmax.f32 %v4394, 0.0
    %v4403 = vmax.f32 %v4395, 0.0
    %v4404 = vmax.f32 %v4396, 0.0
    %v4405 = vmax.f32 %v4397, 0.0
    %v4406 = vmax.f32 %v4398, 0.0
    %v4407 = vmax.f32 %v4399, 0.0
    %v4408 = vpack.c.bf16 %v4402, %v4400
    %v4409 = vpack.c.bf16 %v4403, %v4401
    %v4410 = vpack.c.bf16 %v4406, %v4404
    %v4411 = vpack.c.bf16 %v4407, %v4405
    %v4412 = vld [vmem:[%s4] sm:$0xff]
    %v4413 = vld [vmem:[%s4 + $0x8] sm:$0xff]
    %v4414 = vld [vmem:[%s4 + $0x10] sm:$0xff]
    %v4415 = vld [vmem:[%s4 + $0x18] sm:$0xff]
    %v4416 = vld [vmem:[%s4 + $0x20] sm:$0xff]
    %v4417 = vld [vmem:[%s4 + $0x28] sm:$0xff]
    %v4418 = vld [vmem:[%s4 + $0x30] sm:$0xff]
    %v4419 = vld [vmem:[%s4 + $0x38] sm:$0xff]
    %v4420 = vld [vmem:[%s4 + $0x40] sm:$0xff]
    %v4421 = vld [vmem:[%s4 + $0x48] sm:$0xff]
    %v4422 = vld [vmem:[%s4 + $0x50] sm:$0xff]
    %v4423 = vld [vmem:[%s4 + $0x58] sm:$0xff]
    %v4424 = vld [vmem:[%s4 + $0x60] sm:$0xff]
    %v4425 = vld [vmem:[%s4 + $0x68] sm:$0xff]
    %v4426 = vld [vmem:[%s4 + $0x70] sm:$0xff]
    %v4427 = vld [vmem:[%s4 + $0x78] sm:$0xff]
    %v4428 = vld [vmem:[%s4 + $0x80] sm:$0xff]
    %v4429 = vld [vmem:[%s4 + $0x88] sm:$0xff]
    %v4430 = vld [vmem:[%s4 + $0x90] sm:$0xff]
    %v4431 = vld [vmem:[%s4 + $0x98] sm:$0xff]
    %v4432 = vld [vmem:[%s4 + $0xa0] sm:$0xff]
    %v4433 = vld [vmem:[%s4 + $0xa8] sm:$0xff]
    %v4434 = vld [vmem:[%s4 + $0xb0] sm:$0xff]
    %v4435 = vld [vmem:[%s4 + $0xb8] sm:$0xff]
    %v4436 = vld [vmem:[%s4 + $0xc0] sm:$0xff]
    %v4437 = vld [vmem:[%s4 + $0xc8] sm:$0xff]
    %v4438 = vld [vmem:[%s4 + $0xd0] sm:$0xff]
    %v4439 = vld [vmem:[%s4 + $0xd8] sm:$0xff]
    %v4440 = vld [vmem:[%s4 + $0xe0] sm:$0xff]
    %v4441 = vld [vmem:[%s4 + $0xe8] sm:$0xff]
    %v4442 = vld [vmem:[%s4 + $0xf0] sm:$0xff]
    %v4443 = vld [vmem:[%s4 + $0xf8] sm:$0xff]
    %v4476 = vunpack.c.l.b16 %v4412
    %v4477 = vunpack.c.h.b16 %v4412
    %v4478 = vunpack.c.l.b16 %v4413
    %v4479 = vunpack.c.h.b16 %v4413
    %v4480 = vunpack.c.l.b16 %v4414
    %v4481 = vunpack.c.h.b16 %v4414
    %v4482 = vunpack.c.l.b16 %v4415
    %v4483 = vunpack.c.h.b16 %v4415
    %v4484 = vunpack.c.l.b16 %v4416
    %v4485 = vunpack.c.h.b16 %v4416
    %v4486 = vunpack.c.l.b16 %v4417
    %v4487 = vunpack.c.h.b16 %v4417
    %v4488 = vunpack.c.l.b16 %v4418
    %v4489 = vunpack.c.h.b16 %v4418
    %v4490 = vunpack.c.l.b16 %v4419
    %v4491 = vunpack.c.h.b16 %v4419
    %v4492 = vunpack.c.l.b16 %v4420
    %v4493 = vunpack.c.h.b16 %v4420
    %v4494 = vunpack.c.l.b16 %v4421
    %v4495 = vunpack.c.h.b16 %v4421
    %v4496 = vunpack.c.l.b16 %v4422
    %v4497 = vunpack.c.h.b16 %v4422
    %v4498 = vunpack.c.l.b16 %v4423
    %v4499 = vunpack.c.h.b16 %v4423
    %v4500 = vunpack.c.l.b16 %v4424
    %v4501 = vunpack.c.h.b16 %v4424
    %v4502 = vunpack.c.l.b16 %v4425
    %v4503 = vunpack.c.h.b16 %v4425
    %v4504 = vunpack.c.l.b16 %v4426
    %v4505 = vunpack.c.h.b16 %v4426
    %v4506 = vunpack.c.l.b16 %v4427
    %v4507 = vunpack.c.h.b16 %v4427
    %v4508 = vunpack.c.l.b16 %v4428
    %v4509 = vunpack.c.h.b16 %v4428
    %v4510 = vunpack.c.l.b16 %v4429
    %v4511 = vunpack.c.h.b16 %v4429
    %v4512 = vunpack.c.l.b16 %v4430
    %v4513 = vunpack.c.h.b16 %v4430
    %v4514 = vunpack.c.l.b16 %v4431
    %v4515 = vunpack.c.h.b16 %v4431
    %v4516 = vunpack.c.l.b16 %v4432
    %v4517 = vunpack.c.h.b16 %v4432
    %v4518 = vunpack.c.l.b16 %v4433
    %v4519 = vunpack.c.h.b16 %v4433
    %v4520 = vunpack.c.l.b16 %v4434
    %v4521 = vunpack.c.h.b16 %v4434
    %v4522 = vunpack.c.l.b16 %v4435
    %v4523 = vunpack.c.h.b16 %v4435
    %v4524 = vunpack.c.l.b16 %v4436
    %v4525 = vunpack.c.h.b16 %v4436
    %v4526 = vunpack.c.l.b16 %v4437
    %v4527 = vunpack.c.h.b16 %v4437
    %v4528 = vunpack.c.l.b16 %v4438
    %v4529 = vunpack.c.h.b16 %v4438
    %v4530 = vunpack.c.l.b16 %v4439
    %v4531 = vunpack.c.h.b16 %v4439
    %v4532 = vunpack.c.l.b16 %v4440
    %v4533 = vunpack.c.h.b16 %v4440
    %v4534 = vunpack.c.l.b16 %v4441
    %v4535 = vunpack.c.h.b16 %v4441
    %v4536 = vunpack.c.l.b16 %v4442
    %v4537 = vunpack.c.h.b16 %v4442
    %v4538 = vunpack.c.l.b16 %v4443
    %v4539 = vunpack.c.h.b16 %v4443
    %v4540 = vpack.c.b16 %v4478, %v4476
    %v4541 = vpack.c.b16 %v4479, %v4477
    %v4542 = vpack.c.b16 %v4482, %v4480
    %v4543 = vpack.c.b16 %v4483, %v4481
    %v4544 = vpack.c.b16 %v4486, %v4484
    %v4545 = vpack.c.b16 %v4487, %v4485
    %v4546 = vpack.c.b16 %v4490, %v4488
    %v4547 = vpack.c.b16 %v4491, %v4489
    %v4548 = vpack.c.b16 %v4494, %v4492
    %v4549 = vpack.c.b16 %v4495, %v4493
    %v4550 = vpack.c.b16 %v4498, %v4496
    %v4551 = vpack.c.b16 %v4499, %v4497
    %v4552 = vpack.c.b16 %v4502, %v4500
    %v4553 = vpack.c.b16 %v4503, %v4501
    %v4554 = vpack.c.b16 %v4506, %v4504
    %v4555 = vpack.c.b16 %v4507, %v4505
    %v4556 = vpack.c.b16 %v4510, %v4508
    %v4557 = vpack.c.b16 %v4511, %v4509
    %v4558 = vpack.c.b16 %v4514, %v4512
    %v4559 = vpack.c.b16 %v4515, %v4513
    %v4560 = vpack.c.b16 %v4518, %v4516
    %v4561 = vpack.c.b16 %v4519, %v4517
    %v4562 = vpack.c.b16 %v4522, %v4520
    %v4563 = vpack.c.b16 %v4523, %v4521
    %v4564 = vpack.c.b16 %v4526, %v4524
    %v4565 = vpack.c.b16 %v4527, %v4525
    %v4566 = vpack.c.b16 %v4530, %v4528
    %v4567 = vpack.c.b16 %v4531, %v4529
    %v4568 = vpack.c.b16 %v4534, %v4532
    %v4569 = vpack.c.b16 %v4535, %v4533
    %v4570 = vpack.c.b16 %v4538, %v4536
    %v4571 = vpack.c.b16 %v4539, %v4537
    %4604 = vmatprep.subr.bf16.mxu0 %v4541
    %4605 = vmatpush1.bf16.msra.mxu0 %v4540
    %4606 = vmatprep.subr.bf16.mxu0 %v4543
    %4607 = vmatpush1.bf16.msra.mxu0 %v4542
    %4608 = vmatprep.subr.bf16.mxu0 %v4545
    %4609 = vmatpush1.bf16.msra.mxu0 %v4544
    %4610 = vmatprep.subr.bf16.mxu0 %v4547
    %4611 = vmatpush1.bf16.msra.mxu0 %v4546
    %4612 = vmatprep.subr.bf16.mxu0 %v4549
    %4613 = vmatpush1.bf16.msra.mxu0 %v4548
    %4614 = vmatprep.subr.bf16.mxu0 %v4551
    %4615 = vmatpush1.bf16.msra.mxu0 %v4550
    %4616 = vmatprep.subr.bf16.mxu0 %v4553
    %4617 = vmatpush1.bf16.msra.mxu0 %v4552
    %4618 = vmatprep.subr.bf16.mxu0 %v4555
    %4619 = vmatpush1.bf16.msra.mxu0 %v4554
    %4620 = vmatprep.subr.bf16.mxu0 %v4557
    %4621 = vmatpush1.bf16.msra.mxu0 %v4556
    %4622 = vmatprep.subr.bf16.mxu0 %v4559
    %4623 = vmatpush1.bf16.msra.mxu0 %v4558
    %4624 = vmatprep.subr.bf16.mxu0 %v4561
    %4625 = vmatpush1.bf16.msra.mxu0 %v4560
    %4626 = vmatprep.subr.bf16.mxu0 %v4563
    %4627 = vmatpush1.bf16.msra.mxu0 %v4562
    %4628 = vmatprep.subr.bf16.mxu0 %v4565
    %4629 = vmatpush1.bf16.msra.mxu0 %v4564
    %4630 = vmatprep.subr.bf16.mxu0 %v4567
    %4631 = vmatpush1.bf16.msra.mxu0 %v4566
    %4632 = vmatprep.subr.bf16.mxu0 %v4569
    %4633 = vmatpush1.bf16.msra.mxu0 %v4568
    %4634 = vmatprep.subr.bf16.mxu0 %v4571
    %4635 = vmatpush1.bf16.msra.mxu0 %v4570
    %4636 = vmatprep.mubr.bf16.mxu0 %v4409
    %4637 = vmatmul.mubr.bf16.gmra.mrb[0].mxu0 %v4408
    %v4638 = vpop.f32.mrb[0].mxu0
    %v4639 = vadd.f32 0.0, %v4638
    %v4640 = vpop.f32.mrb[0].mxu0
    %v4641 = vadd.f32 0.0, %v4640
    %v4642 = vpop.f32.mrb[0].mxu0
    %v4643 = vadd.f32 0.0, %v4642
    %v4644 = vpop.f32.mrb[0].mxu0
    %v4645 = vadd.f32 0.0, %v4644
    %4646 = vmatprep.mubr.bf16.mxu0 %v4411
    %4647 = vmatmul.mubr.bf16.gmra.mrb[0].mxu0 %v4410
    %v4648 = vpop.f32.mrb[0].mxu0
    %v4649 = vadd.f32 0.0, %v4648
    %v4650 = vpop.f32.mrb[0].mxu0
    %v4651 = vadd.f32 0.0, %v4650
    %v4652 = vpop.f32.mrb[0].mxu0
    %v4653 = vadd.f32 0.0, %v4652
    %v4654 = vpop.f32.mrb[0].mxu0
    %v4655 = vadd.f32 0.0, %v4654
    %4656 = vdwg.mxu0
    %v4657 = vld [vmem:[%s9] sm:$0xf]
    %v4658 = vld [vmem:[%s9 + $0x4] sm:$0xf]
    %v4659 = vld [vmem:[%s9 + $0x8] sm:$0xf]
    %v4660 = vld [vmem:[%s9 + $0xc] sm:$0xf]
    %v4661 = vld [vmem:[%s9 + $0x10] sm:$0xf]
    %v4662 = vld [vmem:[%s9 + $0x14] sm:$0xf]
    %v4663 = vld [vmem:[%s9 + $0x18] sm:$0xf]
    %v4664 = vld [vmem:[%s9 + $0x1c] sm:$0xf]
    %v4665 = vpack.c.bf16 %v4643, %v4639
    %v4666 = vpack.c.bf16 %v4645, %v4641
    %v4667 = vpack.c.bf16 %v4653, %v4649
    %v4668 = vpack.c.bf16 %v4655, %v4651
    %s4669 = scalar_lea.vmem %s4, 256
    %v4670 = vld [vmem:[%s4669] sm:$0xff]
    %v4671 = vld [vmem:[%s4669 + $0x8] sm:$0xff]
    %v4672 = vld [vmem:[%s4669 + $0x10] sm:$0xff]
    %v4673 = vld [vmem:[%s4669 + $0x18] sm:$0xff]
    %v4674 = vld [vmem:[%s4669 + $0x20] sm:$0xff]
    %v4675 = vld [vmem:[%s4669 + $0x28] sm:$0xff]
    %v4676 = vld [vmem:[%s4669 + $0x30] sm:$0xff]
    %v4677 = vld [vmem:[%s4669 + $0x38] sm:$0xff]
    %v4678 = vld [vmem:[%s4669 + $0x40] sm:$0xff]
    %v4679 = vld [vmem:[%s4669 + $0x48] sm:$0xff]
    %v4680 = vld [vmem:[%s4669 + $0x50] sm:$0xff]
    %v4681 = vld [vmem:[%s4669 + $0x58] sm:$0xff]
    %v4682 = vld [vmem:[%s4669 + $0x60] sm:$0xff]
    %v4683 = vld [vmem:[%s4669 + $0x68] sm:$0xff]
    %v4684 = vld [vmem:[%s4669 + $0x70] sm:$0xff]
    %v4685 = vld [vmem:[%s4669 + $0x78] sm:$0xff]
    %v4686 = vld [vmem:[%s4669 + $0x80] sm:$0xff]
    %v4687 = vld [vmem:[%s4669 + $0x88] sm:$0xff]
    %v4688 = vld [vmem:[%s4669 + $0x90] sm:$0xff]
    %v4689 = vld [vmem:[%s4669 + $0x98] sm:$0xff]
    %v4690 = vld [vmem:[%s4669 + $0xa0] sm:$0xff]
    %v4691 = vld [vmem:[%s4669 + $0xa8] sm:$0xff]
    %v4692 = vld [vmem:[%s4669 + $0xb0] sm:$0xff]
    %v4693 = vld [vmem:[%s4669 + $0xb8] sm:$0xff]
    %v4694 = vld [vmem:[%s4669 + $0xc0] sm:$0xff]
    %v4695 = vld [vmem:[%s4669 + $0xc8] sm:$0xff]
    %v4696 = vld [vmem:[%s4669 + $0xd0] sm:$0xff]
    %v4697 = vld [vmem:[%s4669 + $0xd8] sm:$0xff]
    %v4698 = vld [vmem:[%s4669 + $0xe0] sm:$0xff]
    %v4699 = vld [vmem:[%s4669 + $0xe8] sm:$0xff]
    %v4700 = vld [vmem:[%s4669 + $0xf0] sm:$0xff]
    %v4701 = vld [vmem:[%s4669 + $0xf8] sm:$0xff]
    %v4734 = vunpack.c.l.b16 %v4670
    %v4735 = vunpack.c.h.b16 %v4670
    %v4736 = vunpack.c.l.b16 %v4671
    %v4737 = vunpack.c.h.b16 %v4671
    %v4738 = vunpack.c.l.b16 %v4672
    %v4739 = vunpack.c.h.b16 %v4672
    %v4740 = vunpack.c.l.b16 %v4673
    %v4741 = vunpack.c.h.b16 %v4673
    %v4742 = vunpack.c.l.b16 %v4674
    %v4743 = vunpack.c.h.b16 %v4674
    %v4744 = vunpack.c.l.b16 %v4675
    %v4745 = vunpack.c.h.b16 %v4675
    %v4746 = vunpack.c.l.b16 %v4676
    %v4747 = vunpack.c.h.b16 %v4676
    %v4748 = vunpack.c.l.b16 %v4677
    %v4749 = vunpack.c.h.b16 %v4677
    %v4750 = vunpack.c.l.b16 %v4678
    %v4751 = vunpack.c.h.b16 %v4678
    %v4752 = vunpack.c.l.b16 %v4679
    %v4753 = vunpack.c.h.b16 %v4679
    %v4754 = vunpack.c.l.b16 %v4680
    %v4755 = vunpack.c.h.b16 %v4680
    %v4756 = vunpack.c.l.b16 %v4681
    %v4757 = vunpack.c.h.b16 %v4681
    %v4758 = vunpack.c.l.b16 %v4682
    %v4759 = vunpack.c.h.b16 %v4682
    %v4760 = vunpack.c.l.b16 %v4683
    %v4761 = vunpack.c.h.b16 %v4683
    %v4762 = vunpack.c.l.b16 %v4684
    %v4763 = vunpack.c.h.b16 %v4684
    %v4764 = vunpack.c.l.b16 %v4685
    %v4765 = vunpack.c.h.b16 %v4685
    %v4766 = vunpack.c.l.b16 %v4686
    %v4767 = vunpack.c.h.b16 %v4686
    %v4768 = vunpack.c.l.b16 %v4687
    %v4769 = vunpack.c.h.b16 %v4687
    %v4770 = vunpack.c.l.b16 %v4688
    %v4771 = vunpack.c.h.b16 %v4688
    %v4772 = vunpack.c.l.b16 %v4689
    %v4773 = vunpack.c.h.b16 %v4689
    %v4774 = vunpack.c.l.b16 %v4690
    %v4775 = vunpack.c.h.b16 %v4690
    %v4776 = vunpack.c.l.b16 %v4691
    %v4777 = vunpack.c.h.b16 %v4691
    %v4778 = vunpack.c.l.b16 %v4692
    %v4779 = vunpack.c.h.b16 %v4692
    %v4780 = vunpack.c.l.b16 %v4693
    %v4781 = vunpack.c.h.b16 %v4693
    %v4782 = vunpack.c.l.b16 %v4694
    %v4783 = vunpack.c.h.b16 %v4694
    %v4784 = vunpack.c.l.b16 %v4695
    %v4785 = vunpack.c.h.b16 %v4695
    %v4786 = vunpack.c.l.b16 %v4696
    %v4787 = vunpack.c.h.b16 %v4696
    %v4788 = vunpack.c.l.b16 %v4697
    %v4789 = vunpack.c.h.b16 %v4697
    %v4790 = vunpack.c.l.b16 %v4698
    %v4791 = vunpack.c.h.b16 %v4698
    %v4792 = vunpack.c.l.b16 %v4699
    %v4793 = vunpack.c.h.b16 %v4699
    %v4794 = vunpack.c.l.b16 %v4700
    %v4795 = vunpack.c.h.b16 %v4700
    %v4796 = vunpack.c.l.b16 %v4701
    %v4797 = vunpack.c.h.b16 %v4701
    %v4798 = vpack.c.b16 %v4736, %v4734
    %v4799 = vpack.c.b16 %v4737, %v4735
    %v4800 = vpack.c.b16 %v4740, %v4738
    %v4801 = vpack.c.b16 %v4741, %v4739
    %v4802 = vpack.c.b16 %v4744, %v4742
    %v4803 = vpack.c.b16 %v4745, %v4743
    %v4804 = vpack.c.b16 %v4748, %v4746
    %v4805 = vpack.c.b16 %v4749, %v4747
    %v4806 = vpack.c.b16 %v4752, %v4750
    %v4807 = vpack.c.b16 %v4753, %v4751
    %v4808 = vpack.c.b16 %v4756, %v4754
    %v4809 = vpack.c.b16 %v4757, %v4755
    %v4810 = vpack.c.b16 %v4760, %v4758
    %v4811 = vpack.c.b16 %v4761, %v4759
    %v4812 = vpack.c.b16 %v4764, %v4762
    %v4813 = vpack.c.b16 %v4765, %v4763
    %v4814 = vpack.c.b16 %v4768, %v4766
    %v4815 = vpack.c.b16 %v4769, %v4767
    %v4816 = vpack.c.b16 %v4772, %v4770
    %v4817 = vpack.c.b16 %v4773, %v4771
    %v4818 = vpack.c.b16 %v4776, %v4774
    %v4819 = vpack.c.b16 %v4777, %v4775
    %v4820 = vpack.c.b16 %v4780, %v4778
    %v4821 = vpack.c.b16 %v4781, %v4779
    %v4822 = vpack.c.b16 %v4784, %v4782
    %v4823 = vpack.c.b16 %v4785, %v4783
    %v4824 = vpack.c.b16 %v4788, %v4786
    %v4825 = vpack.c.b16 %v4789, %v4787
    %v4826 = vpack.c.b16 %v4792, %v4790
    %v4827 = vpack.c.b16 %v4793, %v4791
    %v4828 = vpack.c.b16 %v4796, %v4794
    %v4829 = vpack.c.b16 %v4797, %v4795
    %4862 = vmatprep.subr.bf16.mxu0 %v4799
    %4863 = vmatpush1.bf16.msra.mxu0 %v4798
    %4864 = vmatprep.subr.bf16.mxu0 %v4801
    %4865 = vmatpush1.bf16.msra.mxu0 %v4800
    %4866 = vmatprep.subr.bf16.mxu0 %v4803
    %4867 = vmatpush1.bf16.msra.mxu0 %v4802
    %4868 = vmatprep.subr.bf16.mxu0 %v4805
    %4869 = vmatpush1.bf16.msra.mxu0 %v4804
    %4870 = vmatprep.subr.bf16.mxu0 %v4807
    %4871 = vmatpush1.bf16.msra.mxu0 %v4806
    %4872 = vmatprep.subr.bf16.mxu0 %v4809
    %4873 = vmatpush1.bf16.msra.mxu0 %v4808
    %4874 = vmatprep.subr.bf16.mxu0 %v4811
    %4875 = vmatpush1.bf16.msra.mxu0 %v4810
    %4876 = vmatprep.subr.bf16.mxu0 %v4813
    %4877 = vmatpush1.bf16.msra.mxu0 %v4812
    %4878 = vmatprep.subr.bf16.mxu0 %v4815
    %4879 = vmatpush1.bf16.msra.mxu0 %v4814
    %4880 = vmatprep.subr.bf16.mxu0 %v4817
    %4881 = vmatpush1.bf16.msra.mxu0 %v4816
    %4882 = vmatprep.subr.bf16.mxu0 %v4819
    %4883 = vmatpush1.bf16.msra.mxu0 %v4818
    %4884 = vmatprep.subr.bf16.mxu0 %v4821
    %4885 = vmatpush1.bf16.msra.mxu0 %v4820
    %4886 = vmatprep.subr.bf16.mxu0 %v4823
    %4887 = vmatpush1.bf16.msra.mxu0 %v4822
    %4888 = vmatprep.subr.bf16.mxu0 %v4825
    %4889 = vmatpush1.bf16.msra.mxu0 %v4824
    %4890 = vmatprep.subr.bf16.mxu0 %v4827
    %4891 = vmatpush1.bf16.msra.mxu0 %v4826
    %4892 = vmatprep.subr.bf16.mxu0 %v4829
    %4893 = vmatpush1.bf16.msra.mxu0 %v4828
    %4894 = vmatprep.mubr.bf16.mxu0 %v4409
    %4895 = vmatmul.mubr.bf16.gmra.mrb[0].mxu0 %v4408
    %v4896 = vpop.f32.mrb[0].mxu0
    %v4897 = vadd.f32 0.0, %v4896
    %v4898 = vpop.f32.mrb[0].mxu0
    %v4899 = vadd.f32 0.0, %v4898
    %v4900 = vpop.f32.mrb[0].mxu0
    %v4901 = vadd.f32 0.0, %v4900
    %v4902 = vpop.f32.mrb[0].mxu0
    %v4903 = vadd.f32 0.0, %v4902
    %4904 = vmatprep.mubr.bf16.mxu0 %v4411
    %4905 = vmatmul.mubr.bf16.gmra.mrb[0].mxu0 %v4410
    %v4906 = vpop.f32.mrb[0].mxu0
    %v4907 = vadd.f32 0.0, %v4906
    %v4908 = vpop.f32.mrb[0].mxu0
    %v4909 = vadd.f32 0.0, %v4908
    %v4910 = vpop.f32.mrb[0].mxu0
    %v4911 = vadd.f32 0.0, %v4910
    %v4912 = vpop.f32.mrb[0].mxu0
    %v4913 = vadd.f32 0.0, %v4912
    %4914 = vdwg.mxu0
    %s4915 = scalar_lea.vmem %s9, 32
    %v4916 = vld [vmem:[%s4915] sm:$0xf]
    %v4917 = vld [vmem:[%s4915 + $0x4] sm:$0xf]
    %v4918 = vld [vmem:[%s4915 + $0x8] sm:$0xf]
    %v4919 = vld [vmem:[%s4915 + $0xc] sm:$0xf]
    %v4920 = vld [vmem:[%s4915 + $0x10] sm:$0xf]
    %v4921 = vld [vmem:[%s4915 + $0x14] sm:$0xf]
    %v4922 = vld [vmem:[%s4915 + $0x18] sm:$0xf]
    %v4923 = vld [vmem:[%s4915 + $0x1c] sm:$0xf]
    %v4924 = vpack.c.bf16 %v4901, %v4897
    %v4925 = vpack.c.bf16 %v4903, %v4899
    %v4926 = vpack.c.bf16 %v4911, %v4907
    %v4927 = vpack.c.bf16 %v4913, %v4909
    %v4936 = vunpack.c.l.b16 %v4916
    %v4937 = vunpack.c.l.b16 %v4917
    %v4938 = vunpack.c.l.b16 %v4918
    %v4939 = vunpack.c.l.b16 %v4919
    %v4940 = vunpack.c.l.b16 %v4920
    %v4941 = vunpack.c.l.b16 %v4921
    %v4942 = vunpack.c.l.b16 %v4922
    %v4943 = vunpack.c.l.b16 %v4923
    %v4944 = vpack.c.b16 %v4937, %v4936
    %v4945 = vpack.c.b16 %v4939, %v4938
    %v4946 = vpack.c.b16 %v4941, %v4940
    %v4947 = vpack.c.b16 %v4943, %v4942
    %v4949 = vsel %vm271, %v4944, 0
    %v4952 = vsel %vm271, %v4945, 0
    %v4955 = vsel %vm271, %v4946, 0
    %v4958 = vsel %vm271, %v4947, 0
    %4960 = vmatprep.subr.bf16.mxu0 %v4925
    %4961 = vmatpush1.bf16.msra.mxu0 %v4924
    %4962 = vmatprep.subr.bf16.mxu0 %v4927
    %4963 = vmatpush1.bf16.msra.mxu0 %v4926
    %4964 = vmatprep.subr.bf16.mxu0 0
    %4965 = vmatpush1.bf16.msra.mxu0 0
    %4966 = vmatprep.subr.bf16.mxu0 0
    %4967 = vmatpush1.bf16.msra.mxu0 0
    %4968 = vmatprep.subr.bf16.mxu0 0
    %4969 = vmatpush1.bf16.msra.mxu0 0
    %4970 = vmatprep.subr.bf16.mxu0 0
    %4971 = vmatpush1.bf16.msra.mxu0 0
    %4972 = vmatprep.subr.bf16.mxu0 0
    %4973 = vmatpush1.bf16.msra.mxu0 0
    %4974 = vmatprep.subr.bf16.mxu0 0
    %4975 = vmatpush1.bf16.msra.mxu0 0
    %4976 = vmatprep.subr.bf16.mxu0 0
    %4977 = vmatpush1.bf16.msra.mxu0 0
    %4978 = vmatprep.subr.bf16.mxu0 0
    %4979 = vmatpush1.bf16.msra.mxu0 0
    %4980 = vmatprep.subr.bf16.mxu0 0
    %4981 = vmatpush1.bf16.msra.mxu0 0
    %4982 = vmatprep.subr.bf16.mxu0 0
    %4983 = vmatpush1.bf16.msra.mxu0 0
    %4984 = vmatprep.subr.bf16.mxu0 0
    %4985 = vmatpush1.bf16.msra.mxu0 0
    %4986 = vmatprep.subr.bf16.mxu0 0
    %4987 = vmatpush1.bf16.msra.mxu0 0
    %4988 = vmatprep.subr.bf16.mxu0 0
    %4989 = vmatpush1.bf16.msra.mxu0 0
    %4990 = vmatprep.subr.bf16.mxu0 0
    %4991 = vmatpush1.bf16.msra.mxu0 0
    %4992 = vmatprep.mubr.bf16.mxu0 0
    %4993 = vmatmul.mubr.bf16.gmra.mrb[0].mxu0 %v4949
    %v4994 = vpop.f32.mrb[0].mxu0
    %v4995 = vadd.f32 0.0, %v4994
    %v4996 = vpop.f32.mrb[0].mxu0
    %v4997 = vadd.f32 0.0, %v4996
    %v4998 = vpop.f32.mrb[0].mxu0
    %v4999 = vadd.f32 0.0, %v4998
    %v5000 = vpop.f32.mrb[0].mxu0
    %v5001 = vadd.f32 0.0, %v5000
    %5002 = vmatprep.mubr.bf16.mxu0 0
    %5003 = vmatmul.mubr.bf16.gmra.mrb[0].mxu0 %v4952
    %v5004 = vpop.f32.mrb[0].mxu0
    %v5005 = vadd.f32 0.0, %v5004
    %v5006 = vpop.f32.mrb[0].mxu0
    %v5007 = vadd.f32 0.0, %v5006
    %v5008 = vpop.f32.mrb[0].mxu0
    %v5009 = vadd.f32 0.0, %v5008
    %v5010 = vpop.f32.mrb[0].mxu0
    %v5011 = vadd.f32 0.0, %v5010
    %5012 = vmatprep.mubr.bf16.mxu0 0
    %5013 = vmatmul.mubr.bf16.gmra.mrb[0].mxu0 %v4955
    %v5014 = vpop.f32.mrb[0].mxu0
    %v5015 = vadd.f32 0.0, %v5014
    %v5016 = vpop.f32.mrb[0].mxu0
    %v5017 = vadd.f32 0.0, %v5016
    %v5018 = vpop.f32.mrb[0].mxu0
    %v5019 = vadd.f32 0.0, %v5018
    %v5020 = vpop.f32.mrb[0].mxu0
    %v5021 = vadd.f32 0.0, %v5020
    %5022 = vmatprep.mubr.bf16.mxu0 0
    %5023 = vmatmul.mubr.bf16.gmra.mrb[0].mxu0 %v4958
    %v5024 = vpop.f32.mrb[0].mxu0
    %v5025 = vadd.f32 0.0, %v5024
    %v5026 = vpop.f32.mrb[0].mxu0
    %v5027 = vadd.f32 0.0, %v5026
    %v5028 = vpop.f32.mrb[0].mxu0
    %v5029 = vadd.f32 0.0, %v5028
    %v5030 = vpop.f32.mrb[0].mxu0
    %v5031 = vadd.f32 0.0, %v5030
    %5032 = vdwg.mxu0
    %v5041 = vunpack.c.l.b16 %v4657
    %v5042 = vunpack.c.l.b16 %v4658
    %v5043 = vunpack.c.l.b16 %v4659
    %v5044 = vunpack.c.l.b16 %v4660
    %v5045 = vunpack.c.l.b16 %v4661
    %v5046 = vunpack.c.l.b16 %v4662
    %v5047 = vunpack.c.l.b16 %v4663
    %v5048 = vunpack.c.l.b16 %v4664
    %v5049 = vpack.c.b16 %v5042, %v5041
    %v5050 = vpack.c.b16 %v5044, %v5043
    %v5051 = vpack.c.b16 %v5046, %v5045
    %v5052 = vpack.c.b16 %v5048, %v5047
    %v5054 = vsel %vm271, %v5049, 0
    %v5057 = vsel %vm271, %v5050, 0
    %v5060 = vsel %vm271, %v5051, 0
    %v5063 = vsel %vm271, %v5052, 0
    %5065 = vmatprep.subr.bf16.mxu0 %v4666
    %5066 = vmatpush1.bf16.msra.mxu0 %v4665
    %5067 = vmatprep.subr.bf16.mxu0 %v4668
    %5068 = vmatpush1.bf16.msra.mxu0 %v4667
    %5069 = vmatprep.subr.bf16.mxu0 0
    %5070 = vmatpush1.bf16.msra.mxu0 0
    %5071 = vmatprep.subr.bf16.mxu0 0
    %5072 = vmatpush1.bf16.msra.mxu0 0
    %5073 = vmatprep.subr.bf16.mxu0 0
    %5074 = vmatpush1.bf16.msra.mxu0 0
    %5075 = vmatprep.subr.bf16.mxu0 0
    %5076 = vmatpush1.bf16.msra.mxu0 0
    %5077 = vmatprep.subr.bf16.mxu0 0
    %5078 = vmatpush1.bf16.msra.mxu0 0
    %5079 = vmatprep.subr.bf16.mxu0 0
    %5080 = vmatpush1.bf16.msra.mxu0 0
    %5081 = vmatprep.subr.bf16.mxu0 0
    %5082 = vmatpush1.bf16.msra.mxu0 0
    %5083 = vmatprep.subr.bf16.mxu0 0
    %5084 = vmatpush1.bf16.msra.mxu0 0
    %5085 = vmatprep.subr.bf16.mxu0 0
    %5086 = vmatpush1.bf16.msra.mxu0 0
    %5087 = vmatprep.subr.bf16.mxu0 0
    %5088 = vmatpush1.bf16.msra.mxu0 0
    %5089 = vmatprep.subr.bf16.mxu0 0
    %5090 = vmatpush1.bf16.msra.mxu0 0
    %5091 = vmatprep.subr.bf16.mxu0 0
    %5092 = vmatpush1.bf16.msra.mxu0 0
    %5093 = vmatprep.subr.bf16.mxu0 0
    %5094 = vmatpush1.bf16.msra.mxu0 0
    %5095 = vmatprep.subr.bf16.mxu0 0
    %5096 = vmatpush1.bf16.msra.mxu0 0
    %5097 = vmatprep.mubr.bf16.mxu0 0
    %5098 = vmatmul.mubr.bf16.gmra.mrb[0].mxu0 %v5054
    %v5099 = vpop.f32.mrb[0].mxu0
    %v5100 = vadd.f32 %v4995, %v5099
    %v5101 = vpop.f32.mrb[0].mxu0
    %v5102 = vadd.f32 %v4997, %v5101
    %v5103 = vpop.f32.mrb[0].mxu0
    %v5104 = vadd.f32 %v4999, %v5103
    %v5105 = vpop.f32.mrb[0].mxu0
    %v5106 = vadd.f32 %v5001, %v5105
    %5107 = vmatprep.mubr.bf16.mxu0 0
    %5108 = vmatmul.mubr.bf16.gmra.mrb[0].mxu0 %v5057
    %v5109 = vpop.f32.mrb[0].mxu0
    %v5110 = vadd.f32 %v5005, %v5109
    %v5111 = vpop.f32.mrb[0].mxu0
    %v5112 = vadd.f32 %v5007, %v5111
    %v5113 = vpop.f32.mrb[0].mxu0
    %v5114 = vadd.f32 %v5009, %v5113
    %v5115 = vpop.f32.mrb[0].mxu0
    %v5116 = vadd.f32 %v5011, %v5115
    %5117 = vmatprep.mubr.bf16.mxu0 0
    %5118 = vmatmul.mubr.bf16.gmra.mrb[0].mxu0 %v5060
    %v5119 = vpop.f32.mrb[0].mxu0
    %v5120 = vadd.f32 %v5015, %v5119
    %v5121 = vpop.f32.mrb[0].mxu0
    %v5122 = vadd.f32 %v5017, %v5121
    %v5123 = vpop.f32.mrb[0].mxu0
    %v5124 = vadd.f32 %v5019, %v5123
    %v5125 = vpop.f32.mrb[0].mxu0
    %v5126 = vadd.f32 %v5021, %v5125
    %5127 = vmatprep.mubr.bf16.mxu0 0
    %5128 = vmatmul.mubr.bf16.gmra.mrb[0].mxu0 %v5063
    %v5129 = vpop.f32.mrb[0].mxu0
    %v5130 = vadd.f32 %v5025, %v5129
    %v5131 = vpop.f32.mrb[0].mxu0
    %v5132 = vadd.f32 %v5027, %v5131
    %v5133 = vpop.f32.mrb[0].mxu0
    %v5134 = vadd.f32 %v5029, %v5133
    %v5135 = vpop.f32.mrb[0].mxu0
    %v5136 = vadd.f32 %v5031, %v5135
    %5137 = vdwg.mxu0
    %s5138 = scalar_lea.vmem %s4, 512
    %v5139 = vld [vmem:[%s5138] sm:$0xff]
    %v5140 = vld [vmem:[%s5138 + $0x8] sm:$0xff]
    %v5141 = vld [vmem:[%s5138 + $0x10] sm:$0xff]
    %v5142 = vld [vmem:[%s5138 + $0x18] sm:$0xff]
    %v5143 = vld [vmem:[%s5138 + $0x20] sm:$0xff]
    %v5144 = vld [vmem:[%s5138 + $0x28] sm:$0xff]
    %v5145 = vld [vmem:[%s5138 + $0x30] sm:$0xff]
    %v5146 = vld [vmem:[%s5138 + $0x38] sm:$0xff]
    %v5147 = vld [vmem:[%s5138 + $0x40] sm:$0xff]
    %v5148 = vld [vmem:[%s5138 + $0x48] sm:$0xff]
    %v5149 = vld [vmem:[%s5138 + $0x50] sm:$0xff]
    %v5150 = vld [vmem:[%s5138 + $0x58] sm:$0xff]
    %v5151 = vld [vmem:[%s5138 + $0x60] sm:$0xff]
    %v5152 = vld [vmem:[%s5138 + $0x68] sm:$0xff]
    %v5153 = vld [vmem:[%s5138 + $0x70] sm:$0xff]
    %v5154 = vld [vmem:[%s5138 + $0x78] sm:$0xff]
    %v5155 = vld [vmem:[%s5138 + $0x80] sm:$0xff]
    %v5156 = vld [vmem:[%s5138 + $0x88] sm:$0xff]
    %v5157 = vld [vmem:[%s5138 + $0x90] sm:$0xff]
    %v5158 = vld [vmem:[%s5138 + $0x98] sm:$0xff]
    %v5159 = vld [vmem:[%s5138 + $0xa0] sm:$0xff]
    %v5160 = vld [vmem:[%s5138 + $0xa8] sm:$0xff]
    %v5161 = vld [vmem:[%s5138 + $0xb0] sm:$0xff]
    %v5162 = vld [vmem:[%s5138 + $0xb8] sm:$0xff]
    %v5163 = vld [vmem:[%s5138 + $0xc0] sm:$0xff]
    %v5164 = vld [vmem:[%s5138 + $0xc8] sm:$0xff]
    %v5165 = vld [vmem:[%s5138 + $0xd0] sm:$0xff]
    %v5166 = vld [vmem:[%s5138 + $0xd8] sm:$0xff]
    %v5167 = vld [vmem:[%s5138 + $0xe0] sm:$0xff]
    %v5168 = vld [vmem:[%s5138 + $0xe8] sm:$0xff]
    %v5169 = vld [vmem:[%s5138 + $0xf0] sm:$0xff]
    %v5170 = vld [vmem:[%s5138 + $0xf8] sm:$0xff]
    %v5203 = vunpack.c.l.b16 %v5139
    %v5204 = vunpack.c.h.b16 %v5139
    %v5205 = vunpack.c.l.b16 %v5140
    %v5206 = vunpack.c.h.b16 %v5140
    %v5207 = vunpack.c.l.b16 %v5141
    %v5208 = vunpack.c.h.b16 %v5141
    %v5209 = vunpack.c.l.b16 %v5142
    %v5210 = vunpack.c.h.b16 %v5142
    %v5211 = vunpack.c.l.b16 %v5143
    %v5212 = vunpack.c.h.b16 %v5143
    %v5213 = vunpack.c.l.b16 %v5144
    %v5214 = vunpack.c.h.b16 %v5144
    %v5215 = vunpack.c.l.b16 %v5145
    %v5216 = vunpack.c.h.b16 %v5145
    %v5217 = vunpack.c.l.b16 %v5146
    %v5218 = vunpack.c.h.b16 %v5146
    %v5219 = vunpack.c.l.b16 %v5147
    %v5220 = vunpack.c.h.b16 %v5147
    %v5221 = vunpack.c.l.b16 %v5148
    %v5222 = vunpack.c.h.b16 %v5148
    %v5223 = vunpack.c.l.b16 %v5149
    %v5224 = vunpack.c.h.b16 %v5149
    %v5225 = vunpack.c.l.b16 %v5150
    %v5226 = vunpack.c.h.b16 %v5150
    %v5227 = vunpack.c.l.b16 %v5151
    %v5228 = vunpack.c.h.b16 %v5151
    %v5229 = vunpack.c.l.b16 %v5152
    %v5230 = vunpack.c.h.b16 %v5152
    %v5231 = vunpack.c.l.b16 %v5153
    %v5232 = vunpack.c.h.b16 %v5153
    %v5233 = vunpack.c.l.b16 %v5154
    %v5234 = vunpack.c.h.b16 %v5154
    %v5235 = vunpack.c.l.b16 %v5155
    %v5236 = vunpack.c.h.b16 %v5155
    %v5237 = vunpack.c.l.b16 %v5156
    %v5238 = vunpack.c.h.b16 %v5156
    %v5239 = vunpack.c.l.b16 %v5157
    %v5240 = vunpack.c.h.b16 %v5157
    %v5241 = vunpack.c.l.b16 %v5158
    %v5242 = vunpack.c.h.b16 %v5158
    %v5243 = vunpack.c.l.b16 %v5159
    %v5244 = vunpack.c.h.b16 %v5159
    %v5245 = vunpack.c.l.b16 %v5160
    %v5246 = vunpack.c.h.b16 %v5160
    %v5247 = vunpack.c.l.b16 %v5161
    %v5248 = vunpack.c.h.b16 %v5161
    %v5249 = vunpack.c.l.b16 %v5162
    %v5250 = vunpack.c.h.b16 %v5162
    %v5251 = vunpack.c.l.b16 %v5163
    %v5252 = vunpack.c.h.b16 %v5163
    %v5253 = vunpack.c.l.b16 %v5164
    %v5254 = vunpack.c.h.b16 %v5164
    %v5255 = vunpack.c.l.b16 %v5165
    %v5256 = vunpack.c.h.b16 %v5165
    %v5257 = vunpack.c.l.b16 %v5166
    %v5258 = vunpack.c.h.b16 %v5166
    %v5259 = vunpack.c.l.b16 %v5167
    %v5260 = vunpack.c.h.b16 %v5167
    %v5261 = vunpack.c.l.b16 %v5168
    %v5262 = vunpack.c.h.b16 %v5168
    %v5263 = vunpack.c.l.b16 %v5169
    %v5264 = vunpack.c.h.b16 %v5169
    %v5265 = vunpack.c.l.b16 %v5170
    %v5266 = vunpack.c.h.b16 %v5170
    %v5267 = vpack.c.b16 %v5205, %v5203
    %v5268 = vpack.c.b16 %v5206, %v5204
    %v5269 = vpack.c.b16 %v5209, %v5207
    %v5270 = vpack.c.b16 %v5210, %v5208
    %v5271 = vpack.c.b16 %v5213, %v5211
    %v5272 = vpack.c.b16 %v5214, %v5212
    %v5273 = vpack.c.b16 %v5217, %v5215
    %v5274 = vpack.c.b16 %v5218, %v5216
    %v5275 = vpack.c.b16 %v5221, %v5219
    %v5276 = vpack.c.b16 %v5222, %v5220
    %v5277 = vpack.c.b16 %v5225, %v5223
    %v5278 = vpack.c.b16 %v5226, %v5224
    %v5279 = vpack.c.b16 %v5229, %v5227
    %v5280 = vpack.c.b16 %v5230, %v5228
    %v5281 = vpack.c.b16 %v5233, %v5231
    %v5282 = vpack.c.b16 %v5234, %v5232
    %v5283 = vpack.c.b16 %v5237, %v5235
    %v5284 = vpack.c.b16 %v5238, %v5236
    %v5285 = vpack.c.b16 %v5241, %v5239
    %v5286 = vpack.c.b16 %v5242, %v5240
    %v5287 = vpack.c.b16 %v5245, %v5243
    %v5288 = vpack.c.b16 %v5246, %v5244
    %v5289 = vpack.c.b16 %v5249, %v5247
    %v5290 = vpack.c.b16 %v5250, %v5248
    %v5291 = vpack.c.b16 %v5253, %v5251
    %v5292 = vpack.c.b16 %v5254, %v5252
    %v5293 = vpack.c.b16 %v5257, %v5255
    %v5294 = vpack.c.b16 %v5258, %v5256
    %v5295 = vpack.c.b16 %v5261, %v5259
    %v5296 = vpack.c.b16 %v5262, %v5260
    %v5297 = vpack.c.b16 %v5265, %v5263
    %v5298 = vpack.c.b16 %v5266, %v5264
    %5331 = vmatprep.subr.bf16.mxu0 %v5268
    %5332 = vmatpush1.bf16.msra.mxu0 %v5267
    %5333 = vmatprep.subr.bf16.mxu0 %v5270
    %5334 = vmatpush1.bf16.msra.mxu0 %v5269
    %5335 = vmatprep.subr.bf16.mxu0 %v5272
    %5336 = vmatpush1.bf16.msra.mxu0 %v5271
    %5337 = vmatprep.subr.bf16.mxu0 %v5274
    %5338 = vmatpush1.bf16.msra.mxu0 %v5273
    %5339 = vmatprep.subr.bf16.mxu0 %v5276
    %5340 = vmatpush1.bf16.msra.mxu0 %v5275
    %5341 = vmatprep.subr.bf16.mxu0 %v5278
    %5342 = vmatpush1.bf16.msra.mxu0 %v5277
    %5343 = vmatprep.subr.bf16.mxu0 %v5280
    %5344 = vmatpush1.bf16.msra.mxu0 %v5279
    %5345 = vmatprep.subr.bf16.mxu0 %v5282
    %5346 = vmatpush1.bf16.msra.mxu0 %v5281
    %5347 = vmatprep.subr.bf16.mxu0 %v5284
    %5348 = vmatpush1.bf16.msra.mxu0 %v5283
    %5349 = vmatprep.subr.bf16.mxu0 %v5286
    %5350 = vmatpush1.bf16.msra.mxu0 %v5285
    %5351 = vmatprep.subr.bf16.mxu0 %v5288
    %5352 = vmatpush1.bf16.msra.mxu0 %v5287
    %5353 = vmatprep.subr.bf16.mxu0 %v5290
    %5354 = vmatpush1.bf16.msra.mxu0 %v5289
    %5355 = vmatprep.subr.bf16.mxu0 %v5292
    %5356 = vmatpush1.bf16.msra.mxu0 %v5291
    %5357 = vmatprep.subr.bf16.mxu0 %v5294
    %5358 = vmatpush1.bf16.msra.mxu0 %v5293
    %5359 = vmatprep.subr.bf16.mxu0 %v5296
    %5360 = vmatpush1.bf16.msra.mxu0 %v5295
    %5361 = vmatprep.subr.bf16.mxu0 %v5298
    %5362 = vmatpush1.bf16.msra.mxu0 %v5297
    %5363 = vmatprep.mubr.bf16.mxu0 %v4409
    %5364 = vmatmul.mubr.bf16.gmra.mrb[0].mxu0 %v4408
    %v5365 = vpop.f32.mrb[0].mxu0
    %v5366 = vadd.f32 0.0, %v5365
    %v5367 = vpop.f32.mrb[0].mxu0
    %v5368 = vadd.f32 0.0, %v5367
    %v5369 = vpop.f32.mrb[0].mxu0
    %v5370 = vadd.f32 0.0, %v5369
    %v5371 = vpop.f32.mrb[0].mxu0
    %v5372 = vadd.f32 0.0, %v5371
    %5373 = vmatprep.mubr.bf16.mxu0 %v4411
    %5374 = vmatmul.mubr.bf16.gmra.mrb[0].mxu0 %v4410
    %v5375 = vpop.f32.mrb[0].mxu0
    %v5376 = vadd.f32 0.0, %v5375
    %v5377 = vpop.f32.mrb[0].mxu0
    %v5378 = vadd.f32 0.0, %v5377
    %v5379 = vpop.f32.mrb[0].mxu0
    %v5380 = vadd.f32 0.0, %v5379
    %v5381 = vpop.f32.mrb[0].mxu0
    %v5382 = vadd.f32 0.0, %v5381
    %5383 = vdwg.mxu0
    %s5384 = scalar_lea.vmem %s9, 64
    %v5385 = vld [vmem:[%s5384] sm:$0xf]
    %v5386 = vld [vmem:[%s5384 + $0x4] sm:$0xf]
    %v5387 = vld [vmem:[%s5384 + $0x8] sm:$0xf]
    %v5388 = vld [vmem:[%s5384 + $0xc] sm:$0xf]
    %v5389 = vld [vmem:[%s5384 + $0x10] sm:$0xf]
    %v5390 = vld [vmem:[%s5384 + $0x14] sm:$0xf]
    %v5391 = vld [vmem:[%s5384 + $0x18] sm:$0xf]
    %v5392 = vld [vmem:[%s5384 + $0x1c] sm:$0xf]
    %v5393 = vpack.c.bf16 %v5370, %v5366
    %v5394 = vpack.c.bf16 %v5372, %v5368
    %v5395 = vpack.c.bf16 %v5380, %v5376
    %v5396 = vpack.c.bf16 %v5382, %v5378
    %v5405 = vunpack.c.l.b16 %v5385
    %v5406 = vunpack.c.l.b16 %v5386
    %v5407 = vunpack.c.l.b16 %v5387
    %v5408 = vunpack.c.l.b16 %v5388
    %v5409 = vunpack.c.l.b16 %v5389
    %v5410 = vunpack.c.l.b16 %v5390
    %v5411 = vunpack.c.l.b16 %v5391
    %v5412 = vunpack.c.l.b16 %v5392
    %v5413 = vpack.c.b16 %v5406, %v5405
    %v5414 = vpack.c.b16 %v5408, %v5407
    %v5415 = vpack.c.b16 %v5410, %v5409
    %v5416 = vpack.c.b16 %v5412, %v5411
    %v5418 = vsel %vm271, %v5413, 0
    %v5421 = vsel %vm271, %v5414, 0
    %v5424 = vsel %vm271, %v5415, 0
    %v5427 = vsel %vm271, %v5416, 0
    %5429 = vmatprep.subr.bf16.mxu0 %v5394
    %5430 = vmatpush1.bf16.msra.mxu0 %v5393
    %5431 = vmatprep.subr.bf16.mxu0 %v5396
    %5432 = vmatpush1.bf16.msra.mxu0 %v5395
    %5433 = vmatprep.subr.bf16.mxu0 0
    %5434 = vmatpush1.bf16.msra.mxu0 0
    %5435 = vmatprep.subr.bf16.mxu0 0
    %5436 = vmatpush1.bf16.msra.mxu0 0
    %5437 = vmatprep.subr.bf16.mxu0 0
    %5438 = vmatpush1.bf16.msra.mxu0 0
    %5439 = vmatprep.subr.bf16.mxu0 0
    %5440 = vmatpush1.bf16.msra.mxu0 0
    %5441 = vmatprep.subr.bf16.mxu0 0
    %5442 = vmatpush1.bf16.msra.mxu0 0
    %5443 = vmatprep.subr.bf16.mxu0 0
    %5444 = vmatpush1.bf16.msra.mxu0 0
    %5445 = vmatprep.subr.bf16.mxu0 0
    %5446 = vmatpush1.bf16.msra.mxu0 0
    %5447 = vmatprep.subr.bf16.mxu0 0
    %5448 = vmatpush1.bf16.msra.mxu0 0
    %5449 = vmatprep.subr.bf16.mxu0 0
    %5450 = vmatpush1.bf16.msra.mxu0 0
    %5451 = vmatprep.subr.bf16.mxu0 0
    %5452 = vmatpush1.bf16.msra.mxu0 0
    %5453 = vmatprep.subr.bf16.mxu0 0
    %5454 = vmatpush1.bf16.msra.mxu0 0
    %5455 = vmatprep.subr.bf16.mxu0 0
    %5456 = vmatpush1.bf16.msra.mxu0 0
    %5457 = vmatprep.subr.bf16.mxu0 0
    %5458 = vmatpush1.bf16.msra.mxu0 0
    %5459 = vmatprep.subr.bf16.mxu0 0
    %5460 = vmatpush1.bf16.msra.mxu0 0
    %5461 = vmatprep.mubr.bf16.mxu0 0
    %5462 = vmatmul.mubr.bf16.gmra.mrb[0].mxu0 %v5418
    %v5463 = vpop.f32.mrb[0].mxu0
    %v5464 = vadd.f32 0.0, %v5463
    %v5465 = vpop.f32.mrb[0].mxu0
    %v5466 = vadd.f32 0.0, %v5465
    %v5467 = vpop.f32.mrb[0].mxu0
    %v5468 = vadd.f32 0.0, %v5467
    %v5469 = vpop.f32.mrb[0].mxu0
    %v5470 = vadd.f32 0.0, %v5469
    %5471 = vmatprep.mubr.bf16.mxu0 0
    %5472 = vmatmul.mubr.bf16.gmra.mrb[0].mxu0 %v5421
    %v5473 = vpop.f32.mrb[0].mxu0
    %v5474 = vadd.f32 0.0, %v5473
    %v5475 = vpop.f32.mrb[0].mxu0
    %v5476 = vadd.f32 0.0, %v5475
    %v5477 = vpop.f32.mrb[0].mxu0
    %v5478 = vadd.f32 0.0, %v5477
    %v5479 = vpop.f32.mrb[0].mxu0
    %v5480 = vadd.f32 0.0, %v5479
    %5481 = vmatprep.mubr.bf16.mxu0 0
    %5482 = vmatmul.mubr.bf16.gmra.mrb[0].mxu0 %v5424
    %v5483 = vpop.f32.mrb[0].mxu0
    %v5484 = vadd.f32 0.0, %v5483
    %v5485 = vpop.f32.mrb[0].mxu0
    %v5486 = vadd.f32 0.0, %v5485
    %v5487 = vpop.f32.mrb[0].mxu0
    %v5488 = vadd.f32 0.0, %v5487
    %v5489 = vpop.f32.mrb[0].mxu0
    %v5490 = vadd.f32 0.0, %v5489
    %5491 = vmatprep.mubr.bf16.mxu0 0
    %5492 = vmatmul.mubr.bf16.gmra.mrb[0].mxu0 %v5427
    %v5493 = vpop.f32.mrb[0].mxu0
    %v5494 = vadd.f32 0.0, %v5493
    %v5495 = vpop.f32.mrb[0].mxu0
    %v5496 = vadd.f32 0.0, %v5495
    %v5497 = vpop.f32.mrb[0].mxu0
    %v5498 = vadd.f32 0.0, %v5497
    %v5499 = vpop.f32.mrb[0].mxu0
    %v5500 = vadd.f32 0.0, %v5499
    %5501 = vdwg.mxu0
    %v5502 = vadd.f32 %v5100, %v5464
    %v5503 = vadd.f32 %v5102, %v5466
    %v5504 = vadd.f32 %v5104, %v5468
    %v5505 = vadd.f32 %v5106, %v5470
    %v5506 = vadd.f32 %v5110, %v5474
    %v5507 = vadd.f32 %v5112, %v5476
    %v5508 = vadd.f32 %v5114, %v5478
    %v5509 = vadd.f32 %v5116, %v5480
    %v5510 = vadd.f32 %v5120, %v5484
    %v5511 = vadd.f32 %v5122, %v5486
    %v5512 = vadd.f32 %v5124, %v5488
    %v5513 = vadd.f32 %v5126, %v5490
    %v5514 = vadd.f32 %v5130, %v5494
    %v5515 = vadd.f32 %v5132, %v5496
    %v5516 = vadd.f32 %v5134, %v5498
    %v5517 = vadd.f32 %v5136, %v5500
    %s5518 = scalar_lea.vmem %s4, 768
    %v5519 = vld [vmem:[%s5518] sm:$0xff]
    %v5520 = vld [vmem:[%s5518 + $0x8] sm:$0xff]
    %v5521 = vld [vmem:[%s5518 + $0x10] sm:$0xff]
    %v5522 = vld [vmem:[%s5518 + $0x18] sm:$0xff]
    %v5523 = vld [vmem:[%s5518 + $0x20] sm:$0xff]
    %v5524 = vld [vmem:[%s5518 + $0x28] sm:$0xff]
    %v5525 = vld [vmem:[%s5518 + $0x30] sm:$0xff]
    %v5526 = vld [vmem:[%s5518 + $0x38] sm:$0xff]
    %v5527 = vld [vmem:[%s5518 + $0x40] sm:$0xff]
    %v5528 = vld [vmem:[%s5518 + $0x48] sm:$0xff]
    %v5529 = vld [vmem:[%s5518 + $0x50] sm:$0xff]
    %v5530 = vld [vmem:[%s5518 + $0x58] sm:$0xff]
    %v5531 = vld [vmem:[%s5518 + $0x60] sm:$0xff]
    %v5532 = vld [vmem:[%s5518 + $0x68] sm:$0xff]
    %v5533 = vld [vmem:[%s5518 + $0x70] sm:$0xff]
    %v5534 = vld [vmem:[%s5518 + $0x78] sm:$0xff]
    %v5535 = vld [vmem:[%s5518 + $0x80] sm:$0xff]
    %v5536 = vld [vmem:[%s5518 + $0x88] sm:$0xff]
    %v5537 = vld [vmem:[%s5518 + $0x90] sm:$0xff]
    %v5538 = vld [vmem:[%s5518 + $0x98] sm:$0xff]
    %v5539 = vld [vmem:[%s5518 + $0xa0] sm:$0xff]
    %v5540 = vld [vmem:[%s5518 + $0xa8] sm:$0xff]
    %v5541 = vld [vmem:[%s5518 + $0xb0] sm:$0xff]
    %v5542 = vld [vmem:[%s5518 + $0xb8] sm:$0xff]
    %v5543 = vld [vmem:[%s5518 + $0xc0] sm:$0xff]
    %v5544 = vld [vmem:[%s5518 + $0xc8] sm:$0xff]
    %v5545 = vld [vmem:[%s5518 + $0xd0] sm:$0xff]
    %v5546 = vld [vmem:[%s5518 + $0xd8] sm:$0xff]
    %v5547 = vld [vmem:[%s5518 + $0xe0] sm:$0xff]
    %v5548 = vld [vmem:[%s5518 + $0xe8] sm:$0xff]
    %v5549 = vld [vmem:[%s5518 + $0xf0] sm:$0xff]
    %v5550 = vld [vmem:[%s5518 + $0xf8] sm:$0xff]
    %v5583 = vunpack.c.l.b16 %v5519
    %v5584 = vunpack.c.h.b16 %v5519
    %v5585 = vunpack.c.l.b16 %v5520
    %v5586 = vunpack.c.h.b16 %v5520
    %v5587 = vunpack.c.l.b16 %v5521
    %v5588 = vunpack.c.h.b16 %v5521
    %v5589 = vunpack.c.l.b16 %v5522
    %v5590 = vunpack.c.h.b16 %v5522
    %v5591 = vunpack.c.l.b16 %v5523
    %v5592 = vunpack.c.h.b16 %v5523
    %v5593 = vunpack.c.l.b16 %v5524
    %v5594 = vunpack.c.h.b16 %v5524
    %v5595 = vunpack.c.l.b16 %v5525
    %v5596 = vunpack.c.h.b16 %v5525
    %v5597 = vunpack.c.l.b16 %v5526
    %v5598 = vunpack.c.h.b16 %v5526
    %v5599 = vunpack.c.l.b16 %v5527
    %v5600 = vunpack.c.h.b16 %v5527
    %v5601 = vunpack.c.l.b16 %v5528
    %v5602 = vunpack.c.h.b16 %v5528
    %v5603 = vunpack.c.l.b16 %v5529
    %v5604 = vunpack.c.h.b16 %v5529
    %v5605 = vunpack.c.l.b16 %v5530
    %v5606 = vunpack.c.h.b16 %v5530
    %v5607 = vunpack.c.l.b16 %v5531
    %v5608 = vunpack.c.h.b16 %v5531
    %v5609 = vunpack.c.l.b16 %v5532
    %v5610 = vunpack.c.h.b16 %v5532
    %v5611 = vunpack.c.l.b16 %v5533
    %v5612 = vunpack.c.h.b16 %v5533
    %v5613 = vunpack.c.l.b16 %v5534
    %v5614 = vunpack.c.h.b16 %v5534
    %v5615 = vunpack.c.l.b16 %v5535
    %v5616 = vunpack.c.h.b16 %v5535
    %v5617 = vunpack.c.l.b16 %v5536
    %v5618 = vunpack.c.h.b16 %v5536
    %v5619 = vunpack.c.l.b16 %v5537
    %v5620 = vunpack.c.h.b16 %v5537
    %v5621 = vunpack.c.l.b16 %v5538
    %v5622 = vunpack.c.h.b16 %v5538
    %v5623 = vunpack.c.l.b16 %v5539
    %v5624 = vunpack.c.h.b16 %v5539
    %v5625 = vunpack.c.l.b16 %v5540
    %v5626 = vunpack.c.h.b16 %v5540
    %v5627 = vunpack.c.l.b16 %v5541
    %v5628 = vunpack.c.h.b16 %v5541
    %v5629 = vunpack.c.l.b16 %v5542
    %v5630 = vunpack.c.h.b16 %v5542
    %v5631 = vunpack.c.l.b16 %v5543
    %v5632 = vunpack.c.h.b16 %v5543
    %v5633 = vunpack.c.l.b16 %v5544
    %v5634 = vunpack.c.h.b16 %v5544
    %v5635 = vunpack.c.l.b16 %v5545
    %v5636 = vunpack.c.h.b16 %v5545
    %v5637 = vunpack.c.l.b16 %v5546
    %v5638 = vunpack.c.h.b16 %v5546
    %v5639 = vunpack.c.l.b16 %v5547
    %v5640 = vunpack.c.h.b16 %v5547
    %v5641 = vunpack.c.l.b16 %v5548
    %v5642 = vunpack.c.h.b16 %v5548
    %v5643 = vunpack.c.l.b16 %v5549
    %v5644 = vunpack.c.h.b16 %v5549
    %v5645 = vunpack.c.l.b16 %v5550
    %v5646 = vunpack.c.h.b16 %v5550
    %v5647 = vpack.c.b16 %v5585, %v5583
    %v5648 = vpack.c.b16 %v5586, %v5584
    %v5649 = vpack.c.b16 %v5589, %v5587
    %v5650 = vpack.c.b16 %v5590, %v5588
    %v5651 = vpack.c.b16 %v5593, %v5591
    %v5652 = vpack.c.b16 %v5594, %v5592
    %v5653 = vpack.c.b16 %v5597, %v5595
    %v5654 = vpack.c.b16 %v5598, %v5596
    %v5655 = vpack.c.b16 %v5601, %v5599
    %v5656 = vpack.c.b16 %v5602, %v5600
    %v5657 = vpack.c.b16 %v5605, %v5603
    %v5658 = vpack.c.b16 %v5606, %v5604
    %v5659 = vpack.c.b16 %v5609, %v5607
    %v5660 = vpack.c.b16 %v5610, %v5608
    %v5661 = vpack.c.b16 %v5613, %v5611
    %v5662 = vpack.c.b16 %v5614, %v5612
    %v5663 = vpack.c.b16 %v5617, %v5615
    %v5664 = vpack.c.b16 %v5618, %v5616
    %v5665 = vpack.c.b16 %v5621, %v5619
    %v5666 = vpack.c.b16 %v5622, %v5620
    %v5667 = vpack.c.b16 %v5625, %v5623
    %v5668 = vpack.c.b16 %v5626, %v5624
    %v5669 = vpack.c.b16 %v5629, %v5627
    %v5670 = vpack.c.b16 %v5630, %v5628
    %v5671 = vpack.c.b16 %v5633, %v5631
    %v5672 = vpack.c.b16 %v5634, %v5632
    %v5673 = vpack.c.b16 %v5637, %v5635
    %v5674 = vpack.c.b16 %v5638, %v5636
    %v5675 = vpack.c.b16 %v5641, %v5639
    %v5676 = vpack.c.b16 %v5642, %v5640
    %v5677 = vpack.c.b16 %v5645, %v5643
    %v5678 = vpack.c.b16 %v5646, %v5644
    %5711 = vmatprep.subr.bf16.mxu0 %v5648
    %5712 = vmatpush1.bf16.msra.mxu0 %v5647
    %5713 = vmatprep.subr.bf16.mxu0 %v5650
    %5714 = vmatpush1.bf16.msra.mxu0 %v5649
    %5715 = vmatprep.subr.bf16.mxu0 %v5652
    %5716 = vmatpush1.bf16.msra.mxu0 %v5651
    %5717 = vmatprep.subr.bf16.mxu0 %v5654
    %5718 = vmatpush1.bf16.msra.mxu0 %v5653
    %5719 = vmatprep.subr.bf16.mxu0 %v5656
    %5720 = vmatpush1.bf16.msra.mxu0 %v5655
    %5721 = vmatprep.subr.bf16.mxu0 %v5658
    %5722 = vmatpush1.bf16.msra.mxu0 %v5657
    %5723 = vmatprep.subr.bf16.mxu0 %v5660
    %5724 = vmatpush1.bf16.msra.mxu0 %v5659
    %5725 = vmatprep.subr.bf16.mxu0 %v5662
    %5726 = vmatpush1.bf16.msra.mxu0 %v5661
    %5727 = vmatprep.subr.bf16.mxu0 %v5664
    %5728 = vmatpush1.bf16.msra.mxu0 %v5663
    %5729 = vmatprep.subr.bf16.mxu0 %v5666
    %5730 = vmatpush1.bf16.msra.mxu0 %v5665
    %5731 = vmatprep.subr.bf16.mxu0 %v5668
    %5732 = vmatpush1.bf16.msra.mxu0 %v5667
    %5733 = vmatprep.subr.bf16.mxu0 %v5670
    %5734 = vmatpush1.bf16.msra.mxu0 %v5669
    %5735 = vmatprep.subr.bf16.mxu0 %v5672
    %5736 = vmatpush1.bf16.msra.mxu0 %v5671
    %5737 = vmatprep.subr.bf16.mxu0 %v5674
    %5738 = vmatpush1.bf16.msra.mxu0 %v5673
    %5739 = vmatprep.subr.bf16.mxu0 %v5676
    %5740 = vmatpush1.bf16.msra.mxu0 %v5675
    %5741 = vmatprep.subr.bf16.mxu0 %v5678
    %5742 = vmatpush1.bf16.msra.mxu0 %v5677
    %5743 = vmatprep.mubr.bf16.mxu0 %v4409
    %5744 = vmatmul.mubr.bf16.gmra.mrb[0].mxu0 %v4408
    %v5745 = vpop.f32.mrb[0].mxu0
    %v5746 = vadd.f32 0.0, %v5745
    %v5747 = vpop.f32.mrb[0].mxu0
    %v5748 = vadd.f32 0.0, %v5747
    %v5749 = vpop.f32.mrb[0].mxu0
    %v5750 = vadd.f32 0.0, %v5749
    %v5751 = vpop.f32.mrb[0].mxu0
    %v5752 = vadd.f32 0.0, %v5751
    %5753 = vmatprep.mubr.bf16.mxu0 %v4411
    %5754 = vmatmul.mubr.bf16.gmra.mrb[0].mxu0 %v4410
    %v5755 = vpop.f32.mrb[0].mxu0
    %v5756 = vadd.f32 0.0, %v5755
    %v5757 = vpop.f32.mrb[0].mxu0
    %v5758 = vadd.f32 0.0, %v5757
    %v5759 = vpop.f32.mrb[0].mxu0
    %v5760 = vadd.f32 0.0, %v5759
    %v5761 = vpop.f32.mrb[0].mxu0
    %v5762 = vadd.f32 0.0, %v5761
    %5763 = vdwg.mxu0
    %s5764 = scalar_lea.vmem %s9, 96
    %v5765 = vld [vmem:[%s5764] sm:$0xf]
    %v5766 = vld [vmem:[%s5764 + $0x4] sm:$0xf]
    %v5767 = vld [vmem:[%s5764 + $0x8] sm:$0xf]
    %v5768 = vld [vmem:[%s5764 + $0xc] sm:$0xf]
    %v5769 = vld [vmem:[%s5764 + $0x10] sm:$0xf]
    %v5770 = vld [vmem:[%s5764 + $0x14] sm:$0xf]
    %v5771 = vld [vmem:[%s5764 + $0x18] sm:$0xf]
    %v5772 = vld [vmem:[%s5764 + $0x1c] sm:$0xf]
    %v5773 = vpack.c.bf16 %v5750, %v5746
    %v5774 = vpack.c.bf16 %v5752, %v5748
    %v5775 = vpack.c.bf16 %v5760, %v5756
    %v5776 = vpack.c.bf16 %v5762, %v5758
    %v5785 = vunpack.c.l.b16 %v5765
    %v5786 = vunpack.c.l.b16 %v5766
    %v5787 = vunpack.c.l.b16 %v5767
    %v5788 = vunpack.c.l.b16 %v5768
    %v5789 = vunpack.c.l.b16 %v5769
    %v5790 = vunpack.c.l.b16 %v5770
    %v5791 = vunpack.c.l.b16 %v5771
    %v5792 = vunpack.c.l.b16 %v5772
    %v5793 = vpack.c.b16 %v5786, %v5785
    %v5794 = vpack.c.b16 %v5788, %v5787
    %v5795 = vpack.c.b16 %v5790, %v5789
    %v5796 = vpack.c.b16 %v5792, %v5791
    %v5798 = vsel %vm271, %v5793, 0
    %v5801 = vsel %vm271, %v5794, 0
    %v5804 = vsel %vm271, %v5795, 0
    %v5807 = vsel %vm271, %v5796, 0
    %5809 = vmatprep.subr.bf16.mxu0 %v5774
    %5810 = vmatpush1.bf16.msra.mxu0 %v5773
    %5811 = vmatprep.subr.bf16.mxu0 %v5776
    %5812 = vmatpush1.bf16.msra.mxu0 %v5775
    %5813 = vmatprep.subr.bf16.mxu0 0
    %5814 = vmatpush1.bf16.msra.mxu0 0
    %5815 = vmatprep.subr.bf16.mxu0 0
    %5816 = vmatpush1.bf16.msra.mxu0 0
    %5817 = vmatprep.subr.bf16.mxu0 0
    %5818 = vmatpush1.bf16.msra.mxu0 0
    %5819 = vmatprep.subr.bf16.mxu0 0
    %5820 = vmatpush1.bf16.msra.mxu0 0
    %5821 = vmatprep.subr.bf16.mxu0 0
    %5822 = vmatpush1.bf16.msra.mxu0 0
    %5823 = vmatprep.subr.bf16.mxu0 0
    %5824 = vmatpush1.bf16.msra.mxu0 0
    %5825 = vmatprep.subr.bf16.mxu0 0
    %5826 = vmatpush1.bf16.msra.mxu0 0
    %5827 = vmatprep.subr.bf16.mxu0 0
    %5828 = vmatpush1.bf16.msra.mxu0 0
    %5829 = vmatprep.subr.bf16.mxu0 0
    %5830 = vmatpush1.bf16.msra.mxu0 0
    %5831 = vmatprep.subr.bf16.mxu0 0
    %5832 = vmatpush1.bf16.msra.mxu0 0
    %5833 = vmatprep.subr.bf16.mxu0 0
    %5834 = vmatpush1.bf16.msra.mxu0 0
    %5835 = vmatprep.subr.bf16.mxu0 0
    %5836 = vmatpush1.bf16.msra.mxu0 0
    %5837 = vmatprep.subr.bf16.mxu0 0
    %5838 = vmatpush1.bf16.msra.mxu0 0
    %5839 = vmatprep.subr.bf16.mxu0 0
    %5840 = vmatpush1.bf16.msra.mxu0 0
    %5841 = vmatprep.mubr.bf16.mxu0 0
    %5842 = vmatmul.mubr.bf16.gmra.mrb[0].mxu0 %v5798
    %v5843 = vpop.f32.mrb[0].mxu0
    %v5844 = vadd.f32 0.0, %v5843
    %v5845 = vpop.f32.mrb[0].mxu0
    %v5846 = vadd.f32 0.0, %v5845
    %v5847 = vpop.f32.mrb[0].mxu0
    %v5848 = vadd.f32 0.0, %v5847
    %v5849 = vpop.f32.mrb[0].mxu0
    %v5850 = vadd.f32 0.0, %v5849
    %5851 = vmatprep.mubr.bf16.mxu0 0
    %5852 = vmatmul.mubr.bf16.gmra.mrb[0].mxu0 %v5801
    %v5853 = vpop.f32.mrb[0].mxu0
    %v5854 = vadd.f32 0.0, %v5853
    %v5855 = vpop.f32.mrb[0].mxu0
    %v5856 = vadd.f32 0.0, %v5855
    %v5857 = vpop.f32.mrb[0].mxu0
    %v5858 = vadd.f32 0.0, %v5857
    %v5859 = vpop.f32.mrb[0].mxu0
    %v5860 = vadd.f32 0.0, %v5859
    %5861 = vmatprep.mubr.bf16.mxu0 0
    %5862 = vmatmul.mubr.bf16.gmra.mrb[0].mxu0 %v5804
    %v5863 = vpop.f32.mrb[0].mxu0
    %v5864 = vadd.f32 0.0, %v5863
    %v5865 = vpop.f32.mrb[0].mxu0
    %v5866 = vadd.f32 0.0, %v5865
    %v5867 = vpop.f32.mrb[0].mxu0
    %v5868 = vadd.f32 0.0, %v5867
    %v5869 = vpop.f32.mrb[0].mxu0
    %v5870 = vadd.f32 0.0, %v5869
    %5871 = vmatprep.mubr.bf16.mxu0 0
    %5872 = vmatmul.mubr.bf16.gmra.mrb[0].mxu0 %v5807
    %v5873 = vpop.f32.mrb[0].mxu0
    %v5874 = vadd.f32 0.0, %v5873
    %v5875 = vpop.f32.mrb[0].mxu0
    %v5876 = vadd.f32 0.0, %v5875
    %v5877 = vpop.f32.mrb[0].mxu0
    %v5878 = vadd.f32 0.0, %v5877
    %v5879 = vpop.f32.mrb[0].mxu0
    %v5880 = vadd.f32 0.0, %v5879
    %5881 = vdwg.mxu0
    %v5882 = vadd.f32 %v5502, %v5844
    %v5883 = vadd.f32 %v5503, %v5846
    %v5884 = vadd.f32 %v5504, %v5848
    %v5885 = vadd.f32 %v5505, %v5850
    %v5886 = vadd.f32 %v5506, %v5854
    %v5887 = vadd.f32 %v5507, %v5856
    %v5888 = vadd.f32 %v5508, %v5858
    %v5889 = vadd.f32 %v5509, %v5860
    %v5890 = vadd.f32 %v5510, %v5864
    %v5891 = vadd.f32 %v5511, %v5866
    %v5892 = vadd.f32 %v5512, %v5868
    %v5893 = vadd.f32 %v5513, %v5870
    %v5894 = vadd.f32 %v5514, %v5874
    %v5895 = vadd.f32 %v5515, %v5876
    %v5896 = vadd.f32 %v5516, %v5878
    %v5897 = vadd.f32 %v5517, %v5880
    %v5898 = vld [vmem:[#allocation9] sm:$0x1]
    %v5899 = vld [vmem:[#allocation15] sm:$0x1]
    %v5900 = vld [vmem:[%s22] sm:$0xff]
    %v5901 = vld [vmem:[%s22 + $0x8] sm:$0xff]
    %v5902 = vld [vmem:[%s22 + $0x10] sm:$0xff]
    %v5903 = vld [vmem:[%s22 + $0x18] sm:$0xff]
    %v5904 = vld [vmem:[%s22 + $0x20] sm:$0xff]
    %v5905 = vld [vmem:[%s22 + $0x28] sm:$0xff]
    %v5906 = vld [vmem:[%s22 + $0x30] sm:$0xff]
    %v5907 = vld [vmem:[%s22 + $0x38] sm:$0xff]
    %v5908 = vld [vmem:[%s22 + $0x40] sm:$0xff]
    %v5909 = vld [vmem:[%s22 + $0x48] sm:$0xff]
    %v5910 = vld [vmem:[%s22 + $0x50] sm:$0xff]
    %v5911 = vld [vmem:[%s22 + $0x58] sm:$0xff]
    %v5912 = vld [vmem:[%s22 + $0x60] sm:$0xff]
    %v5913 = vld [vmem:[%s22 + $0x68] sm:$0xff]
    %v5914 = vld [vmem:[%s22 + $0x70] sm:$0xff]
    %v5915 = vld [vmem:[%s22 + $0x78] sm:$0xff]
    %v5916 = vld [vmem:[%s22 + $0x80] sm:$0xff]
    %v5917 = vld [vmem:[%s22 + $0x88] sm:$0xff]
    %v5918 = vld [vmem:[%s22 + $0x90] sm:$0xff]
    %v5919 = vld [vmem:[%s22 + $0x98] sm:$0xff]
    %v5920 = vld [vmem:[%s22 + $0xa0] sm:$0xff]
    %v5921 = vld [vmem:[%s22 + $0xa8] sm:$0xff]
    %v5922 = vld [vmem:[%s22 + $0xb0] sm:$0xff]
    %v5923 = vld [vmem:[%s22 + $0xb8] sm:$0xff]
    %v5924 = vld [vmem:[%s22 + $0xc0] sm:$0xff]
    %v5925 = vld [vmem:[%s22 + $0xc8] sm:$0xff]
    %v5926 = vld [vmem:[%s22 + $0xd0] sm:$0xff]
    %v5927 = vld [vmem:[%s22 + $0xd8] sm:$0xff]
    %v5928 = vld [vmem:[%s22 + $0xe0] sm:$0xff]
    %v5929 = vld [vmem:[%s22 + $0xe8] sm:$0xff]
    %v5930 = vld [vmem:[%s22 + $0xf0] sm:$0xff]
    %v5931 = vld [vmem:[%s22 + $0xf8] sm:$0xff]
    %v5932 = vld [vmem:[#allocation21] sm:$0xff]
    %v5933 = vld [vmem:[#allocation21 + $0x8] sm:$0xff]
    %v5934 = vadd.f32 %v5882, %v5884
    %v5935 = vadd.f32 %v5934, %v5886
    %v5936 = vadd.f32 %v5935, %v5888
    %v5937 = vadd.f32 %v5936, %v5890
    %v5938 = vadd.f32 %v5937, %v5892
    %v5939 = vadd.f32 %v5938, %v5894
    %v5940 = vadd.f32 %v5939, %v5896
    %v5941 = vrot.slane %v5940, 4
    %v5942 = vadd.f32 %v5940, %v5941
    %v5943 = vrot.slane %v5942, 2
    %v5944 = vadd.f32 %v5942, %v5943
    %v5945 = vrot.slane %v5944, 1
    %v5946 = vadd.f32 %v5944, %v5945
    %v5947 = vadd.f32 %v5883, %v5885
    %v5948 = vadd.f32 %v5947, %v5887
    %v5949 = vadd.f32 %v5948, %v5889
    %v5950 = vadd.f32 %v5949, %v5891
    %v5951 = vadd.f32 %v5950, %v5893
    %v5952 = vadd.f32 %v5951, %v5895
    %v5953 = vadd.f32 %v5952, %v5897
    %v5954 = vrot.slane %v5953, 4
    %v5955 = vadd.f32 %v5953, %v5954
    %v5956 = vrot.slane %v5955, 2
    %v5957 = vadd.f32 %v5955, %v5956
    %v5958 = vrot.slane %v5957, 1
    %v5959 = vadd.f32 %v5957, %v5958
    %v5960 = vmul.f32 %v5882, %v5882
    %v5961 = vmul.f32 %v5883, %v5883
    %v5962 = vmul.f32 %v5884, %v5884
    %v5963 = vmul.f32 %v5885, %v5885
    %v5964 = vmul.f32 %v5886, %v5886
    %v5965 = vmul.f32 %v5887, %v5887
    %v5966 = vmul.f32 %v5888, %v5888
    %v5967 = vmul.f32 %v5889, %v5889
    %v5968 = vmul.f32 %v5890, %v5890
    %v5969 = vmul.f32 %v5891, %v5891
    %v5970 = vmul.f32 %v5892, %v5892
    %v5971 = vmul.f32 %v5893, %v5893
    %v5972 = vmul.f32 %v5894, %v5894
    %v5973 = vmul.f32 %v5895, %v5895
    %v5974 = vmul.f32 %v5896, %v5896
    %v5975 = vmul.f32 %v5897, %v5897
    %v5976 = vadd.f32 %v5960, %v5962
    %v5977 = vadd.f32 %v5976, %v5964
    %v5978 = vadd.f32 %v5977, %v5966
    %v5979 = vadd.f32 %v5978, %v5968
    %v5980 = vadd.f32 %v5979, %v5970
    %v5981 = vadd.f32 %v5980, %v5972
    %v5982 = vadd.f32 %v5981, %v5974
    %v5983 = vrot.slane %v5982, 4
    %v5984 = vadd.f32 %v5982, %v5983
    %v5985 = vrot.slane %v5984, 2
    %v5986 = vadd.f32 %v5984, %v5985
    %v5987 = vrot.slane %v5986, 1
    %v5988 = vadd.f32 %v5986, %v5987
    %v5989 = vadd.f32 %v5961, %v5963
    %v5990 = vadd.f32 %v5989, %v5965
    %v5991 = vadd.f32 %v5990, %v5967
    %v5992 = vadd.f32 %v5991, %v5969
    %v5993 = vadd.f32 %v5992, %v5971
    %v5994 = vadd.f32 %v5993, %v5973
    %v5995 = vadd.f32 %v5994, %v5975
    %v5996 = vrot.slane %v5995, 4
    %v5997 = vadd.f32 %v5995, %v5996
    %v5998 = vrot.slane %v5997, 2
    %v5999 = vadd.f32 %v5997, %v5998
    %v6000 = vrot.slane %v5999, 1
    %v6001 = vadd.f32 %v5999, %v6000
    %6002 = vmatprep.subr.mxu0 0.0
    %6003 = vmatpush1.msra.mxu0 %v5900
    %6004 = vmatprep.subr.mxu0 0.0
    %6005 = vmatpush1.msra.mxu0 %v5901
    %6006 = vmatprep.subr.mxu0 0.0
    %6007 = vmatpush1.msra.mxu0 %v5902
    %6008 = vmatprep.subr.mxu0 0.0
    %6009 = vmatpush1.msra.mxu0 %v5903
    %6010 = vmatprep.subr.mxu0 0.0
    %6011 = vmatpush1.msra.mxu0 %v5904
    %6012 = vmatprep.subr.mxu0 0.0
    %6013 = vmatpush1.msra.mxu0 %v5905
    %6014 = vmatprep.subr.mxu0 0.0
    %6015 = vmatpush1.msra.mxu0 %v5906
    %6016 = vmatprep.subr.mxu0 0.0
    %6017 = vmatpush1.msra.mxu0 %v5907
    %6018 = vmatprep.subr.mxu0 0.0
    %6019 = vmatpush1.msra.mxu0 %v5908
    %6020 = vmatprep.subr.mxu0 0.0
    %6021 = vmatpush1.msra.mxu0 %v5909
    %6022 = vmatprep.subr.mxu0 0.0
    %6023 = vmatpush1.msra.mxu0 %v5910
    %6024 = vmatprep.subr.mxu0 0.0
    %6025 = vmatpush1.msra.mxu0 %v5911
    %6026 = vmatprep.subr.mxu0 0.0
    %6027 = vmatpush1.msra.mxu0 %v5912
    %6028 = vmatprep.subr.mxu0 0.0
    %6029 = vmatpush1.msra.mxu0 %v5913
    %6030 = vmatprep.subr.mxu0 0.0
    %6031 = vmatpush1.msra.mxu0 %v5914
    %6032 = vmatprep.subr.mxu0 0.0
    %6033 = vmatpush1.msra.mxu0 %v5915
    %6034 = vmatprep.subr.mxu0 0.0
    %6035 = vmatpush1.msra.mxu0 %v5916
    %6036 = vmatprep.subr.mxu0 0.0
    %6037 = vmatpush1.msra.mxu0 %v5917
    %6038 = vmatprep.subr.mxu0 0.0
    %6039 = vmatpush1.msra.mxu0 %v5918
    %6040 = vmatprep.subr.mxu0 0.0
    %6041 = vmatpush1.msra.mxu0 %v5919
    %6042 = vmatprep.subr.mxu0 0.0
    %6043 = vmatpush1.msra.mxu0 %v5920
    %6044 = vmatprep.subr.mxu0 0.0
    %6045 = vmatpush1.msra.mxu0 %v5921
    %6046 = vmatprep.subr.mxu0 0.0
    %6047 = vmatpush1.msra.mxu0 %v5922
    %6048 = vmatprep.subr.mxu0 0.0
    %6049 = vmatpush1.msra.mxu0 %v5923
    %6050 = vmatprep.subr.mxu0 0.0
    %6051 = vmatpush1.msra.mxu0 %v5924
    %6052 = vmatprep.subr.mxu0 0.0
    %6053 = vmatpush1.msra.mxu0 %v5925
    %6054 = vmatprep.subr.mxu0 0.0
    %6055 = vmatpush1.msra.mxu0 %v5926
    %6056 = vmatprep.subr.mxu0 0.0
    %6057 = vmatpush1.msra.mxu0 %v5927
    %6058 = vmatprep.subr.mxu0 0.0
    %6059 = vmatpush1.msra.mxu0 %v5928
    %6060 = vmatprep.subr.mxu0 0.0
    %6061 = vmatpush1.msra.mxu0 %v5929
    %6062 = vmatprep.subr.mxu0 0.0
    %6063 = vmatpush1.msra.mxu0 %v5930
    %6064 = vmatprep.subr.mxu0 0.0
    %6065 = vmatpush1.msra.mxu0 %v5931
    %6066 = vmatprep.mubr.f32.mxu0 %v5959
    %6067 = vmatmul.mubr.f32.gmra.mrb[0].mxu0 %v5946
    %v6068 = vpop.f32.mrb[0].mxu0
    %v6069 = vadd.f32 0.0, %v6068
    %v6070 = vpop.f32.mrb[0].mxu0
    %6071 = vdwg.mxu0
    %6072 = vmatprep.subr.mxu0 0.0
    %6073 = vmatpush1.msra.mxu0 %v5900
    %6074 = vmatprep.subr.mxu0 0.0
    %6075 = vmatpush1.msra.mxu0 %v5901
    %6076 = vmatprep.subr.mxu0 0.0
    %6077 = vmatpush1.msra.mxu0 %v5902
    %6078 = vmatprep.subr.mxu0 0.0
    %6079 = vmatpush1.msra.mxu0 %v5903
    %6080 = vmatprep.subr.mxu0 0.0
    %6081 = vmatpush1.msra.mxu0 %v5904
    %6082 = vmatprep.subr.mxu0 0.0
    %6083 = vmatpush1.msra.mxu0 %v5905
    %6084 = vmatprep.subr.mxu0 0.0
    %6085 = vmatpush1.msra.mxu0 %v5906
    %6086 = vmatprep.subr.mxu0 0.0
    %6087 = vmatpush1.msra.mxu0 %v5907
    %6088 = vmatprep.subr.mxu0 0.0
    %6089 = vmatpush1.msra.mxu0 %v5908
    %6090 = vmatprep.subr.mxu0 0.0
    %6091 = vmatpush1.msra.mxu0 %v5909
    %6092 = vmatprep.subr.mxu0 0.0
    %6093 = vmatpush1.msra.mxu0 %v5910
    %6094 = vmatprep.subr.mxu0 0.0
    %6095 = vmatpush1.msra.mxu0 %v5911
    %6096 = vmatprep.subr.mxu0 0.0
    %6097 = vmatpush1.msra.mxu0 %v5912
    %6098 = vmatprep.subr.mxu0 0.0
    %6099 = vmatpush1.msra.mxu0 %v5913
    %6100 = vmatprep.subr.mxu0 0.0
    %6101 = vmatpush1.msra.mxu0 %v5914
    %6102 = vmatprep.subr.mxu0 0.0
    %6103 = vmatpush1.msra.mxu0 %v5915
    %6104 = vmatprep.subr.mxu0 0.0
    %6105 = vmatpush1.msra.mxu0 %v5916
    %6106 = vmatprep.subr.mxu0 0.0
    %6107 = vmatpush1.msra.mxu0 %v5917
    %6108 = vmatprep.subr.mxu0 0.0
    %6109 = vmatpush1.msra.mxu0 %v5918
    %6110 = vmatprep.subr.mxu0 0.0
    %6111 = vmatpush1.msra.mxu0 %v5919
    %6112 = vmatprep.subr.mxu0 0.0
    %6113 = vmatpush1.msra.mxu0 %v5920
    %6114 = vmatprep.subr.mxu0 0.0
    %6115 = vmatpush1.msra.mxu0 %v5921
    %6116 = vmatprep.subr.mxu0 0.0
    %6117 = vmatpush1.msra.mxu0 %v5922
    %6118 = vmatprep.subr.mxu0 0.0
    %6119 = vmatpush1.msra.mxu0 %v5923
    %6120 = vmatprep.subr.mxu0 0.0
    %6121 = vmatpush1.msra.mxu0 %v5924
    %6122 = vmatprep.subr.mxu0 0.0
    %6123 = vmatpush1.msra.mxu0 %v5925
    %6124 = vmatprep.subr.mxu0 0.0
    %6125 = vmatpush1.msra.mxu0 %v5926
    %6126 = vmatprep.subr.mxu0 0.0
    %6127 = vmatpush1.msra.mxu0 %v5927
    %6128 = vmatprep.subr.mxu0 0.0
    %6129 = vmatpush1.msra.mxu0 %v5928
    %6130 = vmatprep.subr.mxu0 0.0
    %6131 = vmatpush1.msra.mxu0 %v5929
    %6132 = vmatprep.subr.mxu0 0.0
    %6133 = vmatpush1.msra.mxu0 %v5930
    %6134 = vmatprep.subr.mxu0 0.0
    %6135 = vmatpush1.msra.mxu0 %v5931
    %6136 = vmatprep.mubr.f32.mxu0 %v6001
    %6137 = vmatmul.mubr.f32.gmra.mrb[0].mxu0 %v5988
    %v6138 = vpop.f32.mrb[0].mxu0
    %v6139 = vadd.f32 0.0, %v6138
    %v6140 = vpop.f32.mrb[0].mxu0
    %6141 = vdwg.mxu0
    %v6142 = vmul.f32 %v6069, 0.00048828125
    %v6143 = vmul.f32 %v6139, 0.00048828125
    %v6144 = vmul.f32 %v6142, %v6142
    %v6145 = vsub.f32 %v6143, %v6144
    %v6146 = vadd.f32 %v6145, 1e-05
    %v6147 = vrsqrt.pop %v6146
    %v6148 = vmul.f32 %v5898, %v6147
    %v6149 = vmul.f32 %v6142, %v6148
    %v6150 = vsub.f32 %v5899, %v6149
    %v6152 = vsel %vm1614, %v6148, 0
    %6154 = vmatprep.subr.mxu0 %v5933
    %6155 = vmatpush1.msra.mxu0 %v5932
    %6156 = vmatprep.subr.mxu0 0.0
    %6157 = vmatpush1.msra.mxu0 0.0
    %6158 = vmatprep.subr.mxu0 0.0
    %6159 = vmatpush1.msra.mxu0 0.0
    %6160 = vmatprep.subr.mxu0 0.0
    %6161 = vmatpush1.msra.mxu0 0.0
    %6162 = vmatprep.subr.mxu0 0.0
    %6163 = vmatpush1.msra.mxu0 0.0
    %6164 = vmatprep.subr.mxu0 0.0
    %6165 = vmatpush1.msra.mxu0 0.0
    %6166 = vmatprep.subr.mxu0 0.0
    %6167 = vmatpush1.msra.mxu0 0.0
    %6168 = vmatprep.subr.mxu0 0.0
    %6169 = vmatpush1.msra.mxu0 0.0
    %6170 = vmatprep.subr.mxu0 0.0
    %6171 = vmatpush1.msra.mxu0 0.0
    %6172 = vmatprep.subr.mxu0 0.0
    %6173 = vmatpush1.msra.mxu0 0.0
    %6174 = vmatprep.subr.mxu0 0.0
    %6175 = vmatpush1.msra.mxu0 0.0
    %6176 = vmatprep.subr.mxu0 0.0
    %6177 = vmatpush1.msra.mxu0 0.0
    %6178 = vmatprep.subr.mxu0 0.0
    %6179 = vmatpush1.msra.mxu0 0.0
    %6180 = vmatprep.subr.mxu0 0.0
    %6181 = vmatpush1.msra.mxu0 0.0
    %6182 = vmatprep.subr.mxu0 0.0
    %6183 = vmatpush1.msra.mxu0 0.0
    %6184 = vmatprep.subr.mxu0 0.0
    %6185 = vmatpush1.msra.mxu0 0.0
    %6186 = vmatprep.subr.mxu0 0.0
    %6187 = vmatpush1.msra.mxu0 0.0
    %6188 = vmatprep.subr.mxu0 0.0
    %6189 = vmatpush1.msra.mxu0 0.0
    %6190 = vmatprep.subr.mxu0 0.0
    %6191 = vmatpush1.msra.mxu0 0.0
    %6192 = vmatprep.subr.mxu0 0.0
    %6193 = vmatpush1.msra.mxu0 0.0
    %6194 = vmatprep.subr.mxu0 0.0
    %6195 = vmatpush1.msra.mxu0 0.0
    %6196 = vmatprep.subr.mxu0 0.0
    %6197 = vmatpush1.msra.mxu0 0.0
    %6198 = vmatprep.subr.mxu0 0.0
    %6199 = vmatpush1.msra.mxu0 0.0
    %6200 = vmatprep.subr.mxu0 0.0
    %6201 = vmatpush1.msra.mxu0 0.0
    %6202 = vmatprep.subr.mxu0 0.0
    %6203 = vmatpush1.msra.mxu0 0.0
    %6204 = vmatprep.subr.mxu0 0.0
    %6205 = vmatpush1.msra.mxu0 0.0
    %6206 = vmatprep.subr.mxu0 0.0
    %6207 = vmatpush1.msra.mxu0 0.0
    %6208 = vmatprep.subr.mxu0 0.0
    %6209 = vmatpush1.msra.mxu0 0.0
    %6210 = vmatprep.subr.mxu0 0.0
    %6211 = vmatpush1.msra.mxu0 0.0
    %6212 = vmatprep.subr.mxu0 0.0
    %6213 = vmatpush1.msra.mxu0 0.0
    %6214 = vmatprep.subr.mxu0 0.0
    %6215 = vmatpush1.msra.mxu0 0.0
    %6216 = vmatprep.subr.mxu0 0.0
    %6217 = vmatpush1.msra.mxu0 0.0
    %6218 = vmatprep.mubr.f32.mxu0 0.0
    %6219 = vmatmul.mubr.f32.gmra.mrb[0].mxu0 %v6152
    %v6220 = vpop.f32.mrb[0].mxu0
    %v6221 = vadd.f32 0.0, %v6220
    %v6222 = vpop.f32.mrb[0].mxu0
    %v6223 = vadd.f32 0.0, %v6222
    %6224 = vdwg.mxu0
    %v6226 = vsel %vm1614, %v6150, 0
    %6228 = vmatprep.subr.mxu0 %v5933
    %6229 = vmatpush1.msra.mxu0 %v5932
    %6230 = vmatprep.subr.mxu0 0.0
    %6231 = vmatpush1.msra.mxu0 0.0
    %6232 = vmatprep.subr.mxu0 0.0
    %6233 = vmatpush1.msra.mxu0 0.0
    %6234 = vmatprep.subr.mxu0 0.0
    %6235 = vmatpush1.msra.mxu0 0.0
    %6236 = vmatprep.subr.mxu0 0.0
    %6237 = vmatpush1.msra.mxu0 0.0
    %6238 = vmatprep.subr.mxu0 0.0
    %6239 = vmatpush1.msra.mxu0 0.0
    %6240 = vmatprep.subr.mxu0 0.0
    %6241 = vmatpush1.msra.mxu0 0.0
    %6242 = vmatprep.subr.mxu0 0.0
    %6243 = vmatpush1.msra.mxu0 0.0
    %6244 = vmatprep.subr.mxu0 0.0
    %6245 = vmatpush1.msra.mxu0 0.0
    %6246 = vmatprep.subr.mxu0 0.0
    %6247 = vmatpush1.msra.mxu0 0.0
    %6248 = vmatprep.subr.mxu0 0.0
    %6249 = vmatpush1.msra.mxu0 0.0
    %6250 = vmatprep.subr.mxu0 0.0
    %6251 = vmatpush1.msra.mxu0 0.0
    %6252 = vmatprep.subr.mxu0 0.0
    %6253 = vmatpush1.msra.mxu0 0.0
    %6254 = vmatprep.subr.mxu0 0.0
    %6255 = vmatpush1.msra.mxu0 0.0
    %6256 = vmatprep.subr.mxu0 0.0
    %6257 = vmatpush1.msra.mxu0 0.0
    %6258 = vmatprep.subr.mxu0 0.0
    %6259 = vmatpush1.msra.mxu0 0.0
    %6260 = vmatprep.subr.mxu0 0.0
    %6261 = vmatpush1.msra.mxu0 0.0
    %6262 = vmatprep.subr.mxu0 0.0
    %6263 = vmatpush1.msra.mxu0 0.0
    %6264 = vmatprep.subr.mxu0 0.0
    %6265 = vmatpush1.msra.mxu0 0.0
    %6266 = vmatprep.subr.mxu0 0.0
    %6267 = vmatpush1.msra.mxu0 0.0
    %6268 = vmatprep.subr.mxu0 0.0
    %6269 = vmatpush1.msra.mxu0 0.0
    %6270 = vmatprep.subr.mxu0 0.0
    %6271 = vmatpush1.msra.mxu0 0.0
    %6272 = vmatprep.subr.mxu0 0.0
    %6273 = vmatpush1.msra.mxu0 0.0
    %6274 = vmatprep.subr.mxu0 0.0
    %6275 = vmatpush1.msra.mxu0 0.0
    %6276 = vmatprep.subr.mxu0 0.0
    %6277 = vmatpush1.msra.mxu0 0.0
    %6278 = vmatprep.subr.mxu0 0.0
    %6279 = vmatpush1.msra.mxu0 0.0
    %6280 = vmatprep.subr.mxu0 0.0
    %6281 = vmatpush1.msra.mxu0 0.0
    %6282 = vmatprep.subr.mxu0 0.0
    %6283 = vmatpush1.msra.mxu0 0.0
    %6284 = vmatprep.subr.mxu0 0.0
    %6285 = vmatpush1.msra.mxu0 0.0
    %6286 = vmatprep.subr.mxu0 0.0
    %6287 = vmatpush1.msra.mxu0 0.0
    %6288 = vmatprep.subr.mxu0 0.0
    %6289 = vmatpush1.msra.mxu0 0.0
    %6290 = vmatprep.subr.mxu0 0.0
    %6291 = vmatpush1.msra.mxu0 0.0
    %6292 = vmatprep.mubr.f32.mxu0 0.0
    %6293 = vmatmul.mubr.f32.gmra.mrb[0].mxu0 %v6226
    %v6294 = vpop.f32.mrb[0].mxu0
    %v6295 = vadd.f32 0.0, %v6294
    %v6296 = vpop.f32.mrb[0].mxu0
    %v6297 = vadd.f32 0.0, %v6296
    %6298 = vdwg.mxu0
    %v6299 = vlaneseq
    %v6300 = vshrl.u32 %v6299, 7
    %v6301 = vsub.s32 0, %v6300
    %v6302 = vrot.slane %v6221, %v6301
    %v6303 = vlaneseq
    %v6304 = vshrl.u32 %v6303, 7
    %v6305 = vsub.s32 0, %v6304
    %v6306 = vrot.slane %v6223, %v6305
    %v6307 = vmul.f32 %v5882, %v6302
    %v6308 = vmul.f32 %v5883, %v6306
    %v6309 = vmul.f32 %v5884, %v6302
    %v6310 = vmul.f32 %v5885, %v6306
    %v6311 = vmul.f32 %v5886, %v6302
    %v6312 = vmul.f32 %v5887, %v6306
    %v6313 = vmul.f32 %v5888, %v6302
    %v6314 = vmul.f32 %v5889, %v6306
    %v6315 = vmul.f32 %v5890, %v6302
    %v6316 = vmul.f32 %v5891, %v6306
    %v6317 = vmul.f32 %v5892, %v6302
    %v6318 = vmul.f32 %v5893, %v6306
    %v6319 = vmul.f32 %v5894, %v6302
    %v6320 = vmul.f32 %v5895, %v6306
    %v6321 = vmul.f32 %v5896, %v6302
    %v6322 = vmul.f32 %v5897, %v6306
    %v6323 = vlaneseq
    %v6324 = vshrl.u32 %v6323, 7
    %v6325 = vsub.s32 0, %v6324
    %v6326 = vrot.slane %v6295, %v6325
    %v6327 = vlaneseq
    %v6328 = vshrl.u32 %v6327, 7
    %v6329 = vsub.s32 0, %v6328
    %v6330 = vrot.slane %v6297, %v6329
    %v6331 = vadd.f32 %v6307, %v6326
    %v6332 = vadd.f32 %v6308, %v6330
    %v6333 = vadd.f32 %v6309, %v6326
    %v6334 = vadd.f32 %v6310, %v6330
    %v6335 = vadd.f32 %v6311, %v6326
    %v6336 = vadd.f32 %v6312, %v6330
    %v6337 = vadd.f32 %v6313, %v6326
    %v6338 = vadd.f32 %v6314, %v6330
    %v6339 = vadd.f32 %v6315, %v6326
    %v6340 = vadd.f32 %v6316, %v6330
    %v6341 = vadd.f32 %v6317, %v6326
    %v6342 = vadd.f32 %v6318, %v6330
    %v6343 = vadd.f32 %v6319, %v6326
    %v6344 = vadd.f32 %v6320, %v6330
    %v6345 = vadd.f32 %v6321, %v6326
    %v6346 = vadd.f32 %v6322, %v6330
    %v6347 = vmax.f32 %v6331, 0.0
    %v6348 = vmax.f32 %v6332, 0.0
    %v6349 = vmax.f32 %v6333, 0.0
    %v6350 = vmax.f32 %v6334, 0.0
    %v6351 = vmax.f32 %v6335, 0.0
    %v6352 = vmax.f32 %v6336, 0.0
    %v6353 = vmax.f32 %v6337, 0.0
    %v6354 = vmax.f32 %v6338, 0.0
    %v6355 = vmax.f32 %v6339, 0.0
    %v6356 = vmax.f32 %v6340, 0.0
    %v6357 = vmax.f32 %v6341, 0.0
    %v6358 = vmax.f32 %v6342, 0.0
    %v6359 = vmax.f32 %v6343, 0.0
    %v6360 = vmax.f32 %v6344, 0.0
    %v6361 = vmax.f32 %v6345, 0.0
    %v6362 = vmax.f32 %v6346, 0.0
    %v6363 = vpack.c.bf16 %v6349, %v6347
    %v6364 = vpack.c.bf16 %v6350, %v6348
    %v6365 = vpack.c.bf16 %v6353, %v6351
    %v6366 = vpack.c.bf16 %v6354, %v6352
    %v6367 = vpack.c.bf16 %v6357, %v6355
    %v6368 = vpack.c.bf16 %v6358, %v6356
    %v6369 = vpack.c.bf16 %v6361, %v6359
    %v6370 = vpack.c.bf16 %v6362, %v6360
    %v6371 = vld [vmem:[%s5] sm:$0xff]
    %v6372 = vld [vmem:[%s5 + $0x8] sm:$0xff]
    %v6373 = vld [vmem:[%s5 + $0x10] sm:$0xff]
    %v6374 = vld [vmem:[%s5 + $0x18] sm:$0xff]
    %v6375 = vld [vmem:[%s5 + $0x20] sm:$0xff]
    %v6376 = vld [vmem:[%s5 + $0x28] sm:$0xff]
    %v6377 = vld [vmem:[%s5 + $0x30] sm:$0xff]
    %v6378 = vld [vmem:[%s5 + $0x38] sm:$0xff]
    %v6379 = vld [vmem:[%s5 + $0x40] sm:$0xff]
    %v6380 = vld [vmem:[%s5 + $0x48] sm:$0xff]
    %v6381 = vld [vmem:[%s5 + $0x50] sm:$0xff]
    %v6382 = vld [vmem:[%s5 + $0x58] sm:$0xff]
    %v6383 = vld [vmem:[%s5 + $0x60] sm:$0xff]
    %v6384 = vld [vmem:[%s5 + $0x68] sm:$0xff]
    %v6385 = vld [vmem:[%s5 + $0x70] sm:$0xff]
    %v6386 = vld [vmem:[%s5 + $0x78] sm:$0xff]
    %v6387 = vld [vmem:[%s5 + $0x80] sm:$0xff]
    %v6388 = vld [vmem:[%s5 + $0x88] sm:$0xff]
    %v6389 = vld [vmem:[%s5 + $0x90] sm:$0xff]
    %v6390 = vld [vmem:[%s5 + $0x98] sm:$0xff]
    %v6391 = vld [vmem:[%s5 + $0xa0] sm:$0xff]
    %v6392 = vld [vmem:[%s5 + $0xa8] sm:$0xff]
    %v6393 = vld [vmem:[%s5 + $0xb0] sm:$0xff]
    %v6394 = vld [vmem:[%s5 + $0xb8] sm:$0xff]
    %v6395 = vld [vmem:[%s5 + $0xc0] sm:$0xff]
    %v6396 = vld [vmem:[%s5 + $0xc8] sm:$0xff]
    %v6397 = vld [vmem:[%s5 + $0xd0] sm:$0xff]
    %v6398 = vld [vmem:[%s5 + $0xd8] sm:$0xff]
    %v6399 = vld [vmem:[%s5 + $0xe0] sm:$0xff]
    %v6400 = vld [vmem:[%s5 + $0xe8] sm:$0xff]
    %v6401 = vld [vmem:[%s5 + $0xf0] sm:$0xff]
    %v6402 = vld [vmem:[%s5 + $0xf8] sm:$0xff]
    %v6435 = vunpack.c.l.b16 %v6371
    %v6436 = vunpack.c.h.b16 %v6371
    %v6437 = vunpack.c.l.b16 %v6372
    %v6438 = vunpack.c.h.b16 %v6372
    %v6439 = vunpack.c.l.b16 %v6373
    %v6440 = vunpack.c.h.b16 %v6373
    %v6441 = vunpack.c.l.b16 %v6374
    %v6442 = vunpack.c.h.b16 %v6374
    %v6443 = vunpack.c.l.b16 %v6375
    %v6444 = vunpack.c.h.b16 %v6375
    %v6445 = vunpack.c.l.b16 %v6376
    %v6446 = vunpack.c.h.b16 %v6376
    %v6447 = vunpack.c.l.b16 %v6377
    %v6448 = vunpack.c.h.b16 %v6377
    %v6449 = vunpack.c.l.b16 %v6378
    %v6450 = vunpack.c.h.b16 %v6378
    %v6451 = vunpack.c.l.b16 %v6379
    %v6452 = vunpack.c.h.b16 %v6379
    %v6453 = vunpack.c.l.b16 %v6380
    %v6454 = vunpack.c.h.b16 %v6380
    %v6455 = vunpack.c.l.b16 %v6381
    %v6456 = vunpack.c.h.b16 %v6381
    %v6457 = vunpack.c.l.b16 %v6382
    %v6458 = vunpack.c.h.b16 %v6382
    %v6459 = vunpack.c.l.b16 %v6383
    %v6460 = vunpack.c.h.b16 %v6383
    %v6461 = vunpack.c.l.b16 %v6384
    %v6462 = vunpack.c.h.b16 %v6384
    %v6463 = vunpack.c.l.b16 %v6385
    %v6464 = vunpack.c.h.b16 %v6385
    %v6465 = vunpack.c.l.b16 %v6386
    %v6466 = vunpack.c.h.b16 %v6386
    %v6467 = vunpack.c.l.b16 %v6387
    %v6468 = vunpack.c.h.b16 %v6387
    %v6469 = vunpack.c.l.b16 %v6388
    %v6470 = vunpack.c.h.b16 %v6388
    %v6471 = vunpack.c.l.b16 %v6389
    %v6472 = vunpack.c.h.b16 %v6389
    %v6473 = vunpack.c.l.b16 %v6390
    %v6474 = vunpack.c.h.b16 %v6390
    %v6475 = vunpack.c.l.b16 %v6391
    %v6476 = vunpack.c.h.b16 %v6391
    %v6477 = vunpack.c.l.b16 %v6392
    %v6478 = vunpack.c.h.b16 %v6392
    %v6479 = vunpack.c.l.b16 %v6393
    %v6480 = vunpack.c.h.b16 %v6393
    %v6481 = vunpack.c.l.b16 %v6394
    %v6482 = vunpack.c.h.b16 %v6394
    %v6483 = vunpack.c.l.b16 %v6395
    %v6484 = vunpack.c.h.b16 %v6395
    %v6485 = vunpack.c.l.b16 %v6396
    %v6486 = vunpack.c.h.b16 %v6396
    %v6487 = vunpack.c.l.b16 %v6397
    %v6488 = vunpack.c.h.b16 %v6397
    %v6489 = vunpack.c.l.b16 %v6398
    %v6490 = vunpack.c.h.b16 %v6398
    %v6491 = vunpack.c.l.b16 %v6399
    %v6492 = vunpack.c.h.b16 %v6399
    %v6493 = vunpack.c.l.b16 %v6400
    %v6494 = vunpack.c.h.b16 %v6400
    %v6495 = vunpack.c.l.b16 %v6401
    %v6496 = vunpack.c.h.b16 %v6401
    %v6497 = vunpack.c.l.b16 %v6402
    %v6498 = vunpack.c.h.b16 %v6402
    %v6499 = vpack.c.b16 %v6437, %v6435
    %v6500 = vpack.c.b16 %v6438, %v6436
    %v6501 = vpack.c.b16 %v6441, %v6439
    %v6502 = vpack.c.b16 %v6442, %v6440
    %v6503 = vpack.c.b16 %v6445, %v6443
    %v6504 = vpack.c.b16 %v6446, %v6444
    %v6505 = vpack.c.b16 %v6449, %v6447
    %v6506 = vpack.c.b16 %v6450, %v6448
    %v6507 = vpack.c.b16 %v6453, %v6451
    %v6508 = vpack.c.b16 %v6454, %v6452
    %v6509 = vpack.c.b16 %v6457, %v6455
    %v6510 = vpack.c.b16 %v6458, %v6456
    %v6511 = vpack.c.b16 %v6461, %v6459
    %v6512 = vpack.c.b16 %v6462, %v6460
    %v6513 = vpack.c.b16 %v6465, %v6463
    %v6514 = vpack.c.b16 %v6466, %v6464
    %v6515 = vpack.c.b16 %v6469, %v6467
    %v6516 = vpack.c.b16 %v6470, %v6468
    %v6517 = vpack.c.b16 %v6473, %v6471
    %v6518 = vpack.c.b16 %v6474, %v6472
    %v6519 = vpack.c.b16 %v6477, %v6475
    %v6520 = vpack.c.b16 %v6478, %v6476
    %v6521 = vpack.c.b16 %v6481, %v6479
    %v6522 = vpack.c.b16 %v6482, %v6480
    %v6523 = vpack.c.b16 %v6485, %v6483
    %v6524 = vpack.c.b16 %v6486, %v6484
    %v6525 = vpack.c.b16 %v6489, %v6487
    %v6526 = vpack.c.b16 %v6490, %v6488
    %v6527 = vpack.c.b16 %v6493, %v6491
    %v6528 = vpack.c.b16 %v6494, %v6492
    %v6529 = vpack.c.b16 %v6497, %v6495
    %v6530 = vpack.c.b16 %v6498, %v6496
    %6563 = vmatprep.subr.bf16.mxu0 %v6500
    %6564 = vmatpush1.bf16.msra.mxu0 %v6499
    %6565 = vmatprep.subr.bf16.mxu0 %v6502
    %6566 = vmatpush1.bf16.msra.mxu0 %v6501
    %6567 = vmatprep.subr.bf16.mxu0 %v6504
    %6568 = vmatpush1.bf16.msra.mxu0 %v6503
    %6569 = vmatprep.subr.bf16.mxu0 %v6506
    %6570 = vmatpush1.bf16.msra.mxu0 %v6505
    %6571 = vmatprep.subr.bf16.mxu0 %v6508
    %6572 = vmatpush1.bf16.msra.mxu0 %v6507
    %6573 = vmatprep.subr.bf16.mxu0 %v6510
    %6574 = vmatpush1.bf16.msra.mxu0 %v6509
    %6575 = vmatprep.subr.bf16.mxu0 %v6512
    %6576 = vmatpush1.bf16.msra.mxu0 %v6511
    %6577 = vmatprep.subr.bf16.mxu0 %v6514
    %6578 = vmatpush1.bf16.msra.mxu0 %v6513
    %6579 = vmatprep.subr.bf16.mxu0 %v6516
    %6580 = vmatpush1.bf16.msra.mxu0 %v6515
    %6581 = vmatprep.subr.bf16.mxu0 %v6518
    %6582 = vmatpush1.bf16.msra.mxu0 %v6517
    %6583 = vmatprep.subr.bf16.mxu0 %v6520
    %6584 = vmatpush1.bf16.msra.mxu0 %v6519
    %6585 = vmatprep.subr.bf16.mxu0 %v6522
    %6586 = vmatpush1.bf16.msra.mxu0 %v6521
    %6587 = vmatprep.subr.bf16.mxu0 %v6524
    %6588 = vmatpush1.bf16.msra.mxu0 %v6523
    %6589 = vmatprep.subr.bf16.mxu0 %v6526
    %6590 = vmatpush1.bf16.msra.mxu0 %v6525
    %6591 = vmatprep.subr.bf16.mxu0 %v6528
    %6592 = vmatpush1.bf16.msra.mxu0 %v6527
    %6593 = vmatprep.subr.bf16.mxu0 %v6530
    %6594 = vmatpush1.bf16.msra.mxu0 %v6529
    %6595 = vmatprep.mubr.bf16.mxu0 %v6364
    %6596 = vmatmul.mubr.bf16.gmra.mrb[0].mxu0 %v6363
    %v6597 = vpop.f32.mrb[0].mxu0
    %v6598 = vadd.f32 0.0, %v6597
    %v6599 = vpop.f32.mrb[0].mxu0
    %v6600 = vadd.f32 0.0, %v6599
    %v6601 = vpop.f32.mrb[0].mxu0
    %v6602 = vadd.f32 0.0, %v6601
    %v6603 = vpop.f32.mrb[0].mxu0
    %v6604 = vadd.f32 0.0, %v6603
    %6605 = vmatprep.mubr.bf16.mxu0 %v6366
    %6606 = vmatmul.mubr.bf16.gmra.mrb[0].mxu0 %v6365
    %v6607 = vpop.f32.mrb[0].mxu0
    %v6608 = vadd.f32 0.0, %v6607
    %v6609 = vpop.f32.mrb[0].mxu0
    %v6610 = vadd.f32 0.0, %v6609
    %v6611 = vpop.f32.mrb[0].mxu0
    %v6612 = vadd.f32 0.0, %v6611
    %v6613 = vpop.f32.mrb[0].mxu0
    %v6614 = vadd.f32 0.0, %v6613
    %6615 = vmatprep.mubr.bf16.mxu0 %v6368
    %6616 = vmatmul.mubr.bf16.gmra.mrb[0].mxu0 %v6367
    %v6617 = vpop.f32.mrb[0].mxu0
    %v6618 = vadd.f32 0.0, %v6617
    %v6619 = vpop.f32.mrb[0].mxu0
    %v6620 = vadd.f32 0.0, %v6619
    %v6621 = vpop.f32.mrb[0].mxu0
    %v6622 = vadd.f32 0.0, %v6621
    %v6623 = vpop.f32.mrb[0].mxu0
    %v6624 = vadd.f32 0.0, %v6623
    %6625 = vmatprep.mubr.bf16.mxu0 %v6370
    %6626 = vmatmul.mubr.bf16.gmra.mrb[0].mxu0 %v6369
    %v6627 = vpop.f32.mrb[0].mxu0
    %v6628 = vadd.f32 0.0, %v6627
    %v6629 = vpop.f32.mrb[0].mxu0
    %v6630 = vadd.f32 0.0, %v6629
    %v6631 = vpop.f32.mrb[0].mxu0
    %v6632 = vadd.f32 0.0, %v6631
    %v6633 = vpop.f32.mrb[0].mxu0
    %v6634 = vadd.f32 0.0, %v6633
    %6635 = vdwg.mxu0
    %v6636 = vld [vmem:[%s10] sm:$0xf]
    %v6637 = vld [vmem:[%s10 + $0x4] sm:$0xf]
    %v6638 = vld [vmem:[%s10 + $0x8] sm:$0xf]
    %v6639 = vld [vmem:[%s10 + $0xc] sm:$0xf]
    %v6640 = vld [vmem:[%s10 + $0x10] sm:$0xf]
    %v6641 = vld [vmem:[%s10 + $0x14] sm:$0xf]
    %v6642 = vld [vmem:[%s10 + $0x18] sm:$0xf]
    %v6643 = vld [vmem:[%s10 + $0x1c] sm:$0xf]
    %v6644 = vld [vmem:[%s10 + $0x20] sm:$0xf]
    %v6645 = vld [vmem:[%s10 + $0x24] sm:$0xf]
    %v6646 = vld [vmem:[%s10 + $0x28] sm:$0xf]
    %v6647 = vld [vmem:[%s10 + $0x2c] sm:$0xf]
    %v6648 = vld [vmem:[%s10 + $0x30] sm:$0xf]
    %v6649 = vld [vmem:[%s10 + $0x34] sm:$0xf]
    %v6650 = vld [vmem:[%s10 + $0x38] sm:$0xf]
    %v6651 = vld [vmem:[%s10 + $0x3c] sm:$0xf]
    %v6652 = vpack.c.bf16 %v6602, %v6598
    %v6653 = vpack.c.bf16 %v6604, %v6600
    %v6654 = vpack.c.bf16 %v6612, %v6608
    %v6655 = vpack.c.bf16 %v6614, %v6610
    %v6656 = vpack.c.bf16 %v6622, %v6618
    %v6657 = vpack.c.bf16 %v6624, %v6620
    %v6658 = vpack.c.bf16 %v6632, %v6628
    %v6659 = vpack.c.bf16 %v6634, %v6630
    %s6660 = scalar_lea.vmem %s5, 256
    %v6661 = vld [vmem:[%s6660] sm:$0xff]
    %v6662 = vld [vmem:[%s6660 + $0x8] sm:$0xff]
    %v6663 = vld [vmem:[%s6660 + $0x10] sm:$0xff]
    %v6664 = vld [vmem:[%s6660 + $0x18] sm:$0xff]
    %v6665 = vld [vmem:[%s6660 + $0x20] sm:$0xff]
    %v6666 = vld [vmem:[%s6660 + $0x28] sm:$0xff]
    %v6667 = vld [vmem:[%s6660 + $0x30] sm:$0xff]
    %v6668 = vld [vmem:[%s6660 + $0x38] sm:$0xff]
    %v6669 = vld [vmem:[%s6660 + $0x40] sm:$0xff]
    %v6670 = vld [vmem:[%s6660 + $0x48] sm:$0xff]
    %v6671 = vld [vmem:[%s6660 + $0x50] sm:$0xff]
    %v6672 = vld [vmem:[%s6660 + $0x58] sm:$0xff]
    %v6673 = vld [vmem:[%s6660 + $0x60] sm:$0xff]
    %v6674 = vld [vmem:[%s6660 + $0x68] sm:$0xff]
    %v6675 = vld [vmem:[%s6660 + $0x70] sm:$0xff]
    %v6676 = vld [vmem:[%s6660 + $0x78] sm:$0xff]
    %v6677 = vld [vmem:[%s6660 + $0x80] sm:$0xff]
    %v6678 = vld [vmem:[%s6660 + $0x88] sm:$0xff]
    %v6679 = vld [vmem:[%s6660 + $0x90] sm:$0xff]
    %v6680 = vld [vmem:[%s6660 + $0x98] sm:$0xff]
    %v6681 = vld [vmem:[%s6660 + $0xa0] sm:$0xff]
    %v6682 = vld [vmem:[%s6660 + $0xa8] sm:$0xff]
    %v6683 = vld [vmem:[%s6660 + $0xb0] sm:$0xff]
    %v6684 = vld [vmem:[%s6660 + $0xb8] sm:$0xff]
    %v6685 = vld [vmem:[%s6660 + $0xc0] sm:$0xff]
    %v6686 = vld [vmem:[%s6660 + $0xc8] sm:$0xff]
    %v6687 = vld [vmem:[%s6660 + $0xd0] sm:$0xff]
    %v6688 = vld [vmem:[%s6660 + $0xd8] sm:$0xff]
    %v6689 = vld [vmem:[%s6660 + $0xe0] sm:$0xff]
    %v6690 = vld [vmem:[%s6660 + $0xe8] sm:$0xff]
    %v6691 = vld [vmem:[%s6660 + $0xf0] sm:$0xff]
    %v6692 = vld [vmem:[%s6660 + $0xf8] sm:$0xff]
    %v6725 = vunpack.c.l.b16 %v6661
    %v6726 = vunpack.c.h.b16 %v6661
    %v6727 = vunpack.c.l.b16 %v6662
    %v6728 = vunpack.c.h.b16 %v6662
    %v6729 = vunpack.c.l.b16 %v6663
    %v6730 = vunpack.c.h.b16 %v6663
    %v6731 = vunpack.c.l.b16 %v6664
    %v6732 = vunpack.c.h.b16 %v6664
    %v6733 = vunpack.c.l.b16 %v6665
    %v6734 = vunpack.c.h.b16 %v6665
    %v6735 = vunpack.c.l.b16 %v6666
    %v6736 = vunpack.c.h.b16 %v6666
    %v6737 = vunpack.c.l.b16 %v6667
    %v6738 = vunpack.c.h.b16 %v6667
    %v6739 = vunpack.c.l.b16 %v6668
    %v6740 = vunpack.c.h.b16 %v6668
    %v6741 = vunpack.c.l.b16 %v6669
    %v6742 = vunpack.c.h.b16 %v6669
    %v6743 = vunpack.c.l.b16 %v6670
    %v6744 = vunpack.c.h.b16 %v6670
    %v6745 = vunpack.c.l.b16 %v6671
    %v6746 = vunpack.c.h.b16 %v6671
    %v6747 = vunpack.c.l.b16 %v6672
    %v6748 = vunpack.c.h.b16 %v6672
    %v6749 = vunpack.c.l.b16 %v6673
    %v6750 = vunpack.c.h.b16 %v6673
    %v6751 = vunpack.c.l.b16 %v6674
    %v6752 = vunpack.c.h.b16 %v6674
    %v6753 = vunpack.c.l.b16 %v6675
    %v6754 = vunpack.c.h.b16 %v6675
    %v6755 = vunpack.c.l.b16 %v6676
    %v6756 = vunpack.c.h.b16 %v6676
    %v6757 = vunpack.c.l.b16 %v6677
    %v6758 = vunpack.c.h.b16 %v6677
    %v6759 = vunpack.c.l.b16 %v6678
    %v6760 = vunpack.c.h.b16 %v6678
    %v6761 = vunpack.c.l.b16 %v6679
    %v6762 = vunpack.c.h.b16 %v6679
    %v6763 = vunpack.c.l.b16 %v6680
    %v6764 = vunpack.c.h.b16 %v6680
    %v6765 = vunpack.c.l.b16 %v6681
    %v6766 = vunpack.c.h.b16 %v6681
    %v6767 = vunpack.c.l.b16 %v6682
    %v6768 = vunpack.c.h.b16 %v6682
    %v6769 = vunpack.c.l.b16 %v6683
    %v6770 = vunpack.c.h.b16 %v6683
    %v6771 = vunpack.c.l.b16 %v6684
    %v6772 = vunpack.c.h.b16 %v6684
    %v6773 = vunpack.c.l.b16 %v6685
    %v6774 = vunpack.c.h.b16 %v6685
    %v6775 = vunpack.c.l.b16 %v6686
    %v6776 = vunpack.c.h.b16 %v6686
    %v6777 = vunpack.c.l.b16 %v6687
    %v6778 = vunpack.c.h.b16 %v6687
    %v6779 = vunpack.c.l.b16 %v6688
    %v6780 = vunpack.c.h.b16 %v6688
    %v6781 = vunpack.c.l.b16 %v6689
    %v6782 = vunpack.c.h.b16 %v6689
    %v6783 = vunpack.c.l.b16 %v6690
    %v6784 = vunpack.c.h.b16 %v6690
    %v6785 = vunpack.c.l.b16 %v6691
    %v6786 = vunpack.c.h.b16 %v6691
    %v6787 = vunpack.c.l.b16 %v6692
    %v6788 = vunpack.c.h.b16 %v6692
    %v6789 = vpack.c.b16 %v6727, %v6725
    %v6790 = vpack.c.b16 %v6728, %v6726
    %v6791 = vpack.c.b16 %v6731, %v6729
    %v6792 = vpack.c.b16 %v6732, %v6730
    %v6793 = vpack.c.b16 %v6735, %v6733
    %v6794 = vpack.c.b16 %v6736, %v6734
    %v6795 = vpack.c.b16 %v6739, %v6737
    %v6796 = vpack.c.b16 %v6740, %v6738
    %v6797 = vpack.c.b16 %v6743, %v6741
    %v6798 = vpack.c.b16 %v6744, %v6742
    %v6799 = vpack.c.b16 %v6747, %v6745
    %v6800 = vpack.c.b16 %v6748, %v6746
    %v6801 = vpack.c.b16 %v6751, %v6749
    %v6802 = vpack.c.b16 %v6752, %v6750
    %v6803 = vpack.c.b16 %v6755, %v6753
    %v6804 = vpack.c.b16 %v6756, %v6754
    %v6805 = vpack.c.b16 %v6759, %v6757
    %v6806 = vpack.c.b16 %v6760, %v6758
    %v6807 = vpack.c.b16 %v6763, %v6761
    %v6808 = vpack.c.b16 %v6764, %v6762
    %v6809 = vpack.c.b16 %v6767, %v6765
    %v6810 = vpack.c.b16 %v6768, %v6766
    %v6811 = vpack.c.b16 %v6771, %v6769
    %v6812 = vpack.c.b16 %v6772, %v6770
    %v6813 = vpack.c.b16 %v6775, %v6773
    %v6814 = vpack.c.b16 %v6776, %v6774
    %v6815 = vpack.c.b16 %v6779, %v6777
    %v6816 = vpack.c.b16 %v6780, %v6778
    %v6817 = vpack.c.b16 %v6783, %v6781
    %v6818 = vpack.c.b16 %v6784, %v6782
    %v6819 = vpack.c.b16 %v6787, %v6785
    %v6820 = vpack.c.b16 %v6788, %v6786
    %6853 = vmatprep.subr.bf16.mxu0 %v6790
    %6854 = vmatpush1.bf16.msra.mxu0 %v6789
    %6855 = vmatprep.subr.bf16.mxu0 %v6792
    %6856 = vmatpush1.bf16.msra.mxu0 %v6791
    %6857 = vmatprep.subr.bf16.mxu0 %v6794
    %6858 = vmatpush1.bf16.msra.mxu0 %v6793
    %6859 = vmatprep.subr.bf16.mxu0 %v6796
    %6860 = vmatpush1.bf16.msra.mxu0 %v6795
    %6861 = vmatprep.subr.bf16.mxu0 %v6798
    %6862 = vmatpush1.bf16.msra.mxu0 %v6797
    %6863 = vmatprep.subr.bf16.mxu0 %v6800
    %6864 = vmatpush1.bf16.msra.mxu0 %v6799
    %6865 = vmatprep.subr.bf16.mxu0 %v6802
    %6866 = vmatpush1.bf16.msra.mxu0 %v6801
    %6867 = vmatprep.subr.bf16.mxu0 %v6804
    %6868 = vmatpush1.bf16.msra.mxu0 %v6803
    %6869 = vmatprep.subr.bf16.mxu0 %v6806
    %6870 = vmatpush1.bf16.msra.mxu0 %v6805
    %6871 = vmatprep.subr.bf16.mxu0 %v6808
    %6872 = vmatpush1.bf16.msra.mxu0 %v6807
    %6873 = vmatprep.subr.bf16.mxu0 %v6810
    %6874 = vmatpush1.bf16.msra.mxu0 %v6809
    %6875 = vmatprep.subr.bf16.mxu0 %v6812
    %6876 = vmatpush1.bf16.msra.mxu0 %v6811
    %6877 = vmatprep.subr.bf16.mxu0 %v6814
    %6878 = vmatpush1.bf16.msra.mxu0 %v6813
    %6879 = vmatprep.subr.bf16.mxu0 %v6816
    %6880 = vmatpush1.bf16.msra.mxu0 %v6815
    %6881 = vmatprep.subr.bf16.mxu0 %v6818
    %6882 = vmatpush1.bf16.msra.mxu0 %v6817
    %6883 = vmatprep.subr.bf16.mxu0 %v6820
    %6884 = vmatpush1.bf16.msra.mxu0 %v6819
    %6885 = vmatprep.mubr.bf16.mxu0 %v6364
    %6886 = vmatmul.mubr.bf16.gmra.mrb[0].mxu0 %v6363
    %v6887 = vpop.f32.mrb[0].mxu0
    %v6888 = vadd.f32 0.0, %v6887
    %v6889 = vpop.f32.mrb[0].mxu0
    %v6890 = vadd.f32 0.0, %v6889
    %v6891 = vpop.f32.mrb[0].mxu0
    %v6892 = vadd.f32 0.0, %v6891
    %v6893 = vpop.f32.mrb[0].mxu0
    %v6894 = vadd.f32 0.0, %v6893
    %6895 = vmatprep.mubr.bf16.mxu0 %v6366
    %6896 = vmatmul.mubr.bf16.gmra.mrb[0].mxu0 %v6365
    %v6897 = vpop.f32.mrb[0].mxu0
    %v6898 = vadd.f32 0.0, %v6897
    %v6899 = vpop.f32.mrb[0].mxu0
    %v6900 = vadd.f32 0.0, %v6899
    %v6901 = vpop.f32.mrb[0].mxu0
    %v6902 = vadd.f32 0.0, %v6901
    %v6903 = vpop.f32.mrb[0].mxu0
    %v6904 = vadd.f32 0.0, %v6903
    %6905 = vmatprep.mubr.bf16.mxu0 %v6368
    %6906 = vmatmul.mubr.bf16.gmra.mrb[0].mxu0 %v6367
    %v6907 = vpop.f32.mrb[0].mxu0
    %v6908 = vadd.f32 0.0, %v6907
    %v6909 = vpop.f32.mrb[0].mxu0
    %v6910 = vadd.f32 0.0, %v6909
    %v6911 = vpop.f32.mrb[0].mxu0
    %v6912 = vadd.f32 0.0, %v6911
    %v6913 = vpop.f32.mrb[0].mxu0
    %v6914 = vadd.f32 0.0, %v6913
    %6915 = vmatprep.mubr.bf16.mxu0 %v6370
    %6916 = vmatmul.mubr.bf16.gmra.mrb[0].mxu0 %v6369
    %v6917 = vpop.f32.mrb[0].mxu0
    %v6918 = vadd.f32 0.0, %v6917
    %v6919 = vpop.f32.mrb[0].mxu0
    %v6920 = vadd.f32 0.0, %v6919
    %v6921 = vpop.f32.mrb[0].mxu0
    %v6922 = vadd.f32 0.0, %v6921
    %v6923 = vpop.f32.mrb[0].mxu0
    %v6924 = vadd.f32 0.0, %v6923
    %6925 = vdwg.mxu0
    %s6926 = scalar_lea.vmem %s10, 64
    %v6927 = vld [vmem:[%s6926] sm:$0xf]
    %v6928 = vld [vmem:[%s6926 + $0x4] sm:$0xf]
    %v6929 = vld [vmem:[%s6926 + $0x8] sm:$0xf]
    %v6930 = vld [vmem:[%s6926 + $0xc] sm:$0xf]
    %v6931 = vld [vmem:[%s6926 + $0x10] sm:$0xf]
    %v6932 = vld [vmem:[%s6926 + $0x14] sm:$0xf]
    %v6933 = vld [vmem:[%s6926 + $0x18] sm:$0xf]
    %v6934 = vld [vmem:[%s6926 + $0x1c] sm:$0xf]
    %v6935 = vld [vmem:[%s6926 + $0x20] sm:$0xf]
    %v6936 = vld [vmem:[%s6926 + $0x24] sm:$0xf]
    %v6937 = vld [vmem:[%s6926 + $0x28] sm:$0xf]
    %v6938 = vld [vmem:[%s6926 + $0x2c] sm:$0xf]
    %v6939 = vld [vmem:[%s6926 + $0x30] sm:$0xf]
    %v6940 = vld [vmem:[%s6926 + $0x34] sm:$0xf]
    %v6941 = vld [vmem:[%s6926 + $0x38] sm:$0xf]
    %v6942 = vld [vmem:[%s6926 + $0x3c] sm:$0xf]
    %v6943 = vpack.c.bf16 %v6892, %v6888
    %v6944 = vpack.c.bf16 %v6894, %v6890
    %v6945 = vpack.c.bf16 %v6902, %v6898
    %v6946 = vpack.c.bf16 %v6904, %v6900
    %v6947 = vpack.c.bf16 %v6912, %v6908
    %v6948 = vpack.c.bf16 %v6914, %v6910
    %v6949 = vpack.c.bf16 %v6922, %v6918
    %v6950 = vpack.c.bf16 %v6924, %v6920
    %v6967 = vunpack.c.l.b16 %v6927
    %v6968 = vunpack.c.l.b16 %v6928
    %v6969 = vunpack.c.l.b16 %v6929
    %v6970 = vunpack.c.l.b16 %v6930
    %v6971 = vunpack.c.l.b16 %v6931
    %v6972 = vunpack.c.l.b16 %v6932
    %v6973 = vunpack.c.l.b16 %v6933
    %v6974 = vunpack.c.l.b16 %v6934
    %v6975 = vunpack.c.l.b16 %v6935
    %v6976 = vunpack.c.l.b16 %v6936
    %v6977 = vunpack.c.l.b16 %v6937
    %v6978 = vunpack.c.l.b16 %v6938
    %v6979 = vunpack.c.l.b16 %v6939
    %v6980 = vunpack.c.l.b16 %v6940
    %v6981 = vunpack.c.l.b16 %v6941
    %v6982 = vunpack.c.l.b16 %v6942
    %v6983 = vpack.c.b16 %v6968, %v6967
    %v6984 = vpack.c.b16 %v6970, %v6969
    %v6985 = vpack.c.b16 %v6972, %v6971
    %v6986 = vpack.c.b16 %v6974, %v6973
    %v6987 = vpack.c.b16 %v6976, %v6975
    %v6988 = vpack.c.b16 %v6978, %v6977
    %v6989 = vpack.c.b16 %v6980, %v6979
    %v6990 = vpack.c.b16 %v6982, %v6981
    %v6992 = vsel %vm960, %v6983, 0
    %v6995 = vsel %vm960, %v6984, 0
    %v6998 = vsel %vm960, %v6985, 0
    %v7001 = vsel %vm960, %v6986, 0
    %v7004 = vsel %vm960, %v6987, 0
    %v7007 = vsel %vm960, %v6988, 0
    %v7010 = vsel %vm960, %v6989, 0
    %v7013 = vsel %vm960, %v6990, 0
    %7015 = vmatprep.subr.bf16.mxu0 %v6944
    %7016 = vmatpush1.bf16.msra.mxu0 %v6943
    %7017 = vmatprep.subr.bf16.mxu0 %v6946
    %7018 = vmatpush1.bf16.msra.mxu0 %v6945
    %7019 = vmatprep.subr.bf16.mxu0 %v6948
    %7020 = vmatpush1.bf16.msra.mxu0 %v6947
    %7021 = vmatprep.subr.bf16.mxu0 %v6950
    %7022 = vmatpush1.bf16.msra.mxu0 %v6949
    %7023 = vmatprep.subr.bf16.mxu0 0
    %7024 = vmatpush1.bf16.msra.mxu0 0
    %7025 = vmatprep.subr.bf16.mxu0 0
    %7026 = vmatpush1.bf16.msra.mxu0 0
    %7027 = vmatprep.subr.bf16.mxu0 0
    %7028 = vmatpush1.bf16.msra.mxu0 0
    %7029 = vmatprep.subr.bf16.mxu0 0
    %7030 = vmatpush1.bf16.msra.mxu0 0
    %7031 = vmatprep.subr.bf16.mxu0 0
    %7032 = vmatpush1.bf16.msra.mxu0 0
    %7033 = vmatprep.subr.bf16.mxu0 0
    %7034 = vmatpush1.bf16.msra.mxu0 0
    %7035 = vmatprep.subr.bf16.mxu0 0
    %7036 = vmatpush1.bf16.msra.mxu0 0
    %7037 = vmatprep.subr.bf16.mxu0 0
    %7038 = vmatpush1.bf16.msra.mxu0 0
    %7039 = vmatprep.subr.bf16.mxu0 0
    %7040 = vmatpush1.bf16.msra.mxu0 0
    %7041 = vmatprep.subr.bf16.mxu0 0
    %7042 = vmatpush1.bf16.msra.mxu0 0
    %7043 = vmatprep.subr.bf16.mxu0 0
    %7044 = vmatpush1.bf16.msra.mxu0 0
    %7045 = vmatprep.subr.bf16.mxu0 0
    %7046 = vmatpush1.bf16.msra.mxu0 0
    %7047 = vmatprep.mubr.bf16.mxu0 0
    %7048 = vmatmul.mubr.bf16.gmra.mrb[0].mxu0 %v6992
    %v7049 = vpop.f32.mrb[0].mxu0
    %v7050 = vadd.f32 0.0, %v7049
    %v7051 = vpop.f32.mrb[0].mxu0
    %v7052 = vadd.f32 0.0, %v7051
    %v7053 = vpop.f32.mrb[0].mxu0
    %v7054 = vadd.f32 0.0, %v7053
    %v7055 = vpop.f32.mrb[0].mxu0
    %v7056 = vadd.f32 0.0, %v7055
    %7057 = vmatprep.mubr.bf16.mxu0 0
    %7058 = vmatmul.mubr.bf16.gmra.mrb[0].mxu0 %v6995
    %v7059 = vpop.f32.mrb[0].mxu0
    %v7060 = vadd.f32 0.0, %v7059
    %v7061 = vpop.f32.mrb[0].mxu0
    %v7062 = vadd.f32 0.0, %v7061
    %v7063 = vpop.f32.mrb[0].mxu0
    %v7064 = vadd.f32 0.0, %v7063
    %v7065 = vpop.f32.mrb[0].mxu0
    %v7066 = vadd.f32 0.0, %v7065
    %7067 = vmatprep.mubr.bf16.mxu0 0
    %7068 = vmatmul.mubr.bf16.gmra.mrb[0].mxu0 %v6998
    %v7069 = vpop.f32.mrb[0].mxu0
    %v7070 = vadd.f32 0.0, %v7069
    %v7071 = vpop.f32.mrb[0].mxu0
    %v7072 = vadd.f32 0.0, %v7071
    %v7073 = vpop.f32.mrb[0].mxu0
    %v7074 = vadd.f32 0.0, %v7073
    %v7075 = vpop.f32.mrb[0].mxu0
    %v7076 = vadd.f32 0.0, %v7075
    %7077 = vmatprep.mubr.bf16.mxu0 0
    %7078 = vmatmul.mubr.bf16.gmra.mrb[0].mxu0 %v7001
    %v7079 = vpop.f32.mrb[0].mxu0
    %v7080 = vadd.f32 0.0, %v7079
    %v7081 = vpop.f32.mrb[0].mxu0
    %v7082 = vadd.f32 0.0, %v7081
    %v7083 = vpop.f32.mrb[0].mxu0
    %v7084 = vadd.f32 0.0, %v7083
    %v7085 = vpop.f32.mrb[0].mxu0
    %v7086 = vadd.f32 0.0, %v7085
    %7087 = vmatprep.mubr.bf16.mxu0 0
    %7088 = vmatmul.mubr.bf16.gmra.mrb[0].mxu0 %v7004
    %v7089 = vpop.f32.mrb[0].mxu0
    %v7090 = vadd.f32 0.0, %v7089
    %v7091 = vpop.f32.mrb[0].mxu0
    %v7092 = vadd.f32 0.0, %v7091
    %v7093 = vpop.f32.mrb[0].mxu0
    %v7094 = vadd.f32 0.0, %v7093
    %v7095 = vpop.f32.mrb[0].mxu0
    %v7096 = vadd.f32 0.0, %v7095
    %7097 = vmatprep.mubr.bf16.mxu0 0
    %7098 = vmatmul.mubr.bf16.gmra.mrb[0].mxu0 %v7007
    %v7099 = vpop.f32.mrb[0].mxu0
    %v7100 = vadd.f32 0.0, %v7099
    %v7101 = vpop.f32.mrb[0].mxu0
    %v7102 = vadd.f32 0.0, %v7101
    %v7103 = vpop.f32.mrb[0].mxu0
    %v7104 = vadd.f32 0.0, %v7103
    %v7105 = vpop.f32.mrb[0].mxu0
    %v7106 = vadd.f32 0.0, %v7105
    %7107 = vmatprep.mubr.bf16.mxu0 0
    %7108 = vmatmul.mubr.bf16.gmra.mrb[0].mxu0 %v7010
    %v7109 = vpop.f32.mrb[0].mxu0
    %v7110 = vadd.f32 0.0, %v7109
    %v7111 = vpop.f32.mrb[0].mxu0
    %v7112 = vadd.f32 0.0, %v7111
    %v7113 = vpop.f32.mrb[0].mxu0
    %v7114 = vadd.f32 0.0, %v7113
    %v7115 = vpop.f32.mrb[0].mxu0
    %v7116 = vadd.f32 0.0, %v7115
    %7117 = vmatprep.mubr.bf16.mxu0 0
    %7118 = vmatmul.mubr.bf16.gmra.mrb[0].mxu0 %v7013
    %v7119 = vpop.f32.mrb[0].mxu0
    %v7120 = vadd.f32 0.0, %v7119
    %v7121 = vpop.f32.mrb[0].mxu0
    %v7122 = vadd.f32 0.0, %v7121
    %v7123 = vpop.f32.mrb[0].mxu0
    %v7124 = vadd.f32 0.0, %v7123
    %v7125 = vpop.f32.mrb[0].mxu0
    %v7126 = vadd.f32 0.0, %v7125
    %7127 = vdwg.mxu0
    %v7144 = vunpack.c.l.b16 %v6636
    %v7145 = vunpack.c.l.b16 %v6637
    %v7146 = vunpack.c.l.b16 %v6638
    %v7147 = vunpack.c.l.b16 %v6639
    %v7148 = vunpack.c.l.b16 %v6640
    %v7149 = vunpack.c.l.b16 %v6641
    %v7150 = vunpack.c.l.b16 %v6642
    %v7151 = vunpack.c.l.b16 %v6643
    %v7152 = vunpack.c.l.b16 %v6644
    %v7153 = vunpack.c.l.b16 %v6645
    %v7154 = vunpack.c.l.b16 %v6646
    %v7155 = vunpack.c.l.b16 %v6647
    %v7156 = vunpack.c.l.b16 %v6648
    %v7157 = vunpack.c.l.b16 %v6649
    %v7158 = vunpack.c.l.b16 %v6650
    %v7159 = vunpack.c.l.b16 %v6651
    %v7160 = vpack.c.b16 %v7145, %v7144
    %v7161 = vpack.c.b16 %v7147, %v7146
    %v7162 = vpack.c.b16 %v7149, %v7148
    %v7163 = vpack.c.b16 %v7151, %v7150
    %v7164 = vpack.c.b16 %v7153, %v7152
    %v7165 = vpack.c.b16 %v7155, %v7154
    %v7166 = vpack.c.b16 %v7157, %v7156
    %v7167 = vpack.c.b16 %v7159, %v7158
    %v7169 = vsel %vm960, %v7160, 0
    %v7172 = vsel %vm960, %v7161, 0
    %v7175 = vsel %vm960, %v7162, 0
    %v7178 = vsel %vm960, %v7163, 0
    %v7181 = vsel %vm960, %v7164, 0
    %v7184 = vsel %vm960, %v7165, 0
    %v7187 = vsel %vm960, %v7166, 0
    %v7190 = vsel %vm960, %v7167, 0
    %7192 = vmatprep.subr.bf16.mxu0 %v6653
    %7193 = vmatpush1.bf16.msra.mxu0 %v6652
    %7194 = vmatprep.subr.bf16.mxu0 %v6655
    %7195 = vmatpush1.bf16.msra.mxu0 %v6654
    %7196 = vmatprep.subr.bf16.mxu0 %v6657
    %7197 = vmatpush1.bf16.msra.mxu0 %v6656
    %7198 = vmatprep.subr.bf16.mxu0 %v6659
    %7199 = vmatpush1.bf16.msra.mxu0 %v6658
    %7200 = vmatprep.subr.bf16.mxu0 0
    %7201 = vmatpush1.bf16.msra.mxu0 0
    %7202 = vmatprep.subr.bf16.mxu0 0
    %7203 = vmatpush1.bf16.msra.mxu0 0
    %7204 = vmatprep.subr.bf16.mxu0 0
    %7205 = vmatpush1.bf16.msra.mxu0 0
    %7206 = vmatprep.subr.bf16.mxu0 0
    %7207 = vmatpush1.bf16.msra.mxu0 0
    %7208 = vmatprep.subr.bf16.mxu0 0
    %7209 = vmatpush1.bf16.msra.mxu0 0
    %7210 = vmatprep.subr.bf16.mxu0 0
    %7211 = vmatpush1.bf16.msra.mxu0 0
    %7212 = vmatprep.subr.bf16.mxu0 0
    %7213 = vmatpush1.bf16.msra.mxu0 0
    %7214 = vmatprep.subr.bf16.mxu0 0
    %7215 = vmatpush1.bf16.msra.mxu0 0
    %7216 = vmatprep.subr.bf16.mxu0 0
    %7217 = vmatpush1.bf16.msra.mxu0 0
    %7218 = vmatprep.subr.bf16.mxu0 0
    %7219 = vmatpush1.bf16.msra.mxu0 0
    %7220 = vmatprep.subr.bf16.mxu0 0
    %7221 = vmatpush1.bf16.msra.mxu0 0
    %7222 = vmatprep.subr.bf16.mxu0 0
    %7223 = vmatpush1.bf16.msra.mxu0 0
    %7224 = vmatprep.mubr.bf16.mxu0 0
    %7225 = vmatmul.mubr.bf16.gmra.mrb[0].mxu0 %v7169
    %v7226 = vpop.f32.mrb[0].mxu0
    %v7227 = vadd.f32 %v7050, %v7226
    %v7228 = vpop.f32.mrb[0].mxu0
    %v7229 = vadd.f32 %v7052, %v7228
    %v7230 = vpop.f32.mrb[0].mxu0
    %v7231 = vadd.f32 %v7054, %v7230
    %v7232 = vpop.f32.mrb[0].mxu0
    %v7233 = vadd.f32 %v7056, %v7232
    %7234 = vmatprep.mubr.bf16.mxu0 0
    %7235 = vmatmul.mubr.bf16.gmra.mrb[0].mxu0 %v7172
    %v7236 = vpop.f32.mrb[0].mxu0
    %v7237 = vadd.f32 %v7060, %v7236
    %v7238 = vpop.f32.mrb[0].mxu0
    %v7239 = vadd.f32 %v7062, %v7238
    %v7240 = vpop.f32.mrb[0].mxu0
    %v7241 = vadd.f32 %v7064, %v7240
    %v7242 = vpop.f32.mrb[0].mxu0
    %v7243 = vadd.f32 %v7066, %v7242
    %7244 = vmatprep.mubr.bf16.mxu0 0
    %7245 = vmatmul.mubr.bf16.gmra.mrb[0].mxu0 %v7175
    %v7246 = vpop.f32.mrb[0].mxu0
    %v7247 = vadd.f32 %v7070, %v7246
    %v7248 = vpop.f32.mrb[0].mxu0
    %v7249 = vadd.f32 %v7072, %v7248
    %v7250 = vpop.f32.mrb[0].mxu0
    %v7251 = vadd.f32 %v7074, %v7250
    %v7252 = vpop.f32.mrb[0].mxu0
    %v7253 = vadd.f32 %v7076, %v7252
    %7254 = vmatprep.mubr.bf16.mxu0 0
    %7255 = vmatmul.mubr.bf16.gmra.mrb[0].mxu0 %v7178
    %v7256 = vpop.f32.mrb[0].mxu0
    %v7257 = vadd.f32 %v7080, %v7256
    %v7258 = vpop.f32.mrb[0].mxu0
    %v7259 = vadd.f32 %v7082, %v7258
    %v7260 = vpop.f32.mrb[0].mxu0
    %v7261 = vadd.f32 %v7084, %v7260
    %v7262 = vpop.f32.mrb[0].mxu0
    %v7263 = vadd.f32 %v7086, %v7262
    %7264 = vmatprep.mubr.bf16.mxu0 0
    %7265 = vmatmul.mubr.bf16.gmra.mrb[0].mxu0 %v7181
    %v7266 = vpop.f32.mrb[0].mxu0
    %v7267 = vadd.f32 %v7090, %v7266
    %v7268 = vpop.f32.mrb[0].mxu0
    %v7269 = vadd.f32 %v7092, %v7268
    %v7270 = vpop.f32.mrb[0].mxu0
    %v7271 = vadd.f32 %v7094, %v7270
    %v7272 = vpop.f32.mrb[0].mxu0
    %v7273 = vadd.f32 %v7096, %v7272
    %7274 = vmatprep.mubr.bf16.mxu0 0
    %7275 = vmatmul.mubr.bf16.gmra.mrb[0].mxu0 %v7184
    %v7276 = vpop.f32.mrb[0].mxu0
    %v7277 = vadd.f32 %v7100, %v7276
    %v7278 = vpop.f32.mrb[0].mxu0
    %v7279 = vadd.f32 %v7102, %v7278
    %v7280 = vpop.f32.mrb[0].mxu0
    %v7281 = vadd.f32 %v7104, %v7280
    %v7282 = vpop.f32.mrb[0].mxu0
    %v7283 = vadd.f32 %v7106, %v7282
    %7284 = vmatprep.mubr.bf16.mxu0 0
    %7285 = vmatmul.mubr.bf16.gmra.mrb[0].mxu0 %v7187
    %v7286 = vpop.f32.mrb[0].mxu0
    %v7287 = vadd.f32 %v7110, %v7286
    %v7288 = vpop.f32.mrb[0].mxu0
    %v7289 = vadd.f32 %v7112, %v7288
    %v7290 = vpop.f32.mrb[0].mxu0
    %v7291 = vadd.f32 %v7114, %v7290
    %v7292 = vpop.f32.mrb[0].mxu0
    %v7293 = vadd.f32 %v7116, %v7292
    %7294 = vmatprep.mubr.bf16.mxu0 0
    %7295 = vmatmul.mubr.bf16.gmra.mrb[0].mxu0 %v7190
    %v7296 = vpop.f32.mrb[0].mxu0
    %v7297 = vadd.f32 %v7120, %v7296
    %v7298 = vpop.f32.mrb[0].mxu0
    %v7299 = vadd.f32 %v7122, %v7298
    %v7300 = vpop.f32.mrb[0].mxu0
    %v7301 = vadd.f32 %v7124, %v7300
    %v7302 = vpop.f32.mrb[0].mxu0
    %v7303 = vadd.f32 %v7126, %v7302
    %7304 = vdwg.mxu0
    %s7305 = scalar_lea.vmem %s5, 512
    %v7306 = vld [vmem:[%s7305] sm:$0xff]
    %v7307 = vld [vmem:[%s7305 + $0x8] sm:$0xff]
    %v7308 = vld [vmem:[%s7305 + $0x10] sm:$0xff]
    %v7309 = vld [vmem:[%s7305 + $0x18] sm:$0xff]
    %v7310 = vld [vmem:[%s7305 + $0x20] sm:$0xff]
    %v7311 = vld [vmem:[%s7305 + $0x28] sm:$0xff]
    %v7312 = vld [vmem:[%s7305 + $0x30] sm:$0xff]
    %v7313 = vld [vmem:[%s7305 + $0x38] sm:$0xff]
    %v7314 = vld [vmem:[%s7305 + $0x40] sm:$0xff]
    %v7315 = vld [vmem:[%s7305 + $0x48] sm:$0xff]
    %v7316 = vld [vmem:[%s7305 + $0x50] sm:$0xff]
    %v7317 = vld [vmem:[%s7305 + $0x58] sm:$0xff]
    %v7318 = vld [vmem:[%s7305 + $0x60] sm:$0xff]
    %v7319 = vld [vmem:[%s7305 + $0x68] sm:$0xff]
    %v7320 = vld [vmem:[%s7305 + $0x70] sm:$0xff]
    %v7321 = vld [vmem:[%s7305 + $0x78] sm:$0xff]
    %v7322 = vld [vmem:[%s7305 + $0x80] sm:$0xff]
    %v7323 = vld [vmem:[%s7305 + $0x88] sm:$0xff]
    %v7324 = vld [vmem:[%s7305 + $0x90] sm:$0xff]
    %v7325 = vld [vmem:[%s7305 + $0x98] sm:$0xff]
    %v7326 = vld [vmem:[%s7305 + $0xa0] sm:$0xff]
    %v7327 = vld [vmem:[%s7305 + $0xa8] sm:$0xff]
    %v7328 = vld [vmem:[%s7305 + $0xb0] sm:$0xff]
    %v7329 = vld [vmem:[%s7305 + $0xb8] sm:$0xff]
    %v7330 = vld [vmem:[%s7305 + $0xc0] sm:$0xff]
    %v7331 = vld [vmem:[%s7305 + $0xc8] sm:$0xff]
    %v7332 = vld [vmem:[%s7305 + $0xd0] sm:$0xff]
    %v7333 = vld [vmem:[%s7305 + $0xd8] sm:$0xff]
    %v7334 = vld [vmem:[%s7305 + $0xe0] sm:$0xff]
    %v7335 = vld [vmem:[%s7305 + $0xe8] sm:$0xff]
    %v7336 = vld [vmem:[%s7305 + $0xf0] sm:$0xff]
    %v7337 = vld [vmem:[%s7305 + $0xf8] sm:$0xff]
    %v7370 = vunpack.c.l.b16 %v7306
    %v7371 = vunpack.c.h.b16 %v7306
    %v7372 = vunpack.c.l.b16 %v7307
    %v7373 = vunpack.c.h.b16 %v7307
    %v7374 = vunpack.c.l.b16 %v7308
    %v7375 = vunpack.c.h.b16 %v7308
    %v7376 = vunpack.c.l.b16 %v7309
    %v7377 = vunpack.c.h.b16 %v7309
    %v7378 = vunpack.c.l.b16 %v7310
    %v7379 = vunpack.c.h.b16 %v7310
    %v7380 = vunpack.c.l.b16 %v7311
    %v7381 = vunpack.c.h.b16 %v7311
    %v7382 = vunpack.c.l.b16 %v7312
    %v7383 = vunpack.c.h.b16 %v7312
    %v7384 = vunpack.c.l.b16 %v7313
    %v7385 = vunpack.c.h.b16 %v7313
    %v7386 = vunpack.c.l.b16 %v7314
    %v7387 = vunpack.c.h.b16 %v7314
    %v7388 = vunpack.c.l.b16 %v7315
    %v7389 = vunpack.c.h.b16 %v7315
    %v7390 = vunpack.c.l.b16 %v7316
    %v7391 = vunpack.c.h.b16 %v7316
    %v7392 = vunpack.c.l.b16 %v7317
    %v7393 = vunpack.c.h.b16 %v7317
    %v7394 = vunpack.c.l.b16 %v7318
    %v7395 = vunpack.c.h.b16 %v7318
    %v7396 = vunpack.c.l.b16 %v7319
    %v7397 = vunpack.c.h.b16 %v7319
    %v7398 = vunpack.c.l.b16 %v7320
    %v7399 = vunpack.c.h.b16 %v7320
    %v7400 = vunpack.c.l.b16 %v7321
    %v7401 = vunpack.c.h.b16 %v7321
    %v7402 = vunpack.c.l.b16 %v7322
    %v7403 = vunpack.c.h.b16 %v7322
    %v7404 = vunpack.c.l.b16 %v7323
    %v7405 = vunpack.c.h.b16 %v7323
    %v7406 = vunpack.c.l.b16 %v7324
    %v7407 = vunpack.c.h.b16 %v7324
    %v7408 = vunpack.c.l.b16 %v7325
    %v7409 = vunpack.c.h.b16 %v7325
    %v7410 = vunpack.c.l.b16 %v7326
    %v7411 = vunpack.c.h.b16 %v7326
    %v7412 = vunpack.c.l.b16 %v7327
    %v7413 = vunpack.c.h.b16 %v7327
    %v7414 = vunpack.c.l.b16 %v7328
    %v7415 = vunpack.c.h.b16 %v7328
    %v7416 = vunpack.c.l.b16 %v7329
    %v7417 = vunpack.c.h.b16 %v7329
    %v7418 = vunpack.c.l.b16 %v7330
    %v7419 = vunpack.c.h.b16 %v7330
    %v7420 = vunpack.c.l.b16 %v7331
    %v7421 = vunpack.c.h.b16 %v7331
    %v7422 = vunpack.c.l.b16 %v7332
    %v7423 = vunpack.c.h.b16 %v7332
    %v7424 = vunpack.c.l.b16 %v7333
    %v7425 = vunpack.c.h.b16 %v7333
    %v7426 = vunpack.c.l.b16 %v7334
    %v7427 = vunpack.c.h.b16 %v7334
    %v7428 = vunpack.c.l.b16 %v7335
    %v7429 = vunpack.c.h.b16 %v7335
    %v7430 = vunpack.c.l.b16 %v7336
    %v7431 = vunpack.c.h.b16 %v7336
    %v7432 = vunpack.c.l.b16 %v7337
    %v7433 = vunpack.c.h.b16 %v7337
    %v7434 = vpack.c.b16 %v7372, %v7370
    %v7435 = vpack.c.b16 %v7373, %v7371
    %v7436 = vpack.c.b16 %v7376, %v7374
    %v7437 = vpack.c.b16 %v7377, %v7375
    %v7438 = vpack.c.b16 %v7380, %v7378
    %v7439 = vpack.c.b16 %v7381, %v7379
    %v7440 = vpack.c.b16 %v7384, %v7382
    %v7441 = vpack.c.b16 %v7385, %v7383
    %v7442 = vpack.c.b16 %v7388, %v7386
    %v7443 = vpack.c.b16 %v7389, %v7387
    %v7444 = vpack.c.b16 %v7392, %v7390
    %v7445 = vpack.c.b16 %v7393, %v7391
    %v7446 = vpack.c.b16 %v7396, %v7394
    %v7447 = vpack.c.b16 %v7397, %v7395
    %v7448 = vpack.c.b16 %v7400, %v7398
    %v7449 = vpack.c.b16 %v7401, %v7399
    %v7450 = vpack.c.b16 %v7404, %v7402
    %v7451 = vpack.c.b16 %v7405, %v7403
    %v7452 = vpack.c.b16 %v7408, %v7406
    %v7453 = vpack.c.b16 %v7409, %v7407
    %v7454 = vpack.c.b16 %v7412, %v7410
    %v7455 = vpack.c.b16 %v7413, %v7411
    %v7456 = vpack.c.b16 %v7416, %v7414
    %v7457 = vpack.c.b16 %v7417, %v7415
    %v7458 = vpack.c.b16 %v7420, %v7418
    %v7459 = vpack.c.b16 %v7421, %v7419
    %v7460 = vpack.c.b16 %v7424, %v7422
    %v7461 = vpack.c.b16 %v7425, %v7423
    %v7462 = vpack.c.b16 %v7428, %v7426
    %v7463 = vpack.c.b16 %v7429, %v7427
    %v7464 = vpack.c.b16 %v7432, %v7430
    %v7465 = vpack.c.b16 %v7433, %v7431
    %7498 = vmatprep.subr.bf16.mxu0 %v7435
    %7499 = vmatpush1.bf16.msra.mxu0 %v7434
    %7500 = vmatprep.subr.bf16.mxu0 %v7437
    %7501 = vmatpush1.bf16.msra.mxu0 %v7436
    %7502 = vmatprep.subr.bf16.mxu0 %v7439
    %7503 = vmatpush1.bf16.msra.mxu0 %v7438
    %7504 = vmatprep.subr.bf16.mxu0 %v7441
    %7505 = vmatpush1.bf16.msra.mxu0 %v7440
    %7506 = vmatprep.subr.bf16.mxu0 %v7443
    %7507 = vmatpush1.bf16.msra.mxu0 %v7442
    %7508 = vmatprep.subr.bf16.mxu0 %v7445
    %7509 = vmatpush1.bf16.msra.mxu0 %v7444
    %7510 = vmatprep.subr.bf16.mxu0 %v7447
    %7511 = vmatpush1.bf16.msra.mxu0 %v7446
    %7512 = vmatprep.subr.bf16.mxu0 %v7449
    %7513 = vmatpush1.bf16.msra.mxu0 %v7448
    %7514 = vmatprep.subr.bf16.mxu0 %v7451
    %7515 = vmatpush1.bf16.msra.mxu0 %v7450
    %7516 = vmatprep.subr.bf16.mxu0 %v7453
    %7517 = vmatpush1.bf16.msra.mxu0 %v7452
    %7518 = vmatprep.subr.bf16.mxu0 %v7455
    %7519 = vmatpush1.bf16.msra.mxu0 %v7454
    %7520 = vmatprep.subr.bf16.mxu0 %v7457
    %7521 = vmatpush1.bf16.msra.mxu0 %v7456
    %7522 = vmatprep.subr.bf16.mxu0 %v7459
    %7523 = vmatpush1.bf16.msra.mxu0 %v7458
    %7524 = vmatprep.subr.bf16.mxu0 %v7461
    %7525 = vmatpush1.bf16.msra.mxu0 %v7460
    %7526 = vmatprep.subr.bf16.mxu0 %v7463
    %7527 = vmatpush1.bf16.msra.mxu0 %v7462
    %7528 = vmatprep.subr.bf16.mxu0 %v7465
    %7529 = vmatpush1.bf16.msra.mxu0 %v7464
    %7530 = vmatprep.mubr.bf16.mxu0 %v6364
    %7531 = vmatmul.mubr.bf16.gmra.mrb[0].mxu0 %v6363
    %v7532 = vpop.f32.mrb[0].mxu0
    %v7533 = vadd.f32 0.0, %v7532
    %v7534 = vpop.f32.mrb[0].mxu0
    %v7535 = vadd.f32 0.0, %v7534
    %v7536 = vpop.f32.mrb[0].mxu0
    %v7537 = vadd.f32 0.0, %v7536
    %v7538 = vpop.f32.mrb[0].mxu0
    %v7539 = vadd.f32 0.0, %v7538
    %7540 = vmatprep.mubr.bf16.mxu0 %v6366
    %7541 = vmatmul.mubr.bf16.gmra.mrb[0].mxu0 %v6365
    %v7542 = vpop.f32.mrb[0].mxu0
    %v7543 = vadd.f32 0.0, %v7542
    %v7544 = vpop.f32.mrb[0].mxu0
    %v7545 = vadd.f32 0.0, %v7544
    %v7546 = vpop.f32.mrb[0].mxu0
    %v7547 = vadd.f32 0.0, %v7546
    %v7548 = vpop.f32.mrb[0].mxu0
    %v7549 = vadd.f32 0.0, %v7548
    %7550 = vmatprep.mubr.bf16.mxu0 %v6368
    %7551 = vmatmul.mubr.bf16.gmra.mrb[0].mxu0 %v6367
    %v7552 = vpop.f32.mrb[0].mxu0
    %v7553 = vadd.f32 0.0, %v7552
    %v7554 = vpop.f32.mrb[0].mxu0
    %v7555 = vadd.f32 0.0, %v7554
    %v7556 = vpop.f32.mrb[0].mxu0
    %v7557 = vadd.f32 0.0, %v7556
    %v7558 = vpop.f32.mrb[0].mxu0
    %v7559 = vadd.f32 0.0, %v7558
    %7560 = vmatprep.mubr.bf16.mxu0 %v6370
    %7561 = vmatmul.mubr.bf16.gmra.mrb[0].mxu0 %v6369
    %v7562 = vpop.f32.mrb[0].mxu0
    %v7563 = vadd.f32 0.0, %v7562
    %v7564 = vpop.f32.mrb[0].mxu0
    %v7565 = vadd.f32 0.0, %v7564
    %v7566 = vpop.f32.mrb[0].mxu0
    %v7567 = vadd.f32 0.0, %v7566
    %v7568 = vpop.f32.mrb[0].mxu0
    %v7569 = vadd.f32 0.0, %v7568
    %7570 = vdwg.mxu0
    %s7571 = scalar_lea.vmem %s10, 128
    %v7572 = vld [vmem:[%s7571] sm:$0xf]
    %v7573 = vld [vmem:[%s7571 + $0x4] sm:$0xf]
    %v7574 = vld [vmem:[%s7571 + $0x8] sm:$0xf]
    %v7575 = vld [vmem:[%s7571 + $0xc] sm:$0xf]
    %v7576 = vld [vmem:[%s7571 + $0x10] sm:$0xf]
    %v7577 = vld [vmem:[%s7571 + $0x14] sm:$0xf]
    %v7578 = vld [vmem:[%s7571 + $0x18] sm:$0xf]
    %v7579 = vld [vmem:[%s7571 + $0x1c] sm:$0xf]
    %v7580 = vld [vmem:[%s7571 + $0x20] sm:$0xf]
    %v7581 = vld [vmem:[%s7571 + $0x24] sm:$0xf]
    %v7582 = vld [vmem:[%s7571 + $0x28] sm:$0xf]
    %v7583 = vld [vmem:[%s7571 + $0x2c] sm:$0xf]
    %v7584 = vld [vmem:[%s7571 + $0x30] sm:$0xf]
    %v7585 = vld [vmem:[%s7571 + $0x34] sm:$0xf]
    %v7586 = vld [vmem:[%s7571 + $0x38] sm:$0xf]
    %v7587 = vld [vmem:[%s7571 + $0x3c] sm:$0xf]
    %v7588 = vpack.c.bf16 %v7537, %v7533
    %v7589 = vpack.c.bf16 %v7539, %v7535
    %v7590 = vpack.c.bf16 %v7547, %v7543
    %v7591 = vpack.c.bf16 %v7549, %v7545
    %v7592 = vpack.c.bf16 %v7557, %v7553
    %v7593 = vpack.c.bf16 %v7559, %v7555
    %v7594 = vpack.c.bf16 %v7567, %v7563
    %v7595 = vpack.c.bf16 %v7569, %v7565
    %v7612 = vunpack.c.l.b16 %v7572
    %v7613 = vunpack.c.l.b16 %v7573
    %v7614 = vunpack.c.l.b16 %v7574
    %v7615 = vunpack.c.l.b16 %v7575
    %v7616 = vunpack.c.l.b16 %v7576
    %v7617 = vunpack.c.l.b16 %v7577
    %v7618 = vunpack.c.l.b16 %v7578
    %v7619 = vunpack.c.l.b16 %v7579
    %v7620 = vunpack.c.l.b16 %v7580
    %v7621 = vunpack.c.l.b16 %v7581
    %v7622 = vunpack.c.l.b16 %v7582
    %v7623 = vunpack.c.l.b16 %v7583
    %v7624 = vunpack.c.l.b16 %v7584
    %v7625 = vunpack.c.l.b16 %v7585
    %v7626 = vunpack.c.l.b16 %v7586
    %v7627 = vunpack.c.l.b16 %v7587
    %v7628 = vpack.c.b16 %v7613, %v7612
    %v7629 = vpack.c.b16 %v7615, %v7614
    %v7630 = vpack.c.b16 %v7617, %v7616
    %v7631 = vpack.c.b16 %v7619, %v7618
    %v7632 = vpack.c.b16 %v7621, %v7620
    %v7633 = vpack.c.b16 %v7623, %v7622
    %v7634 = vpack.c.b16 %v7625, %v7624
    %v7635 = vpack.c.b16 %v7627, %v7626
    %v7637 = vsel %vm960, %v7628, 0
    %v7640 = vsel %vm960, %v7629, 0
    %v7643 = vsel %vm960, %v7630, 0
    %v7646 = vsel %vm960, %v7631, 0
    %v7649 = vsel %vm960, %v7632, 0
    %v7652 = vsel %vm960, %v7633, 0
    %v7655 = vsel %vm960, %v7634, 0
    %v7658 = vsel %vm960, %v7635, 0
    %7660 = vmatprep.subr.bf16.mxu0 %v7589
    %7661 = vmatpush1.bf16.msra.mxu0 %v7588
    %7662 = vmatprep.subr.bf16.mxu0 %v7591
    %7663 = vmatpush1.bf16.msra.mxu0 %v7590
    %7664 = vmatprep.subr.bf16.mxu0 %v7593
    %7665 = vmatpush1.bf16.msra.mxu0 %v7592
    %7666 = vmatprep.subr.bf16.mxu0 %v7595
    %7667 = vmatpush1.bf16.msra.mxu0 %v7594
    %7668 = vmatprep.subr.bf16.mxu0 0
    %7669 = vmatpush1.bf16.msra.mxu0 0
    %7670 = vmatprep.subr.bf16.mxu0 0
    %7671 = vmatpush1.bf16.msra.mxu0 0
    %7672 = vmatprep.subr.bf16.mxu0 0
    %7673 = vmatpush1.bf16.msra.mxu0 0
    %7674 = vmatprep.subr.bf16.mxu0 0
    %7675 = vmatpush1.bf16.msra.mxu0 0
    %7676 = vmatprep.subr.bf16.mxu0 0
    %7677 = vmatpush1.bf16.msra.mxu0 0
    %7678 = vmatprep.subr.bf16.mxu0 0
    %7679 = vmatpush1.bf16.msra.mxu0 0
    %7680 = vmatprep.subr.bf16.mxu0 0
    %7681 = vmatpush1.bf16.msra.mxu0 0
    %7682 = vmatprep.subr.bf16.mxu0 0
    %7683 = vmatpush1.bf16.msra.mxu0 0
    %7684 = vmatprep.subr.bf16.mxu0 0
    %7685 = vmatpush1.bf16.msra.mxu0 0
    %7686 = vmatprep.subr.bf16.mxu0 0
    %7687 = vmatpush1.bf16.msra.mxu0 0
    %7688 = vmatprep.subr.bf16.mxu0 0
    %7689 = vmatpush1.bf16.msra.mxu0 0
    %7690 = vmatprep.subr.bf16.mxu0 0
    %7691 = vmatpush1.bf16.msra.mxu0 0
    %7692 = vmatprep.mubr.bf16.mxu0 0
    %7693 = vmatmul.mubr.bf16.gmra.mrb[0].mxu0 %v7637
    %v7694 = vpop.f32.mrb[0].mxu0
    %v7695 = vadd.f32 0.0, %v7694
    %v7696 = vpop.f32.mrb[0].mxu0
    %v7697 = vadd.f32 0.0, %v7696
    %v7698 = vpop.f32.mrb[0].mxu0
    %v7699 = vadd.f32 0.0, %v7698
    %v7700 = vpop.f32.mrb[0].mxu0
    %v7701 = vadd.f32 0.0, %v7700
    %7702 = vmatprep.mubr.bf16.mxu0 0
    %7703 = vmatmul.mubr.bf16.gmra.mrb[0].mxu0 %v7640
    %v7704 = vpop.f32.mrb[0].mxu0
    %v7705 = vadd.f32 0.0, %v7704
    %v7706 = vpop.f32.mrb[0].mxu0
    %v7707 = vadd.f32 0.0, %v7706
    %v7708 = vpop.f32.mrb[0].mxu0
    %v7709 = vadd.f32 0.0, %v7708
    %v7710 = vpop.f32.mrb[0].mxu0
    %v7711 = vadd.f32 0.0, %v7710
    %7712 = vmatprep.mubr.bf16.mxu0 0
    %7713 = vmatmul.mubr.bf16.gmra.mrb[0].mxu0 %v7643
    %v7714 = vpop.f32.mrb[0].mxu0
    %v7715 = vadd.f32 0.0, %v7714
    %v7716 = vpop.f32.mrb[0].mxu0
    %v7717 = vadd.f32 0.0, %v7716
    %v7718 = vpop.f32.mrb[0].mxu0
    %v7719 = vadd.f32 0.0, %v7718
    %v7720 = vpop.f32.mrb[0].mxu0
    %v7721 = vadd.f32 0.0, %v7720
    %7722 = vmatprep.mubr.bf16.mxu0 0
    %7723 = vmatmul.mubr.bf16.gmra.mrb[0].mxu0 %v7646
    %v7724 = vpop.f32.mrb[0].mxu0
    %v7725 = vadd.f32 0.0, %v7724
    %v7726 = vpop.f32.mrb[0].mxu0
    %v7727 = vadd.f32 0.0, %v7726
    %v7728 = vpop.f32.mrb[0].mxu0
    %v7729 = vadd.f32 0.0, %v7728
    %v7730 = vpop.f32.mrb[0].mxu0
    %v7731 = vadd.f32 0.0, %v7730
    %7732 = vmatprep.mubr.bf16.mxu0 0
    %7733 = vmatmul.mubr.bf16.gmra.mrb[0].mxu0 %v7649
    %v7734 = vpop.f32.mrb[0].mxu0
    %v7735 = vadd.f32 0.0, %v7734
    %v7736 = vpop.f32.mrb[0].mxu0
    %v7737 = vadd.f32 0.0, %v7736
    %v7738 = vpop.f32.mrb[0].mxu0
    %v7739 = vadd.f32 0.0, %v7738
    %v7740 = vpop.f32.mrb[0].mxu0
    %v7741 = vadd.f32 0.0, %v7740
    %7742 = vmatprep.mubr.bf16.mxu0 0
    %7743 = vmatmul.mubr.bf16.gmra.mrb[0].mxu0 %v7652
    %v7744 = vpop.f32.mrb[0].mxu0
    %v7745 = vadd.f32 0.0, %v7744
    %v7746 = vpop.f32.mrb[0].mxu0
    %v7747 = vadd.f32 0.0, %v7746
    %v7748 = vpop.f32.mrb[0].mxu0
    %v7749 = vadd.f32 0.0, %v7748
    %v7750 = vpop.f32.mrb[0].mxu0
    %v7751 = vadd.f32 0.0, %v7750
    %7752 = vmatprep.mubr.bf16.mxu0 0
    %7753 = vmatmul.mubr.bf16.gmra.mrb[0].mxu0 %v7655
    %v7754 = vpop.f32.mrb[0].mxu0
    %v7755 = vadd.f32 0.0, %v7754
    %v7756 = vpop.f32.mrb[0].mxu0
    %v7757 = vadd.f32 0.0, %v7756
    %v7758 = vpop.f32.mrb[0].mxu0
    %v7759 = vadd.f32 0.0, %v7758
    %v7760 = vpop.f32.mrb[0].mxu0
    %v7761 = vadd.f32 0.0, %v7760
    %7762 = vmatprep.mubr.bf16.mxu0 0
    %7763 = vmatmul.mubr.bf16.gmra.mrb[0].mxu0 %v7658
    %v7764 = vpop.f32.mrb[0].mxu0
    %v7765 = vadd.f32 0.0, %v7764
    %v7766 = vpop.f32.mrb[0].mxu0
    %v7767 = vadd.f32 0.0, %v7766
    %v7768 = vpop.f32.mrb[0].mxu0
    %v7769 = vadd.f32 0.0, %v7768
    %v7770 = vpop.f32.mrb[0].mxu0
    %v7771 = vadd.f32 0.0, %v7770
    %7772 = vdwg.mxu0
    %v7773 = vadd.f32 %v7227, %v7695
    %v7774 = vadd.f32 %v7229, %v7697
    %v7775 = vadd.f32 %v7231, %v7699
    %v7776 = vadd.f32 %v7233, %v7701
    %v7777 = vadd.f32 %v7237, %v7705
    %v7778 = vadd.f32 %v7239, %v7707
    %v7779 = vadd.f32 %v7241, %v7709
    %v7780 = vadd.f32 %v7243, %v7711
    %v7781 = vadd.f32 %v7247, %v7715
    %v7782 = vadd.f32 %v7249, %v7717
    %v7783 = vadd.f32 %v7251, %v7719
    %v7784 = vadd.f32 %v7253, %v7721
    %v7785 = vadd.f32 %v7257, %v7725
    %v7786 = vadd.f32 %v7259, %v7727
    %v7787 = vadd.f32 %v7261, %v7729
    %v7788 = vadd.f32 %v7263, %v7731
    %v7789 = vadd.f32 %v7267, %v7735
    %v7790 = vadd.f32 %v7269, %v7737
    %v7791 = vadd.f32 %v7271, %v7739
    %v7792 = vadd.f32 %v7273, %v7741
    %v7793 = vadd.f32 %v7277, %v7745
    %v7794 = vadd.f32 %v7279, %v7747
    %v7795 = vadd.f32 %v7281, %v7749
    %v7796 = vadd.f32 %v7283, %v7751
    %v7797 = vadd.f32 %v7287, %v7755
    %v7798 = vadd.f32 %v7289, %v7757
    %v7799 = vadd.f32 %v7291, %v7759
    %v7800 = vadd.f32 %v7293, %v7761
    %v7801 = vadd.f32 %v7297, %v7765
    %v7802 = vadd.f32 %v7299, %v7767
    %v7803 = vadd.f32 %v7301, %v7769
    %v7804 = vadd.f32 %v7303, %v7771
    %s7805 = scalar_lea.vmem %s5, 768
    %v7806 = vld [vmem:[%s7805] sm:$0xff]
    %v7807 = vld [vmem:[%s7805 + $0x8] sm:$0xff]
    %v7808 = vld [vmem:[%s7805 + $0x10] sm:$0xff]
    %v7809 = vld [vmem:[%s7805 + $0x18] sm:$0xff]
    %v7810 = vld [vmem:[%s7805 + $0x20] sm:$0xff]
    %v7811 = vld [vmem:[%s7805 + $0x28] sm:$0xff]
    %v7812 = vld [vmem:[%s7805 + $0x30] sm:$0xff]
    %v7813 = vld [vmem:[%s7805 + $0x38] sm:$0xff]
    %v7814 = vld [vmem:[%s7805 + $0x40] sm:$0xff]
    %v7815 = vld [vmem:[%s7805 + $0x48] sm:$0xff]
    %v7816 = vld [vmem:[%s7805 + $0x50] sm:$0xff]
    %v7817 = vld [vmem:[%s7805 + $0x58] sm:$0xff]
    %v7818 = vld [vmem:[%s7805 + $0x60] sm:$0xff]
    %v7819 = vld [vmem:[%s7805 + $0x68] sm:$0xff]
    %v7820 = vld [vmem:[%s7805 + $0x70] sm:$0xff]
    %v7821 = vld [vmem:[%s7805 + $0x78] sm:$0xff]
    %v7822 = vld [vmem:[%s7805 + $0x80] sm:$0xff]
    %v7823 = vld [vmem:[%s7805 + $0x88] sm:$0xff]
    %v7824 = vld [vmem:[%s7805 + $0x90] sm:$0xff]
    %v7825 = vld [vmem:[%s7805 + $0x98] sm:$0xff]
    %v7826 = vld [vmem:[%s7805 + $0xa0] sm:$0xff]
    %v7827 = vld [vmem:[%s7805 + $0xa8] sm:$0xff]
    %v7828 = vld [vmem:[%s7805 + $0xb0] sm:$0xff]
    %v7829 = vld [vmem:[%s7805 + $0xb8] sm:$0xff]
    %v7830 = vld [vmem:[%s7805 + $0xc0] sm:$0xff]
    %v7831 = vld [vmem:[%s7805 + $0xc8] sm:$0xff]
    %v7832 = vld [vmem:[%s7805 + $0xd0] sm:$0xff]
    %v7833 = vld [vmem:[%s7805 + $0xd8] sm:$0xff]
    %v7834 = vld [vmem:[%s7805 + $0xe0] sm:$0xff]
    %v7835 = vld [vmem:[%s7805 + $0xe8] sm:$0xff]
    %v7836 = vld [vmem:[%s7805 + $0xf0] sm:$0xff]
    %v7837 = vld [vmem:[%s7805 + $0xf8] sm:$0xff]
    %v7870 = vunpack.c.l.b16 %v7806
    %v7871 = vunpack.c.h.b16 %v7806
    %v7872 = vunpack.c.l.b16 %v7807
    %v7873 = vunpack.c.h.b16 %v7807
    %v7874 = vunpack.c.l.b16 %v7808
    %v7875 = vunpack.c.h.b16 %v7808
    %v7876 = vunpack.c.l.b16 %v7809
    %v7877 = vunpack.c.h.b16 %v7809
    %v7878 = vunpack.c.l.b16 %v7810
    %v7879 = vunpack.c.h.b16 %v7810
    %v7880 = vunpack.c.l.b16 %v7811
    %v7881 = vunpack.c.h.b16 %v7811
    %v7882 = vunpack.c.l.b16 %v7812
    %v7883 = vunpack.c.h.b16 %v7812
    %v7884 = vunpack.c.l.b16 %v7813
    %v7885 = vunpack.c.h.b16 %v7813
    %v7886 = vunpack.c.l.b16 %v7814
    %v7887 = vunpack.c.h.b16 %v7814
    %v7888 = vunpack.c.l.b16 %v7815
    %v7889 = vunpack.c.h.b16 %v7815
    %v7890 = vunpack.c.l.b16 %v7816
    %v7891 = vunpack.c.h.b16 %v7816
    %v7892 = vunpack.c.l.b16 %v7817
    %v7893 = vunpack.c.h.b16 %v7817
    %v7894 = vunpack.c.l.b16 %v7818
    %v7895 = vunpack.c.h.b16 %v7818
    %v7896 = vunpack.c.l.b16 %v7819
    %v7897 = vunpack.c.h.b16 %v7819
    %v7898 = vunpack.c.l.b16 %v7820
    %v7899 = vunpack.c.h.b16 %v7820
    %v7900 = vunpack.c.l.b16 %v7821
    %v7901 = vunpack.c.h.b16 %v7821
    %v7902 = vunpack.c.l.b16 %v7822
    %v7903 = vunpack.c.h.b16 %v7822
    %v7904 = vunpack.c.l.b16 %v7823
    %v7905 = vunpack.c.h.b16 %v7823
    %v7906 = vunpack.c.l.b16 %v7824
    %v7907 = vunpack.c.h.b16 %v7824
    %v7908 = vunpack.c.l.b16 %v7825
    %v7909 = vunpack.c.h.b16 %v7825
    %v7910 = vunpack.c.l.b16 %v7826
    %v7911 = vunpack.c.h.b16 %v7826
    %v7912 = vunpack.c.l.b16 %v7827
    %v7913 = vunpack.c.h.b16 %v7827
    %v7914 = vunpack.c.l.b16 %v7828
    %v7915 = vunpack.c.h.b16 %v7828
    %v7916 = vunpack.c.l.b16 %v7829
    %v7917 = vunpack.c.h.b16 %v7829
    %v7918 = vunpack.c.l.b16 %v7830
    %v7919 = vunpack.c.h.b16 %v7830
    %v7920 = vunpack.c.l.b16 %v7831
    %v7921 = vunpack.c.h.b16 %v7831
    %v7922 = vunpack.c.l.b16 %v7832
    %v7923 = vunpack.c.h.b16 %v7832
    %v7924 = vunpack.c.l.b16 %v7833
    %v7925 = vunpack.c.h.b16 %v7833
    %v7926 = vunpack.c.l.b16 %v7834
    %v7927 = vunpack.c.h.b16 %v7834
    %v7928 = vunpack.c.l.b16 %v7835
    %v7929 = vunpack.c.h.b16 %v7835
    %v7930 = vunpack.c.l.b16 %v7836
    %v7931 = vunpack.c.h.b16 %v7836
    %v7932 = vunpack.c.l.b16 %v7837
    %v7933 = vunpack.c.h.b16 %v7837
    %v7934 = vpack.c.b16 %v7872, %v7870
    %v7935 = vpack.c.b16 %v7873, %v7871
    %v7936 = vpack.c.b16 %v7876, %v7874
    %v7937 = vpack.c.b16 %v7877, %v7875
    %v7938 = vpack.c.b16 %v7880, %v7878
    %v7939 = vpack.c.b16 %v7881, %v7879
    %v7940 = vpack.c.b16 %v7884, %v7882
    %v7941 = vpack.c.b16 %v7885, %v7883
    %v7942 = vpack.c.b16 %v7888, %v7886
    %v7943 = vpack.c.b16 %v7889, %v7887
    %v7944 = vpack.c.b16 %v7892, %v7890
    %v7945 = vpack.c.b16 %v7893, %v7891
    %v7946 = vpack.c.b16 %v7896, %v7894
    %v7947 = vpack.c.b16 %v7897, %v7895
    %v7948 = vpack.c.b16 %v7900, %v7898
    %v7949 = vpack.c.b16 %v7901, %v7899
    %v7950 = vpack.c.b16 %v7904, %v7902
    %v7951 = vpack.c.b16 %v7905, %v7903
    %v7952 = vpack.c.b16 %v7908, %v7906
    %v7953 = vpack.c.b16 %v7909, %v7907
    %v7954 = vpack.c.b16 %v7912, %v7910
    %v7955 = vpack.c.b16 %v7913, %v7911
    %v7956 = vpack.c.b16 %v7916, %v7914
    %v7957 = vpack.c.b16 %v7917, %v7915
    %v7958 = vpack.c.b16 %v7920, %v7918
    %v7959 = vpack.c.b16 %v7921, %v7919
    %v7960 = vpack.c.b16 %v7924, %v7922
    %v7961 = vpack.c.b16 %v7925, %v7923
    %v7962 = vpack.c.b16 %v7928, %v7926
    %v7963 = vpack.c.b16 %v7929, %v7927
    %v7964 = vpack.c.b16 %v7932, %v7930
    %v7965 = vpack.c.b16 %v7933, %v7931
    %7998 = vmatprep.subr.bf16.mxu0 %v7935
    %7999 = vmatpush1.bf16.msra.mxu0 %v7934
    %8000 = vmatprep.subr.bf16.mxu0 %v7937
    %8001 = vmatpush1.bf16.msra.mxu0 %v7936
    %8002 = vmatprep.subr.bf16.mxu0 %v7939
    %8003 = vmatpush1.bf16.msra.mxu0 %v7938
    %8004 = vmatprep.subr.bf16.mxu0 %v7941
    %8005 = vmatpush1.bf16.msra.mxu0 %v7940
    %8006 = vmatprep.subr.bf16.mxu0 %v7943
    %8007 = vmatpush1.bf16.msra.mxu0 %v7942
    %8008 = vmatprep.subr.bf16.mxu0 %v7945
    %8009 = vmatpush1.bf16.msra.mxu0 %v7944
    %8010 = vmatprep.subr.bf16.mxu0 %v7947
    %8011 = vmatpush1.bf16.msra.mxu0 %v7946
    %8012 = vmatprep.subr.bf16.mxu0 %v7949
    %8013 = vmatpush1.bf16.msra.mxu0 %v7948
    %8014 = vmatprep.subr.bf16.mxu0 %v7951
    %8015 = vmatpush1.bf16.msra.mxu0 %v7950
    %8016 = vmatprep.subr.bf16.mxu0 %v7953
    %8017 = vmatpush1.bf16.msra.mxu0 %v7952
    %8018 = vmatprep.subr.bf16.mxu0 %v7955
    %8019 = vmatpush1.bf16.msra.mxu0 %v7954
    %8020 = vmatprep.subr.bf16.mxu0 %v7957
    %8021 = vmatpush1.bf16.msra.mxu0 %v7956
    %8022 = vmatprep.subr.bf16.mxu0 %v7959
    %8023 = vmatpush1.bf16.msra.mxu0 %v7958
    %8024 = vmatprep.subr.bf16.mxu0 %v7961
    %8025 = vmatpush1.bf16.msra.mxu0 %v7960
    %8026 = vmatprep.subr.bf16.mxu0 %v7963
    %8027 = vmatpush1.bf16.msra.mxu0 %v7962
    %8028 = vmatprep.subr.bf16.mxu0 %v7965
    %8029 = vmatpush1.bf16.msra.mxu0 %v7964
    %8030 = vmatprep.mubr.bf16.mxu0 %v6364
    %8031 = vmatmul.mubr.bf16.gmra.mrb[0].mxu0 %v6363
    %v8032 = vpop.f32.mrb[0].mxu0
    %v8033 = vadd.f32 0.0, %v8032
    %v8034 = vpop.f32.mrb[0].mxu0
    %v8035 = vadd.f32 0.0, %v8034
    %v8036 = vpop.f32.mrb[0].mxu0
    %v8037 = vadd.f32 0.0, %v8036
    %v8038 = vpop.f32.mrb[0].mxu0
    %v8039 = vadd.f32 0.0, %v8038
    %8040 = vmatprep.mubr.bf16.mxu0 %v6366
    %8041 = vmatmul.mubr.bf16.gmra.mrb[0].mxu0 %v6365
    %v8042 = vpop.f32.mrb[0].mxu0
    %v8043 = vadd.f32 0.0, %v8042
    %v8044 = vpop.f32.mrb[0].mxu0
    %v8045 = vadd.f32 0.0, %v8044
    %v8046 = vpop.f32.mrb[0].mxu0
    %v8047 = vadd.f32 0.0, %v8046
    %v8048 = vpop.f32.mrb[0].mxu0
    %v8049 = vadd.f32 0.0, %v8048
    %8050 = vmatprep.mubr.bf16.mxu0 %v6368
    %8051 = vmatmul.mubr.bf16.gmra.mrb[0].mxu0 %v6367
    %v8052 = vpop.f32.mrb[0].mxu0
    %v8053 = vadd.f32 0.0, %v8052
    %v8054 = vpop.f32.mrb[0].mxu0
    %v8055 = vadd.f32 0.0, %v8054
    %v8056 = vpop.f32.mrb[0].mxu0
    %v8057 = vadd.f32 0.0, %v8056
    %v8058 = vpop.f32.mrb[0].mxu0
    %v8059 = vadd.f32 0.0, %v8058
    %8060 = vmatprep.mubr.bf16.mxu0 %v6370
    %8061 = vmatmul.mubr.bf16.gmra.mrb[0].mxu0 %v6369
    %v8062 = vpop.f32.mrb[0].mxu0
    %v8063 = vadd.f32 0.0, %v8062
    %v8064 = vpop.f32.mrb[0].mxu0
    %v8065 = vadd.f32 0.0, %v8064
    %v8066 = vpop.f32.mrb[0].mxu0
    %v8067 = vadd.f32 0.0, %v8066
    %v8068 = vpop.f32.mrb[0].mxu0
    %v8069 = vadd.f32 0.0, %v8068
    %8070 = vdwg.mxu0
    %s8071 = scalar_lea.vmem %s10, 192
    %v8072 = vld [vmem:[%s8071] sm:$0xf]
    %v8073 = vld [vmem:[%s8071 + $0x4] sm:$0xf]
    %v8074 = vld [vmem:[%s8071 + $0x8] sm:$0xf]
    %v8075 = vld [vmem:[%s8071 + $0xc] sm:$0xf]
    %v8076 = vld [vmem:[%s8071 + $0x10] sm:$0xf]
    %v8077 = vld [vmem:[%s8071 + $0x14] sm:$0xf]
    %v8078 = vld [vmem:[%s8071 + $0x18] sm:$0xf]
    %v8079 = vld [vmem:[%s8071 + $0x1c] sm:$0xf]
    %v8080 = vld [vmem:[%s8071 + $0x20] sm:$0xf]
    %v8081 = vld [vmem:[%s8071 + $0x24] sm:$0xf]
    %v8082 = vld [vmem:[%s8071 + $0x28] sm:$0xf]
    %v8083 = vld [vmem:[%s8071 + $0x2c] sm:$0xf]
    %v8084 = vld [vmem:[%s8071 + $0x30] sm:$0xf]
    %v8085 = vld [vmem:[%s8071 + $0x34] sm:$0xf]
    %v8086 = vld [vmem:[%s8071 + $0x38] sm:$0xf]
    %v8087 = vld [vmem:[%s8071 + $0x3c] sm:$0xf]
    %v8088 = vpack.c.bf16 %v8037, %v8033
    %v8089 = vpack.c.bf16 %v8039, %v8035
    %v8090 = vpack.c.bf16 %v8047, %v8043
    %v8091 = vpack.c.bf16 %v8049, %v8045
    %v8092 = vpack.c.bf16 %v8057, %v8053
    %v8093 = vpack.c.bf16 %v8059, %v8055
    %v8094 = vpack.c.bf16 %v8067, %v8063
    %v8095 = vpack.c.bf16 %v8069, %v8065
    %v8112 = vunpack.c.l.b16 %v8072
    %v8113 = vunpack.c.l.b16 %v8073
    %v8114 = vunpack.c.l.b16 %v8074
    %v8115 = vunpack.c.l.b16 %v8075
    %v8116 = vunpack.c.l.b16 %v8076
    %v8117 = vunpack.c.l.b16 %v8077
    %v8118 = vunpack.c.l.b16 %v8078
    %v8119 = vunpack.c.l.b16 %v8079
    %v8120 = vunpack.c.l.b16 %v8080
    %v8121 = vunpack.c.l.b16 %v8081
    %v8122 = vunpack.c.l.b16 %v8082
    %v8123 = vunpack.c.l.b16 %v8083
    %v8124 = vunpack.c.l.b16 %v8084
    %v8125 = vunpack.c.l.b16 %v8085
    %v8126 = vunpack.c.l.b16 %v8086
    %v8127 = vunpack.c.l.b16 %v8087
    %v8128 = vpack.c.b16 %v8113, %v8112
    %v8129 = vpack.c.b16 %v8115, %v8114
    %v8130 = vpack.c.b16 %v8117, %v8116
    %v8131 = vpack.c.b16 %v8119, %v8118
    %v8132 = vpack.c.b16 %v8121, %v8120
    %v8133 = vpack.c.b16 %v8123, %v8122
    %v8134 = vpack.c.b16 %v8125, %v8124
    %v8135 = vpack.c.b16 %v8127, %v8126
    %v8137 = vsel %vm960, %v8128, 0
    %v8140 = vsel %vm960, %v8129, 0
    %v8143 = vsel %vm960, %v8130, 0
    %v8146 = vsel %vm960, %v8131, 0
    %v8149 = vsel %vm960, %v8132, 0
    %v8152 = vsel %vm960, %v8133, 0
    %v8155 = vsel %vm960, %v8134, 0
    %v8158 = vsel %vm960, %v8135, 0
    %8160 = vmatprep.subr.bf16.mxu0 %v8089
    %8161 = vmatpush1.bf16.msra.mxu0 %v8088
    %8162 = vmatprep.subr.bf16.mxu0 %v8091
    %8163 = vmatpush1.bf16.msra.mxu0 %v8090
    %8164 = vmatprep.subr.bf16.mxu0 %v8093
    %8165 = vmatpush1.bf16.msra.mxu0 %v8092
    %8166 = vmatprep.subr.bf16.mxu0 %v8095
    %8167 = vmatpush1.bf16.msra.mxu0 %v8094
    %8168 = vmatprep.subr.bf16.mxu0 0
    %8169 = vmatpush1.bf16.msra.mxu0 0
    %8170 = vmatprep.subr.bf16.mxu0 0
    %8171 = vmatpush1.bf16.msra.mxu0 0
    %8172 = vmatprep.subr.bf16.mxu0 0
    %8173 = vmatpush1.bf16.msra.mxu0 0
    %8174 = vmatprep.subr.bf16.mxu0 0
    %8175 = vmatpush1.bf16.msra.mxu0 0
    %8176 = vmatprep.subr.bf16.mxu0 0
    %8177 = vmatpush1.bf16.msra.mxu0 0
    %8178 = vmatprep.subr.bf16.mxu0 0
    %8179 = vmatpush1.bf16.msra.mxu0 0
    %8180 = vmatprep.subr.bf16.mxu0 0
    %8181 = vmatpush1.bf16.msra.mxu0 0
    %8182 = vmatprep.subr.bf16.mxu0 0
    %8183 = vmatpush1.bf16.msra.mxu0 0
    %8184 = vmatprep.subr.bf16.mxu0 0
    %8185 = vmatpush1.bf16.msra.mxu0 0
    %8186 = vmatprep.subr.bf16.mxu0 0
    %8187 = vmatpush1.bf16.msra.mxu0 0
    %8188 = vmatprep.subr.bf16.mxu0 0
    %8189 = vmatpush1.bf16.msra.mxu0 0
    %8190 = vmatprep.subr.bf16.mxu0 0
    %8191 = vmatpush1.bf16.msra.mxu0 0
    %8192 = vmatprep.mubr.bf16.mxu0 0
    %8193 = vmatmul.mubr.bf16.gmra.mrb[0].mxu0 %v8137
    %v8194 = vpop.f32.mrb[0].mxu0
    %v8195 = vadd.f32 0.0, %v8194
    %v8196 = vpop.f32.mrb[0].mxu0
    %v8197 = vadd.f32 0.0, %v8196
    %v8198 = vpop.f32.mrb[0].mxu0
    %v8199 = vadd.f32 0.0, %v8198
    %v8200 = vpop.f32.mrb[0].mxu0
    %v8201 = vadd.f32 0.0, %v8200
    %8202 = vmatprep.mubr.bf16.mxu0 0
    %8203 = vmatmul.mubr.bf16.gmra.mrb[0].mxu0 %v8140
    %v8204 = vpop.f32.mrb[0].mxu0
    %v8205 = vadd.f32 0.0, %v8204
    %v8206 = vpop.f32.mrb[0].mxu0
    %v8207 = vadd.f32 0.0, %v8206
    %v8208 = vpop.f32.mrb[0].mxu0
    %v8209 = vadd.f32 0.0, %v8208
    %v8210 = vpop.f32.mrb[0].mxu0
    %v8211 = vadd.f32 0.0, %v8210
    %8212 = vmatprep.mubr.bf16.mxu0 0
    %8213 = vmatmul.mubr.bf16.gmra.mrb[0].mxu0 %v8143
    %v8214 = vpop.f32.mrb[0].mxu0
    %v8215 = vadd.f32 0.0, %v8214
    %v8216 = vpop.f32.mrb[0].mxu0
    %v8217 = vadd.f32 0.0, %v8216
    %v8218 = vpop.f32.mrb[0].mxu0
    %v8219 = vadd.f32 0.0, %v8218
    %v8220 = vpop.f32.mrb[0].mxu0
    %v8221 = vadd.f32 0.0, %v8220
    %8222 = vmatprep.mubr.bf16.mxu0 0
    %8223 = vmatmul.mubr.bf16.gmra.mrb[0].mxu0 %v8146
    %v8224 = vpop.f32.mrb[0].mxu0
    %v8225 = vadd.f32 0.0, %v8224
    %v8226 = vpop.f32.mrb[0].mxu0
    %v8227 = vadd.f32 0.0, %v8226
    %v8228 = vpop.f32.mrb[0].mxu0
    %v8229 = vadd.f32 0.0, %v8228
    %v8230 = vpop.f32.mrb[0].mxu0
    %v8231 = vadd.f32 0.0, %v8230
    %8232 = vmatprep.mubr.bf16.mxu0 0
    %8233 = vmatmul.mubr.bf16.gmra.mrb[0].mxu0 %v8149
    %v8234 = vpop.f32.mrb[0].mxu0
    %v8235 = vadd.f32 0.0, %v8234
    %v8236 = vpop.f32.mrb[0].mxu0
    %v8237 = vadd.f32 0.0, %v8236
    %v8238 = vpop.f32.mrb[0].mxu0
    %v8239 = vadd.f32 0.0, %v8238
    %v8240 = vpop.f32.mrb[0].mxu0
    %v8241 = vadd.f32 0.0, %v8240
    %8242 = vmatprep.mubr.bf16.mxu0 0
    %8243 = vmatmul.mubr.bf16.gmra.mrb[0].mxu0 %v8152
    %v8244 = vpop.f32.mrb[0].mxu0
    %v8245 = vadd.f32 0.0, %v8244
    %v8246 = vpop.f32.mrb[0].mxu0
    %v8247 = vadd.f32 0.0, %v8246
    %v8248 = vpop.f32.mrb[0].mxu0
    %v8249 = vadd.f32 0.0, %v8248
    %v8250 = vpop.f32.mrb[0].mxu0
    %v8251 = vadd.f32 0.0, %v8250
    %8252 = vmatprep.mubr.bf16.mxu0 0
    %8253 = vmatmul.mubr.bf16.gmra.mrb[0].mxu0 %v8155
    %v8254 = vpop.f32.mrb[0].mxu0
    %v8255 = vadd.f32 0.0, %v8254
    %v8256 = vpop.f32.mrb[0].mxu0
    %v8257 = vadd.f32 0.0, %v8256
    %v8258 = vpop.f32.mrb[0].mxu0
    %v8259 = vadd.f32 0.0, %v8258
    %v8260 = vpop.f32.mrb[0].mxu0
    %v8261 = vadd.f32 0.0, %v8260
    %8262 = vmatprep.mubr.bf16.mxu0 0
    %8263 = vmatmul.mubr.bf16.gmra.mrb[0].mxu0 %v8158
    %v8264 = vpop.f32.mrb[0].mxu0
    %v8265 = vadd.f32 0.0, %v8264
    %v8266 = vpop.f32.mrb[0].mxu0
    %v8267 = vadd.f32 0.0, %v8266
    %v8268 = vpop.f32.mrb[0].mxu0
    %v8269 = vadd.f32 0.0, %v8268
    %v8270 = vpop.f32.mrb[0].mxu0
    %v8271 = vadd.f32 0.0, %v8270
    %8272 = vdwg.mxu0
    %v8273 = vadd.f32 %v7773, %v8195
    %v8274 = vadd.f32 %v7774, %v8197
    %v8275 = vadd.f32 %v7775, %v8199
    %v8276 = vadd.f32 %v7776, %v8201
    %v8277 = vadd.f32 %v7777, %v8205
    %v8278 = vadd.f32 %v7778, %v8207
    %v8279 = vadd.f32 %v7779, %v8209
    %v8280 = vadd.f32 %v7780, %v8211
    %v8281 = vadd.f32 %v7781, %v8215
    %v8282 = vadd.f32 %v7782, %v8217
    %v8283 = vadd.f32 %v7783, %v8219
    %v8284 = vadd.f32 %v7784, %v8221
    %v8285 = vadd.f32 %v7785, %v8225
    %v8286 = vadd.f32 %v7786, %v8227
    %v8287 = vadd.f32 %v7787, %v8229
    %v8288 = vadd.f32 %v7788, %v8231
    %v8289 = vadd.f32 %v7789, %v8235
    %v8290 = vadd.f32 %v7790, %v8237
    %v8291 = vadd.f32 %v7791, %v8239
    %v8292 = vadd.f32 %v7792, %v8241
    %v8293 = vadd.f32 %v7793, %v8245
    %v8294 = vadd.f32 %v7794, %v8247
    %v8295 = vadd.f32 %v7795, %v8249
    %v8296 = vadd.f32 %v7796, %v8251
    %v8297 = vadd.f32 %v7797, %v8255
    %v8298 = vadd.f32 %v7798, %v8257
    %v8299 = vadd.f32 %v7799, %v8259
    %v8300 = vadd.f32 %v7800, %v8261
    %v8301 = vadd.f32 %v7801, %v8265
    %v8302 = vadd.f32 %v7802, %v8267
    %v8303 = vadd.f32 %v7803, %v8269
    %v8304 = vadd.f32 %v7804, %v8271
    %v8305 = vtanh.pop %v8273
    %v8306 = vtanh.pop %v8274
    %v8307 = vtanh.pop %v8275
    %v8308 = vtanh.pop %v8276
    %v8309 = vtanh.pop %v8277
    %v8310 = vtanh.pop %v8278
    %v8311 = vtanh.pop %v8279
    %v8312 = vtanh.pop %v8280
    %v8313 = vtanh.pop %v8281
    %v8314 = vtanh.pop %v8282
    %v8315 = vtanh.pop %v8283
    %v8316 = vtanh.pop %v8284
    %v8317 = vtanh.pop %v8285
    %v8318 = vtanh.pop %v8286
    %v8319 = vtanh.pop %v8287
    %v8320 = vtanh.pop %v8288
    %v8321 = vtanh.pop %v8289
    %v8322 = vtanh.pop %v8290
    %v8323 = vtanh.pop %v8291
    %v8324 = vtanh.pop %v8292
    %v8325 = vtanh.pop %v8293
    %v8326 = vtanh.pop %v8294
    %v8327 = vtanh.pop %v8295
    %v8328 = vtanh.pop %v8296
    %v8329 = vtanh.pop %v8297
    %v8330 = vtanh.pop %v8298
    %v8331 = vtanh.pop %v8299
    %v8332 = vtanh.pop %v8300
    %v8333 = vtanh.pop %v8301
    %v8334 = vtanh.pop %v8302
    %v8335 = vtanh.pop %v8303
    %v8336 = vtanh.pop %v8304
    %8337 = vst [vmem:[%s27] sm:$0xff] %v8305
    %8338 = vst.msk [vmem:[%s27 + $0x8] sm:$0xff] %vm960, %v8306
    %8339 = vst [vmem:[%s27 + $0x10] sm:$0xff] %v8307
    %8340 = vst.msk [vmem:[%s27 + $0x18] sm:$0xff] %vm960, %v8308
    %8341 = vst [vmem:[%s27 + $0x20] sm:$0xff] %v8309
    %8342 = vst.msk [vmem:[%s27 + $0x28] sm:$0xff] %vm960, %v8310
    %8343 = vst [vmem:[%s27 + $0x30] sm:$0xff] %v8311
    %8344 = vst.msk [vmem:[%s27 + $0x38] sm:$0xff] %vm960, %v8312
    %8345 = vst [vmem:[%s27 + $0x40] sm:$0xff] %v8313
    %8346 = vst.msk [vmem:[%s27 + $0x48] sm:$0xff] %vm960, %v8314
    %8347 = vst [vmem:[%s27 + $0x50] sm:$0xff] %v8315
    %8348 = vst.msk [vmem:[%s27 + $0x58] sm:$0xff] %vm960, %v8316
    %8349 = vst [vmem:[%s27 + $0x60] sm:$0xff] %v8317
    %8350 = vst.msk [vmem:[%s27 + $0x68] sm:$0xff] %vm960, %v8318
    %8351 = vst [vmem:[%s27 + $0x70] sm:$0xff] %v8319
    %8352 = vst.msk [vmem:[%s27 + $0x78] sm:$0xff] %vm960, %v8320
    %8353 = vst [vmem:[%s27 + $0x80] sm:$0xff] %v8321
    %8354 = vst.msk [vmem:[%s27 + $0x88] sm:$0xff] %vm960, %v8322
    %8355 = vst [vmem:[%s27 + $0x90] sm:$0xff] %v8323
    %8356 = vst.msk [vmem:[%s27 + $0x98] sm:$0xff] %vm960, %v8324
    %8357 = vst [vmem:[%s27 + $0xa0] sm:$0xff] %v8325
    %8358 = vst.msk [vmem:[%s27 + $0xa8] sm:$0xff] %vm960, %v8326
    %8359 = vst [vmem:[%s27 + $0xb0] sm:$0xff] %v8327
    %8360 = vst.msk [vmem:[%s27 + $0xb8] sm:$0xff] %vm960, %v8328
    %8361 = vst [vmem:[%s27 + $0xc0] sm:$0xff] %v8329
    %8362 = vst.msk [vmem:[%s27 + $0xc8] sm:$0xff] %vm960, %v8330
    %8363 = vst [vmem:[%s27 + $0xd0] sm:$0xff] %v8331
    %8364 = vst.msk [vmem:[%s27 + $0xd8] sm:$0xff] %vm960, %v8332
    %8365 = vst [vmem:[%s27 + $0xe0] sm:$0xff] %v8333
    %8366 = vst.msk [vmem:[%s27 + $0xe8] sm:$0xff] %vm960, %v8334
    %8367 = vst [vmem:[%s27 + $0xf0] sm:$0xff] %v8335
    %8368 = vst.msk [vmem:[%s27 + $0xf8] sm:$0xff] %vm960, %v8336
    // Predicated region
    $region162: #{generator_forward.1} parent=1 // pred_check
      _
    $region163: #{generator_forward.1} parent=1 // pred_check_branch
      %8370 = sbr.rel (0) target = $region165
    $region164: #{generator_forward.1} parent=1 // pred_region
      _
    $region165: #{generator_forward.1} parent=1 // pred_fallthru
      _
    // Predicated region
    $region166: #{generator_forward.1} parent=1 // pred_check
      _
    $region167: #{generator_forward.1} parent=1 // pred_check_branch
      %8372 = sbr.rel (0) target = $region169
    $region168: #{generator_forward.1} parent=1 // pred_region
      _
    $region169: #{generator_forward.1} parent=1 // pred_fallthru
      _
    %8373 = vsyncpa [#allocation3], 1
    %8374 = vsyncpa [#allocation5], 1
    %8375 = vsyncpa [#allocation8], 1
    %8376 = vsyncpa [#allocation11], 1
    %8377 = vsyncpa [#allocation14], 1
    %8378 = vsyncpa [#allocation17], 1
    %8379 = vsyncpa [#allocation20], 1

</llo_original>
